<compile_context>
chip_gen: v7x
topology: tpu7x:2x2x1
jax: 0.10.0
libtpu: 0.0.40
codegen_flags: <defaults>
</compile_context>

<pallas_src>
import functools

import jax
import jax.numpy as jnp
from jax import lax
from jax.experimental import pallas as pl
from jax.experimental.pallas import tpu as pltpu


# ---------------------------------------------------------------------------
# In-kernel helpers (operate on VMEM-resident values)
# ---------------------------------------------------------------------------
def _proj(a16, w16, b32):
    """bf16 activations @ bf16 weights with f32 accumulation, + f32 bias."""
    return jnp.dot(a16, w16, preferred_element_type=jnp.float32) + b32


def _attention(q16, k16, v16, wo_ref, bo, nb, sq, sk, nhead):
    """Multi-head attention core for a block of `nb` samples.

    q16: (nb*sq, E) bf16, k16/v16: (nb*sk, E) bf16, wo_ref: (E, E) bf16 ref,
    bo: (1, E) f32.  The 1/sqrt(dh) scale is already folded into Wq.
    Heads are accumulated straight into the out-projection (no concat)."""
    E = q16.shape[-1]
    dh = E // nhead
    out = None
    for h in range(nhead):                             # static unroll over heads
        lo = h * dh
        qh = q16[:, lo:lo + dh].reshape(nb, sq, dh)
        kh = k16[:, lo:lo + dh].reshape(nb, sk, dh)
        vh = v16[:, lo:lo + dh].reshape(nb, sk, dh)
        # scores + softmax (f32 statistics), batched over the nb samples
        s = jnp.einsum("bqd,bkd->bqk", qh, kh,
                       preferred_element_type=jnp.float32)        # (nb, sq, sk)
        s = s - jnp.max(s, axis=-1, keepdims=True)
        p = jnp.exp(s)
        p = p * pl.reciprocal(jnp.sum(p, axis=-1, keepdims=True), approx=True)
        pv = jnp.einsum("bqk,bkd->bqd", p.astype(jnp.bfloat16), vh,
                        preferred_element_type=jnp.float32)       # (nb, sq, dh)
        # accumulate this head through its slice of Wo (slice the ref, no concat)
        proj = jnp.dot(pv.reshape(nb * sq, dh).astype(jnp.bfloat16),
                       wo_ref[pl.ds(lo, dh), :],
                       preferred_element_type=jnp.float32)        # (nb*sq, E)
        out = proj if out is None else out + proj
    return out + bo


def _add_ln(x, y, g, b, eps):
    """LayerNorm(x + y) over the last dim; inputs and statistics in f32."""
    z = x + y
    mu = jnp.mean(z, axis=-1, keepdims=True)
    zc = z - mu
    var = jnp.mean(zc * zc, axis=-1, keepdims=True)
    return zc * lax.rsqrt(var + eps) * g + b


# ---------------------------------------------------------------------------
# Fused decoder-layer kernel (NB batch elements per grid step)
# ---------------------------------------------------------------------------
def _decoder_layer_kernel(
        # per-batch-block activation tiles (bf16)
        tgt_ref, qpos_ref, mem_ref, mpos_ref, refv_ref,
        # self-attention params
        sa_wqkv_ref, sa_bqkv_ref, sa_wo_ref, sa_bo_ref,
        # cross-attention params
        ca_wqkv_ref, ca_bqkv_ref, ca_wo_ref, ca_bo_ref,
        # feed-forward params
        w1_ref, b1_ref, w2_ref, b2_ref,
        # layer-norm params
        g1_ref, be1_ref, g2_ref, be2_ref, g3_ref, be3_ref,
        # output
        out_ref,
        *, nhead, eps, nb, sq, sk):
    E = tgt_ref.shape[-1]
    rq = nb * sq                                    # query rows in this block
    rk = nb * sk                                    # key/value rows in this block

    # Flatten to lane-dense (rows, E) bf16 slabs; no f32 upcast at entry.
    tgt = tgt_ref[...].reshape(rq, E)
    qp = qpos_ref[...].reshape(rq, E)
    mem = mem_ref[...].reshape(rk, E)
    mp = mpos_ref[...].reshape(rk, E)
    rv = refv_ref[...].reshape(rk, E)

    # ---- self-attention: q = k = tgt + query_pos, value = tgt --------------
    xqk = tgt + qp                                                  # bf16
    qk = _proj(xqk, sa_wqkv_ref[:, pl.ds(0, 2 * E)],                # fused Q|K
               sa_bqkv_ref[:, pl.ds(0, 2 * E)])
    v = _proj(tgt, sa_wqkv_ref[:, pl.ds(2 * E, E)],
              sa_bqkv_ref[:, pl.ds(2 * E, E)])
    qk16 = qk.astype(jnp.bfloat16)
    sa = _attention(qk16[:, :E], qk16[:, E:], v.astype(jnp.bfloat16),
                    sa_wo_ref, sa_bo_ref[...], nb, sq, sq, nhead)
    x32 = _add_ln(tgt.astype(jnp.float32), sa, g1_ref[...], be1_ref[...], eps)
    x16 = x32.astype(jnp.bfloat16)

    # ---- cross-attention: q = x + query_pos, k = memory + memory_pos,
    #                       value = reference --------------------------------
    q = _proj(x16 + qp, ca_wqkv_ref[:, pl.ds(0, E)], ca_bqkv_ref[:, pl.ds(0, E)])
    k = _proj(mem + mp, ca_wqkv_ref[:, pl.ds(E, E)], ca_bqkv_ref[:, pl.ds(E, E)])
    v = _proj(rv, ca_wqkv_ref[:, pl.ds(2 * E, E)], ca_bqkv_ref[:, pl.ds(2 * E, E)])
    ca = _attention(q.astype(jnp.bfloat16), k.astype(jnp.bfloat16),
                    v.astype(jnp.bfloat16), ca_wo_ref, ca_bo_ref[...],
                    nb, sq, sk, nhead)
    y32 = _add_ln(x32, ca, g2_ref[...], be2_ref[...], eps)
    y16 = y32.astype(jnp.bfloat16)

    # ---- feed-forward: linear2(relu(linear1(x))) ----------------------------
    h = jnp.maximum(
        jnp.dot(y16, w1_ref[...], preferred_element_type=jnp.float32) + b1_ref[...],
        0.0)
    ff = jnp.dot(h.astype(jnp.bfloat16), w2_ref[...],
                 preferred_element_type=jnp.float32) + b2_ref[...]
    z32 = _add_ln(y32, ff, g3_ref[...], be3_ref[...], eps)

    out_ref[...] = z32.reshape(nb, sq, E).astype(out_ref.dtype)


# ---------------------------------------------------------------------------
# Wrapper: single pallas_call for the whole layer, gridded over batch blocks
# ---------------------------------------------------------------------------
def _pick_batch_block(n, sq, sk, d_ff):
    """Largest divisor of n whose activation block stays comfortably in VMEM
    while giving the projection/FFN matmuls a large M dim (nb * seq rows)."""
    nb = 1
    for cand in range(1, n + 1):
        if n % cand:
            continue
        rows = cand * max(sq, sk)
        hidden_bytes = cand * sq * d_ff * 4           # f32 FFN hidden intermediate
        if rows <= 2048 and hidden_bytes <= (8 << 20):
            nb = cand
    return nb


def transformer_decoder_layer(tgt, memory, reference, query_pos, memory_pos,
                              params, nhead):
    """tgt/query_pos: (L, N, E); memory/memory_pos/reference: (S, N, E)."""
    L, N, E = tgt.shape
    S = memory.shape[0]
    FF = params["linear1_w"].shape[1]
    assert E % nhead == 0, "d_model must be divisible by nhead"

    nb = _pick_batch_block(N, L, S, FF)
    grid = (N // nb,)

    # One-time batch-major relayout + bf16 cast: each grid step gets a
    # contiguous, lane-dense (nb*L, E) / (nb*S, E) activation slab.
    def to_kernel_layout(a):
        return jnp.transpose(a, (1, 0, 2)).astype(jnp.bfloat16)

    t = to_kernel_layout(tgt)             # (N, L, E)
    qp = to_kernel_layout(query_pos)      # (N, L, E)
    m = to_kernel_layout(memory)          # (N, S, E)
    mp = to_kernel_layout(memory_pos)     # (N, S, E)
    r = to_kernel_layout(reference)       # (N, S, E)

    sa, ca = params["self_attn"], params["cross_attn"]
    weights = [
        sa["w_qkv"], sa["b_qkv"], sa["w_out"], sa["b_out"],
        ca["w_qkv"], ca["b_qkv"], ca["w_out"], ca["b_out"],
        params["linear1_w"], params["linear1_b"],
        params["linear2_w"], params["linear2_b"],
        params["norm1_g"], params["norm1_b"],
        params["norm2_g"], params["norm2_b"],
        params["norm3_g"], params["norm3_b"],
    ]

    def batch_spec(rows):
        return pl.BlockSpec((nb, rows, E), lambda i: (i, 0, 0))

    def full_spec(arr):    # weights/biases are 2-D and resident whole in VMEM
        return pl.BlockSpec(arr.shape, lambda i: (0, 0))

    in_specs = ([batch_spec(L), batch_spec(L),
                 batch_spec(S), batch_spec(S), batch_spec(S)]
                + [full_spec(w) for w in weights])

    # Advisory cost estimate + explicit VMEM budget.
    flops = N * (2 * L * E * 3 * E                     # self-attn QKV projection
                 + 2 * 2 * L * L * E                   # self-attn scores + PV
                 + 2 * L * E * E                       # self-attn out projection
                 + 2 * L * E * E + 2 * 2 * S * E * E   # cross-attn q,k,v projections
                 + 2 * 2 * L * S * E                   # cross-attn scores + PV
                 + 2 * L * E * E                       # cross-attn out projection
                 + 2 * 2 * L * E * FF)                 # FFN
    transcendentals = N * nhead * (L * L + L * S)      # softmax exps
    w_bytes = sum(int(w.size) * w.dtype.itemsize for w in weights)
    act_bytes = ((2 * N * L * E + 3 * N * S * E) * 2   # bf16 inputs
                 + N * L * E * tgt.dtype.itemsize)     # output
    cost = pl.CostEstimate(flops=int(flops),
                           transcendentals=int(transcendentals),
                           bytes_accessed=int(w_bytes + act_bytes))

    block_bytes = ((2 * nb * L * E + 3 * nb * S * E) * 2
                   + nb * L * E * tgt.dtype.itemsize)
    vmem_limit = min(64 << 20,
                     max(32 << 20, int(1.5 * 2 * (block_bytes + w_bytes))))

    kernel = functools.partial(_decoder_layer_kernel, nhead=nhead, eps=1e-5,
                               nb=nb, sq=L, sk=S)

    out = pl.pallas_call(
        kernel,
        out_shape=jax.ShapeDtypeStruct((N, L, E), tgt.dtype),
        grid=grid,
        in_specs=in_specs,
        out_specs=pl.BlockSpec((nb, L, E), lambda i: (i, 0, 0)),
        compiler_params=pltpu.CompilerParams(
            dimension_semantics=("parallel",),
            vmem_limit_bytes=vmem_limit),
        cost_estimate=cost,
    )(t, qp, m, mp, r, *weights)

    return jnp.transpose(out, (1, 0, 2))               # back to (L, N, E)


# ---------------------------------------------------------------------------
# Parameter construction (kernel layout: weights pre-transposed, i.e.
# w_qkv = torch in_proj_weight.T, w_out = out_proj.weight.T, linear*_w = W.T)
# ---------------------------------------------------------------------------
def make_params(key, d_model, nhead, dim_feedforward):
    keys = jax.random.split(key, 6)

    def mha(k1, k2):
        return {
            "w_qkv": jax.random.normal(k1, (d_model, 3 * d_model), jnp.float32) * 0.05,
            "b_qkv": jnp.zeros((1, 3 * d_model), jnp.float32),
            "w_out": jax.random.normal(k2, (d_model, d_model), jnp.float32) * 0.05,
            "b_out": jnp.zeros((1, d_model), jnp.float32),
        }

    return {
        "self_attn": mha(keys[0], keys[1]),
        "cross_attn": mha(keys[2], keys[3]),
        "linear1_w": jax.random.normal(keys[4], (d_model, dim_feedforward), jnp.float32) * 0.05,
        "linear1_b": jnp.zeros((1, dim_feedforward), jnp.float32),
        "linear2_w": jax.random.normal(keys[5], (dim_feedforward, d_model), jnp.float32) * 0.05,
        "linear2_b": jnp.zeros((1, d_model), jnp.float32),
        "norm1_g": jnp.ones((1, d_model), jnp.float32),
        "norm1_b": jnp.zeros((1, d_model), jnp.float32),
        "norm2_g": jnp.ones((1, d_model), jnp.float32),
        "norm2_b": jnp.zeros((1, d_model), jnp.float32),
        "norm3_g": jnp.ones((1, d_model), jnp.float32),
        "norm3_b": jnp.zeros((1, d_model), jnp.float32),
    }


def prepare_params(params, nhead):
    """One-time constant transform (outside jit): fold the 1/sqrt(dh) attention
    scale into Wq / bq and cast matmul weights to bf16 (biases / LN stay f32)."""
    def prep_attn(p):
        d_model = p["w_out"].shape[0]
        scale = 1.0 / float(d_model // nhead) ** 0.5
        w = p["w_qkv"].at[:, :d_model].multiply(scale)
        b = p["b_qkv"].at[:, :d_model].multiply(scale)
        return {
            "w_qkv": w.astype(jnp.bfloat16),
            "b_qkv": b.astype(jnp.float32),
            "w_out": p["w_out"].astype(jnp.bfloat16),
            "b_out": p["b_out"].astype(jnp.float32),
        }

    out = dict(params)
    out["self_attn"] = prep_attn(params["self_attn"])
    out["cross_attn"] = prep_attn(params["cross_attn"])
    out["linear1_w"] = params["linear1_w"].astype(jnp.bfloat16)
    out["linear2_w"] = params["linear2_w"].astype(jnp.bfloat16)
    return out


if __name__ == "__main__":
    # small demo: seq_q=16, seq_kv=32, batch=4, d_model=128, nhead=4, ff=256
    L, S, N, E, H, FF = 16, 32, 4, 128, 4, 256
    key = jax.random.PRNGKey(0)
    k_in = jax.random.split(key, 6)

    tgt = jax.random.normal(k_in[0], (L, N, E), jnp.float32)
    memory = jax.random.normal(k_in[1], (S, N, E), jnp.float32)
    reference = jax.random.normal(k_in[2], (S, N, E), jnp.float32)
    query_pos = jax.random.normal(k_in[3], (L, N, E), jnp.float32)
    memory_pos = jax.random.normal(k_in[4], (S, N, E), jnp.float32)

    params = prepare_params(make_params(k_in[5], E, H, FF), H)

    fwd = jax.jit(transformer_decoder_layer, static_argnums=(6,))
    out = fwd(tgt, memory, reference, query_pos, memory_pos, params, H)
    jax.block_until_ready(out)
    assert out.shape == (L, N, E)
    assert bool(jnp.all(jnp.isfinite(out)))
    print("KERNEL_OK")
</pallas_src>

<mosaic_0001>
module attributes {stable_mosaic.version = 11 : i64} {
  func.func @_decoder_layer_kernel(%arg0: i32, %arg1: memref<4x16x128xbf16, #tpu.memory_space<vmem>>, %arg2: memref<4x16x128xbf16, #tpu.memory_space<vmem>>, %arg3: memref<4x32x128xbf16, #tpu.memory_space<vmem>>, %arg4: memref<4x32x128xbf16, #tpu.memory_space<vmem>>, %arg5: memref<4x32x128xbf16, #tpu.memory_space<vmem>>, %arg6: memref<128x384xbf16, #tpu.memory_space<vmem>>, %arg7: memref<1x384xf32, #tpu.memory_space<vmem>>, %arg8: memref<128x128xbf16, #tpu.memory_space<vmem>>, %arg9: memref<1x128xf32, #tpu.memory_space<vmem>>, %arg10: memref<128x384xbf16, #tpu.memory_space<vmem>>, %arg11: memref<1x384xf32, #tpu.memory_space<vmem>>, %arg12: memref<128x128xbf16, #tpu.memory_space<vmem>>, %arg13: memref<1x128xf32, #tpu.memory_space<vmem>>, %arg14: memref<128x256xbf16, #tpu.memory_space<vmem>>, %arg15: memref<1x256xf32, #tpu.memory_space<vmem>>, %arg16: memref<256x128xbf16, #tpu.memory_space<vmem>>, %arg17: memref<1x128xf32, #tpu.memory_space<vmem>>, %arg18: memref<1x128xf32, #tpu.memory_space<vmem>>, %arg19: memref<1x128xf32, #tpu.memory_space<vmem>>, %arg20: memref<1x128xf32, #tpu.memory_space<vmem>>, %arg21: memref<1x128xf32, #tpu.memory_space<vmem>>, %arg22: memref<1x128xf32, #tpu.memory_space<vmem>>, %arg23: memref<1x128xf32, #tpu.memory_space<vmem>>, %arg24: memref<4x16x128xf32, #tpu.memory_space<vmem>>) attributes {dimension_semantics = [#tpu.dimension_semantics<parallel>], iteration_bounds = array<i64: 1>, scalar_prefetch = 0 : i64, scratch_operands = 0 : i64, tpu.core_type = #tpu.core_type<tc>, window_params = [{transform_indices = @transform_0, window_bounds = array<i64: 4, 16, 128>}, {transform_indices = @transform_1, window_bounds = array<i64: 4, 16, 128>}, {transform_indices = @transform_2, window_bounds = array<i64: 4, 32, 128>}, {transform_indices = @transform_3, window_bounds = array<i64: 4, 32, 128>}, {transform_indices = @transform_4, window_bounds = array<i64: 4, 32, 128>}, {pipeline_mode = #tpu.pipeline_mode<synchronous>, transform_indices = @transform_5, window_bounds = array<i64: 128, 384>}, {pipeline_mode = #tpu.pipeline_mode<synchronous>, transform_indices = @transform_6, window_bounds = array<i64: 1, 384>}, {pipeline_mode = #tpu.pipeline_mode<synchronous>, transform_indices = @transform_7, window_bounds = array<i64: 128, 128>}, {pipeline_mode = #tpu.pipeline_mode<synchronous>, transform_indices = @transform_8, window_bounds = array<i64: 1, 128>}, {pipeline_mode = #tpu.pipeline_mode<synchronous>, transform_indices = @transform_9, window_bounds = array<i64: 128, 384>}, {pipeline_mode = #tpu.pipeline_mode<synchronous>, transform_indices = @transform_10, window_bounds = array<i64: 1, 384>}, {pipeline_mode = #tpu.pipeline_mode<synchronous>, transform_indices = @transform_11, window_bounds = array<i64: 128, 128>}, {pipeline_mode = #tpu.pipeline_mode<synchronous>, transform_indices = @transform_12, window_bounds = array<i64: 1, 128>}, {pipeline_mode = #tpu.pipeline_mode<synchronous>, transform_indices = @transform_13, window_bounds = array<i64: 128, 256>}, {pipeline_mode = #tpu.pipeline_mode<synchronous>, transform_indices = @transform_14, window_bounds = array<i64: 1, 256>}, {pipeline_mode = #tpu.pipeline_mode<synchronous>, transform_indices = @transform_15, window_bounds = array<i64: 256, 128>}, {pipeline_mode = #tpu.pipeline_mode<synchronous>, transform_indices = @transform_16, window_bounds = array<i64: 1, 128>}, {pipeline_mode = #tpu.pipeline_mode<synchronous>, transform_indices = @transform_17, window_bounds = array<i64: 1, 128>}, {pipeline_mode = #tpu.pipeline_mode<synchronous>, transform_indices = @transform_18, window_bounds = array<i64: 1, 128>}, {pipeline_mode = #tpu.pipeline_mode<synchronous>, transform_indices = @transform_19, window_bounds = array<i64: 1, 128>}, {pipeline_mode = #tpu.pipeline_mode<synchronous>, transform_indices = @transform_20, window_bounds = array<i64: 1, 128>}, {pipeline_mode = #tpu.pipeline_mode<synchronous>, transform_indices = @transform_21, window_bounds = array<i64: 1, 128>}, {pipeline_mode = #tpu.pipeline_mode<synchronous>, transform_indices = @transform_22, window_bounds = array<i64: 1, 128>}, {transform_indices = @transform_23, window_bounds = array<i64: 4, 16, 128>}]} {
    %c0 = arith.constant 0 : index
    %c0_0 = arith.constant 0 : index
    %c0_1 = arith.constant 0 : index
    %0 = vector.load %arg1[%c0, %c0_0, %c0_1] : memref<4x16x128xbf16, #tpu.memory_space<vmem>>, vector<4x16x128xbf16>
    %1 = vector.shape_cast %0 : vector<4x16x128xbf16> to vector<64x128xbf16>
    %c0_2 = arith.constant 0 : index
    %c0_3 = arith.constant 0 : index
    %c0_4 = arith.constant 0 : index
    %2 = vector.load %arg2[%c0_2, %c0_3, %c0_4] : memref<4x16x128xbf16, #tpu.memory_space<vmem>>, vector<4x16x128xbf16>
    %3 = vector.shape_cast %2 : vector<4x16x128xbf16> to vector<64x128xbf16>
    %c0_5 = arith.constant 0 : index
    %c0_6 = arith.constant 0 : index
    %c0_7 = arith.constant 0 : index
    %4 = vector.load %arg3[%c0_5, %c0_6, %c0_7] : memref<4x32x128xbf16, #tpu.memory_space<vmem>>, vector<4x32x128xbf16>
    %5 = vector.shape_cast %4 : vector<4x32x128xbf16> to vector<128x128xbf16>
    %c0_8 = arith.constant 0 : index
    %c0_9 = arith.constant 0 : index
    %c0_10 = arith.constant 0 : index
    %6 = vector.load %arg4[%c0_8, %c0_9, %c0_10] : memref<4x32x128xbf16, #tpu.memory_space<vmem>>, vector<4x32x128xbf16>
    %7 = vector.shape_cast %6 : vector<4x32x128xbf16> to vector<128x128xbf16>
    %c0_11 = arith.constant 0 : index
    %c0_12 = arith.constant 0 : index
    %c0_13 = arith.constant 0 : index
    %8 = vector.load %arg5[%c0_11, %c0_12, %c0_13] : memref<4x32x128xbf16, #tpu.memory_space<vmem>>, vector<4x32x128xbf16>
    %9 = vector.shape_cast %8 : vector<4x32x128xbf16> to vector<128x128xbf16>
    %10 = arith.addf %1, %3 : vector<64x128xbf16>
    %c0_14 = arith.constant 0 : index
    %c0_15 = arith.constant 0 : index
    %11 = vector.load %arg6[%c0_14, %c0_15] : memref<128x384xbf16, #tpu.memory_space<vmem>>, vector<128x256xbf16>
    %c0_16 = arith.constant 0 : index
    %c0_17 = arith.constant 0 : index
    %12 = vector.load %arg7[%c0_16, %c0_17] : memref<1x384xf32, #tpu.memory_space<vmem>>, vector<1x256xf32>
    %cst = arith.constant dense<0.000000e+00> : vector<64x256xf32>
    %13 = tpu.matmul %10, %11, %cst {dimension_numbers = #tpu.dot_dimension_numbers<[1], [0], [0], [1], [0, 0, 1, 1], [], []>} : vector<64x128xbf16>, vector<128x256xbf16>, vector<64x256xf32> -> vector<64x256xf32>
    %14 = vector.broadcast %12 : vector<1x256xf32> to vector<64x256xf32>
    %15 = arith.addf %13, %14 : vector<64x256xf32>
    %c0_18 = arith.constant 0 : index
    %c256 = arith.constant 256 : index
    %16 = vector.load %arg6[%c0_18, %c256] : memref<128x384xbf16, #tpu.memory_space<vmem>>, vector<128x128xbf16>
    %c0_19 = arith.constant 0 : index
    %c256_20 = arith.constant 256 : index
    %17 = vector.load %arg7[%c0_19, %c256_20] : memref<1x384xf32, #tpu.memory_space<vmem>>, vector<1x128xf32>
    %cst_21 = arith.constant dense<0.000000e+00> : vector<64x128xf32>
    %18 = tpu.matmul %1, %16, %cst_21 {dimension_numbers = #tpu.dot_dimension_numbers<[1], [0], [0], [1], [0, 0, 1, 1], [], []>} : vector<64x128xbf16>, vector<128x128xbf16>, vector<64x128xf32> -> vector<64x128xf32>
    %19 = vector.broadcast %17 : vector<1x128xf32> to vector<64x128xf32>
    %20 = arith.addf %18, %19 : vector<64x128xf32>
    %21 = arith.truncf %15 : vector<64x256xf32> to vector<64x256xbf16>
    %22 = vector.extract_strided_slice %21 {offsets = [0, 0], sizes = [64, 128], strides = [1, 1]} : vector<64x256xbf16> to vector<64x128xbf16>
    %23 = vector.extract_strided_slice %21 {offsets = [0, 128], sizes = [64, 128], strides = [1, 1]} : vector<64x256xbf16> to vector<64x128xbf16>
    %24 = arith.truncf %20 : vector<64x128xf32> to vector<64x128xbf16>
    %c0_22 = arith.constant 0 : index
    %c0_23 = arith.constant 0 : index
    %25 = vector.load %arg9[%c0_22, %c0_23] : memref<1x128xf32, #tpu.memory_space<vmem>>, vector<1x128xf32>
    %26 = vector.extract_strided_slice %22 {offsets = [0, 0], sizes = [64, 32], strides = [1, 1]} : vector<64x128xbf16> to vector<64x32xbf16>
    %27 = vector.shape_cast %26 : vector<64x32xbf16> to vector<4x16x32xbf16>
    %28 = vector.extract_strided_slice %23 {offsets = [0, 0], sizes = [64, 32], strides = [1, 1]} : vector<64x128xbf16> to vector<64x32xbf16>
    %29 = vector.shape_cast %28 : vector<64x32xbf16> to vector<4x16x32xbf16>
    %30 = vector.extract_strided_slice %24 {offsets = [0, 0], sizes = [64, 32], strides = [1, 1]} : vector<64x128xbf16> to vector<64x32xbf16>
    %31 = vector.shape_cast %30 : vector<64x32xbf16> to vector<4x16x32xbf16>
    "tpu.trace_start"() <{level = 10 : i32, message = "bqd,bkd->bqk"}> : () -> ()
    %cst_24 = arith.constant dense<0.000000e+00> : vector<4x16x16xf32>
    %32 = tpu.matmul %27, %29, %cst_24 {dimension_numbers = #tpu.dot_dimension_numbers<[2], [2], [1], [1], [0, 0, 0, 1, 1, 1], [0], [0]>} : vector<4x16x32xbf16>, vector<4x16x32xbf16>, vector<4x16x16xf32> -> vector<4x16x16xf32>
    "tpu.trace_stop"() : () -> ()
    %cst_25 = arith.constant dense<0xFF800000> : vector<4x16xf32>
    %33 = vector.multi_reduction <maximumf>, %32, %cst_25 [2] : vector<4x16x16xf32> to vector<4x16xf32>
    %34 = vector.shape_cast %33 : vector<4x16xf32> to vector<4x16x1xf32>
    %35 = vector.broadcast %34 : vector<4x16x1xf32> to vector<4x16x16xf32>
    %36 = arith.subf %32, %35 : vector<4x16x16xf32>
    %37 = math.exp %36 : vector<4x16x16xf32>
    %cst_26 = arith.constant dense<0.000000e+00> : vector<4x16xf32>
    %38 = vector.multi_reduction <add>, %37, %cst_26 [2] : vector<4x16x16xf32> to vector<4x16xf32>
    %39 = vector.shape_cast %38 : vector<4x16xf32> to vector<4x16x1xf32>
    %40 = tpu.reciprocal %39 {approx = true} : vector<4x16x1xf32> -> vector<4x16x1xf32>
    %41 = vector.broadcast %40 : vector<4x16x1xf32> to vector<4x16x16xf32>
    %42 = arith.mulf %37, %41 : vector<4x16x16xf32>
    %43 = arith.truncf %42 : vector<4x16x16xf32> to vector<4x16x16xbf16>
    "tpu.trace_start"() <{level = 10 : i32, message = "bqk,bkd->bqd"}> : () -> ()
    %cst_27 = arith.constant dense<0.000000e+00> : vector<4x16x32xf32>
    %44 = tpu.matmul %43, %31, %cst_27 {dimension_numbers = #tpu.dot_dimension_numbers<[2], [1], [1], [2], [0, 0, 0, 1, 1, 2], [0], [0]>} : vector<4x16x16xbf16>, vector<4x16x32xbf16>, vector<4x16x32xf32> -> vector<4x16x32xf32>
    "tpu.trace_stop"() : () -> ()
    %45 = vector.shape_cast %44 : vector<4x16x32xf32> to vector<64x32xf32>
    %46 = arith.truncf %45 : vector<64x32xf32> to vector<64x32xbf16>
    %c0_28 = arith.constant 0 : index
    %c0_29 = arith.constant 0 : index
    %47 = vector.load %arg8[%c0_28, %c0_29] : memref<128x128xbf16, #tpu.memory_space<vmem>>, vector<32x128xbf16>
    %cst_30 = arith.constant dense<0.000000e+00> : vector<64x128xf32>
    %48 = tpu.matmul %46, %47, %cst_30 {dimension_numbers = #tpu.dot_dimension_numbers<[1], [0], [0], [1], [0, 0, 1, 1], [], []>} : vector<64x32xbf16>, vector<32x128xbf16>, vector<64x128xf32> -> vector<64x128xf32>
    %49 = vector.extract_strided_slice %22 {offsets = [0, 32], sizes = [64, 32], strides = [1, 1]} : vector<64x128xbf16> to vector<64x32xbf16>
    %50 = vector.shape_cast %49 : vector<64x32xbf16> to vector<4x16x32xbf16>
    %51 = vector.extract_strided_slice %23 {offsets = [0, 32], sizes = [64, 32], strides = [1, 1]} : vector<64x128xbf16> to vector<64x32xbf16>
    %52 = vector.shape_cast %51 : vector<64x32xbf16> to vector<4x16x32xbf16>
    %53 = vector.extract_strided_slice %24 {offsets = [0, 32], sizes = [64, 32], strides = [1, 1]} : vector<64x128xbf16> to vector<64x32xbf16>
    %54 = vector.shape_cast %53 : vector<64x32xbf16> to vector<4x16x32xbf16>
    "tpu.trace_start"() <{level = 10 : i32, message = "bqd,bkd->bqk"}> : () -> ()
    %cst_31 = arith.constant dense<0.000000e+00> : vector<4x16x16xf32>
    %55 = tpu.matmul %50, %52, %cst_31 {dimension_numbers = #tpu.dot_dimension_numbers<[2], [2], [1], [1], [0, 0, 0, 1, 1, 1], [0], [0]>} : vector<4x16x32xbf16>, vector<4x16x32xbf16>, vector<4x16x16xf32> -> vector<4x16x16xf32>
    "tpu.trace_stop"() : () -> ()
    %cst_32 = arith.constant dense<0xFF800000> : vector<4x16xf32>
    %56 = vector.multi_reduction <maximumf>, %55, %cst_32 [2] : vector<4x16x16xf32> to vector<4x16xf32>
    %57 = vector.shape_cast %56 : vector<4x16xf32> to vector<4x16x1xf32>
    %58 = vector.broadcast %57 : vector<4x16x1xf32> to vector<4x16x16xf32>
    %59 = arith.subf %55, %58 : vector<4x16x16xf32>
    %60 = math.exp %59 : vector<4x16x16xf32>
    %cst_33 = arith.constant dense<0.000000e+00> : vector<4x16xf32>
    %61 = vector.multi_reduction <add>, %60, %cst_33 [2] : vector<4x16x16xf32> to vector<4x16xf32>
    %62 = vector.shape_cast %61 : vector<4x16xf32> to vector<4x16x1xf32>
    %63 = tpu.reciprocal %62 {approx = true} : vector<4x16x1xf32> -> vector<4x16x1xf32>
    %64 = vector.broadcast %63 : vector<4x16x1xf32> to vector<4x16x16xf32>
    %65 = arith.mulf %60, %64 : vector<4x16x16xf32>
    %66 = arith.truncf %65 : vector<4x16x16xf32> to vector<4x16x16xbf16>
    "tpu.trace_start"() <{level = 10 : i32, message = "bqk,bkd->bqd"}> : () -> ()
    %cst_34 = arith.constant dense<0.000000e+00> : vector<4x16x32xf32>
    %67 = tpu.matmul %66, %54, %cst_34 {dimension_numbers = #tpu.dot_dimension_numbers<[2], [1], [1], [2], [0, 0, 0, 1, 1, 2], [0], [0]>} : vector<4x16x16xbf16>, vector<4x16x32xbf16>, vector<4x16x32xf32> -> vector<4x16x32xf32>
    "tpu.trace_stop"() : () -> ()
    %68 = vector.shape_cast %67 : vector<4x16x32xf32> to vector<64x32xf32>
    %69 = arith.truncf %68 : vector<64x32xf32> to vector<64x32xbf16>
    %c32 = arith.constant 32 : index
    %c0_35 = arith.constant 0 : index
    %70 = vector.load %arg8[%c32, %c0_35] : memref<128x128xbf16, #tpu.memory_space<vmem>>, vector<32x128xbf16>
    %cst_36 = arith.constant dense<0.000000e+00> : vector<64x128xf32>
    %71 = tpu.matmul %69, %70, %cst_36 {dimension_numbers = #tpu.dot_dimension_numbers<[1], [0], [0], [1], [0, 0, 1, 1], [], []>} : vector<64x32xbf16>, vector<32x128xbf16>, vector<64x128xf32> -> vector<64x128xf32>
    %72 = arith.addf %48, %71 : vector<64x128xf32>
    %73 = vector.extract_strided_slice %22 {offsets = [0, 64], sizes = [64, 32], strides = [1, 1]} : vector<64x128xbf16> to vector<64x32xbf16>
    %74 = vector.shape_cast %73 : vector<64x32xbf16> to vector<4x16x32xbf16>
    %75 = vector.extract_strided_slice %23 {offsets = [0, 64], sizes = [64, 32], strides = [1, 1]} : vector<64x128xbf16> to vector<64x32xbf16>
    %76 = vector.shape_cast %75 : vector<64x32xbf16> to vector<4x16x32xbf16>
    %77 = vector.extract_strided_slice %24 {offsets = [0, 64], sizes = [64, 32], strides = [1, 1]} : vector<64x128xbf16> to vector<64x32xbf16>
    %78 = vector.shape_cast %77 : vector<64x32xbf16> to vector<4x16x32xbf16>
    "tpu.trace_start"() <{level = 10 : i32, message = "bqd,bkd->bqk"}> : () -> ()
    %cst_37 = arith.constant dense<0.000000e+00> : vector<4x16x16xf32>
    %79 = tpu.matmul %74, %76, %cst_37 {dimension_numbers = #tpu.dot_dimension_numbers<[2], [2], [1], [1], [0, 0, 0, 1, 1, 1], [0], [0]>} : vector<4x16x32xbf16>, vector<4x16x32xbf16>, vector<4x16x16xf32> -> vector<4x16x16xf32>
    "tpu.trace_stop"() : () -> ()
    %cst_38 = arith.constant dense<0xFF800000> : vector<4x16xf32>
    %80 = vector.multi_reduction <maximumf>, %79, %cst_38 [2] : vector<4x16x16xf32> to vector<4x16xf32>
    %81 = vector.shape_cast %80 : vector<4x16xf32> to vector<4x16x1xf32>
    %82 = vector.broadcast %81 : vector<4x16x1xf32> to vector<4x16x16xf32>
    %83 = arith.subf %79, %82 : vector<4x16x16xf32>
    %84 = math.exp %83 : vector<4x16x16xf32>
    %cst_39 = arith.constant dense<0.000000e+00> : vector<4x16xf32>
    %85 = vector.multi_reduction <add>, %84, %cst_39 [2] : vector<4x16x16xf32> to vector<4x16xf32>
    %86 = vector.shape_cast %85 : vector<4x16xf32> to vector<4x16x1xf32>
    %87 = tpu.reciprocal %86 {approx = true} : vector<4x16x1xf32> -> vector<4x16x1xf32>
    %88 = vector.broadcast %87 : vector<4x16x1xf32> to vector<4x16x16xf32>
    %89 = arith.mulf %84, %88 : vector<4x16x16xf32>
    %90 = arith.truncf %89 : vector<4x16x16xf32> to vector<4x16x16xbf16>
    "tpu.trace_start"() <{level = 10 : i32, message = "bqk,bkd->bqd"}> : () -> ()
    %cst_40 = arith.constant dense<0.000000e+00> : vector<4x16x32xf32>
    %91 = tpu.matmul %90, %78, %cst_40 {dimension_numbers = #tpu.dot_dimension_numbers<[2], [1], [1], [2], [0, 0, 0, 1, 1, 2], [0], [0]>} : vector<4x16x16xbf16>, vector<4x16x32xbf16>, vector<4x16x32xf32> -> vector<4x16x32xf32>
    "tpu.trace_stop"() : () -> ()
    %92 = vector.shape_cast %91 : vector<4x16x32xf32> to vector<64x32xf32>
    %93 = arith.truncf %92 : vector<64x32xf32> to vector<64x32xbf16>
    %c64 = arith.constant 64 : index
    %c0_41 = arith.constant 0 : index
    %94 = vector.load %arg8[%c64, %c0_41] : memref<128x128xbf16, #tpu.memory_space<vmem>>, vector<32x128xbf16>
    %cst_42 = arith.constant dense<0.000000e+00> : vector<64x128xf32>
    %95 = tpu.matmul %93, %94, %cst_42 {dimension_numbers = #tpu.dot_dimension_numbers<[1], [0], [0], [1], [0, 0, 1, 1], [], []>} : vector<64x32xbf16>, vector<32x128xbf16>, vector<64x128xf32> -> vector<64x128xf32>
    %96 = arith.addf %72, %95 : vector<64x128xf32>
    %97 = vector.extract_strided_slice %22 {offsets = [0, 96], sizes = [64, 32], strides = [1, 1]} : vector<64x128xbf16> to vector<64x32xbf16>
    %98 = vector.shape_cast %97 : vector<64x32xbf16> to vector<4x16x32xbf16>
    %99 = vector.extract_strided_slice %23 {offsets = [0, 96], sizes = [64, 32], strides = [1, 1]} : vector<64x128xbf16> to vector<64x32xbf16>
    %100 = vector.shape_cast %99 : vector<64x32xbf16> to vector<4x16x32xbf16>
    %101 = vector.extract_strided_slice %24 {offsets = [0, 96], sizes = [64, 32], strides = [1, 1]} : vector<64x128xbf16> to vector<64x32xbf16>
    %102 = vector.shape_cast %101 : vector<64x32xbf16> to vector<4x16x32xbf16>
    "tpu.trace_start"() <{level = 10 : i32, message = "bqd,bkd->bqk"}> : () -> ()
    %cst_43 = arith.constant dense<0.000000e+00> : vector<4x16x16xf32>
    %103 = tpu.matmul %98, %100, %cst_43 {dimension_numbers = #tpu.dot_dimension_numbers<[2], [2], [1], [1], [0, 0, 0, 1, 1, 1], [0], [0]>} : vector<4x16x32xbf16>, vector<4x16x32xbf16>, vector<4x16x16xf32> -> vector<4x16x16xf32>
    "tpu.trace_stop"() : () -> ()
    %cst_44 = arith.constant dense<0xFF800000> : vector<4x16xf32>
    %104 = vector.multi_reduction <maximumf>, %103, %cst_44 [2] : vector<4x16x16xf32> to vector<4x16xf32>
    %105 = vector.shape_cast %104 : vector<4x16xf32> to vector<4x16x1xf32>
    %106 = vector.broadcast %105 : vector<4x16x1xf32> to vector<4x16x16xf32>
    %107 = arith.subf %103, %106 : vector<4x16x16xf32>
    %108 = math.exp %107 : vector<4x16x16xf32>
    %cst_45 = arith.constant dense<0.000000e+00> : vector<4x16xf32>
    %109 = vector.multi_reduction <add>, %108, %cst_45 [2] : vector<4x16x16xf32> to vector<4x16xf32>
    %110 = vector.shape_cast %109 : vector<4x16xf32> to vector<4x16x1xf32>
    %111 = tpu.reciprocal %110 {approx = true} : vector<4x16x1xf32> -> vector<4x16x1xf32>
    %112 = vector.broadcast %111 : vector<4x16x1xf32> to vector<4x16x16xf32>
    %113 = arith.mulf %108, %112 : vector<4x16x16xf32>
    %114 = arith.truncf %113 : vector<4x16x16xf32> to vector<4x16x16xbf16>
    "tpu.trace_start"() <{level = 10 : i32, message = "bqk,bkd->bqd"}> : () -> ()
    %cst_46 = arith.constant dense<0.000000e+00> : vector<4x16x32xf32>
    %115 = tpu.matmul %114, %102, %cst_46 {dimension_numbers = #tpu.dot_dimension_numbers<[2], [1], [1], [2], [0, 0, 0, 1, 1, 2], [0], [0]>} : vector<4x16x16xbf16>, vector<4x16x32xbf16>, vector<4x16x32xf32> -> vector<4x16x32xf32>
    "tpu.trace_stop"() : () -> ()
    %116 = vector.shape_cast %115 : vector<4x16x32xf32> to vector<64x32xf32>
    %117 = arith.truncf %116 : vector<64x32xf32> to vector<64x32xbf16>
    %c96 = arith.constant 96 : index
    %c0_47 = arith.constant 0 : index
    %118 = vector.load %arg8[%c96, %c0_47] : memref<128x128xbf16, #tpu.memory_space<vmem>>, vector<32x128xbf16>
    %cst_48 = arith.constant dense<0.000000e+00> : vector<64x128xf32>
    %119 = tpu.matmul %117, %118, %cst_48 {dimension_numbers = #tpu.dot_dimension_numbers<[1], [0], [0], [1], [0, 0, 1, 1], [], []>} : vector<64x32xbf16>, vector<32x128xbf16>, vector<64x128xf32> -> vector<64x128xf32>
    %120 = arith.addf %96, %119 : vector<64x128xf32>
    %121 = vector.broadcast %25 : vector<1x128xf32> to vector<64x128xf32>
    %122 = arith.addf %120, %121 : vector<64x128xf32>
    %123 = arith.extf %1 : vector<64x128xbf16> to vector<64x128xf32>
    %c0_49 = arith.constant 0 : index
    %c0_50 = arith.constant 0 : index
    %124 = vector.load %arg18[%c0_49, %c0_50] : memref<1x128xf32, #tpu.memory_space<vmem>>, vector<1x128xf32>
    %c0_51 = arith.constant 0 : index
    %c0_52 = arith.constant 0 : index
    %125 = vector.load %arg19[%c0_51, %c0_52] : memref<1x128xf32, #tpu.memory_space<vmem>>, vector<1x128xf32>
    %126 = arith.addf %123, %122 : vector<64x128xf32>
    %cst_53 = arith.constant dense<0.000000e+00> : vector<64xf32>
    %127 = vector.multi_reduction <add>, %126, %cst_53 [1] : vector<64x128xf32> to vector<64xf32>
    %128 = vector.shape_cast %127 : vector<64xf32> to vector<64x1xf32>
    %cst_54 = arith.constant 1.280000e+02 : f32
    %129 = vector.broadcast %cst_54 : f32 to vector<64x1xf32>
    %130 = arith.divf %128, %129 : vector<64x1xf32>
    %131 = vector.broadcast %130 : vector<64x1xf32> to vector<64x128xf32>
    %132 = arith.subf %126, %131 : vector<64x128xf32>
    %133 = arith.mulf %132, %132 : vector<64x128xf32>
    %cst_55 = arith.constant dense<0.000000e+00> : vector<64xf32>
    %134 = vector.multi_reduction <add>, %133, %cst_55 [1] : vector<64x128xf32> to vector<64xf32>
    %135 = vector.shape_cast %134 : vector<64xf32> to vector<64x1xf32>
    %cst_56 = arith.constant 1.280000e+02 : f32
    %136 = vector.broadcast %cst_56 : f32 to vector<64x1xf32>
    %137 = arith.divf %135, %136 : vector<64x1xf32>
    %cst_57 = arith.constant 9.99999974E-6 : f32
    %138 = vector.broadcast %cst_57 : f32 to vector<64x1xf32>
    %139 = arith.addf %137, %138 : vector<64x1xf32>
    %140 = math.rsqrt %139 : vector<64x1xf32>
    %141 = vector.broadcast %140 : vector<64x1xf32> to vector<64x128xf32>
    %142 = arith.mulf %132, %141 : vector<64x128xf32>
    %143 = vector.broadcast %124 : vector<1x128xf32> to vector<64x128xf32>
    %144 = arith.mulf %142, %143 : vector<64x128xf32>
    %145 = vector.broadcast %125 : vector<1x128xf32> to vector<64x128xf32>
    %146 = arith.addf %144, %145 : vector<64x128xf32>
    %147 = arith.truncf %146 : vector<64x128xf32> to vector<64x128xbf16>
    %148 = arith.addf %147, %3 : vector<64x128xbf16>
    %c0_58 = arith.constant 0 : index
    %c0_59 = arith.constant 0 : index
    %149 = vector.load %arg10[%c0_58, %c0_59] : memref<128x384xbf16, #tpu.memory_space<vmem>>, vector<128x128xbf16>
    %c0_60 = arith.constant 0 : index
    %c0_61 = arith.constant 0 : index
    %150 = vector.load %arg11[%c0_60, %c0_61] : memref<1x384xf32, #tpu.memory_space<vmem>>, vector<1x128xf32>
    %cst_62 = arith.constant dense<0.000000e+00> : vector<64x128xf32>
    %151 = tpu.matmul %148, %149, %cst_62 {dimension_numbers = #tpu.dot_dimension_numbers<[1], [0], [0], [1], [0, 0, 1, 1], [], []>} : vector<64x128xbf16>, vector<128x128xbf16>, vector<64x128xf32> -> vector<64x128xf32>
    %152 = vector.broadcast %150 : vector<1x128xf32> to vector<64x128xf32>
    %153 = arith.addf %151, %152 : vector<64x128xf32>
    %154 = arith.addf %5, %7 : vector<128x128xbf16>
    %c0_63 = arith.constant 0 : index
    %c128 = arith.constant 128 : index
    %155 = vector.load %arg10[%c0_63, %c128] : memref<128x384xbf16, #tpu.memory_space<vmem>>, vector<128x128xbf16>
    %c0_64 = arith.constant 0 : index
    %c128_65 = arith.constant 128 : index
    %156 = vector.load %arg11[%c0_64, %c128_65] : memref<1x384xf32, #tpu.memory_space<vmem>>, vector<1x128xf32>
    %cst_66 = arith.constant dense<0.000000e+00> : vector<128x128xf32>
    %157 = tpu.matmul %154, %155, %cst_66 {dimension_numbers = #tpu.dot_dimension_numbers<[1], [0], [0], [1], [0, 0, 1, 1], [], []>} : vector<128x128xbf16>, vector<128x128xbf16>, vector<128x128xf32> -> vector<128x128xf32>
    %158 = vector.broadcast %156 : vector<1x128xf32> to vector<128x128xf32>
    %159 = arith.addf %157, %158 : vector<128x128xf32>
    %c0_67 = arith.constant 0 : index
    %c256_68 = arith.constant 256 : index
    %160 = vector.load %arg10[%c0_67, %c256_68] : memref<128x384xbf16, #tpu.memory_space<vmem>>, vector<128x128xbf16>
    %c0_69 = arith.constant 0 : index
    %c256_70 = arith.constant 256 : index
    %161 = vector.load %arg11[%c0_69, %c256_70] : memref<1x384xf32, #tpu.memory_space<vmem>>, vector<1x128xf32>
    %cst_71 = arith.constant dense<0.000000e+00> : vector<128x128xf32>
    %162 = tpu.matmul %9, %160, %cst_71 {dimension_numbers = #tpu.dot_dimension_numbers<[1], [0], [0], [1], [0, 0, 1, 1], [], []>} : vector<128x128xbf16>, vector<128x128xbf16>, vector<128x128xf32> -> vector<128x128xf32>
    %163 = vector.broadcast %161 : vector<1x128xf32> to vector<128x128xf32>
    %164 = arith.addf %162, %163 : vector<128x128xf32>
    %165 = arith.truncf %153 : vector<64x128xf32> to vector<64x128xbf16>
    %166 = arith.truncf %159 : vector<128x128xf32> to vector<128x128xbf16>
    %167 = arith.truncf %164 : vector<128x128xf32> to vector<128x128xbf16>
    %c0_72 = arith.constant 0 : index
    %c0_73 = arith.constant 0 : index
    %168 = vector.load %arg13[%c0_72, %c0_73] : memref<1x128xf32, #tpu.memory_space<vmem>>, vector<1x128xf32>
    %169 = vector.extract_strided_slice %165 {offsets = [0, 0], sizes = [64, 32], strides = [1, 1]} : vector<64x128xbf16> to vector<64x32xbf16>
    %170 = vector.shape_cast %169 : vector<64x32xbf16> to vector<4x16x32xbf16>
    %171 = vector.extract_strided_slice %166 {offsets = [0, 0], sizes = [128, 32], strides = [1, 1]} : vector<128x128xbf16> to vector<128x32xbf16>
    %172 = vector.shape_cast %171 : vector<128x32xbf16> to vector<4x32x32xbf16>
    %173 = vector.extract_strided_slice %167 {offsets = [0, 0], sizes = [128, 32], strides = [1, 1]} : vector<128x128xbf16> to vector<128x32xbf16>
    %174 = vector.shape_cast %173 : vector<128x32xbf16> to vector<4x32x32xbf16>
    "tpu.trace_start"() <{level = 10 : i32, message = "bqd,bkd->bqk"}> : () -> ()
    %cst_74 = arith.constant dense<0.000000e+00> : vector<4x16x32xf32>
    %175 = tpu.matmul %170, %172, %cst_74 {dimension_numbers = #tpu.dot_dimension_numbers<[2], [2], [1], [1], [0, 0, 0, 1, 1, 1], [0], [0]>} : vector<4x16x32xbf16>, vector<4x32x32xbf16>, vector<4x16x32xf32> -> vector<4x16x32xf32>
    "tpu.trace_stop"() : () -> ()
    %cst_75 = arith.constant dense<0xFF800000> : vector<4x16xf32>
    %176 = vector.multi_reduction <maximumf>, %175, %cst_75 [2] : vector<4x16x32xf32> to vector<4x16xf32>
    %177 = vector.shape_cast %176 : vector<4x16xf32> to vector<4x16x1xf32>
    %178 = vector.broadcast %177 : vector<4x16x1xf32> to vector<4x16x32xf32>
    %179 = arith.subf %175, %178 : vector<4x16x32xf32>
    %180 = math.exp %179 : vector<4x16x32xf32>
    %cst_76 = arith.constant dense<0.000000e+00> : vector<4x16xf32>
    %181 = vector.multi_reduction <add>, %180, %cst_76 [2] : vector<4x16x32xf32> to vector<4x16xf32>
    %182 = vector.shape_cast %181 : vector<4x16xf32> to vector<4x16x1xf32>
    %183 = tpu.reciprocal %182 {approx = true} : vector<4x16x1xf32> -> vector<4x16x1xf32>
    %184 = vector.broadcast %183 : vector<4x16x1xf32> to vector<4x16x32xf32>
    %185 = arith.mulf %180, %184 : vector<4x16x32xf32>
    %186 = arith.truncf %185 : vector<4x16x32xf32> to vector<4x16x32xbf16>
    "tpu.trace_start"() <{level = 10 : i32, message = "bqk,bkd->bqd"}> : () -> ()
    %cst_77 = arith.constant dense<0.000000e+00> : vector<4x16x32xf32>
    %187 = tpu.matmul %186, %174, %cst_77 {dimension_numbers = #tpu.dot_dimension_numbers<[2], [1], [1], [2], [0, 0, 0, 1, 1, 2], [0], [0]>} : vector<4x16x32xbf16>, vector<4x32x32xbf16>, vector<4x16x32xf32> -> vector<4x16x32xf32>
    "tpu.trace_stop"() : () -> ()
    %188 = vector.shape_cast %187 : vector<4x16x32xf32> to vector<64x32xf32>
    %189 = arith.truncf %188 : vector<64x32xf32> to vector<64x32xbf16>
    %c0_78 = arith.constant 0 : index
    %c0_79 = arith.constant 0 : index
    %190 = vector.load %arg12[%c0_78, %c0_79] : memref<128x128xbf16, #tpu.memory_space<vmem>>, vector<32x128xbf16>
    %cst_80 = arith.constant dense<0.000000e+00> : vector<64x128xf32>
    %191 = tpu.matmul %189, %190, %cst_80 {dimension_numbers = #tpu.dot_dimension_numbers<[1], [0], [0], [1], [0, 0, 1, 1], [], []>} : vector<64x32xbf16>, vector<32x128xbf16>, vector<64x128xf32> -> vector<64x128xf32>
    %192 = vector.extract_strided_slice %165 {offsets = [0, 32], sizes = [64, 32], strides = [1, 1]} : vector<64x128xbf16> to vector<64x32xbf16>
    %193 = vector.shape_cast %192 : vector<64x32xbf16> to vector<4x16x32xbf16>
    %194 = vector.extract_strided_slice %166 {offsets = [0, 32], sizes = [128, 32], strides = [1, 1]} : vector<128x128xbf16> to vector<128x32xbf16>
    %195 = vector.shape_cast %194 : vector<128x32xbf16> to vector<4x32x32xbf16>
    %196 = vector.extract_strided_slice %167 {offsets = [0, 32], sizes = [128, 32], strides = [1, 1]} : vector<128x128xbf16> to vector<128x32xbf16>
    %197 = vector.shape_cast %196 : vector<128x32xbf16> to vector<4x32x32xbf16>
    "tpu.trace_start"() <{level = 10 : i32, message = "bqd,bkd->bqk"}> : () -> ()
    %cst_81 = arith.constant dense<0.000000e+00> : vector<4x16x32xf32>
    %198 = tpu.matmul %193, %195, %cst_81 {dimension_numbers = #tpu.dot_dimension_numbers<[2], [2], [1], [1], [0, 0, 0, 1, 1, 1], [0], [0]>} : vector<4x16x32xbf16>, vector<4x32x32xbf16>, vector<4x16x32xf32> -> vector<4x16x32xf32>
    "tpu.trace_stop"() : () -> ()
    %cst_82 = arith.constant dense<0xFF800000> : vector<4x16xf32>
    %199 = vector.multi_reduction <maximumf>, %198, %cst_82 [2] : vector<4x16x32xf32> to vector<4x16xf32>
    %200 = vector.shape_cast %199 : vector<4x16xf32> to vector<4x16x1xf32>
    %201 = vector.broadcast %200 : vector<4x16x1xf32> to vector<4x16x32xf32>
    %202 = arith.subf %198, %201 : vector<4x16x32xf32>
    %203 = math.exp %202 : vector<4x16x32xf32>
    %cst_83 = arith.constant dense<0.000000e+00> : vector<4x16xf32>
    %204 = vector.multi_reduction <add>, %203, %cst_83 [2] : vector<4x16x32xf32> to vector<4x16xf32>
    %205 = vector.shape_cast %204 : vector<4x16xf32> to vector<4x16x1xf32>
    %206 = tpu.reciprocal %205 {approx = true} : vector<4x16x1xf32> -> vector<4x16x1xf32>
    %207 = vector.broadcast %206 : vector<4x16x1xf32> to vector<4x16x32xf32>
    %208 = arith.mulf %203, %207 : vector<4x16x32xf32>
    %209 = arith.truncf %208 : vector<4x16x32xf32> to vector<4x16x32xbf16>
    "tpu.trace_start"() <{level = 10 : i32, message = "bqk,bkd->bqd"}> : () -> ()
    %cst_84 = arith.constant dense<0.000000e+00> : vector<4x16x32xf32>
    %210 = tpu.matmul %209, %197, %cst_84 {dimension_numbers = #tpu.dot_dimension_numbers<[2], [1], [1], [2], [0, 0, 0, 1, 1, 2], [0], [0]>} : vector<4x16x32xbf16>, vector<4x32x32xbf16>, vector<4x16x32xf32> -> vector<4x16x32xf32>
    "tpu.trace_stop"() : () -> ()
    %211 = vector.shape_cast %210 : vector<4x16x32xf32> to vector<64x32xf32>
    %212 = arith.truncf %211 : vector<64x32xf32> to vector<64x32xbf16>
    %c32_85 = arith.constant 32 : index
    %c0_86 = arith.constant 0 : index
    %213 = vector.load %arg12[%c32_85, %c0_86] : memref<128x128xbf16, #tpu.memory_space<vmem>>, vector<32x128xbf16>
    %cst_87 = arith.constant dense<0.000000e+00> : vector<64x128xf32>
    %214 = tpu.matmul %212, %213, %cst_87 {dimension_numbers = #tpu.dot_dimension_numbers<[1], [0], [0], [1], [0, 0, 1, 1], [], []>} : vector<64x32xbf16>, vector<32x128xbf16>, vector<64x128xf32> -> vector<64x128xf32>
    %215 = arith.addf %191, %214 : vector<64x128xf32>
    %216 = vector.extract_strided_slice %165 {offsets = [0, 64], sizes = [64, 32], strides = [1, 1]} : vector<64x128xbf16> to vector<64x32xbf16>
    %217 = vector.shape_cast %216 : vector<64x32xbf16> to vector<4x16x32xbf16>
    %218 = vector.extract_strided_slice %166 {offsets = [0, 64], sizes = [128, 32], strides = [1, 1]} : vector<128x128xbf16> to vector<128x32xbf16>
    %219 = vector.shape_cast %218 : vector<128x32xbf16> to vector<4x32x32xbf16>
    %220 = vector.extract_strided_slice %167 {offsets = [0, 64], sizes = [128, 32], strides = [1, 1]} : vector<128x128xbf16> to vector<128x32xbf16>
    %221 = vector.shape_cast %220 : vector<128x32xbf16> to vector<4x32x32xbf16>
    "tpu.trace_start"() <{level = 10 : i32, message = "bqd,bkd->bqk"}> : () -> ()
    %cst_88 = arith.constant dense<0.000000e+00> : vector<4x16x32xf32>
    %222 = tpu.matmul %217, %219, %cst_88 {dimension_numbers = #tpu.dot_dimension_numbers<[2], [2], [1], [1], [0, 0, 0, 1, 1, 1], [0], [0]>} : vector<4x16x32xbf16>, vector<4x32x32xbf16>, vector<4x16x32xf32> -> vector<4x16x32xf32>
    "tpu.trace_stop"() : () -> ()
    %cst_89 = arith.constant dense<0xFF800000> : vector<4x16xf32>
    %223 = vector.multi_reduction <maximumf>, %222, %cst_89 [2] : vector<4x16x32xf32> to vector<4x16xf32>
    %224 = vector.shape_cast %223 : vector<4x16xf32> to vector<4x16x1xf32>
    %225 = vector.broadcast %224 : vector<4x16x1xf32> to vector<4x16x32xf32>
    %226 = arith.subf %222, %225 : vector<4x16x32xf32>
    %227 = math.exp %226 : vector<4x16x32xf32>
    %cst_90 = arith.constant dense<0.000000e+00> : vector<4x16xf32>
    %228 = vector.multi_reduction <add>, %227, %cst_90 [2] : vector<4x16x32xf32> to vector<4x16xf32>
    %229 = vector.shape_cast %228 : vector<4x16xf32> to vector<4x16x1xf32>
    %230 = tpu.reciprocal %229 {approx = true} : vector<4x16x1xf32> -> vector<4x16x1xf32>
    %231 = vector.broadcast %230 : vector<4x16x1xf32> to vector<4x16x32xf32>
    %232 = arith.mulf %227, %231 : vector<4x16x32xf32>
    %233 = arith.truncf %232 : vector<4x16x32xf32> to vector<4x16x32xbf16>
    "tpu.trace_start"() <{level = 10 : i32, message = "bqk,bkd->bqd"}> : () -> ()
    %cst_91 = arith.constant dense<0.000000e+00> : vector<4x16x32xf32>
    %234 = tpu.matmul %233, %221, %cst_91 {dimension_numbers = #tpu.dot_dimension_numbers<[2], [1], [1], [2], [0, 0, 0, 1, 1, 2], [0], [0]>} : vector<4x16x32xbf16>, vector<4x32x32xbf16>, vector<4x16x32xf32> -> vector<4x16x32xf32>
    "tpu.trace_stop"() : () -> ()
    %235 = vector.shape_cast %234 : vector<4x16x32xf32> to vector<64x32xf32>
    %236 = arith.truncf %235 : vector<64x32xf32> to vector<64x32xbf16>
    %c64_92 = arith.constant 64 : index
    %c0_93 = arith.constant 0 : index
    %237 = vector.load %arg12[%c64_92, %c0_93] : memref<128x128xbf16, #tpu.memory_space<vmem>>, vector<32x128xbf16>
    %cst_94 = arith.constant dense<0.000000e+00> : vector<64x128xf32>
    %238 = tpu.matmul %236, %237, %cst_94 {dimension_numbers = #tpu.dot_dimension_numbers<[1], [0], [0], [1], [0, 0, 1, 1], [], []>} : vector<64x32xbf16>, vector<32x128xbf16>, vector<64x128xf32> -> vector<64x128xf32>
    %239 = arith.addf %215, %238 : vector<64x128xf32>
    %240 = vector.extract_strided_slice %165 {offsets = [0, 96], sizes = [64, 32], strides = [1, 1]} : vector<64x128xbf16> to vector<64x32xbf16>
    %241 = vector.shape_cast %240 : vector<64x32xbf16> to vector<4x16x32xbf16>
    %242 = vector.extract_strided_slice %166 {offsets = [0, 96], sizes = [128, 32], strides = [1, 1]} : vector<128x128xbf16> to vector<128x32xbf16>
    %243 = vector.shape_cast %242 : vector<128x32xbf16> to vector<4x32x32xbf16>
    %244 = vector.extract_strided_slice %167 {offsets = [0, 96], sizes = [128, 32], strides = [1, 1]} : vector<128x128xbf16> to vector<128x32xbf16>
    %245 = vector.shape_cast %244 : vector<128x32xbf16> to vector<4x32x32xbf16>
    "tpu.trace_start"() <{level = 10 : i32, message = "bqd,bkd->bqk"}> : () -> ()
    %cst_95 = arith.constant dense<0.000000e+00> : vector<4x16x32xf32>
    %246 = tpu.matmul %241, %243, %cst_95 {dimension_numbers = #tpu.dot_dimension_numbers<[2], [2], [1], [1], [0, 0, 0, 1, 1, 1], [0], [0]>} : vector<4x16x32xbf16>, vector<4x32x32xbf16>, vector<4x16x32xf32> -> vector<4x16x32xf32>
    "tpu.trace_stop"() : () -> ()
    %cst_96 = arith.constant dense<0xFF800000> : vector<4x16xf32>
    %247 = vector.multi_reduction <maximumf>, %246, %cst_96 [2] : vector<4x16x32xf32> to vector<4x16xf32>
    %248 = vector.shape_cast %247 : vector<4x16xf32> to vector<4x16x1xf32>
    %249 = vector.broadcast %248 : vector<4x16x1xf32> to vector<4x16x32xf32>
    %250 = arith.subf %246, %249 : vector<4x16x32xf32>
    %251 = math.exp %250 : vector<4x16x32xf32>
    %cst_97 = arith.constant dense<0.000000e+00> : vector<4x16xf32>
    %252 = vector.multi_reduction <add>, %251, %cst_97 [2] : vector<4x16x32xf32> to vector<4x16xf32>
    %253 = vector.shape_cast %252 : vector<4x16xf32> to vector<4x16x1xf32>
    %254 = tpu.reciprocal %253 {approx = true} : vector<4x16x1xf32> -> vector<4x16x1xf32>
    %255 = vector.broadcast %254 : vector<4x16x1xf32> to vector<4x16x32xf32>
    %256 = arith.mulf %251, %255 : vector<4x16x32xf32>
    %257 = arith.truncf %256 : vector<4x16x32xf32> to vector<4x16x32xbf16>
    "tpu.trace_start"() <{level = 10 : i32, message = "bqk,bkd->bqd"}> : () -> ()
    %cst_98 = arith.constant dense<0.000000e+00> : vector<4x16x32xf32>
    %258 = tpu.matmul %257, %245, %cst_98 {dimension_numbers = #tpu.dot_dimension_numbers<[2], [1], [1], [2], [0, 0, 0, 1, 1, 2], [0], [0]>} : vector<4x16x32xbf16>, vector<4x32x32xbf16>, vector<4x16x32xf32> -> vector<4x16x32xf32>
    "tpu.trace_stop"() : () -> ()
    %259 = vector.shape_cast %258 : vector<4x16x32xf32> to vector<64x32xf32>
    %260 = arith.truncf %259 : vector<64x32xf32> to vector<64x32xbf16>
    %c96_99 = arith.constant 96 : index
    %c0_100 = arith.constant 0 : index
    %261 = vector.load %arg12[%c96_99, %c0_100] : memref<128x128xbf16, #tpu.memory_space<vmem>>, vector<32x128xbf16>
    %cst_101 = arith.constant dense<0.000000e+00> : vector<64x128xf32>
    %262 = tpu.matmul %260, %261, %cst_101 {dimension_numbers = #tpu.dot_dimension_numbers<[1], [0], [0], [1], [0, 0, 1, 1], [], []>} : vector<64x32xbf16>, vector<32x128xbf16>, vector<64x128xf32> -> vector<64x128xf32>
    %263 = arith.addf %239, %262 : vector<64x128xf32>
    %264 = vector.broadcast %168 : vector<1x128xf32> to vector<64x128xf32>
    %265 = arith.addf %263, %264 : vector<64x128xf32>
    %c0_102 = arith.constant 0 : index
    %c0_103 = arith.constant 0 : index
    %266 = vector.load %arg20[%c0_102, %c0_103] : memref<1x128xf32, #tpu.memory_space<vmem>>, vector<1x128xf32>
    %c0_104 = arith.constant 0 : index
    %c0_105 = arith.constant 0 : index
    %267 = vector.load %arg21[%c0_104, %c0_105] : memref<1x128xf32, #tpu.memory_space<vmem>>, vector<1x128xf32>
    %268 = arith.addf %146, %265 : vector<64x128xf32>
    %cst_106 = arith.constant dense<0.000000e+00> : vector<64xf32>
    %269 = vector.multi_reduction <add>, %268, %cst_106 [1] : vector<64x128xf32> to vector<64xf32>
    %270 = vector.shape_cast %269 : vector<64xf32> to vector<64x1xf32>
    %cst_107 = arith.constant 1.280000e+02 : f32
    %271 = vector.broadcast %cst_107 : f32 to vector<64x1xf32>
    %272 = arith.divf %270, %271 : vector<64x1xf32>
    %273 = vector.broadcast %272 : vector<64x1xf32> to vector<64x128xf32>
    %274 = arith.subf %268, %273 : vector<64x128xf32>
    %275 = arith.mulf %274, %274 : vector<64x128xf32>
    %cst_108 = arith.constant dense<0.000000e+00> : vector<64xf32>
    %276 = vector.multi_reduction <add>, %275, %cst_108 [1] : vector<64x128xf32> to vector<64xf32>
    %277 = vector.shape_cast %276 : vector<64xf32> to vector<64x1xf32>
    %cst_109 = arith.constant 1.280000e+02 : f32
    %278 = vector.broadcast %cst_109 : f32 to vector<64x1xf32>
    %279 = arith.divf %277, %278 : vector<64x1xf32>
    %cst_110 = arith.constant 9.99999974E-6 : f32
    %280 = vector.broadcast %cst_110 : f32 to vector<64x1xf32>
    %281 = arith.addf %279, %280 : vector<64x1xf32>
    %282 = math.rsqrt %281 : vector<64x1xf32>
    %283 = vector.broadcast %282 : vector<64x1xf32> to vector<64x128xf32>
    %284 = arith.mulf %274, %283 : vector<64x128xf32>
    %285 = vector.broadcast %266 : vector<1x128xf32> to vector<64x128xf32>
    %286 = arith.mulf %284, %285 : vector<64x128xf32>
    %287 = vector.broadcast %267 : vector<1x128xf32> to vector<64x128xf32>
    %288 = arith.addf %286, %287 : vector<64x128xf32>
    %289 = arith.truncf %288 : vector<64x128xf32> to vector<64x128xbf16>
    %c0_111 = arith.constant 0 : index
    %c0_112 = arith.constant 0 : index
    %290 = vector.load %arg14[%c0_111, %c0_112] : memref<128x256xbf16, #tpu.memory_space<vmem>>, vector<128x256xbf16>
    %cst_113 = arith.constant dense<0.000000e+00> : vector<64x256xf32>
    %291 = tpu.matmul %289, %290, %cst_113 {dimension_numbers = #tpu.dot_dimension_numbers<[1], [0], [0], [1], [0, 0, 1, 1], [], []>} : vector<64x128xbf16>, vector<128x256xbf16>, vector<64x256xf32> -> vector<64x256xf32>
    %c0_114 = arith.constant 0 : index
    %c0_115 = arith.constant 0 : index
    %292 = vector.load %arg15[%c0_114, %c0_115] : memref<1x256xf32, #tpu.memory_space<vmem>>, vector<1x256xf32>
    %293 = vector.broadcast %292 : vector<1x256xf32> to vector<64x256xf32>
    %294 = arith.addf %291, %293 : vector<64x256xf32>
    %cst_116 = arith.constant 0.000000e+00 : f32
    %295 = vector.broadcast %cst_116 : f32 to vector<64x256xf32>
    %296 = arith.maximumf %294, %295 : vector<64x256xf32>
    %297 = arith.truncf %296 : vector<64x256xf32> to vector<64x256xbf16>
    %c0_117 = arith.constant 0 : index
    %c0_118 = arith.constant 0 : index
    %298 = vector.load %arg16[%c0_117, %c0_118] : memref<256x128xbf16, #tpu.memory_space<vmem>>, vector<256x128xbf16>
    %cst_119 = arith.constant dense<0.000000e+00> : vector<64x128xf32>
    %299 = tpu.matmul %297, %298, %cst_119 {dimension_numbers = #tpu.dot_dimension_numbers<[1], [0], [0], [1], [0, 0, 1, 1], [], []>} : vector<64x256xbf16>, vector<256x128xbf16>, vector<64x128xf32> -> vector<64x128xf32>
    %c0_120 = arith.constant 0 : index
    %c0_121 = arith.constant 0 : index
    %300 = vector.load %arg17[%c0_120, %c0_121] : memref<1x128xf32, #tpu.memory_space<vmem>>, vector<1x128xf32>
    %301 = vector.broadcast %300 : vector<1x128xf32> to vector<64x128xf32>
    %302 = arith.addf %299, %301 : vector<64x128xf32>
    %c0_122 = arith.constant 0 : index
    %c0_123 = arith.constant 0 : index
    %303 = vector.load %arg22[%c0_122, %c0_123] : memref<1x128xf32, #tpu.memory_space<vmem>>, vector<1x128xf32>
    %c0_124 = arith.constant 0 : index
    %c0_125 = arith.constant 0 : index
    %304 = vector.load %arg23[%c0_124, %c0_125] : memref<1x128xf32, #tpu.memory_space<vmem>>, vector<1x128xf32>
    %305 = arith.addf %288, %302 : vector<64x128xf32>
    %cst_126 = arith.constant dense<0.000000e+00> : vector<64xf32>
    %306 = vector.multi_reduction <add>, %305, %cst_126 [1] : vector<64x128xf32> to vector<64xf32>
    %307 = vector.shape_cast %306 : vector<64xf32> to vector<64x1xf32>
    %cst_127 = arith.constant 1.280000e+02 : f32
    %308 = vector.broadcast %cst_127 : f32 to vector<64x1xf32>
    %309 = arith.divf %307, %308 : vector<64x1xf32>
    %310 = vector.broadcast %309 : vector<64x1xf32> to vector<64x128xf32>
    %311 = arith.subf %305, %310 : vector<64x128xf32>
    %312 = arith.mulf %311, %311 : vector<64x128xf32>
    %cst_128 = arith.constant dense<0.000000e+00> : vector<64xf32>
    %313 = vector.multi_reduction <add>, %312, %cst_128 [1] : vector<64x128xf32> to vector<64xf32>
    %314 = vector.shape_cast %313 : vector<64xf32> to vector<64x1xf32>
    %cst_129 = arith.constant 1.280000e+02 : f32
    %315 = vector.broadcast %cst_129 : f32 to vector<64x1xf32>
    %316 = arith.divf %314, %315 : vector<64x1xf32>
    %cst_130 = arith.constant 9.99999974E-6 : f32
    %317 = vector.broadcast %cst_130 : f32 to vector<64x1xf32>
    %318 = arith.addf %316, %317 : vector<64x1xf32>
    %319 = math.rsqrt %318 : vector<64x1xf32>
    %320 = vector.broadcast %319 : vector<64x1xf32> to vector<64x128xf32>
    %321 = arith.mulf %311, %320 : vector<64x128xf32>
    %322 = vector.broadcast %303 : vector<1x128xf32> to vector<64x128xf32>
    %323 = arith.mulf %321, %322 : vector<64x128xf32>
    %324 = vector.broadcast %304 : vector<1x128xf32> to vector<64x128xf32>
    %325 = arith.addf %323, %324 : vector<64x128xf32>
    %326 = vector.shape_cast %325 : vector<64x128xf32> to vector<4x16x128xf32>
    %c0_131 = arith.constant 0 : index
    %c0_132 = arith.constant 0 : index
    %c0_133 = arith.constant 0 : index
    %327 = vector.load %arg24[%c0_131, %c0_132, %c0_133] : memref<4x16x128xf32, #tpu.memory_space<vmem>>, vector<4x16x128xf32>
    tpu.vector_store %arg24[%c0_131, %c0_132, %c0_133], %326 {strides = array<i32>} : memref<4x16x128xf32, #tpu.memory_space<vmem>>, vector<4x16x128xf32>,
    return
  }
  func.func @transform_0(%arg0: i32) -> (i32, i32, i32) {
    %c0_i32 = arith.constant 0 : i32
    %c0_i32_0 = arith.constant 0 : i32
    %c0_i32_1 = arith.constant 0 : i32
    return %arg0, %c0_i32, %c0_i32_0 : i32, i32, i32
  }
  func.func @transform_1(%arg0: i32) -> (i32, i32, i32) {
    %c0_i32 = arith.constant 0 : i32
    %c0_i32_0 = arith.constant 0 : i32
    %c0_i32_1 = arith.constant 0 : i32
    return %arg0, %c0_i32, %c0_i32_0 : i32, i32, i32
  }
  func.func @transform_2(%arg0: i32) -> (i32, i32, i32) {
    %c0_i32 = arith.constant 0 : i32
    %c0_i32_0 = arith.constant 0 : i32
    %c0_i32_1 = arith.constant 0 : i32
    return %arg0, %c0_i32, %c0_i32_0 : i32, i32, i32
  }
  func.func @transform_3(%arg0: i32) -> (i32, i32, i32) {
    %c0_i32 = arith.constant 0 : i32
    %c0_i32_0 = arith.constant 0 : i32
    %c0_i32_1 = arith.constant 0 : i32
    return %arg0, %c0_i32, %c0_i32_0 : i32, i32, i32
  }
  func.func @transform_4(%arg0: i32) -> (i32, i32, i32) {
    %c0_i32 = arith.constant 0 : i32
    %c0_i32_0 = arith.constant 0 : i32
    %c0_i32_1 = arith.constant 0 : i32
    return %arg0, %c0_i32, %c0_i32_0 : i32, i32, i32
  }
  func.func @transform_5(%arg0: i32) -> (i32, i32) {
    %c0_i32 = arith.constant 0 : i32
    %c0_i32_0 = arith.constant 0 : i32
    %c0_i32_1 = arith.constant 0 : i32
    return %c0_i32, %c0_i32_0 : i32, i32
  }
  func.func @transform_6(%arg0: i32) -> (i32, i32) {
    %c0_i32 = arith.constant 0 : i32
    %c0_i32_0 = arith.constant 0 : i32
    %c0_i32_1 = arith.constant 0 : i32
    return %c0_i32, %c0_i32_0 : i32, i32
  }
  func.func @transform_7(%arg0: i32) -> (i32, i32) {
    %c0_i32 = arith.constant 0 : i32
    %c0_i32_0 = arith.constant 0 : i32
    %c0_i32_1 = arith.constant 0 : i32
    return %c0_i32, %c0_i32_0 : i32, i32
  }
  func.func @transform_8(%arg0: i32) -> (i32, i32) {
    %c0_i32 = arith.constant 0 : i32
    %c0_i32_0 = arith.constant 0 : i32
    %c0_i32_1 = arith.constant 0 : i32
    return %c0_i32, %c0_i32_0 : i32, i32
  }
  func.func @transform_9(%arg0: i32) -> (i32, i32) {
    %c0_i32 = arith.constant 0 : i32
    %c0_i32_0 = arith.constant 0 : i32
    %c0_i32_1 = arith.constant 0 : i32
    return %c0_i32, %c0_i32_0 : i32, i32
  }
  func.func @transform_10(%arg0: i32) -> (i32, i32) {
    %c0_i32 = arith.constant 0 : i32
    %c0_i32_0 = arith.constant 0 : i32
    %c0_i32_1 = arith.constant 0 : i32
    return %c0_i32, %c0_i32_0 : i32, i32
  }
  func.func @transform_11(%arg0: i32) -> (i32, i32) {
    %c0_i32 = arith.constant 0 : i32
    %c0_i32_0 = arith.constant 0 : i32
    %c0_i32_1 = arith.constant 0 : i32
    return %c0_i32, %c0_i32_0 : i32, i32
  }
  func.func @transform_12(%arg0: i32) -> (i32, i32) {
    %c0_i32 = arith.constant 0 : i32
    %c0_i32_0 = arith.constant 0 : i32
    %c0_i32_1 = arith.constant 0 : i32
    return %c0_i32, %c0_i32_0 : i32, i32
  }
  func.func @transform_13(%arg0: i32) -> (i32, i32) {
    %c0_i32 = arith.constant 0 : i32
    %c0_i32_0 = arith.constant 0 : i32
    %c0_i32_1 = arith.constant 0 : i32
    return %c0_i32, %c0_i32_0 : i32, i32
  }
  func.func @transform_14(%arg0: i32) -> (i32, i32) {
    %c0_i32 = arith.constant 0 : i32
    %c0_i32_0 = arith.constant 0 : i32
    %c0_i32_1 = arith.constant 0 : i32
    return %c0_i32, %c0_i32_0 : i32, i32
  }
  func.func @transform_15(%arg0: i32) -> (i32, i32) {
    %c0_i32 = arith.constant 0 : i32
    %c0_i32_0 = arith.constant 0 : i32
    %c0_i32_1 = arith.constant 0 : i32
    return %c0_i32, %c0_i32_0 : i32, i32
  }
  func.func @transform_16(%arg0: i32) -> (i32, i32) {
    %c0_i32 = arith.constant 0 : i32
    %c0_i32_0 = arith.constant 0 : i32
    %c0_i32_1 = arith.constant 0 : i32
    return %c0_i32, %c0_i32_0 : i32, i32
  }
  func.func @transform_17(%arg0: i32) -> (i32, i32) {
    %c0_i32 = arith.constant 0 : i32
    %c0_i32_0 = arith.constant 0 : i32
    %c0_i32_1 = arith.constant 0 : i32
    return %c0_i32, %c0_i32_0 : i32, i32
  }
  func.func @transform_18(%arg0: i32) -> (i32, i32) {
    %c0_i32 = arith.constant 0 : i32
    %c0_i32_0 = arith.constant 0 : i32
    %c0_i32_1 = arith.constant 0 : i32
    return %c0_i32, %c0_i32_0 : i32, i32
  }
  func.func @transform_19(%arg0: i32) -> (i32, i32) {
    %c0_i32 = arith.constant 0 : i32
    %c0_i32_0 = arith.constant 0 : i32
    %c0_i32_1 = arith.constant 0 : i32
    return %c0_i32, %c0_i32_0 : i32, i32
  }
  func.func @transform_20(%arg0: i32) -> (i32, i32) {
    %c0_i32 = arith.constant 0 : i32
    %c0_i32_0 = arith.constant 0 : i32
    %c0_i32_1 = arith.constant 0 : i32
    return %c0_i32, %c0_i32_0 : i32, i32
  }
  func.func @transform_21(%arg0: i32) -> (i32, i32) {
    %c0_i32 = arith.constant 0 : i32
    %c0_i32_0 = arith.constant 0 : i32
    %c0_i32_1 = arith.constant 0 : i32
    return %c0_i32, %c0_i32_0 : i32, i32
  }
  func.func @transform_22(%arg0: i32) -> (i32, i32) {
    %c0_i32 = arith.constant 0 : i32
    %c0_i32_0 = arith.constant 0 : i32
    %c0_i32_1 = arith.constant 0 : i32
    return %c0_i32, %c0_i32_0 : i32, i32
  }
  func.func @transform_23(%arg0: i32) -> (i32, i32, i32) {
    %c0_i32 = arith.constant 0 : i32
    %c0_i32_0 = arith.constant 0 : i32
    %c0_i32_1 = arith.constant 0 : i32
    return %arg0, %c0_i32, %c0_i32_0 : i32, i32, i32
  }
}

</mosaic_0001>

<llo_original>
// kernel: transformer_decoder_layer.1
$region0: #{transformer_decoder_layer.1}
  #allocation0 [shape = 'u32[]', space=smem, size = 0x4, offset = 0x4, fixed_abs, tag = 'smem constant byte address 0x4 - core index']
  #allocation1 [shape = 'u32[144,128]{1,0:T(1,128)}', space=vmem, size = 0x12000, scoped, tag = 'internal scratch']
  %s0 = inlined_call_operand.vmem [shape: bf16[4,16,128], index: 0, kind: input, shape index: {}]
  %s1 = inlined_call_operand.vmem [shape: bf16[4,16,128], index: 1, kind: input, shape index: {}]
  %s2 = inlined_call_operand.vmem [shape: bf16[4,32,128], index: 2, kind: input, shape index: {}]
  %s3 = inlined_call_operand.vmem [shape: bf16[4,32,128], index: 3, kind: input, shape index: {}]
  %s4 = inlined_call_operand.vmem [shape: bf16[4,32,128], index: 4, kind: input, shape index: {}]
  %s5 = inlined_call_operand.vmem [shape: bf16[128,384], index: 5, kind: input, shape index: {}]
  %s6 = inlined_call_operand.vmem [shape: f32[1,384], index: 6, kind: input, shape index: {}]
  %s7 = inlined_call_operand.vmem [shape: bf16[128,128], index: 7, kind: input, shape index: {}]
  %s8 = inlined_call_operand.vmem [shape: f32[1,128], index: 8, kind: input, shape index: {}]
  %s9 = inlined_call_operand.vmem [shape: bf16[128,384], index: 9, kind: input, shape index: {}]
  %s10 = inlined_call_operand.vmem [shape: f32[1,384], index: 10, kind: input, shape index: {}]
  %s11 = inlined_call_operand.hbm [shape: bf16[128,128], index: 11, kind: input, shape index: {}]
  %s12 = inlined_call_operand.hbm [shape: f32[1,128], index: 12, kind: input, shape index: {}]
  %s13 = inlined_call_operand.vmem [shape: bf16[128,256], index: 13, kind: input, shape index: {}]
  %s14 = inlined_call_operand.hbm [shape: f32[1,256], index: 14, kind: input, shape index: {}]
  %s15 = inlined_call_operand.hbm [shape: bf16[256,128], index: 15, kind: input, shape index: {}]
  %s16 = inlined_call_operand.hbm [shape: f32[1,128], index: 16, kind: input, shape index: {}]
  %s17 = inlined_call_operand.hbm [shape: f32[1,128], index: 17, kind: input, shape index: {}]
  %s18 = inlined_call_operand.hbm [shape: f32[1,128], index: 18, kind: input, shape index: {}]
  %s19 = inlined_call_operand.hbm [shape: f32[1,128], index: 19, kind: input, shape index: {}]
  %s20 = inlined_call_operand.hbm [shape: f32[1,128], index: 20, kind: input, shape index: {}]
  %s21 = inlined_call_operand.vmem [shape: f32[1,128], index: 21, kind: input, shape index: {}]
  %s22 = inlined_call_operand.hbm [shape: f32[1,128], index: 22, kind: input, shape index: {}]
  %s23 = inlined_call_operand.vmem [shape: f32[4,16,128], index: 23, kind: output, shape index: {}]
  %s24 = sld [smem:[#allocation0]]
  $region142: #{transformer_decoder_layer.1} parent=0
    _
  %s26 = ssub.s32 1, %s24
  %s27 = scalar_select 0, %s26, %s24
  $region1: #{transformer_decoder_layer.1} parent=0
    #allocation2 [shape = 'u8[32768]{0}', space=vmem, size = 0x8000, scoped, tag = 'input window, operand 11, single buffered']
    #allocation3 [shape = 's32[1]{0}', space=sflag, size = 0x4, scoped, tag = 'scoped memory for transformer_decoder_layer.1']
    #allocation4 [shape = 'u8[512]{0}', space=vmem, size = 0x400, scoped, tag = 'input window, operand 12, single buffered']
    #allocation5 [shape = 's32[1]{0}', space=sflag, size = 0x4, scoped, tag = 'scoped memory for transformer_decoder_layer.1']
    #allocation6 [shape = 'u8[1024]{0}', space=vmem, size = 0x400, scoped, tag = 'input window, operand 14, single buffered']
    #allocation7 [shape = 'u8[65536]{0}', space=vmem, size = 0x10000, scoped, tag = 'input window, operand 15, single buffered']
    #allocation8 [shape = 's32[1]{0}', space=sflag, size = 0x4, scoped, tag = 'scoped memory for transformer_decoder_layer.1']
    #allocation9 [shape = 'u8[512]{0}', space=vmem, size = 0x400, scoped, tag = 'input window, operand 16, single buffered']
    #allocation10 [shape = 'u8[512]{0}', space=vmem, size = 0x400, scoped, tag = 'input window, operand 17, single buffered']
    #allocation11 [shape = 's32[1]{0}', space=sflag, size = 0x4, scoped, tag = 'scoped memory for transformer_decoder_layer.1']
    #allocation12 [shape = 'u8[512]{0}', space=vmem, size = 0x400, scoped, tag = 'input window, operand 18, single buffered']
    #allocation13 [shape = 'u8[512]{0}', space=vmem, size = 0x400, scoped, tag = 'input window, operand 19, single buffered']
    #allocation14 [shape = 's32[1]{0}', space=sflag, size = 0x4, scoped, tag = 'scoped memory for transformer_decoder_layer.1']
    #allocation15 [shape = 'u8[512]{0}', space=vmem, size = 0x400, scoped, tag = 'input window, operand 20, single buffered']
    #allocation16 [shape = 'u8[512]{0}', space=vmem, size = 0x400, scoped, tag = 'input window, operand 22, single buffered']
    #allocation17 [shape = 's32[1]{0}', space=sflag, size = 0x4, scoped, tag = 'scoped memory for transformer_decoder_layer.1']
    %28 = vsyncpa [#allocation3], 0
    %29 = vsyncpa [#allocation5], 0
    %30 = vsyncpa [#allocation8], 0
    %31 = vsyncpa [#allocation11], 0
    %32 = vsyncpa [#allocation14], 0
    %33 = vsyncpa [#allocation17], 0
    // Predicated region
    $region2: #{transformer_decoder_layer.1} parent=1 // pred_check
      _
    $region3: #{transformer_decoder_layer.1} parent=1 // pred_check_branch
      %35 = sbr.rel (0) target = $region5
    $region4: #{transformer_decoder_layer.1} parent=1 // pred_region
      _
    $region5: #{transformer_decoder_layer.1} parent=1 // pred_fallthru
      _
    // Predicated region
    $region6: #{transformer_decoder_layer.1} parent=1 // pred_check
      _
    $region7: #{transformer_decoder_layer.1} parent=1 // pred_check_branch
      %37 = sbr.rel (0) target = $region9
    $region8: #{transformer_decoder_layer.1} parent=1 // pred_region
      _
    $region9: #{transformer_decoder_layer.1} parent=1 // pred_fallthru
      _
    // Predicated region
    $region10: #{transformer_decoder_layer.1} parent=1 // pred_check
      _
    $region11: #{transformer_decoder_layer.1} parent=1 // pred_check_branch
      %39 = sbr.rel (0) target = $region13
    $region12: #{transformer_decoder_layer.1} parent=1 // pred_region
      _
    $region13: #{transformer_decoder_layer.1} parent=1 // pred_fallthru
      _
    // Predicated region
    $region14: #{transformer_decoder_layer.1} parent=1 // pred_check
      _
    $region15: #{transformer_decoder_layer.1} parent=1 // pred_check_branch
      %41 = sbr.rel (0) target = $region17
    $region16: #{transformer_decoder_layer.1} parent=1 // pred_region
      _
    $region17: #{transformer_decoder_layer.1} parent=1 // pred_fallthru
      _
    // Predicated region
    $region18: #{transformer_decoder_layer.1} parent=1 // pred_check
      _
    $region19: #{transformer_decoder_layer.1} parent=1 // pred_check_branch
      %43 = sbr.rel (0) target = $region21
    $region20: #{transformer_decoder_layer.1} parent=1 // pred_region
      _
    $region21: #{transformer_decoder_layer.1} parent=1 // pred_fallthru
      _
    // Predicated region
    $region22: #{transformer_decoder_layer.1} parent=1 // pred_check
      _
    $region23: #{transformer_decoder_layer.1} parent=1 // pred_check_branch
      %45 = sbr.rel (0) target = $region25
    $region24: #{transformer_decoder_layer.1} parent=1 // pred_region
      _
    $region25: #{transformer_decoder_layer.1} parent=1 // pred_fallthru
      _
    // Predicated region
    $region26: #{transformer_decoder_layer.1} parent=1 // pred_check
      _
    $region27: #{transformer_decoder_layer.1} parent=1 // pred_check_branch
      %47 = sbr.rel (0) target = $region29
    $region28: #{transformer_decoder_layer.1} parent=1 // pred_region
      _
    $region29: #{transformer_decoder_layer.1} parent=1 // pred_fallthru
      _
    // Predicated region
    $region30: #{transformer_decoder_layer.1} parent=1 // pred_check
      _
    $region31: #{transformer_decoder_layer.1} parent=1 // pred_check_branch
      %49 = sbr.rel (0) target = $region33
    $region32: #{transformer_decoder_layer.1} parent=1 // pred_region
      _
    $region33: #{transformer_decoder_layer.1} parent=1 // pred_fallthru
      _
    // Predicated region
    $region34: #{transformer_decoder_layer.1} parent=1 // pred_check
      _
    $region35: #{transformer_decoder_layer.1} parent=1 // pred_check_branch
      %51 = sbr.rel (0) target = $region37
    $region36: #{transformer_decoder_layer.1} parent=1 // pred_region
      _
    $region37: #{transformer_decoder_layer.1} parent=1 // pred_fallthru
      _
    // Predicated region
    $region38: #{transformer_decoder_layer.1} parent=1 // pred_check
      _
    $region39: #{transformer_decoder_layer.1} parent=1 // pred_check_branch
      %53 = sbr.rel (0) target = $region41
    $region40: #{transformer_decoder_layer.1} parent=1 // pred_region
      _
    $region41: #{transformer_decoder_layer.1} parent=1 // pred_fallthru
      _
    // Predicated region
    $region42: #{transformer_decoder_layer.1} parent=1 // pred_check
      _
    $region43: #{transformer_decoder_layer.1} parent=1 // pred_check_branch
      %55 = sbr.rel (0) target = $region45
    $region44: #{transformer_decoder_layer.1} parent=1 // pred_region
      _
    $region45: #{transformer_decoder_layer.1} parent=1 // pred_fallthru
      _
    // Predicated region
    $region46: #{transformer_decoder_layer.1} parent=1 // pred_check
      _
    $region47: #{transformer_decoder_layer.1} parent=1 // pred_check_branch
      %57 = sbr.rel (0) target = $region49
    $region48: #{transformer_decoder_layer.1} parent=1 // pred_region
      %s59 = ssub.s32 1024, 1024
      %60 = vsyncadd [#allocation3], %s59
      %s61 = sshll.u32 [#allocation2], 4
      %s62 = int_to_ptr.vmem [resolvable:$true] %s61
      %67 = dma.hbm_to_vmem [thread:$0]  %s11, 1024, %s62, [#allocation3], 64, 64, 4
    $region49: #{transformer_decoder_layer.1} parent=1 // pred_fallthru
      _
    // Predicated region
    $region50: #{transformer_decoder_layer.1} parent=1 // pred_check
      _
    $region51: #{transformer_decoder_layer.1} parent=1 // pred_check_branch
      %69 = sbr.rel (0) target = $region53
    $region52: #{transformer_decoder_layer.1} parent=1 // pred_region
      %s71 = ssub.s32 16, 16
      %72 = vsyncadd [#allocation5], %s71
      %s74 = sshll.u32 [#allocation4], 4
      %s75 = int_to_ptr.vmem [resolvable:$true] %s74
      %77 = dma.hbm_to_vmem [thread:$0]  %s12, 16, %s75, [#allocation5]
    $region53: #{transformer_decoder_layer.1} parent=1 // pred_fallthru
      _
    // Predicated region
    $region54: #{transformer_decoder_layer.1} parent=1 // pred_check
      _
    $region55: #{transformer_decoder_layer.1} parent=1 // pred_check_branch
      %79 = sbr.rel (0) target = $region57
    $region56: #{transformer_decoder_layer.1} parent=1 // pred_region
      _
    $region57: #{transformer_decoder_layer.1} parent=1 // pred_fallthru
      _
    // Predicated region
    $region58: #{transformer_decoder_layer.1} parent=1 // pred_check
      _
    $region59: #{transformer_decoder_layer.1} parent=1 // pred_check_branch
      %81 = sbr.rel (0) target = $region61
    $region60: #{transformer_decoder_layer.1} parent=1 // pred_region
      %s83 = ssub.s32 32, 32
      %84 = vsyncadd [#allocation5], %s83
      %s86 = sshll.u32 [#allocation6], 4
      %s87 = int_to_ptr.vmem [resolvable:$true] %s86
      %89 = dma.hbm_to_vmem [thread:$0]  %s14, 32, %s87, [#allocation5]
    $region61: #{transformer_decoder_layer.1} parent=1 // pred_fallthru
      _
    // Predicated region
    $region62: #{transformer_decoder_layer.1} parent=1 // pred_check
      _
    $region63: #{transformer_decoder_layer.1} parent=1 // pred_check_branch
      %91 = sbr.rel (0) target = $region65
    $region64: #{transformer_decoder_layer.1} parent=1 // pred_region
      %s93 = ssub.s32 2048, 2048
      %94 = vsyncadd [#allocation8], %s93
      %s95 = sshll.u32 [#allocation7], 4
      %s96 = int_to_ptr.vmem [resolvable:$true] %s95
      %101 = dma.hbm_to_vmem [thread:$0]  %s15, 2048, %s96, [#allocation8], 64, 64, 4
    $region65: #{transformer_decoder_layer.1} parent=1 // pred_fallthru
      _
    // Predicated region
    $region66: #{transformer_decoder_layer.1} parent=1 // pred_check
      _
    $region67: #{transformer_decoder_layer.1} parent=1 // pred_check_branch
      %103 = sbr.rel (0) target = $region69
    $region68: #{transformer_decoder_layer.1} parent=1 // pred_region
      %s105 = ssub.s32 16, 16
      %106 = vsyncadd [#allocation8], %s105
      %s108 = sshll.u32 [#allocation9], 4
      %s109 = int_to_ptr.vmem [resolvable:$true] %s108
      %111 = dma.hbm_to_vmem [thread:$0]  %s16, 16, %s109, [#allocation8]
    $region69: #{transformer_decoder_layer.1} parent=1 // pred_fallthru
      _
    // Predicated region
    $region70: #{transformer_decoder_layer.1} parent=1 // pred_check
      _
    $region71: #{transformer_decoder_layer.1} parent=1 // pred_check_branch
      %113 = sbr.rel (0) target = $region73
    $region72: #{transformer_decoder_layer.1} parent=1 // pred_region
      %s115 = ssub.s32 16, 16
      %116 = vsyncadd [#allocation11], %s115
      %s118 = sshll.u32 [#allocation10], 4
      %s119 = int_to_ptr.vmem [resolvable:$true] %s118
      %121 = dma.hbm_to_vmem [thread:$0]  %s17, 16, %s119, [#allocation11]
    $region73: #{transformer_decoder_layer.1} parent=1 // pred_fallthru
      _
    // Predicated region
    $region74: #{transformer_decoder_layer.1} parent=1 // pred_check
      _
    $region75: #{transformer_decoder_layer.1} parent=1 // pred_check_branch
      %123 = sbr.rel (0) target = $region77
    $region76: #{transformer_decoder_layer.1} parent=1 // pred_region
      %s125 = ssub.s32 16, 16
      %126 = vsyncadd [#allocation11], %s125
      %s128 = sshll.u32 [#allocation12], 4
      %s129 = int_to_ptr.vmem [resolvable:$true] %s128
      %131 = dma.hbm_to_vmem [thread:$0]  %s18, 16, %s129, [#allocation11]
    $region77: #{transformer_decoder_layer.1} parent=1 // pred_fallthru
      _
    // Predicated region
    $region78: #{transformer_decoder_layer.1} parent=1 // pred_check
      _
    $region79: #{transformer_decoder_layer.1} parent=1 // pred_check_branch
      %133 = sbr.rel (0) target = $region81
    $region80: #{transformer_decoder_layer.1} parent=1 // pred_region
      %s135 = ssub.s32 16, 16
      %136 = vsyncadd [#allocation14], %s135
      %s138 = sshll.u32 [#allocation13], 4
      %s139 = int_to_ptr.vmem [resolvable:$true] %s138
      %141 = dma.hbm_to_vmem [thread:$0]  %s19, 16, %s139, [#allocation14]
    $region81: #{transformer_decoder_layer.1} parent=1 // pred_fallthru
      _
    // Predicated region
    $region82: #{transformer_decoder_layer.1} parent=1 // pred_check
      _
    $region83: #{transformer_decoder_layer.1} parent=1 // pred_check_branch
      %143 = sbr.rel (0) target = $region85
    $region84: #{transformer_decoder_layer.1} parent=1 // pred_region
      %s145 = ssub.s32 16, 16
      %146 = vsyncadd [#allocation14], %s145
      %s148 = sshll.u32 [#allocation15], 4
      %s149 = int_to_ptr.vmem [resolvable:$true] %s148
      %151 = dma.hbm_to_vmem [thread:$0]  %s20, 16, %s149, [#allocation14]
    $region85: #{transformer_decoder_layer.1} parent=1 // pred_fallthru
      _
    // Predicated region
    $region86: #{transformer_decoder_layer.1} parent=1 // pred_check
      _
    $region87: #{transformer_decoder_layer.1} parent=1 // pred_check_branch
      %153 = sbr.rel (0) target = $region89
    $region88: #{transformer_decoder_layer.1} parent=1 // pred_region
      _
    $region89: #{transformer_decoder_layer.1} parent=1 // pred_fallthru
      _
    // Predicated region
    $region90: #{transformer_decoder_layer.1} parent=1 // pred_check
      _
    $region91: #{transformer_decoder_layer.1} parent=1 // pred_check_branch
      %155 = sbr.rel (0) target = $region93
    $region92: #{transformer_decoder_layer.1} parent=1 // pred_region
      %s157 = ssub.s32 16, 16
      %158 = vsyncadd [#allocation17], %s157
      %s160 = sshll.u32 [#allocation16], 4
      %s161 = int_to_ptr.vmem [resolvable:$true] %s160
      %163 = dma.hbm_to_vmem [thread:$0]  %s22, 16, %s161, [#allocation17]
    $region93: #{transformer_decoder_layer.1} parent=1 // pred_fallthru
      _
    // Predicated region
    $region94: #{transformer_decoder_layer.1} parent=1 // pred_check
      _
    $region95: #{transformer_decoder_layer.1} parent=1 // pred_check_branch
      %165 = sbr.rel (0) target = $region97
    $region96: #{transformer_decoder_layer.1} parent=1 // pred_region
      %166 = dma.done [#allocation3], 1024
    $region97: #{transformer_decoder_layer.1} parent=1 // pred_fallthru
      _
    // Predicated region
    $region98: #{transformer_decoder_layer.1} parent=1 // pred_check
      _
    $region99: #{transformer_decoder_layer.1} parent=1 // pred_check_branch
      %168 = sbr.rel (0) target = $region101
    $region100: #{transformer_decoder_layer.1} parent=1 // pred_region
      %169 = dma.done [#allocation5], 16
    $region101: #{transformer_decoder_layer.1} parent=1 // pred_fallthru
      _
    // Predicated region
    $region102: #{transformer_decoder_layer.1} parent=1 // pred_check
      _
    $region103: #{transformer_decoder_layer.1} parent=1 // pred_check_branch
      %171 = sbr.rel (0) target = $region105
    $region104: #{transformer_decoder_layer.1} parent=1 // pred_region
      %172 = dma.done [#allocation5], 32
    $region105: #{transformer_decoder_layer.1} parent=1 // pred_fallthru
      _
    // Predicated region
    $region106: #{transformer_decoder_layer.1} parent=1 // pred_check
      _
    $region107: #{transformer_decoder_layer.1} parent=1 // pred_check_branch
      %174 = sbr.rel (0) target = $region109
    $region108: #{transformer_decoder_layer.1} parent=1 // pred_region
      %175 = dma.done [#allocation8], 2048
    $region109: #{transformer_decoder_layer.1} parent=1 // pred_fallthru
      _
    // Predicated region
    $region110: #{transformer_decoder_layer.1} parent=1 // pred_check
      _
    $region111: #{transformer_decoder_layer.1} parent=1 // pred_check_branch
      %177 = sbr.rel (0) target = $region113
    $region112: #{transformer_decoder_layer.1} parent=1 // pred_region
      %178 = dma.done [#allocation8], 16
    $region113: #{transformer_decoder_layer.1} parent=1 // pred_fallthru
      _
    // Predicated region
    $region114: #{transformer_decoder_layer.1} parent=1 // pred_check
      _
    $region115: #{transformer_decoder_layer.1} parent=1 // pred_check_branch
      %180 = sbr.rel (0) target = $region117
    $region116: #{transformer_decoder_layer.1} parent=1 // pred_region
      %181 = dma.done [#allocation11], 16
    $region117: #{transformer_decoder_layer.1} parent=1 // pred_fallthru
      _
    // Predicated region
    $region118: #{transformer_decoder_layer.1} parent=1 // pred_check
      _
    $region119: #{transformer_decoder_layer.1} parent=1 // pred_check_branch
      %183 = sbr.rel (0) target = $region121
    $region120: #{transformer_decoder_layer.1} parent=1 // pred_region
      %184 = dma.done [#allocation11], 16
    $region121: #{transformer_decoder_layer.1} parent=1 // pred_fallthru
      _
    // Predicated region
    $region122: #{transformer_decoder_layer.1} parent=1 // pred_check
      _
    $region123: #{transformer_decoder_layer.1} parent=1 // pred_check_branch
      %186 = sbr.rel (0) target = $region125
    $region124: #{transformer_decoder_layer.1} parent=1 // pred_region
      %187 = dma.done [#allocation14], 16
    $region125: #{transformer_decoder_layer.1} parent=1 // pred_fallthru
      _
    // Predicated region
    $region126: #{transformer_decoder_layer.1} parent=1 // pred_check
      _
    $region127: #{transformer_decoder_layer.1} parent=1 // pred_check_branch
      %189 = sbr.rel (0) target = $region129
    $region128: #{transformer_decoder_layer.1} parent=1 // pred_region
      %190 = dma.done [#allocation14], 16
    $region129: #{transformer_decoder_layer.1} parent=1 // pred_fallthru
      _
    // Predicated region
    $region130: #{transformer_decoder_layer.1} parent=1 // pred_check
      _
    $region131: #{transformer_decoder_layer.1} parent=1 // pred_check_branch
      %192 = sbr.rel (0) target = $region133
    $region132: #{transformer_decoder_layer.1} parent=1 // pred_region
      %193 = dma.done [#allocation17], 16
    $region133: #{transformer_decoder_layer.1} parent=1 // pred_fallthru
      _
    %v195 = vld [vmem:[%s0] sm:$0xf]
    %v196 = vld [vmem:[%s0 + $0x4] sm:$0xf]
    %v197 = vld [vmem:[%s0 + $0x8] sm:$0xf]
    %v198 = vld [vmem:[%s0 + $0xc] sm:$0xf]
    %v199 = vld [vmem:[%s0 + $0x10] sm:$0xf]
    %v200 = vld [vmem:[%s0 + $0x14] sm:$0xf]
    %v201 = vld [vmem:[%s0 + $0x18] sm:$0xf]
    %v202 = vld [vmem:[%s0 + $0x1c] sm:$0xf]
    %v203 = vld [vmem:[%s1] sm:$0xf]
    %v204 = vld [vmem:[%s1 + $0x4] sm:$0xf]
    %v205 = vld [vmem:[%s1 + $0x8] sm:$0xf]
    %v206 = vld [vmem:[%s1 + $0xc] sm:$0xf]
    %v207 = vld [vmem:[%s1 + $0x10] sm:$0xf]
    %v208 = vld [vmem:[%s1 + $0x14] sm:$0xf]
    %v209 = vld [vmem:[%s1 + $0x18] sm:$0xf]
    %v210 = vld [vmem:[%s1 + $0x1c] sm:$0xf]
    %v211 = vld [vmem:[%s2] sm:$0xf]
    %v212 = vld [vmem:[%s2 + $0x4] sm:$0xf]
    %v213 = vld [vmem:[%s2 + $0x8] sm:$0xf]
    %v214 = vld [vmem:[%s2 + $0xc] sm:$0xf]
    %v215 = vld [vmem:[%s2 + $0x10] sm:$0xf]
    %v216 = vld [vmem:[%s2 + $0x14] sm:$0xf]
    %v217 = vld [vmem:[%s2 + $0x18] sm:$0xf]
    %v218 = vld [vmem:[%s2 + $0x1c] sm:$0xf]
    %v219 = vld [vmem:[%s2 + $0x20] sm:$0xf]
    %v220 = vld [vmem:[%s2 + $0x24] sm:$0xf]
    %v221 = vld [vmem:[%s2 + $0x28] sm:$0xf]
    %v222 = vld [vmem:[%s2 + $0x2c] sm:$0xf]
    %v223 = vld [vmem:[%s2 + $0x30] sm:$0xf]
    %v224 = vld [vmem:[%s2 + $0x34] sm:$0xf]
    %v225 = vld [vmem:[%s2 + $0x38] sm:$0xf]
    %v226 = vld [vmem:[%s2 + $0x3c] sm:$0xf]
    %v227 = vld [vmem:[%s3] sm:$0xf]
    %v228 = vld [vmem:[%s3 + $0x4] sm:$0xf]
    %v229 = vld [vmem:[%s3 + $0x8] sm:$0xf]
    %v230 = vld [vmem:[%s3 + $0xc] sm:$0xf]
    %v231 = vld [vmem:[%s3 + $0x10] sm:$0xf]
    %v232 = vld [vmem:[%s3 + $0x14] sm:$0xf]
    %v233 = vld [vmem:[%s3 + $0x18] sm:$0xf]
    %v234 = vld [vmem:[%s3 + $0x1c] sm:$0xf]
    %v235 = vld [vmem:[%s3 + $0x20] sm:$0xf]
    %v236 = vld [vmem:[%s3 + $0x24] sm:$0xf]
    %v237 = vld [vmem:[%s3 + $0x28] sm:$0xf]
    %v238 = vld [vmem:[%s3 + $0x2c] sm:$0xf]
    %v239 = vld [vmem:[%s3 + $0x30] sm:$0xf]
    %v240 = vld [vmem:[%s3 + $0x34] sm:$0xf]
    %v241 = vld [vmem:[%s3 + $0x38] sm:$0xf]
    %v242 = vld [vmem:[%s3 + $0x3c] sm:$0xf]
    %v243 = vld [vmem:[%s4] sm:$0xf]
    %v244 = vld [vmem:[%s4 + $0x4] sm:$0xf]
    %v245 = vld [vmem:[%s4 + $0x8] sm:$0xf]
    %v246 = vld [vmem:[%s4 + $0xc] sm:$0xf]
    %v247 = vld [vmem:[%s4 + $0x10] sm:$0xf]
    %v248 = vld [vmem:[%s4 + $0x14] sm:$0xf]
    %v249 = vld [vmem:[%s4 + $0x18] sm:$0xf]
    %v250 = vld [vmem:[%s4 + $0x1c] sm:$0xf]
    %v251 = vld [vmem:[%s4 + $0x20] sm:$0xf]
    %v252 = vld [vmem:[%s4 + $0x24] sm:$0xf]
    %v253 = vld [vmem:[%s4 + $0x28] sm:$0xf]
    %v254 = vld [vmem:[%s4 + $0x2c] sm:$0xf]
    %v255 = vld [vmem:[%s4 + $0x30] sm:$0xf]
    %v256 = vld [vmem:[%s4 + $0x34] sm:$0xf]
    %v257 = vld [vmem:[%s4 + $0x38] sm:$0xf]
    %v258 = vld [vmem:[%s4 + $0x3c] sm:$0xf]
    %v259 = vadd.bf16 %v195, %v203
    %v260 = vadd.bf16 %v196, %v204
    %v261 = vadd.bf16 %v197, %v205
    %v262 = vadd.bf16 %v198, %v206
    %v263 = vadd.bf16 %v199, %v207
    %v264 = vadd.bf16 %v200, %v208
    %v265 = vadd.bf16 %v201, %v209
    %v266 = vadd.bf16 %v202, %v210
    %v267 = vld [vmem:[%s5] sm:$0xff]
    %v268 = vld [vmem:[%s5 + $0xc] sm:$0xff]
    %v269 = vld [vmem:[%s5 + $0x18] sm:$0xff]
    %v270 = vld [vmem:[%s5 + $0x24] sm:$0xff]
    %v271 = vld [vmem:[%s5 + $0x30] sm:$0xff]
    %v272 = vld [vmem:[%s5 + $0x3c] sm:$0xff]
    %v273 = vld [vmem:[%s5 + $0x48] sm:$0xff]
    %v274 = vld [vmem:[%s5 + $0x54] sm:$0xff]
    %v275 = vld [vmem:[%s5 + $0x60] sm:$0xff]
    %v276 = vld [vmem:[%s5 + $0x6c] sm:$0xff]
    %v277 = vld [vmem:[%s5 + $0x78] sm:$0xff]
    %v278 = vld [vmem:[%s5 + $0x84] sm:$0xff]
    %v279 = vld [vmem:[%s5 + $0x90] sm:$0xff]
    %v280 = vld [vmem:[%s5 + $0x9c] sm:$0xff]
    %v281 = vld [vmem:[%s5 + $0xa8] sm:$0xff]
    %v282 = vld [vmem:[%s5 + $0xb4] sm:$0xff]
    %v283 = vld [vmem:[%s6] sm:$0x3]
    %v285 = vlaneseq
    %v286 = vshrl.u32 %v285, 7
    %v287 = vsub.s32 0, %v286
    %v288 = vrot.slane %v283, %v287
    %v289 = vlaneseq
    %v290 = vshrl.u32 %v289, 7
    %v291 = vsub.s32 1, %v290
    %v292 = vrot.slane %v283, %v291
    %v303 = vunpack.c.l.b16 %v259
    %v304 = vunpack.c.l.b16 %v260
    %v305 = vunpack.c.l.b16 %v261
    %v306 = vunpack.c.l.b16 %v262
    %v307 = vunpack.c.l.b16 %v263
    %v308 = vunpack.c.l.b16 %v264
    %v309 = vunpack.c.l.b16 %v265
    %v310 = vunpack.c.l.b16 %v266
    %v311 = vpack.c.b16 %v304, %v303
    %v312 = vpack.c.b16 %v306, %v305
    %v313 = vpack.c.b16 %v308, %v307
    %v314 = vpack.c.b16 %v310, %v309
    %v335 = vunpack.c.l.b16 %v267
    %v336 = vunpack.c.h.b16 %v267
    %v337 = vunpack.c.l.b16 %v268
    %v338 = vunpack.c.h.b16 %v268
    %v339 = vunpack.c.l.b16 %v269
    %v340 = vunpack.c.h.b16 %v269
    %v341 = vunpack.c.l.b16 %v270
    %v342 = vunpack.c.h.b16 %v270
    %v343 = vunpack.c.l.b16 %v271
    %v344 = vunpack.c.h.b16 %v271
    %v345 = vunpack.c.l.b16 %v272
    %v346 = vunpack.c.h.b16 %v272
    %v347 = vunpack.c.l.b16 %v273
    %v348 = vunpack.c.h.b16 %v273
    %v349 = vunpack.c.l.b16 %v274
    %v350 = vunpack.c.h.b16 %v274
    %v351 = vunpack.c.l.b16 %v275
    %v352 = vunpack.c.h.b16 %v275
    %v353 = vunpack.c.l.b16 %v276
    %v354 = vunpack.c.h.b16 %v276
    %v355 = vunpack.c.l.b16 %v277
    %v356 = vunpack.c.h.b16 %v277
    %v357 = vunpack.c.l.b16 %v278
    %v358 = vunpack.c.h.b16 %v278
    %v359 = vunpack.c.l.b16 %v279
    %v360 = vunpack.c.h.b16 %v279
    %v361 = vunpack.c.l.b16 %v280
    %v362 = vunpack.c.h.b16 %v280
    %v363 = vunpack.c.l.b16 %v281
    %v364 = vunpack.c.h.b16 %v281
    %v365 = vunpack.c.l.b16 %v282
    %v366 = vunpack.c.h.b16 %v282
    %v367 = vpack.c.b16 %v337, %v335
    %v368 = vpack.c.b16 %v338, %v336
    %v369 = vpack.c.b16 %v341, %v339
    %v370 = vpack.c.b16 %v342, %v340
    %v371 = vpack.c.b16 %v345, %v343
    %v372 = vpack.c.b16 %v346, %v344
    %v373 = vpack.c.b16 %v349, %v347
    %v374 = vpack.c.b16 %v350, %v348
    %v375 = vpack.c.b16 %v353, %v351
    %v376 = vpack.c.b16 %v354, %v352
    %v377 = vpack.c.b16 %v357, %v355
    %v378 = vpack.c.b16 %v358, %v356
    %v379 = vpack.c.b16 %v361, %v359
    %v380 = vpack.c.b16 %v362, %v360
    %v381 = vpack.c.b16 %v365, %v363
    %v382 = vpack.c.b16 %v366, %v364
    %399 = vmatprep.subr.bf16.mxu0 %v368
    %400 = vmatpush1.bf16.msra.mxu0 %v367
    %401 = vmatprep.subr.bf16.mxu0 %v370
    %402 = vmatpush1.bf16.msra.mxu0 %v369
    %403 = vmatprep.subr.bf16.mxu0 %v372
    %404 = vmatpush1.bf16.msra.mxu0 %v371
    %405 = vmatprep.subr.bf16.mxu0 %v374
    %406 = vmatpush1.bf16.msra.mxu0 %v373
    %407 = vmatprep.subr.bf16.mxu0 %v376
    %408 = vmatpush1.bf16.msra.mxu0 %v375
    %409 = vmatprep.subr.bf16.mxu0 %v378
    %410 = vmatpush1.bf16.msra.mxu0 %v377
    %411 = vmatprep.subr.bf16.mxu0 %v380
    %412 = vmatpush1.bf16.msra.mxu0 %v379
    %413 = vmatprep.subr.bf16.mxu0 %v382
    %414 = vmatpush1.bf16.msra.mxu0 %v381
    %415 = vmatprep.subr.bf16.mxu0 0
    %416 = vmatpush1.bf16.msra.mxu0 0
    %417 = vmatprep.subr.bf16.mxu0 0
    %418 = vmatpush1.bf16.msra.mxu0 0
    %419 = vmatprep.subr.bf16.mxu0 0
    %420 = vmatpush1.bf16.msra.mxu0 0
    %421 = vmatprep.subr.bf16.mxu0 0
    %422 = vmatpush1.bf16.msra.mxu0 0
    %423 = vmatprep.subr.bf16.mxu0 0
    %424 = vmatpush1.bf16.msra.mxu0 0
    %425 = vmatprep.subr.bf16.mxu0 0
    %426 = vmatpush1.bf16.msra.mxu0 0
    %427 = vmatprep.subr.bf16.mxu0 0
    %428 = vmatpush1.bf16.msra.mxu0 0
    %429 = vmatprep.subr.bf16.mxu0 0
    %430 = vmatpush1.bf16.msra.mxu0 0
    %431 = vmatprep.mubr.bf16.mxu0 0
    %432 = vmatmul.mubr.bf16.gmra.mrb[0].mxu0 %v311
    %v433 = vpop.f32.mrb[0].mxu0
    %v434 = vadd.f32 %v288, %v433
    %v435 = vpop.f32.mrb[0].mxu0
    %v436 = vadd.f32 %v292, %v435
    %v437 = vpop.f32.mrb[0].mxu0
    %v438 = vadd.f32 %v288, %v437
    %v439 = vpop.f32.mrb[0].mxu0
    %v440 = vadd.f32 %v292, %v439
    %441 = vmatprep.mubr.bf16.mxu0 0
    %442 = vmatmul.mubr.bf16.gmra.mrb[0].mxu0 %v312
    %v443 = vpop.f32.mrb[0].mxu0
    %v444 = vadd.f32 %v288, %v443
    %v445 = vpop.f32.mrb[0].mxu0
    %v446 = vadd.f32 %v292, %v445
    %v447 = vpop.f32.mrb[0].mxu0
    %v448 = vadd.f32 %v288, %v447
    %v449 = vpop.f32.mrb[0].mxu0
    %v450 = vadd.f32 %v292, %v449
    %451 = vmatprep.mubr.bf16.mxu0 0
    %452 = vmatmul.mubr.bf16.gmra.mrb[0].mxu0 %v313
    %v453 = vpop.f32.mrb[0].mxu0
    %v454 = vadd.f32 %v288, %v453
    %v455 = vpop.f32.mrb[0].mxu0
    %v456 = vadd.f32 %v292, %v455
    %v457 = vpop.f32.mrb[0].mxu0
    %v458 = vadd.f32 %v288, %v457
    %v459 = vpop.f32.mrb[0].mxu0
    %v460 = vadd.f32 %v292, %v459
    %461 = vmatprep.mubr.bf16.mxu0 0
    %462 = vmatmul.mubr.bf16.gmra.mrb[0].mxu0 %v314
    %v463 = vpop.f32.mrb[0].mxu0
    %v464 = vadd.f32 %v288, %v463
    %v465 = vpop.f32.mrb[0].mxu0
    %v466 = vadd.f32 %v292, %v465
    %v467 = vpop.f32.mrb[0].mxu0
    %v468 = vadd.f32 %v288, %v467
    %v469 = vpop.f32.mrb[0].mxu0
    %v470 = vadd.f32 %v292, %v469
    %471 = vdwg.mxu0
    %v472 = vld [vmem:[%s5 + $0x8] sm:$0xf]
    %v473 = vld [vmem:[%s5 + $0x14] sm:$0xf]
    %v474 = vld [vmem:[%s5 + $0x20] sm:$0xf]
    %v475 = vld [vmem:[%s5 + $0x2c] sm:$0xf]
    %v476 = vld [vmem:[%s5 + $0x38] sm:$0xf]
    %v477 = vld [vmem:[%s5 + $0x44] sm:$0xf]
    %v478 = vld [vmem:[%s5 + $0x50] sm:$0xf]
    %v479 = vld [vmem:[%s5 + $0x5c] sm:$0xf]
    %v480 = vld [vmem:[%s5 + $0x68] sm:$0xf]
    %v481 = vld [vmem:[%s5 + $0x74] sm:$0xf]
    %v482 = vld [vmem:[%s5 + $0x80] sm:$0xf]
    %v483 = vld [vmem:[%s5 + $0x8c] sm:$0xf]
    %v484 = vld [vmem:[%s5 + $0x98] sm:$0xf]
    %v485 = vld [vmem:[%s5 + $0xa4] sm:$0xf]
    %v486 = vld [vmem:[%s5 + $0xb0] sm:$0xf]
    %v487 = vld [vmem:[%s5 + $0xbc] sm:$0xf]
    %v488 = vld [vmem:[%s6 + $0x2] sm:$0x1]
    %v490 = vlaneseq
    %v491 = vshrl.u32 %v490, 7
    %v492 = vsub.s32 0, %v491
    %v493 = vrot.slane %v488, %v492
    %v503 = vunpack.c.l.b16 %v195
    %v504 = vunpack.c.l.b16 %v196
    %v505 = vunpack.c.l.b16 %v197
    %v506 = vunpack.c.l.b16 %v198
    %v507 = vunpack.c.l.b16 %v199
    %v508 = vunpack.c.l.b16 %v200
    %v509 = vunpack.c.l.b16 %v201
    %v510 = vunpack.c.l.b16 %v202
    %v511 = vpack.c.b16 %v504, %v503
    %v512 = vpack.c.b16 %v506, %v505
    %v513 = vpack.c.b16 %v508, %v507
    %v514 = vpack.c.b16 %v510, %v509
    %v535 = vunpack.c.l.b16 %v472
    %v536 = vunpack.c.l.b16 %v473
    %v537 = vunpack.c.l.b16 %v474
    %v538 = vunpack.c.l.b16 %v475
    %v539 = vunpack.c.l.b16 %v476
    %v540 = vunpack.c.l.b16 %v477
    %v541 = vunpack.c.l.b16 %v478
    %v542 = vunpack.c.l.b16 %v479
    %v543 = vunpack.c.l.b16 %v480
    %v544 = vunpack.c.l.b16 %v481
    %v545 = vunpack.c.l.b16 %v482
    %v546 = vunpack.c.l.b16 %v483
    %v547 = vunpack.c.l.b16 %v484
    %v548 = vunpack.c.l.b16 %v485
    %v549 = vunpack.c.l.b16 %v486
    %v550 = vunpack.c.l.b16 %v487
    %v551 = vpack.c.b16 %v536, %v535
    %v552 = vpack.c.b16 %v538, %v537
    %v553 = vpack.c.b16 %v540, %v539
    %v554 = vpack.c.b16 %v542, %v541
    %v555 = vpack.c.b16 %v544, %v543
    %v556 = vpack.c.b16 %v546, %v545
    %v557 = vpack.c.b16 %v548, %v547
    %v558 = vpack.c.b16 %v550, %v549
    %567 = vmatprep.subr.bf16.mxu0 0
    %568 = vmatpush1.bf16.msra.mxu0 %v551
    %569 = vmatprep.subr.bf16.mxu0 0
    %570 = vmatpush1.bf16.msra.mxu0 %v552
    %571 = vmatprep.subr.bf16.mxu0 0
    %572 = vmatpush1.bf16.msra.mxu0 %v553
    %573 = vmatprep.subr.bf16.mxu0 0
    %574 = vmatpush1.bf16.msra.mxu0 %v554
    %575 = vmatprep.subr.bf16.mxu0 0
    %576 = vmatpush1.bf16.msra.mxu0 %v555
    %577 = vmatprep.subr.bf16.mxu0 0
    %578 = vmatpush1.bf16.msra.mxu0 %v556
    %579 = vmatprep.subr.bf16.mxu0 0
    %580 = vmatpush1.bf16.msra.mxu0 %v557
    %581 = vmatprep.subr.bf16.mxu0 0
    %582 = vmatpush1.bf16.msra.mxu0 %v558
    %583 = vmatprep.subr.bf16.mxu0 0
    %584 = vmatpush1.bf16.msra.mxu0 0
    %585 = vmatprep.subr.bf16.mxu0 0
    %586 = vmatpush1.bf16.msra.mxu0 0
    %587 = vmatprep.subr.bf16.mxu0 0
    %588 = vmatpush1.bf16.msra.mxu0 0
    %589 = vmatprep.subr.bf16.mxu0 0
    %590 = vmatpush1.bf16.msra.mxu0 0
    %591 = vmatprep.subr.bf16.mxu0 0
    %592 = vmatpush1.bf16.msra.mxu0 0
    %593 = vmatprep.subr.bf16.mxu0 0
    %594 = vmatpush1.bf16.msra.mxu0 0
    %595 = vmatprep.subr.bf16.mxu0 0
    %596 = vmatpush1.bf16.msra.mxu0 0
    %597 = vmatprep.subr.bf16.mxu0 0
    %598 = vmatpush1.bf16.msra.mxu0 0
    %599 = vmatprep.mubr.bf16.mxu0 0
    %600 = vmatmul.mubr.bf16.gmra.mrb[0].mxu0 %v511
    %v601 = vpop.f32.mrb[0].mxu0
    %v602 = vadd.f32 %v493, %v601
    %v603 = vpop.f32.mrb[0].mxu0
    %v604 = vpop.f32.mrb[0].mxu0
    %v605 = vadd.f32 %v493, %v604
    %v606 = vpop.f32.mrb[0].mxu0
    %607 = vmatprep.mubr.bf16.mxu0 0
    %608 = vmatmul.mubr.bf16.gmra.mrb[0].mxu0 %v512
    %v609 = vpop.f32.mrb[0].mxu0
    %v610 = vadd.f32 %v493, %v609
    %v611 = vpop.f32.mrb[0].mxu0
    %v612 = vpop.f32.mrb[0].mxu0
    %v613 = vadd.f32 %v493, %v612
    %v614 = vpop.f32.mrb[0].mxu0
    %615 = vmatprep.mubr.bf16.mxu0 0
    %616 = vmatmul.mubr.bf16.gmra.mrb[0].mxu0 %v513
    %v617 = vpop.f32.mrb[0].mxu0
    %v618 = vadd.f32 %v493, %v617
    %v619 = vpop.f32.mrb[0].mxu0
    %v620 = vpop.f32.mrb[0].mxu0
    %v621 = vadd.f32 %v493, %v620
    %v622 = vpop.f32.mrb[0].mxu0
    %623 = vmatprep.mubr.bf16.mxu0 0
    %624 = vmatmul.mubr.bf16.gmra.mrb[0].mxu0 %v514
    %v625 = vpop.f32.mrb[0].mxu0
    %v626 = vadd.f32 %v493, %v625
    %v627 = vpop.f32.mrb[0].mxu0
    %v628 = vpop.f32.mrb[0].mxu0
    %v629 = vadd.f32 %v493, %v628
    %v630 = vpop.f32.mrb[0].mxu0
    %631 = vdwg.mxu0
    %v632 = vpack.c.bf16 %v438, %v434
    %v633 = vpack.c.bf16 %v440, %v436
    %v634 = vpack.c.bf16 %v448, %v444
    %v635 = vpack.c.bf16 %v450, %v446
    %v636 = vpack.c.bf16 %v458, %v454
    %v637 = vpack.c.bf16 %v460, %v456
    %v638 = vpack.c.bf16 %v468, %v464
    %v639 = vpack.c.bf16 %v470, %v466
    %v640 = vpack.c.bf16 %v605, %v602
    %v641 = vpack.c.bf16 %v613, %v610
    %v642 = vpack.c.bf16 %v621, %v618
    %v643 = vpack.c.bf16 %v629, %v626
    %v644 = vld [vmem:[%s8] sm:$0x1]
    %vm645 = vcmask 261120
    %v647 = vsel %vm645, %v632, 0
    %v650 = vsel %vm645, %v633, 0
    %652 = vmatprep.subr.bf16.mxu0 0
    %653 = vmatpush1.bf16.xpose.msra.mxu0 %v650
    %654 = vmatprep.subr.bf16.mxu0 0
    %655 = vmatpush1.bf16.xpose.msra.mxu0 0
    %656 = vmatprep.subr.bf16.mxu0 0
    %657 = vmatpush1.bf16.xpose.msra.mxu0 0
    %658 = vmatprep.subr.bf16.mxu0 0
    %659 = vmatpush1.bf16.xpose.msra.mxu0 0
    %660 = vmatprep.subr.bf16.mxu0 0
    %661 = vmatpush1.bf16.xpose.msra.mxu0 0
    %662 = vmatprep.subr.bf16.mxu0 0
    %663 = vmatpush1.bf16.xpose.msra.mxu0 0
    %664 = vmatprep.subr.bf16.mxu0 0
    %665 = vmatpush1.bf16.xpose.msra.mxu0 0
    %666 = vmatprep.subr.bf16.mxu0 0
    %667 = vmatpush1.bf16.xpose.msra.mxu0 0
    %668 = vmatprep.subr.bf16.mxu0 0
    %669 = vmatpush1.bf16.xpose.msra.mxu0 0
    %670 = vmatprep.subr.bf16.mxu0 0
    %671 = vmatpush1.bf16.xpose.msra.mxu0 0
    %672 = vmatprep.subr.bf16.mxu0 0
    %673 = vmatpush1.bf16.xpose.msra.mxu0 0
    %674 = vmatprep.subr.bf16.mxu0 0
    %675 = vmatpush1.bf16.xpose.msra.mxu0 0
    %676 = vmatprep.subr.bf16.mxu0 0
    %677 = vmatpush1.bf16.xpose.msra.mxu0 0
    %678 = vmatprep.subr.bf16.mxu0 0
    %679 = vmatpush1.bf16.xpose.msra.mxu0 0
    %680 = vmatprep.subr.bf16.mxu0 0
    %681 = vmatpush1.bf16.xpose.msra.mxu0 0
    %682 = vmatprep.subr.bf16.mxu0 0
    %683 = vmatpush1.bf16.xpose.msra.mxu0 0
    %684 = vmatprep.mubr.bf16.mxu0 0
    %685 = vmatmul.mubr.bf16.gmra.mrb[0].mxu0 %v647
    %v686 = vpop.f32.mrb[0].mxu0
    %v687 = vadd.f32 0.0, %v686
    %v688 = vpop.f32.mrb[0].mxu0
    %v689 = vpop.f32.mrb[0].mxu0
    %v690 = vadd.f32 0.0, %v689
    %v691 = vpop.f32.mrb[0].mxu0
    %692 = vdwg.mxu0
    %v694 = vsel %vm645, %v634, 0
    %v697 = vsel %vm645, %v635, 0
    %699 = vmatprep.subr.bf16.mxu0 0
    %700 = vmatpush1.bf16.xpose.msra.mxu0 %v697
    %701 = vmatprep.subr.bf16.mxu0 0
    %702 = vmatpush1.bf16.xpose.msra.mxu0 0
    %703 = vmatprep.subr.bf16.mxu0 0
    %704 = vmatpush1.bf16.xpose.msra.mxu0 0
    %705 = vmatprep.subr.bf16.mxu0 0
    %706 = vmatpush1.bf16.xpose.msra.mxu0 0
    %707 = vmatprep.subr.bf16.mxu0 0
    %708 = vmatpush1.bf16.xpose.msra.mxu0 0
    %709 = vmatprep.subr.bf16.mxu0 0
    %710 = vmatpush1.bf16.xpose.msra.mxu0 0
    %711 = vmatprep.subr.bf16.mxu0 0
    %712 = vmatpush1.bf16.xpose.msra.mxu0 0
    %713 = vmatprep.subr.bf16.mxu0 0
    %714 = vmatpush1.bf16.xpose.msra.mxu0 0
    %715 = vmatprep.subr.bf16.mxu0 0
    %716 = vmatpush1.bf16.xpose.msra.mxu0 0
    %717 = vmatprep.subr.bf16.mxu0 0
    %718 = vmatpush1.bf16.xpose.msra.mxu0 0
    %719 = vmatprep.subr.bf16.mxu0 0
    %720 = vmatpush1.bf16.xpose.msra.mxu0 0
    %721 = vmatprep.subr.bf16.mxu0 0
    %722 = vmatpush1.bf16.xpose.msra.mxu0 0
    %723 = vmatprep.subr.bf16.mxu0 0
    %724 = vmatpush1.bf16.xpose.msra.mxu0 0
    %725 = vmatprep.subr.bf16.mxu0 0
    %726 = vmatpush1.bf16.xpose.msra.mxu0 0
    %727 = vmatprep.subr.bf16.mxu0 0
    %728 = vmatpush1.bf16.xpose.msra.mxu0 0
    %729 = vmatprep.subr.bf16.mxu0 0
    %730 = vmatpush1.bf16.xpose.msra.mxu0 0
    %731 = vmatprep.mubr.bf16.mxu0 0
    %732 = vmatmul.mubr.bf16.gmra.mrb[0].mxu0 %v694
    %v733 = vpop.f32.mrb[0].mxu0
    %v734 = vadd.f32 0.0, %v733
    %v735 = vpop.f32.mrb[0].mxu0
    %v736 = vpop.f32.mrb[0].mxu0
    %v737 = vadd.f32 0.0, %v736
    %v738 = vpop.f32.mrb[0].mxu0
    %739 = vdwg.mxu0
    %v741 = vsel %vm645, %v636, 0
    %v744 = vsel %vm645, %v637, 0
    %746 = vmatprep.subr.bf16.mxu0 0
    %747 = vmatpush1.bf16.xpose.msra.mxu0 %v744
    %748 = vmatprep.subr.bf16.mxu0 0
    %749 = vmatpush1.bf16.xpose.msra.mxu0 0
    %750 = vmatprep.subr.bf16.mxu0 0
    %751 = vmatpush1.bf16.xpose.msra.mxu0 0
    %752 = vmatprep.subr.bf16.mxu0 0
    %753 = vmatpush1.bf16.xpose.msra.mxu0 0
    %754 = vmatprep.subr.bf16.mxu0 0
    %755 = vmatpush1.bf16.xpose.msra.mxu0 0
    %756 = vmatprep.subr.bf16.mxu0 0
    %757 = vmatpush1.bf16.xpose.msra.mxu0 0
    %758 = vmatprep.subr.bf16.mxu0 0
    %759 = vmatpush1.bf16.xpose.msra.mxu0 0
    %760 = vmatprep.subr.bf16.mxu0 0
    %761 = vmatpush1.bf16.xpose.msra.mxu0 0
    %762 = vmatprep.subr.bf16.mxu0 0
    %763 = vmatpush1.bf16.xpose.msra.mxu0 0
    %764 = vmatprep.subr.bf16.mxu0 0
    %765 = vmatpush1.bf16.xpose.msra.mxu0 0
    %766 = vmatprep.subr.bf16.mxu0 0
    %767 = vmatpush1.bf16.xpose.msra.mxu0 0
    %768 = vmatprep.subr.bf16.mxu0 0
    %769 = vmatpush1.bf16.xpose.msra.mxu0 0
    %770 = vmatprep.subr.bf16.mxu0 0
    %771 = vmatpush1.bf16.xpose.msra.mxu0 0
    %772 = vmatprep.subr.bf16.mxu0 0
    %773 = vmatpush1.bf16.xpose.msra.mxu0 0
    %774 = vmatprep.subr.bf16.mxu0 0
    %775 = vmatpush1.bf16.xpose.msra.mxu0 0
    %776 = vmatprep.subr.bf16.mxu0 0
    %777 = vmatpush1.bf16.xpose.msra.mxu0 0
    %778 = vmatprep.mubr.bf16.mxu0 0
    %779 = vmatmul.mubr.bf16.gmra.mrb[0].mxu0 %v741
    %v780 = vpop.f32.mrb[0].mxu0
    %v781 = vadd.f32 0.0, %v780
    %v782 = vpop.f32.mrb[0].mxu0
    %v783 = vpop.f32.mrb[0].mxu0
    %v784 = vadd.f32 0.0, %v783
    %v785 = vpop.f32.mrb[0].mxu0
    %786 = vdwg.mxu0
    %v788 = vsel %vm645, %v638, 0
    %v791 = vsel %vm645, %v639, 0
    %793 = vmatprep.subr.bf16.mxu0 0
    %794 = vmatpush1.bf16.xpose.msra.mxu0 %v791
    %795 = vmatprep.subr.bf16.mxu0 0
    %796 = vmatpush1.bf16.xpose.msra.mxu0 0
    %797 = vmatprep.subr.bf16.mxu0 0
    %798 = vmatpush1.bf16.xpose.msra.mxu0 0
    %799 = vmatprep.subr.bf16.mxu0 0
    %800 = vmatpush1.bf16.xpose.msra.mxu0 0
    %801 = vmatprep.subr.bf16.mxu0 0
    %802 = vmatpush1.bf16.xpose.msra.mxu0 0
    %803 = vmatprep.subr.bf16.mxu0 0
    %804 = vmatpush1.bf16.xpose.msra.mxu0 0
    %805 = vmatprep.subr.bf16.mxu0 0
    %806 = vmatpush1.bf16.xpose.msra.mxu0 0
    %807 = vmatprep.subr.bf16.mxu0 0
    %808 = vmatpush1.bf16.xpose.msra.mxu0 0
    %809 = vmatprep.subr.bf16.mxu0 0
    %810 = vmatpush1.bf16.xpose.msra.mxu0 0
    %811 = vmatprep.subr.bf16.mxu0 0
    %812 = vmatpush1.bf16.xpose.msra.mxu0 0
    %813 = vmatprep.subr.bf16.mxu0 0
    %814 = vmatpush1.bf16.xpose.msra.mxu0 0
    %815 = vmatprep.subr.bf16.mxu0 0
    %816 = vmatpush1.bf16.xpose.msra.mxu0 0
    %817 = vmatprep.subr.bf16.mxu0 0
    %818 = vmatpush1.bf16.xpose.msra.mxu0 0
    %819 = vmatprep.subr.bf16.mxu0 0
    %820 = vmatpush1.bf16.xpose.msra.mxu0 0
    %821 = vmatprep.subr.bf16.mxu0 0
    %822 = vmatpush1.bf16.xpose.msra.mxu0 0
    %823 = vmatprep.subr.bf16.mxu0 0
    %824 = vmatpush1.bf16.xpose.msra.mxu0 0
    %825 = vmatprep.mubr.bf16.mxu0 0
    %826 = vmatmul.mubr.bf16.gmra.mrb[0].mxu0 %v788
    %v827 = vpop.f32.mrb[0].mxu0
    %v828 = vadd.f32 0.0, %v827
    %v829 = vpop.f32.mrb[0].mxu0
    %v830 = vpop.f32.mrb[0].mxu0
    %v831 = vadd.f32 0.0, %v830
    %v832 = vpop.f32.mrb[0].mxu0
    %833 = vdwg.mxu0
    %vm834 = vcmask 130048
    %v835 = vsel %vm834, %v687, -inf
    %836 = vmax.xlane.f32.xlu0 %v835
    %v837 = vpop.xlane.xlu0 %836
    %v838 = vsel %vm834, %v690, -inf
    %839 = vmax.xlane.f32.xlu0 %v838
    %v840 = vpop.xlane.xlu0 %839
    %v841 = vsel %vm834, %v734, -inf
    %842 = vmax.xlane.f32.xlu0 %v841
    %v843 = vpop.xlane.xlu0 %842
    %v844 = vsel %vm834, %v737, -inf
    %845 = vmax.xlane.f32.xlu0 %v844
    %v846 = vpop.xlane.xlu0 %845
    %v847 = vsel %vm834, %v781, -inf
    %848 = vmax.xlane.f32.xlu0 %v847
    %v849 = vpop.xlane.xlu0 %848
    %v850 = vsel %vm834, %v784, -inf
    %851 = vmax.xlane.f32.xlu0 %v850
    %v852 = vpop.xlane.xlu0 %851
    %v853 = vsel %vm834, %v828, -inf
    %854 = vmax.xlane.f32.xlu0 %v853
    %v855 = vpop.xlane.xlu0 %854
    %v856 = vsel %vm834, %v831, -inf
    %857 = vmax.xlane.f32.xlu0 %v856
    %v858 = vpop.xlane.xlu0 %857
    %v859 = vsub.f32 %v687, %v837
    %v860 = vsub.f32 %v690, %v840
    %v861 = vsub.f32 %v734, %v843
    %v862 = vsub.f32 %v737, %v846
    %v863 = vsub.f32 %v781, %v849
    %v864 = vsub.f32 %v784, %v852
    %v865 = vsub.f32 %v828, %v855
    %v866 = vsub.f32 %v831, %v858
    %v867 = vmul.f32 %v859, 1.442695
    %v868 = vpow.pop %v867
    %v869 = vmul.f32 %v860, 1.442695
    %v870 = vpow.pop %v869
    %v871 = vmul.f32 %v861, 1.442695
    %v872 = vpow.pop %v871
    %v873 = vmul.f32 %v862, 1.442695
    %v874 = vpow.pop %v873
    %v875 = vmul.f32 %v863, 1.442695
    %v876 = vpow.pop %v875
    %v877 = vmul.f32 %v864, 1.442695
    %v878 = vpow.pop %v877
    %v879 = vmul.f32 %v865, 1.442695
    %v880 = vpow.pop %v879
    %v881 = vmul.f32 %v866, 1.442695
    %v882 = vpow.pop %v881
    %v883 = vsel %vm834, %v868, 0.0
    %884 = vadd.xlane.f32.xlu0 %v883
    %v885 = vpop.xlane.xlu0 %884
    %v886 = vsel %vm834, %v870, 0.0
    %887 = vadd.xlane.f32.xlu0 %v886
    %v888 = vpop.xlane.xlu0 %887
    %v889 = vsel %vm834, %v872, 0.0
    %890 = vadd.xlane.f32.xlu0 %v889
    %v891 = vpop.xlane.xlu0 %890
    %v892 = vsel %vm834, %v874, 0.0
    %893 = vadd.xlane.f32.xlu0 %v892
    %v894 = vpop.xlane.xlu0 %893
    %v895 = vsel %vm834, %v876, 0.0
    %896 = vadd.xlane.f32.xlu0 %v895
    %v897 = vpop.xlane.xlu0 %896
    %v898 = vsel %vm834, %v878, 0.0
    %899 = vadd.xlane.f32.xlu0 %v898
    %v900 = vpop.xlane.xlu0 %899
    %v901 = vsel %vm834, %v880, 0.0
    %902 = vadd.xlane.f32.xlu0 %v901
    %v903 = vpop.xlane.xlu0 %902
    %v904 = vsel %vm834, %v882, 0.0
    %905 = vadd.xlane.f32.xlu0 %v904
    %v906 = vpop.xlane.xlu0 %905
    %v907 = vrcp.pop %v885
    %v908 = vrcp.pop %v888
    %v909 = vrcp.pop %v891
    %v910 = vrcp.pop %v894
    %v911 = vrcp.pop %v897
    %v912 = vrcp.pop %v900
    %v913 = vrcp.pop %v903
    %v914 = vrcp.pop %v906
    %v915 = vmul.f32 %v868, %v907
    %v916 = vmul.f32 %v870, %v908
    %v917 = vmul.f32 %v872, %v909
    %v918 = vmul.f32 %v874, %v910
    %v919 = vmul.f32 %v876, %v911
    %v920 = vmul.f32 %v878, %v912
    %v921 = vmul.f32 %v880, %v913
    %v922 = vmul.f32 %v882, %v914
    %v923 = vpack.c.bf16 %v916, %v915
    %v924 = vpack.c.bf16 %v918, %v917
    %v925 = vpack.c.bf16 %v920, %v919
    %v926 = vpack.c.bf16 %v922, %v921
    %v928 = vsel %vm834, %v923, 0
    %930 = vmatprep.subr.bf16.mxu0 0
    %931 = vmatpush1.bf16.msra.mxu0 %v640
    %932 = vmatprep.subr.bf16.mxu0 0
    %933 = vmatpush1.bf16.msra.mxu0 0
    %934 = vmatprep.subr.bf16.mxu0 0
    %935 = vmatpush1.bf16.msra.mxu0 0
    %936 = vmatprep.subr.bf16.mxu0 0
    %937 = vmatpush1.bf16.msra.mxu0 0
    %938 = vmatprep.subr.bf16.mxu0 0
    %939 = vmatpush1.bf16.msra.mxu0 0
    %940 = vmatprep.subr.bf16.mxu0 0
    %941 = vmatpush1.bf16.msra.mxu0 0
    %942 = vmatprep.subr.bf16.mxu0 0
    %943 = vmatpush1.bf16.msra.mxu0 0
    %944 = vmatprep.subr.bf16.mxu0 0
    %945 = vmatpush1.bf16.msra.mxu0 0
    %946 = vmatprep.subr.bf16.mxu0 0
    %947 = vmatpush1.bf16.msra.mxu0 0
    %948 = vmatprep.subr.bf16.mxu0 0
    %949 = vmatpush1.bf16.msra.mxu0 0
    %950 = vmatprep.subr.bf16.mxu0 0
    %951 = vmatpush1.bf16.msra.mxu0 0
    %952 = vmatprep.subr.bf16.mxu0 0
    %953 = vmatpush1.bf16.msra.mxu0 0
    %954 = vmatprep.subr.bf16.mxu0 0
    %955 = vmatpush1.bf16.msra.mxu0 0
    %956 = vmatprep.subr.bf16.mxu0 0
    %957 = vmatpush1.bf16.msra.mxu0 0
    %958 = vmatprep.subr.bf16.mxu0 0
    %959 = vmatpush1.bf16.msra.mxu0 0
    %960 = vmatprep.subr.bf16.mxu0 0
    %961 = vmatpush1.bf16.msra.mxu0 0
    %962 = vmatprep.mubr.bf16.mxu0 0
    %963 = vmatmul.mubr.bf16.gmra.mrb[0].mxu0 %v928
    %v964 = vpop.f32.mrb[0].mxu0
    %v965 = vadd.f32 0.0, %v964
    %v966 = vpop.f32.mrb[0].mxu0
    %v967 = vpop.f32.mrb[0].mxu0
    %v968 = vadd.f32 0.0, %v967
    %v969 = vpop.f32.mrb[0].mxu0
    %970 = vdwg.mxu0
    %v972 = vsel %vm834, %v924, 0
    %974 = vmatprep.subr.bf16.mxu0 0
    %975 = vmatpush1.bf16.msra.mxu0 %v641
    %976 = vmatprep.subr.bf16.mxu0 0
    %977 = vmatpush1.bf16.msra.mxu0 0
    %978 = vmatprep.subr.bf16.mxu0 0
    %979 = vmatpush1.bf16.msra.mxu0 0
    %980 = vmatprep.subr.bf16.mxu0 0
    %981 = vmatpush1.bf16.msra.mxu0 0
    %982 = vmatprep.subr.bf16.mxu0 0
    %983 = vmatpush1.bf16.msra.mxu0 0
    %984 = vmatprep.subr.bf16.mxu0 0
    %985 = vmatpush1.bf16.msra.mxu0 0
    %986 = vmatprep.subr.bf16.mxu0 0
    %987 = vmatpush1.bf16.msra.mxu0 0
    %988 = vmatprep.subr.bf16.mxu0 0
    %989 = vmatpush1.bf16.msra.mxu0 0
    %990 = vmatprep.subr.bf16.mxu0 0
    %991 = vmatpush1.bf16.msra.mxu0 0
    %992 = vmatprep.subr.bf16.mxu0 0
    %993 = vmatpush1.bf16.msra.mxu0 0
    %994 = vmatprep.subr.bf16.mxu0 0
    %995 = vmatpush1.bf16.msra.mxu0 0
    %996 = vmatprep.subr.bf16.mxu0 0
    %997 = vmatpush1.bf16.msra.mxu0 0
    %998 = vmatprep.subr.bf16.mxu0 0
    %999 = vmatpush1.bf16.msra.mxu0 0
    %1000 = vmatprep.subr.bf16.mxu0 0
    %1001 = vmatpush1.bf16.msra.mxu0 0
    %1002 = vmatprep.subr.bf16.mxu0 0
    %1003 = vmatpush1.bf16.msra.mxu0 0
    %1004 = vmatprep.subr.bf16.mxu0 0
    %1005 = vmatpush1.bf16.msra.mxu0 0
    %1006 = vmatprep.mubr.bf16.mxu0 0
    %1007 = vmatmul.mubr.bf16.gmra.mrb[0].mxu0 %v972
    %v1008 = vpop.f32.mrb[0].mxu0
    %v1009 = vadd.f32 0.0, %v1008
    %v1010 = vpop.f32.mrb[0].mxu0
    %v1011 = vpop.f32.mrb[0].mxu0
    %v1012 = vadd.f32 0.0, %v1011
    %v1013 = vpop.f32.mrb[0].mxu0
    %1014 = vdwg.mxu0
    %v1016 = vsel %vm834, %v925, 0
    %1018 = vmatprep.subr.bf16.mxu0 0
    %1019 = vmatpush1.bf16.msra.mxu0 %v642
    %1020 = vmatprep.subr.bf16.mxu0 0
    %1021 = vmatpush1.bf16.msra.mxu0 0
    %1022 = vmatprep.subr.bf16.mxu0 0
    %1023 = vmatpush1.bf16.msra.mxu0 0
    %1024 = vmatprep.subr.bf16.mxu0 0
    %1025 = vmatpush1.bf16.msra.mxu0 0
    %1026 = vmatprep.subr.bf16.mxu0 0
    %1027 = vmatpush1.bf16.msra.mxu0 0
    %1028 = vmatprep.subr.bf16.mxu0 0
    %1029 = vmatpush1.bf16.msra.mxu0 0
    %1030 = vmatprep.subr.bf16.mxu0 0
    %1031 = vmatpush1.bf16.msra.mxu0 0
    %1032 = vmatprep.subr.bf16.mxu0 0
    %1033 = vmatpush1.bf16.msra.mxu0 0
    %1034 = vmatprep.subr.bf16.mxu0 0
    %1035 = vmatpush1.bf16.msra.mxu0 0
    %1036 = vmatprep.subr.bf16.mxu0 0
    %1037 = vmatpush1.bf16.msra.mxu0 0
    %1038 = vmatprep.subr.bf16.mxu0 0
    %1039 = vmatpush1.bf16.msra.mxu0 0
    %1040 = vmatprep.subr.bf16.mxu0 0
    %1041 = vmatpush1.bf16.msra.mxu0 0
    %1042 = vmatprep.subr.bf16.mxu0 0
    %1043 = vmatpush1.bf16.msra.mxu0 0
    %1044 = vmatprep.subr.bf16.mxu0 0
    %1045 = vmatpush1.bf16.msra.mxu0 0
    %1046 = vmatprep.subr.bf16.mxu0 0
    %1047 = vmatpush1.bf16.msra.mxu0 0
    %1048 = vmatprep.subr.bf16.mxu0 0
    %1049 = vmatpush1.bf16.msra.mxu0 0
    %1050 = vmatprep.mubr.bf16.mxu0 0
    %1051 = vmatmul.mubr.bf16.gmra.mrb[0].mxu0 %v1016
    %v1052 = vpop.f32.mrb[0].mxu0
    %v1053 = vadd.f32 0.0, %v1052
    %v1054 = vpop.f32.mrb[0].mxu0
    %v1055 = vpop.f32.mrb[0].mxu0
    %v1056 = vadd.f32 0.0, %v1055
    %v1057 = vpop.f32.mrb[0].mxu0
    %1058 = vdwg.mxu0
    %v1060 = vsel %vm834, %v926, 0
    %1062 = vmatprep.subr.bf16.mxu0 0
    %1063 = vmatpush1.bf16.msra.mxu0 %v643
    %1064 = vmatprep.subr.bf16.mxu0 0
    %1065 = vmatpush1.bf16.msra.mxu0 0
    %1066 = vmatprep.subr.bf16.mxu0 0
    %1067 = vmatpush1.bf16.msra.mxu0 0
    %1068 = vmatprep.subr.bf16.mxu0 0
    %1069 = vmatpush1.bf16.msra.mxu0 0
    %1070 = vmatprep.subr.bf16.mxu0 0
    %1071 = vmatpush1.bf16.msra.mxu0 0
    %1072 = vmatprep.subr.bf16.mxu0 0
    %1073 = vmatpush1.bf16.msra.mxu0 0
    %1074 = vmatprep.subr.bf16.mxu0 0
    %1075 = vmatpush1.bf16.msra.mxu0 0
    %1076 = vmatprep.subr.bf16.mxu0 0
    %1077 = vmatpush1.bf16.msra.mxu0 0
    %1078 = vmatprep.subr.bf16.mxu0 0
    %1079 = vmatpush1.bf16.msra.mxu0 0
    %1080 = vmatprep.subr.bf16.mxu0 0
    %1081 = vmatpush1.bf16.msra.mxu0 0
    %1082 = vmatprep.subr.bf16.mxu0 0
    %1083 = vmatpush1.bf16.msra.mxu0 0
    %1084 = vmatprep.subr.bf16.mxu0 0
    %1085 = vmatpush1.bf16.msra.mxu0 0
    %1086 = vmatprep.subr.bf16.mxu0 0
    %1087 = vmatpush1.bf16.msra.mxu0 0
    %1088 = vmatprep.subr.bf16.mxu0 0
    %1089 = vmatpush1.bf16.msra.mxu0 0
    %1090 = vmatprep.subr.bf16.mxu0 0
    %1091 = vmatpush1.bf16.msra.mxu0 0
    %1092 = vmatprep.subr.bf16.mxu0 0
    %1093 = vmatpush1.bf16.msra.mxu0 0
    %1094 = vmatprep.mubr.bf16.mxu0 0
    %1095 = vmatmul.mubr.bf16.gmra.mrb[0].mxu0 %v1060
    %v1096 = vpop.f32.mrb[0].mxu0
    %v1097 = vadd.f32 0.0, %v1096
    %v1098 = vpop.f32.mrb[0].mxu0
    %v1099 = vpop.f32.mrb[0].mxu0
    %v1100 = vadd.f32 0.0, %v1099
    %v1101 = vpop.f32.mrb[0].mxu0
    %1102 = vdwg.mxu0
    %v1103 = vpack.c.bf16 %v968, %v965
    %v1104 = vpack.c.bf16 %v1012, %v1009
    %v1105 = vpack.c.bf16 %v1056, %v1053
    %v1106 = vpack.c.bf16 %v1100, %v1097
    %v1107 = vld [vmem:[%s7] sm:$0xf]
    %v1108 = vld [vmem:[%s7 + $0x4] sm:$0xf]
    %v1109 = vld [vmem:[%s7 + $0x8] sm:$0xf]
    %v1110 = vld [vmem:[%s7 + $0xc] sm:$0xf]
    %1112 = vrot.lane.b32.xlu0 %v632, 96
    %v1113 = vpop.permute.xlu0 %1112
    %1115 = vrot.lane.b32.xlu0 %v633, 96
    %v1116 = vpop.permute.xlu0 %1115
    %v1118 = vsel %vm645, %v1113, 0
    %v1121 = vsel %vm645, %v1116, 0
    %1123 = vmatprep.subr.bf16.mxu0 0
    %1124 = vmatpush1.bf16.xpose.msra.mxu0 %v1121
    %1125 = vmatprep.subr.bf16.mxu0 0
    %1126 = vmatpush1.bf16.xpose.msra.mxu0 0
    %1127 = vmatprep.subr.bf16.mxu0 0
    %1128 = vmatpush1.bf16.xpose.msra.mxu0 0
    %1129 = vmatprep.subr.bf16.mxu0 0
    %1130 = vmatpush1.bf16.xpose.msra.mxu0 0
    %1131 = vmatprep.subr.bf16.mxu0 0
    %1132 = vmatpush1.bf16.xpose.msra.mxu0 0
    %1133 = vmatprep.subr.bf16.mxu0 0
    %1134 = vmatpush1.bf16.xpose.msra.mxu0 0
    %1135 = vmatprep.subr.bf16.mxu0 0
    %1136 = vmatpush1.bf16.xpose.msra.mxu0 0
    %1137 = vmatprep.subr.bf16.mxu0 0
    %1138 = vmatpush1.bf16.xpose.msra.mxu0 0
    %1139 = vmatprep.subr.bf16.mxu0 0
    %1140 = vmatpush1.bf16.xpose.msra.mxu0 0
    %1141 = vmatprep.subr.bf16.mxu0 0
    %1142 = vmatpush1.bf16.xpose.msra.mxu0 0
    %1143 = vmatprep.subr.bf16.mxu0 0
    %1144 = vmatpush1.bf16.xpose.msra.mxu0 0
    %1145 = vmatprep.subr.bf16.mxu0 0
    %1146 = vmatpush1.bf16.xpose.msra.mxu0 0
    %1147 = vmatprep.subr.bf16.mxu0 0
    %1148 = vmatpush1.bf16.xpose.msra.mxu0 0
    %1149 = vmatprep.subr.bf16.mxu0 0
    %1150 = vmatpush1.bf16.xpose.msra.mxu0 0
    %1151 = vmatprep.subr.bf16.mxu0 0
    %1152 = vmatpush1.bf16.xpose.msra.mxu0 0
    %1153 = vmatprep.subr.bf16.mxu0 0
    %1154 = vmatpush1.bf16.xpose.msra.mxu0 0
    %1155 = vmatprep.mubr.bf16.mxu0 0
    %1156 = vmatmul.mubr.bf16.gmra.mrb[0].mxu0 %v1118
    %v1157 = vpop.f32.mrb[0].mxu0
    %v1158 = vadd.f32 0.0, %v1157
    %v1159 = vpop.f32.mrb[0].mxu0
    %v1160 = vpop.f32.mrb[0].mxu0
    %v1161 = vadd.f32 0.0, %v1160
    %v1162 = vpop.f32.mrb[0].mxu0
    %1163 = vdwg.mxu0
    %1165 = vrot.lane.b32.xlu0 %v634, 96
    %v1166 = vpop.permute.xlu0 %1165
    %1168 = vrot.lane.b32.xlu0 %v635, 96
    %v1169 = vpop.permute.xlu0 %1168
    %v1171 = vsel %vm645, %v1166, 0
    %v1174 = vsel %vm645, %v1169, 0
    %1176 = vmatprep.subr.bf16.mxu0 0
    %1177 = vmatpush1.bf16.xpose.msra.mxu0 %v1174
    %1178 = vmatprep.subr.bf16.mxu0 0
    %1179 = vmatpush1.bf16.xpose.msra.mxu0 0
    %1180 = vmatprep.subr.bf16.mxu0 0
    %1181 = vmatpush1.bf16.xpose.msra.mxu0 0
    %1182 = vmatprep.subr.bf16.mxu0 0
    %1183 = vmatpush1.bf16.xpose.msra.mxu0 0
    %1184 = vmatprep.subr.bf16.mxu0 0
    %1185 = vmatpush1.bf16.xpose.msra.mxu0 0
    %1186 = vmatprep.subr.bf16.mxu0 0
    %1187 = vmatpush1.bf16.xpose.msra.mxu0 0
    %1188 = vmatprep.subr.bf16.mxu0 0
    %1189 = vmatpush1.bf16.xpose.msra.mxu0 0
    %1190 = vmatprep.subr.bf16.mxu0 0
    %1191 = vmatpush1.bf16.xpose.msra.mxu0 0
    %1192 = vmatprep.subr.bf16.mxu0 0
    %1193 = vmatpush1.bf16.xpose.msra.mxu0 0
    %1194 = vmatprep.subr.bf16.mxu0 0
    %1195 = vmatpush1.bf16.xpose.msra.mxu0 0
    %1196 = vmatprep.subr.bf16.mxu0 0
    %1197 = vmatpush1.bf16.xpose.msra.mxu0 0
    %1198 = vmatprep.subr.bf16.mxu0 0
    %1199 = vmatpush1.bf16.xpose.msra.mxu0 0
    %1200 = vmatprep.subr.bf16.mxu0 0
    %1201 = vmatpush1.bf16.xpose.msra.mxu0 0
    %1202 = vmatprep.subr.bf16.mxu0 0
    %1203 = vmatpush1.bf16.xpose.msra.mxu0 0
    %1204 = vmatprep.subr.bf16.mxu0 0
    %1205 = vmatpush1.bf16.xpose.msra.mxu0 0
    %1206 = vmatprep.subr.bf16.mxu0 0
    %1207 = vmatpush1.bf16.xpose.msra.mxu0 0
    %1208 = vmatprep.mubr.bf16.mxu0 0
    %1209 = vmatmul.mubr.bf16.gmra.mrb[0].mxu0 %v1171
    %v1210 = vpop.f32.mrb[0].mxu0
    %v1211 = vadd.f32 0.0, %v1210
    %v1212 = vpop.f32.mrb[0].mxu0
    %v1213 = vpop.f32.mrb[0].mxu0
    %v1214 = vadd.f32 0.0, %v1213
    %v1215 = vpop.f32.mrb[0].mxu0
    %1216 = vdwg.mxu0
    %1218 = vrot.lane.b32.xlu0 %v636, 96
    %v1219 = vpop.permute.xlu0 %1218
    %1221 = vrot.lane.b32.xlu0 %v637, 96
    %v1222 = vpop.permute.xlu0 %1221
    %v1224 = vsel %vm645, %v1219, 0
    %v1227 = vsel %vm645, %v1222, 0
    %1229 = vmatprep.subr.bf16.mxu0 0
    %1230 = vmatpush1.bf16.xpose.msra.mxu0 %v1227
    %1231 = vmatprep.subr.bf16.mxu0 0
    %1232 = vmatpush1.bf16.xpose.msra.mxu0 0
    %1233 = vmatprep.subr.bf16.mxu0 0
    %1234 = vmatpush1.bf16.xpose.msra.mxu0 0
    %1235 = vmatprep.subr.bf16.mxu0 0
    %1236 = vmatpush1.bf16.xpose.msra.mxu0 0
    %1237 = vmatprep.subr.bf16.mxu0 0
    %1238 = vmatpush1.bf16.xpose.msra.mxu0 0
    %1239 = vmatprep.subr.bf16.mxu0 0
    %1240 = vmatpush1.bf16.xpose.msra.mxu0 0
    %1241 = vmatprep.subr.bf16.mxu0 0
    %1242 = vmatpush1.bf16.xpose.msra.mxu0 0
    %1243 = vmatprep.subr.bf16.mxu0 0
    %1244 = vmatpush1.bf16.xpose.msra.mxu0 0
    %1245 = vmatprep.subr.bf16.mxu0 0
    %1246 = vmatpush1.bf16.xpose.msra.mxu0 0
    %1247 = vmatprep.subr.bf16.mxu0 0
    %1248 = vmatpush1.bf16.xpose.msra.mxu0 0
    %1249 = vmatprep.subr.bf16.mxu0 0
    %1250 = vmatpush1.bf16.xpose.msra.mxu0 0
    %1251 = vmatprep.subr.bf16.mxu0 0
    %1252 = vmatpush1.bf16.xpose.msra.mxu0 0
    %1253 = vmatprep.subr.bf16.mxu0 0
    %1254 = vmatpush1.bf16.xpose.msra.mxu0 0
    %1255 = vmatprep.subr.bf16.mxu0 0
    %1256 = vmatpush1.bf16.xpose.msra.mxu0 0
    %1257 = vmatprep.subr.bf16.mxu0 0
    %1258 = vmatpush1.bf16.xpose.msra.mxu0 0
    %1259 = vmatprep.subr.bf16.mxu0 0
    %1260 = vmatpush1.bf16.xpose.msra.mxu0 0
    %1261 = vmatprep.mubr.bf16.mxu0 0
    %1262 = vmatmul.mubr.bf16.gmra.mrb[0].mxu0 %v1224
    %v1263 = vpop.f32.mrb[0].mxu0
    %v1264 = vadd.f32 0.0, %v1263
    %v1265 = vpop.f32.mrb[0].mxu0
    %v1266 = vpop.f32.mrb[0].mxu0
    %v1267 = vadd.f32 0.0, %v1266
    %v1268 = vpop.f32.mrb[0].mxu0
    %1269 = vdwg.mxu0
    %1271 = vrot.lane.b32.xlu0 %v638, 96
    %v1272 = vpop.permute.xlu0 %1271
    %1274 = vrot.lane.b32.xlu0 %v639, 96
    %v1275 = vpop.permute.xlu0 %1274
    %v1277 = vsel %vm645, %v1272, 0
    %v1280 = vsel %vm645, %v1275, 0
    %1282 = vmatprep.subr.bf16.mxu0 0
    %1283 = vmatpush1.bf16.xpose.msra.mxu0 %v1280
    %1284 = vmatprep.subr.bf16.mxu0 0
    %1285 = vmatpush1.bf16.xpose.msra.mxu0 0
    %1286 = vmatprep.subr.bf16.mxu0 0
    %1287 = vmatpush1.bf16.xpose.msra.mxu0 0
    %1288 = vmatprep.subr.bf16.mxu0 0
    %1289 = vmatpush1.bf16.xpose.msra.mxu0 0
    %1290 = vmatprep.subr.bf16.mxu0 0
    %1291 = vmatpush1.bf16.xpose.msra.mxu0 0
    %1292 = vmatprep.subr.bf16.mxu0 0
    %1293 = vmatpush1.bf16.xpose.msra.mxu0 0
    %1294 = vmatprep.subr.bf16.mxu0 0
    %1295 = vmatpush1.bf16.xpose.msra.mxu0 0
    %1296 = vmatprep.subr.bf16.mxu0 0
    %1297 = vmatpush1.bf16.xpose.msra.mxu0 0
    %1298 = vmatprep.subr.bf16.mxu0 0
    %1299 = vmatpush1.bf16.xpose.msra.mxu0 0
    %1300 = vmatprep.subr.bf16.mxu0 0
    %1301 = vmatpush1.bf16.xpose.msra.mxu0 0
    %1302 = vmatprep.subr.bf16.mxu0 0
    %1303 = vmatpush1.bf16.xpose.msra.mxu0 0
    %1304 = vmatprep.subr.bf16.mxu0 0
    %1305 = vmatpush1.bf16.xpose.msra.mxu0 0
    %1306 = vmatprep.subr.bf16.mxu0 0
    %1307 = vmatpush1.bf16.xpose.msra.mxu0 0
    %1308 = vmatprep.subr.bf16.mxu0 0
    %1309 = vmatpush1.bf16.xpose.msra.mxu0 0
    %1310 = vmatprep.subr.bf16.mxu0 0
    %1311 = vmatpush1.bf16.xpose.msra.mxu0 0
    %1312 = vmatprep.subr.bf16.mxu0 0
    %1313 = vmatpush1.bf16.xpose.msra.mxu0 0
    %1314 = vmatprep.mubr.bf16.mxu0 0
    %1315 = vmatmul.mubr.bf16.gmra.mrb[0].mxu0 %v1277
    %v1316 = vpop.f32.mrb[0].mxu0
    %v1317 = vadd.f32 0.0, %v1316
    %v1318 = vpop.f32.mrb[0].mxu0
    %v1319 = vpop.f32.mrb[0].mxu0
    %v1320 = vadd.f32 0.0, %v1319
    %v1321 = vpop.f32.mrb[0].mxu0
    %1322 = vdwg.mxu0
    %v1323 = vsel %vm834, %v1158, -inf
    %1324 = vmax.xlane.f32.xlu0 %v1323
    %v1325 = vpop.xlane.xlu0 %1324
    %v1326 = vsel %vm834, %v1161, -inf
    %1327 = vmax.xlane.f32.xlu0 %v1326
    %v1328 = vpop.xlane.xlu0 %1327
    %v1329 = vsel %vm834, %v1211, -inf
    %1330 = vmax.xlane.f32.xlu0 %v1329
    %v1331 = vpop.xlane.xlu0 %1330
    %v1332 = vsel %vm834, %v1214, -inf
    %1333 = vmax.xlane.f32.xlu0 %v1332
    %v1334 = vpop.xlane.xlu0 %1333
    %v1335 = vsel %vm834, %v1264, -inf
    %1336 = vmax.xlane.f32.xlu0 %v1335
    %v1337 = vpop.xlane.xlu0 %1336
    %v1338 = vsel %vm834, %v1267, -inf
    %1339 = vmax.xlane.f32.xlu0 %v1338
    %v1340 = vpop.xlane.xlu0 %1339
    %v1341 = vsel %vm834, %v1317, -inf
    %1342 = vmax.xlane.f32.xlu0 %v1341
    %v1343 = vpop.xlane.xlu0 %1342
    %v1344 = vsel %vm834, %v1320, -inf
    %1345 = vmax.xlane.f32.xlu0 %v1344
    %v1346 = vpop.xlane.xlu0 %1345
    %v1347 = vsub.f32 %v1158, %v1325
    %v1348 = vsub.f32 %v1161, %v1328
    %v1349 = vsub.f32 %v1211, %v1331
    %v1350 = vsub.f32 %v1214, %v1334
    %v1351 = vsub.f32 %v1264, %v1337
    %v1352 = vsub.f32 %v1267, %v1340
    %v1353 = vsub.f32 %v1317, %v1343
    %v1354 = vsub.f32 %v1320, %v1346
    %v1355 = vmul.f32 %v1347, 1.442695
    %v1356 = vpow.pop %v1355
    %v1357 = vmul.f32 %v1348, 1.442695
    %v1358 = vpow.pop %v1357
    %v1359 = vmul.f32 %v1349, 1.442695
    %v1360 = vpow.pop %v1359
    %v1361 = vmul.f32 %v1350, 1.442695
    %v1362 = vpow.pop %v1361
    %v1363 = vmul.f32 %v1351, 1.442695
    %v1364 = vpow.pop %v1363
    %v1365 = vmul.f32 %v1352, 1.442695
    %v1366 = vpow.pop %v1365
    %v1367 = vmul.f32 %v1353, 1.442695
    %v1368 = vpow.pop %v1367
    %v1369 = vmul.f32 %v1354, 1.442695
    %v1370 = vpow.pop %v1369
    %v1371 = vsel %vm834, %v1356, 0.0
    %1372 = vadd.xlane.f32.xlu0 %v1371
    %v1373 = vpop.xlane.xlu0 %1372
    %v1374 = vsel %vm834, %v1358, 0.0
    %1375 = vadd.xlane.f32.xlu0 %v1374
    %v1376 = vpop.xlane.xlu0 %1375
    %v1377 = vsel %vm834, %v1360, 0.0
    %1378 = vadd.xlane.f32.xlu0 %v1377
    %v1379 = vpop.xlane.xlu0 %1378
    %v1380 = vsel %vm834, %v1362, 0.0
    %1381 = vadd.xlane.f32.xlu0 %v1380
    %v1382 = vpop.xlane.xlu0 %1381
    %v1383 = vsel %vm834, %v1364, 0.0
    %1384 = vadd.xlane.f32.xlu0 %v1383
    %v1385 = vpop.xlane.xlu0 %1384
    %v1386 = vsel %vm834, %v1366, 0.0
    %1387 = vadd.xlane.f32.xlu0 %v1386
    %v1388 = vpop.xlane.xlu0 %1387
    %v1389 = vsel %vm834, %v1368, 0.0
    %1390 = vadd.xlane.f32.xlu0 %v1389
    %v1391 = vpop.xlane.xlu0 %1390
    %v1392 = vsel %vm834, %v1370, 0.0
    %1393 = vadd.xlane.f32.xlu0 %v1392
    %v1394 = vpop.xlane.xlu0 %1393
    %v1395 = vrcp.pop %v1373
    %v1396 = vrcp.pop %v1376
    %v1397 = vrcp.pop %v1379
    %v1398 = vrcp.pop %v1382
    %v1399 = vrcp.pop %v1385
    %v1400 = vrcp.pop %v1388
    %v1401 = vrcp.pop %v1391
    %v1402 = vrcp.pop %v1394
    %v1403 = vmul.f32 %v1356, %v1395
    %v1404 = vmul.f32 %v1358, %v1396
    %v1405 = vmul.f32 %v1360, %v1397
    %v1406 = vmul.f32 %v1362, %v1398
    %v1407 = vmul.f32 %v1364, %v1399
    %v1408 = vmul.f32 %v1366, %v1400
    %v1409 = vmul.f32 %v1368, %v1401
    %v1410 = vmul.f32 %v1370, %v1402
    %v1411 = vpack.c.bf16 %v1404, %v1403
    %v1412 = vpack.c.bf16 %v1406, %v1405
    %v1413 = vpack.c.bf16 %v1408, %v1407
    %v1414 = vpack.c.bf16 %v1410, %v1409
    %1416 = vrot.lane.b32.xlu0 %v640, 96
    %v1417 = vpop.permute.xlu0 %1416
    %v1420 = vsel %vm834, %v1411, 0
    %1422 = vmatprep.subr.bf16.mxu0 0
    %1423 = vmatpush1.bf16.msra.mxu0 %v1417
    %1424 = vmatprep.subr.bf16.mxu0 0
    %1425 = vmatpush1.bf16.msra.mxu0 0
    %1426 = vmatprep.subr.bf16.mxu0 0
    %1427 = vmatpush1.bf16.msra.mxu0 0
    %1428 = vmatprep.subr.bf16.mxu0 0
    %1429 = vmatpush1.bf16.msra.mxu0 0
    %1430 = vmatprep.subr.bf16.mxu0 0
    %1431 = vmatpush1.bf16.msra.mxu0 0
    %1432 = vmatprep.subr.bf16.mxu0 0
    %1433 = vmatpush1.bf16.msra.mxu0 0
    %1434 = vmatprep.subr.bf16.mxu0 0
    %1435 = vmatpush1.bf16.msra.mxu0 0
    %1436 = vmatprep.subr.bf16.mxu0 0
    %1437 = vmatpush1.bf16.msra.mxu0 0
    %1438 = vmatprep.subr.bf16.mxu0 0
    %1439 = vmatpush1.bf16.msra.mxu0 0
    %1440 = vmatprep.subr.bf16.mxu0 0
    %1441 = vmatpush1.bf16.msra.mxu0 0
    %1442 = vmatprep.subr.bf16.mxu0 0
    %1443 = vmatpush1.bf16.msra.mxu0 0
    %1444 = vmatprep.subr.bf16.mxu0 0
    %1445 = vmatpush1.bf16.msra.mxu0 0
    %1446 = vmatprep.subr.bf16.mxu0 0
    %1447 = vmatpush1.bf16.msra.mxu0 0
    %1448 = vmatprep.subr.bf16.mxu0 0
    %1449 = vmatpush1.bf16.msra.mxu0 0
    %1450 = vmatprep.subr.bf16.mxu0 0
    %1451 = vmatpush1.bf16.msra.mxu0 0
    %1452 = vmatprep.subr.bf16.mxu0 0
    %1453 = vmatpush1.bf16.msra.mxu0 0
    %1454 = vmatprep.mubr.bf16.mxu0 0
    %1455 = vmatmul.mubr.bf16.gmra.mrb[0].mxu0 %v1420
    %v1456 = vpop.f32.mrb[0].mxu0
    %v1457 = vadd.f32 0.0, %v1456
    %v1458 = vpop.f32.mrb[0].mxu0
    %v1459 = vpop.f32.mrb[0].mxu0
    %v1460 = vadd.f32 0.0, %v1459
    %v1461 = vpop.f32.mrb[0].mxu0
    %1462 = vdwg.mxu0
    %1464 = vrot.lane.b32.xlu0 %v641, 96
    %v1465 = vpop.permute.xlu0 %1464
    %v1468 = vsel %vm834, %v1412, 0
    %1470 = vmatprep.subr.bf16.mxu0 0
    %1471 = vmatpush1.bf16.msra.mxu0 %v1465
    %1472 = vmatprep.subr.bf16.mxu0 0
    %1473 = vmatpush1.bf16.msra.mxu0 0
    %1474 = vmatprep.subr.bf16.mxu0 0
    %1475 = vmatpush1.bf16.msra.mxu0 0
    %1476 = vmatprep.subr.bf16.mxu0 0
    %1477 = vmatpush1.bf16.msra.mxu0 0
    %1478 = vmatprep.subr.bf16.mxu0 0
    %1479 = vmatpush1.bf16.msra.mxu0 0
    %1480 = vmatprep.subr.bf16.mxu0 0
    %1481 = vmatpush1.bf16.msra.mxu0 0
    %1482 = vmatprep.subr.bf16.mxu0 0
    %1483 = vmatpush1.bf16.msra.mxu0 0
    %1484 = vmatprep.subr.bf16.mxu0 0
    %1485 = vmatpush1.bf16.msra.mxu0 0
    %1486 = vmatprep.subr.bf16.mxu0 0
    %1487 = vmatpush1.bf16.msra.mxu0 0
    %1488 = vmatprep.subr.bf16.mxu0 0
    %1489 = vmatpush1.bf16.msra.mxu0 0
    %1490 = vmatprep.subr.bf16.mxu0 0
    %1491 = vmatpush1.bf16.msra.mxu0 0
    %1492 = vmatprep.subr.bf16.mxu0 0
    %1493 = vmatpush1.bf16.msra.mxu0 0
    %1494 = vmatprep.subr.bf16.mxu0 0
    %1495 = vmatpush1.bf16.msra.mxu0 0
    %1496 = vmatprep.subr.bf16.mxu0 0
    %1497 = vmatpush1.bf16.msra.mxu0 0
    %1498 = vmatprep.subr.bf16.mxu0 0
    %1499 = vmatpush1.bf16.msra.mxu0 0
    %1500 = vmatprep.subr.bf16.mxu0 0
    %1501 = vmatpush1.bf16.msra.mxu0 0
    %1502 = vmatprep.mubr.bf16.mxu0 0
    %1503 = vmatmul.mubr.bf16.gmra.mrb[0].mxu0 %v1468
    %v1504 = vpop.f32.mrb[0].mxu0
    %v1505 = vadd.f32 0.0, %v1504
    %v1506 = vpop.f32.mrb[0].mxu0
    %v1507 = vpop.f32.mrb[0].mxu0
    %v1508 = vadd.f32 0.0, %v1507
    %v1509 = vpop.f32.mrb[0].mxu0
    %1510 = vdwg.mxu0
    %1512 = vrot.lane.b32.xlu0 %v642, 96
    %v1513 = vpop.permute.xlu0 %1512
    %v1516 = vsel %vm834, %v1413, 0
    %1518 = vmatprep.subr.bf16.mxu0 0
    %1519 = vmatpush1.bf16.msra.mxu0 %v1513
    %1520 = vmatprep.subr.bf16.mxu0 0
    %1521 = vmatpush1.bf16.msra.mxu0 0
    %1522 = vmatprep.subr.bf16.mxu0 0
    %1523 = vmatpush1.bf16.msra.mxu0 0
    %1524 = vmatprep.subr.bf16.mxu0 0
    %1525 = vmatpush1.bf16.msra.mxu0 0
    %1526 = vmatprep.subr.bf16.mxu0 0
    %1527 = vmatpush1.bf16.msra.mxu0 0
    %1528 = vmatprep.subr.bf16.mxu0 0
    %1529 = vmatpush1.bf16.msra.mxu0 0
    %1530 = vmatprep.subr.bf16.mxu0 0
    %1531 = vmatpush1.bf16.msra.mxu0 0
    %1532 = vmatprep.subr.bf16.mxu0 0
    %1533 = vmatpush1.bf16.msra.mxu0 0
    %1534 = vmatprep.subr.bf16.mxu0 0
    %1535 = vmatpush1.bf16.msra.mxu0 0
    %1536 = vmatprep.subr.bf16.mxu0 0
    %1537 = vmatpush1.bf16.msra.mxu0 0
    %1538 = vmatprep.subr.bf16.mxu0 0
    %1539 = vmatpush1.bf16.msra.mxu0 0
    %1540 = vmatprep.subr.bf16.mxu0 0
    %1541 = vmatpush1.bf16.msra.mxu0 0
    %1542 = vmatprep.subr.bf16.mxu0 0
    %1543 = vmatpush1.bf16.msra.mxu0 0
    %1544 = vmatprep.subr.bf16.mxu0 0
    %1545 = vmatpush1.bf16.msra.mxu0 0
    %1546 = vmatprep.subr.bf16.mxu0 0
    %1547 = vmatpush1.bf16.msra.mxu0 0
    %1548 = vmatprep.subr.bf16.mxu0 0
    %1549 = vmatpush1.bf16.msra.mxu0 0
    %1550 = vmatprep.mubr.bf16.mxu0 0
    %1551 = vmatmul.mubr.bf16.gmra.mrb[0].mxu0 %v1516
    %v1552 = vpop.f32.mrb[0].mxu0
    %v1553 = vadd.f32 0.0, %v1552
    %v1554 = vpop.f32.mrb[0].mxu0
    %v1555 = vpop.f32.mrb[0].mxu0
    %v1556 = vadd.f32 0.0, %v1555
    %v1557 = vpop.f32.mrb[0].mxu0
    %1558 = vdwg.mxu0
    %1560 = vrot.lane.b32.xlu0 %v643, 96
    %v1561 = vpop.permute.xlu0 %1560
    %v1564 = vsel %vm834, %v1414, 0
    %1566 = vmatprep.subr.bf16.mxu0 0
    %1567 = vmatpush1.bf16.msra.mxu0 %v1561
    %1568 = vmatprep.subr.bf16.mxu0 0
    %1569 = vmatpush1.bf16.msra.mxu0 0
    %1570 = vmatprep.subr.bf16.mxu0 0
    %1571 = vmatpush1.bf16.msra.mxu0 0
    %1572 = vmatprep.subr.bf16.mxu0 0
    %1573 = vmatpush1.bf16.msra.mxu0 0
    %1574 = vmatprep.subr.bf16.mxu0 0
    %1575 = vmatpush1.bf16.msra.mxu0 0
    %1576 = vmatprep.subr.bf16.mxu0 0
    %1577 = vmatpush1.bf16.msra.mxu0 0
    %1578 = vmatprep.subr.bf16.mxu0 0
    %1579 = vmatpush1.bf16.msra.mxu0 0
    %1580 = vmatprep.subr.bf16.mxu0 0
    %1581 = vmatpush1.bf16.msra.mxu0 0
    %1582 = vmatprep.subr.bf16.mxu0 0
    %1583 = vmatpush1.bf16.msra.mxu0 0
    %1584 = vmatprep.subr.bf16.mxu0 0
    %1585 = vmatpush1.bf16.msra.mxu0 0
    %1586 = vmatprep.subr.bf16.mxu0 0
    %1587 = vmatpush1.bf16.msra.mxu0 0
    %1588 = vmatprep.subr.bf16.mxu0 0
    %1589 = vmatpush1.bf16.msra.mxu0 0
    %1590 = vmatprep.subr.bf16.mxu0 0
    %1591 = vmatpush1.bf16.msra.mxu0 0
    %1592 = vmatprep.subr.bf16.mxu0 0
    %1593 = vmatpush1.bf16.msra.mxu0 0
    %1594 = vmatprep.subr.bf16.mxu0 0
    %1595 = vmatpush1.bf16.msra.mxu0 0
    %1596 = vmatprep.subr.bf16.mxu0 0
    %1597 = vmatpush1.bf16.msra.mxu0 0
    %1598 = vmatprep.mubr.bf16.mxu0 0
    %1599 = vmatmul.mubr.bf16.gmra.mrb[0].mxu0 %v1564
    %v1600 = vpop.f32.mrb[0].mxu0
    %v1601 = vadd.f32 0.0, %v1600
    %v1602 = vpop.f32.mrb[0].mxu0
    %v1603 = vpop.f32.mrb[0].mxu0
    %v1604 = vadd.f32 0.0, %v1603
    %v1605 = vpop.f32.mrb[0].mxu0
    %1606 = vdwg.mxu0
    %v1607 = vpack.c.bf16 %v1460, %v1457
    %v1608 = vpack.c.bf16 %v1508, %v1505
    %v1609 = vpack.c.bf16 %v1556, %v1553
    %v1610 = vpack.c.bf16 %v1604, %v1601
    %v1611 = vld [vmem:[%s7 + $0x10] sm:$0xf]
    %v1612 = vld [vmem:[%s7 + $0x14] sm:$0xf]
    %v1613 = vld [vmem:[%s7 + $0x18] sm:$0xf]
    %v1614 = vld [vmem:[%s7 + $0x1c] sm:$0xf]
    %v1619 = vunpack.c.l.b16 %v1611
    %v1620 = vunpack.c.l.b16 %v1612
    %v1621 = vunpack.c.l.b16 %v1613
    %v1622 = vunpack.c.l.b16 %v1614
    %v1623 = vpack.c.b16 %v1620, %v1619
    %v1624 = vpack.c.b16 %v1622, %v1621
    %v1628 = vsel %vm645, %v1607, 0
    %v1631 = vsel %vm645, %v1608, 0
    %v1634 = vsel %vm645, %v1609, 0
    %v1637 = vsel %vm645, %v1610, 0
    %1639 = vmatprep.subr.bf16.mxu0 0
    %1640 = vmatpush1.bf16.msra.mxu0 %v1623
    %1641 = vmatprep.subr.bf16.mxu0 0
    %1642 = vmatpush1.bf16.msra.mxu0 %v1624
    %1643 = vmatprep.subr.bf16.mxu0 0
    %1644 = vmatpush1.bf16.msra.mxu0 0
    %1645 = vmatprep.subr.bf16.mxu0 0
    %1646 = vmatpush1.bf16.msra.mxu0 0
    %1647 = vmatprep.subr.bf16.mxu0 0
    %1648 = vmatpush1.bf16.msra.mxu0 0
    %1649 = vmatprep.subr.bf16.mxu0 0
    %1650 = vmatpush1.bf16.msra.mxu0 0
    %1651 = vmatprep.subr.bf16.mxu0 0
    %1652 = vmatpush1.bf16.msra.mxu0 0
    %1653 = vmatprep.subr.bf16.mxu0 0
    %1654 = vmatpush1.bf16.msra.mxu0 0
    %1655 = vmatprep.subr.bf16.mxu0 0
    %1656 = vmatpush1.bf16.msra.mxu0 0
    %1657 = vmatprep.subr.bf16.mxu0 0
    %1658 = vmatpush1.bf16.msra.mxu0 0
    %1659 = vmatprep.subr.bf16.mxu0 0
    %1660 = vmatpush1.bf16.msra.mxu0 0
    %1661 = vmatprep.subr.bf16.mxu0 0
    %1662 = vmatpush1.bf16.msra.mxu0 0
    %1663 = vmatprep.subr.bf16.mxu0 0
    %1664 = vmatpush1.bf16.msra.mxu0 0
    %1665 = vmatprep.subr.bf16.mxu0 0
    %1666 = vmatpush1.bf16.msra.mxu0 0
    %1667 = vmatprep.subr.bf16.mxu0 0
    %1668 = vmatpush1.bf16.msra.mxu0 0
    %1669 = vmatprep.subr.bf16.mxu0 0
    %1670 = vmatpush1.bf16.msra.mxu0 0
    %1671 = vmatprep.mubr.bf16.mxu0 0
    %1672 = vmatmul.mubr.bf16.gmra.mrb[0].mxu0 %v1628
    %v1673 = vpop.f32.mrb[0].mxu0
    %v1674 = vadd.f32 0.0, %v1673
    %v1675 = vpop.f32.mrb[0].mxu0
    %v1676 = vpop.f32.mrb[0].mxu0
    %v1677 = vadd.f32 0.0, %v1676
    %v1678 = vpop.f32.mrb[0].mxu0
    %1679 = vmatprep.mubr.bf16.mxu0 0
    %1680 = vmatmul.mubr.bf16.gmra.mrb[0].mxu0 %v1631
    %v1681 = vpop.f32.mrb[0].mxu0
    %v1682 = vadd.f32 0.0, %v1681
    %v1683 = vpop.f32.mrb[0].mxu0
    %v1684 = vpop.f32.mrb[0].mxu0
    %v1685 = vadd.f32 0.0, %v1684
    %v1686 = vpop.f32.mrb[0].mxu0
    %1687 = vmatprep.mubr.bf16.mxu0 0
    %1688 = vmatmul.mubr.bf16.gmra.mrb[0].mxu0 %v1634
    %v1689 = vpop.f32.mrb[0].mxu0
    %v1690 = vadd.f32 0.0, %v1689
    %v1691 = vpop.f32.mrb[0].mxu0
    %v1692 = vpop.f32.mrb[0].mxu0
    %v1693 = vadd.f32 0.0, %v1692
    %v1694 = vpop.f32.mrb[0].mxu0
    %1695 = vmatprep.mubr.bf16.mxu0 0
    %1696 = vmatmul.mubr.bf16.gmra.mrb[0].mxu0 %v1637
    %v1697 = vpop.f32.mrb[0].mxu0
    %v1698 = vadd.f32 0.0, %v1697
    %v1699 = vpop.f32.mrb[0].mxu0
    %v1700 = vpop.f32.mrb[0].mxu0
    %v1701 = vadd.f32 0.0, %v1700
    %v1702 = vpop.f32.mrb[0].mxu0
    %1703 = vdwg.mxu0
    %v1708 = vunpack.c.l.b16 %v1107
    %v1709 = vunpack.c.l.b16 %v1108
    %v1710 = vunpack.c.l.b16 %v1109
    %v1711 = vunpack.c.l.b16 %v1110
    %v1712 = vpack.c.b16 %v1709, %v1708
    %v1713 = vpack.c.b16 %v1711, %v1710
    %v1717 = vsel %vm645, %v1103, 0
    %v1720 = vsel %vm645, %v1104, 0
    %v1723 = vsel %vm645, %v1105, 0
    %v1726 = vsel %vm645, %v1106, 0
    %1728 = vmatprep.subr.bf16.mxu0 0
    %1729 = vmatpush1.bf16.msra.mxu0 %v1712
    %1730 = vmatprep.subr.bf16.mxu0 0
    %1731 = vmatpush1.bf16.msra.mxu0 %v1713
    %1732 = vmatprep.subr.bf16.mxu0 0
    %1733 = vmatpush1.bf16.msra.mxu0 0
    %1734 = vmatprep.subr.bf16.mxu0 0
    %1735 = vmatpush1.bf16.msra.mxu0 0
    %1736 = vmatprep.subr.bf16.mxu0 0
    %1737 = vmatpush1.bf16.msra.mxu0 0
    %1738 = vmatprep.subr.bf16.mxu0 0
    %1739 = vmatpush1.bf16.msra.mxu0 0
    %1740 = vmatprep.subr.bf16.mxu0 0
    %1741 = vmatpush1.bf16.msra.mxu0 0
    %1742 = vmatprep.subr.bf16.mxu0 0
    %1743 = vmatpush1.bf16.msra.mxu0 0
    %1744 = vmatprep.subr.bf16.mxu0 0
    %1745 = vmatpush1.bf16.msra.mxu0 0
    %1746 = vmatprep.subr.bf16.mxu0 0
    %1747 = vmatpush1.bf16.msra.mxu0 0
    %1748 = vmatprep.subr.bf16.mxu0 0
    %1749 = vmatpush1.bf16.msra.mxu0 0
    %1750 = vmatprep.subr.bf16.mxu0 0
    %1751 = vmatpush1.bf16.msra.mxu0 0
    %1752 = vmatprep.subr.bf16.mxu0 0
    %1753 = vmatpush1.bf16.msra.mxu0 0
    %1754 = vmatprep.subr.bf16.mxu0 0
    %1755 = vmatpush1.bf16.msra.mxu0 0
    %1756 = vmatprep.subr.bf16.mxu0 0
    %1757 = vmatpush1.bf16.msra.mxu0 0
    %1758 = vmatprep.subr.bf16.mxu0 0
    %1759 = vmatpush1.bf16.msra.mxu0 0
    %1760 = vmatprep.mubr.bf16.mxu0 0
    %1761 = vmatmul.mubr.bf16.gmra.mrb[0].mxu0 %v1717
    %v1762 = vpop.f32.mrb[0].mxu0
    %v1763 = vadd.f32 %v1674, %v1762
    %v1764 = vpop.f32.mrb[0].mxu0
    %v1765 = vpop.f32.mrb[0].mxu0
    %v1766 = vadd.f32 %v1677, %v1765
    %v1767 = vpop.f32.mrb[0].mxu0
    %1768 = vmatprep.mubr.bf16.mxu0 0
    %1769 = vmatmul.mubr.bf16.gmra.mrb[0].mxu0 %v1720
    %v1770 = vpop.f32.mrb[0].mxu0
    %v1771 = vadd.f32 %v1682, %v1770
    %v1772 = vpop.f32.mrb[0].mxu0
    %v1773 = vpop.f32.mrb[0].mxu0
    %v1774 = vadd.f32 %v1685, %v1773
    %v1775 = vpop.f32.mrb[0].mxu0
    %1776 = vmatprep.mubr.bf16.mxu0 0
    %1777 = vmatmul.mubr.bf16.gmra.mrb[0].mxu0 %v1723
    %v1778 = vpop.f32.mrb[0].mxu0
    %v1779 = vadd.f32 %v1690, %v1778
    %v1780 = vpop.f32.mrb[0].mxu0
    %v1781 = vpop.f32.mrb[0].mxu0
    %v1782 = vadd.f32 %v1693, %v1781
    %v1783 = vpop.f32.mrb[0].mxu0
    %1784 = vmatprep.mubr.bf16.mxu0 0
    %1785 = vmatmul.mubr.bf16.gmra.mrb[0].mxu0 %v1726
    %v1786 = vpop.f32.mrb[0].mxu0
    %v1787 = vadd.f32 %v1698, %v1786
    %v1788 = vpop.f32.mrb[0].mxu0
    %v1789 = vpop.f32.mrb[0].mxu0
    %v1790 = vadd.f32 %v1701, %v1789
    %v1791 = vpop.f32.mrb[0].mxu0
    %1792 = vdwg.mxu0
    %1793 = vrot.lane.b32.xlu0 %v632, 64
    %v1794 = vpop.permute.xlu0 %1793
    %1795 = vrot.lane.b32.xlu0 %v633, 64
    %v1796 = vpop.permute.xlu0 %1795
    %v1798 = vsel %vm645, %v1794, 0
    %v1801 = vsel %vm645, %v1796, 0
    %1803 = vmatprep.subr.bf16.mxu0 0
    %1804 = vmatpush1.bf16.xpose.msra.mxu0 %v1801
    %1805 = vmatprep.subr.bf16.mxu0 0
    %1806 = vmatpush1.bf16.xpose.msra.mxu0 0
    %1807 = vmatprep.subr.bf16.mxu0 0
    %1808 = vmatpush1.bf16.xpose.msra.mxu0 0
    %1809 = vmatprep.subr.bf16.mxu0 0
    %1810 = vmatpush1.bf16.xpose.msra.mxu0 0
    %1811 = vmatprep.subr.bf16.mxu0 0
    %1812 = vmatpush1.bf16.xpose.msra.mxu0 0
    %1813 = vmatprep.subr.bf16.mxu0 0
    %1814 = vmatpush1.bf16.xpose.msra.mxu0 0
    %1815 = vmatprep.subr.bf16.mxu0 0
    %1816 = vmatpush1.bf16.xpose.msra.mxu0 0
    %1817 = vmatprep.subr.bf16.mxu0 0
    %1818 = vmatpush1.bf16.xpose.msra.mxu0 0
    %1819 = vmatprep.subr.bf16.mxu0 0
    %1820 = vmatpush1.bf16.xpose.msra.mxu0 0
    %1821 = vmatprep.subr.bf16.mxu0 0
    %1822 = vmatpush1.bf16.xpose.msra.mxu0 0
    %1823 = vmatprep.subr.bf16.mxu0 0
    %1824 = vmatpush1.bf16.xpose.msra.mxu0 0
    %1825 = vmatprep.subr.bf16.mxu0 0
    %1826 = vmatpush1.bf16.xpose.msra.mxu0 0
    %1827 = vmatprep.subr.bf16.mxu0 0
    %1828 = vmatpush1.bf16.xpose.msra.mxu0 0
    %1829 = vmatprep.subr.bf16.mxu0 0
    %1830 = vmatpush1.bf16.xpose.msra.mxu0 0
    %1831 = vmatprep.subr.bf16.mxu0 0
    %1832 = vmatpush1.bf16.xpose.msra.mxu0 0
    %1833 = vmatprep.subr.bf16.mxu0 0
    %1834 = vmatpush1.bf16.xpose.msra.mxu0 0
    %1835 = vmatprep.mubr.bf16.mxu0 0
    %1836 = vmatmul.mubr.bf16.gmra.mrb[0].mxu0 %v1798
    %v1837 = vpop.f32.mrb[0].mxu0
    %v1838 = vadd.f32 0.0, %v1837
    %v1839 = vpop.f32.mrb[0].mxu0
    %v1840 = vpop.f32.mrb[0].mxu0
    %v1841 = vadd.f32 0.0, %v1840
    %v1842 = vpop.f32.mrb[0].mxu0
    %1843 = vdwg.mxu0
    %1844 = vrot.lane.b32.xlu0 %v634, 64
    %v1845 = vpop.permute.xlu0 %1844
    %1846 = vrot.lane.b32.xlu0 %v635, 64
    %v1847 = vpop.permute.xlu0 %1846
    %v1849 = vsel %vm645, %v1845, 0
    %v1852 = vsel %vm645, %v1847, 0
    %1854 = vmatprep.subr.bf16.mxu0 0
    %1855 = vmatpush1.bf16.xpose.msra.mxu0 %v1852
    %1856 = vmatprep.subr.bf16.mxu0 0
    %1857 = vmatpush1.bf16.xpose.msra.mxu0 0
    %1858 = vmatprep.subr.bf16.mxu0 0
    %1859 = vmatpush1.bf16.xpose.msra.mxu0 0
    %1860 = vmatprep.subr.bf16.mxu0 0
    %1861 = vmatpush1.bf16.xpose.msra.mxu0 0
    %1862 = vmatprep.subr.bf16.mxu0 0
    %1863 = vmatpush1.bf16.xpose.msra.mxu0 0
    %1864 = vmatprep.subr.bf16.mxu0 0
    %1865 = vmatpush1.bf16.xpose.msra.mxu0 0
    %1866 = vmatprep.subr.bf16.mxu0 0
    %1867 = vmatpush1.bf16.xpose.msra.mxu0 0
    %1868 = vmatprep.subr.bf16.mxu0 0
    %1869 = vmatpush1.bf16.xpose.msra.mxu0 0
    %1870 = vmatprep.subr.bf16.mxu0 0
    %1871 = vmatpush1.bf16.xpose.msra.mxu0 0
    %1872 = vmatprep.subr.bf16.mxu0 0
    %1873 = vmatpush1.bf16.xpose.msra.mxu0 0
    %1874 = vmatprep.subr.bf16.mxu0 0
    %1875 = vmatpush1.bf16.xpose.msra.mxu0 0
    %1876 = vmatprep.subr.bf16.mxu0 0
    %1877 = vmatpush1.bf16.xpose.msra.mxu0 0
    %1878 = vmatprep.subr.bf16.mxu0 0
    %1879 = vmatpush1.bf16.xpose.msra.mxu0 0
    %1880 = vmatprep.subr.bf16.mxu0 0
    %1881 = vmatpush1.bf16.xpose.msra.mxu0 0
    %1882 = vmatprep.subr.bf16.mxu0 0
    %1883 = vmatpush1.bf16.xpose.msra.mxu0 0
    %1884 = vmatprep.subr.bf16.mxu0 0
    %1885 = vmatpush1.bf16.xpose.msra.mxu0 0
    %1886 = vmatprep.mubr.bf16.mxu0 0
    %1887 = vmatmul.mubr.bf16.gmra.mrb[0].mxu0 %v1849
    %v1888 = vpop.f32.mrb[0].mxu0
    %v1889 = vadd.f32 0.0, %v1888
    %v1890 = vpop.f32.mrb[0].mxu0
    %v1891 = vpop.f32.mrb[0].mxu0
    %v1892 = vadd.f32 0.0, %v1891
    %v1893 = vpop.f32.mrb[0].mxu0
    %1894 = vdwg.mxu0
    %1895 = vrot.lane.b32.xlu0 %v636, 64
    %v1896 = vpop.permute.xlu0 %1895
    %1897 = vrot.lane.b32.xlu0 %v637, 64
    %v1898 = vpop.permute.xlu0 %1897
    %v1900 = vsel %vm645, %v1896, 0
    %v1903 = vsel %vm645, %v1898, 0
    %1905 = vmatprep.subr.bf16.mxu0 0
    %1906 = vmatpush1.bf16.xpose.msra.mxu0 %v1903
    %1907 = vmatprep.subr.bf16.mxu0 0
    %1908 = vmatpush1.bf16.xpose.msra.mxu0 0
    %1909 = vmatprep.subr.bf16.mxu0 0
    %1910 = vmatpush1.bf16.xpose.msra.mxu0 0
    %1911 = vmatprep.subr.bf16.mxu0 0
    %1912 = vmatpush1.bf16.xpose.msra.mxu0 0
    %1913 = vmatprep.subr.bf16.mxu0 0
    %1914 = vmatpush1.bf16.xpose.msra.mxu0 0
    %1915 = vmatprep.subr.bf16.mxu0 0
    %1916 = vmatpush1.bf16.xpose.msra.mxu0 0
    %1917 = vmatprep.subr.bf16.mxu0 0
    %1918 = vmatpush1.bf16.xpose.msra.mxu0 0
    %1919 = vmatprep.subr.bf16.mxu0 0
    %1920 = vmatpush1.bf16.xpose.msra.mxu0 0
    %1921 = vmatprep.subr.bf16.mxu0 0
    %1922 = vmatpush1.bf16.xpose.msra.mxu0 0
    %1923 = vmatprep.subr.bf16.mxu0 0
    %1924 = vmatpush1.bf16.xpose.msra.mxu0 0
    %1925 = vmatprep.subr.bf16.mxu0 0
    %1926 = vmatpush1.bf16.xpose.msra.mxu0 0
    %1927 = vmatprep.subr.bf16.mxu0 0
    %1928 = vmatpush1.bf16.xpose.msra.mxu0 0
    %1929 = vmatprep.subr.bf16.mxu0 0
    %1930 = vmatpush1.bf16.xpose.msra.mxu0 0
    %1931 = vmatprep.subr.bf16.mxu0 0
    %1932 = vmatpush1.bf16.xpose.msra.mxu0 0
    %1933 = vmatprep.subr.bf16.mxu0 0
    %1934 = vmatpush1.bf16.xpose.msra.mxu0 0
    %1935 = vmatprep.subr.bf16.mxu0 0
    %1936 = vmatpush1.bf16.xpose.msra.mxu0 0
    %1937 = vmatprep.mubr.bf16.mxu0 0
    %1938 = vmatmul.mubr.bf16.gmra.mrb[0].mxu0 %v1900
    %v1939 = vpop.f32.mrb[0].mxu0
    %v1940 = vadd.f32 0.0, %v1939
    %v1941 = vpop.f32.mrb[0].mxu0
    %v1942 = vpop.f32.mrb[0].mxu0
    %v1943 = vadd.f32 0.0, %v1942
    %v1944 = vpop.f32.mrb[0].mxu0
    %1945 = vdwg.mxu0
    %1946 = vrot.lane.b32.xlu0 %v638, 64
    %v1947 = vpop.permute.xlu0 %1946
    %1948 = vrot.lane.b32.xlu0 %v639, 64
    %v1949 = vpop.permute.xlu0 %1948
    %v1951 = vsel %vm645, %v1947, 0
    %v1954 = vsel %vm645, %v1949, 0
    %1956 = vmatprep.subr.bf16.mxu0 0
    %1957 = vmatpush1.bf16.xpose.msra.mxu0 %v1954
    %1958 = vmatprep.subr.bf16.mxu0 0
    %1959 = vmatpush1.bf16.xpose.msra.mxu0 0
    %1960 = vmatprep.subr.bf16.mxu0 0
    %1961 = vmatpush1.bf16.xpose.msra.mxu0 0
    %1962 = vmatprep.subr.bf16.mxu0 0
    %1963 = vmatpush1.bf16.xpose.msra.mxu0 0
    %1964 = vmatprep.subr.bf16.mxu0 0
    %1965 = vmatpush1.bf16.xpose.msra.mxu0 0
    %1966 = vmatprep.subr.bf16.mxu0 0
    %1967 = vmatpush1.bf16.xpose.msra.mxu0 0
    %1968 = vmatprep.subr.bf16.mxu0 0
    %1969 = vmatpush1.bf16.xpose.msra.mxu0 0
    %1970 = vmatprep.subr.bf16.mxu0 0
    %1971 = vmatpush1.bf16.xpose.msra.mxu0 0
    %1972 = vmatprep.subr.bf16.mxu0 0
    %1973 = vmatpush1.bf16.xpose.msra.mxu0 0
    %1974 = vmatprep.subr.bf16.mxu0 0
    %1975 = vmatpush1.bf16.xpose.msra.mxu0 0
    %1976 = vmatprep.subr.bf16.mxu0 0
    %1977 = vmatpush1.bf16.xpose.msra.mxu0 0
    %1978 = vmatprep.subr.bf16.mxu0 0
    %1979 = vmatpush1.bf16.xpose.msra.mxu0 0
    %1980 = vmatprep.subr.bf16.mxu0 0
    %1981 = vmatpush1.bf16.xpose.msra.mxu0 0
    %1982 = vmatprep.subr.bf16.mxu0 0
    %1983 = vmatpush1.bf16.xpose.msra.mxu0 0
    %1984 = vmatprep.subr.bf16.mxu0 0
    %1985 = vmatpush1.bf16.xpose.msra.mxu0 0
    %1986 = vmatprep.subr.bf16.mxu0 0
    %1987 = vmatpush1.bf16.xpose.msra.mxu0 0
    %1988 = vmatprep.mubr.bf16.mxu0 0
    %1989 = vmatmul.mubr.bf16.gmra.mrb[0].mxu0 %v1951
    %v1990 = vpop.f32.mrb[0].mxu0
    %v1991 = vadd.f32 0.0, %v1990
    %v1992 = vpop.f32.mrb[0].mxu0
    %v1993 = vpop.f32.mrb[0].mxu0
    %v1994 = vadd.f32 0.0, %v1993
    %v1995 = vpop.f32.mrb[0].mxu0
    %1996 = vdwg.mxu0
    %v1997 = vsel %vm834, %v1838, -inf
    %1998 = vmax.xlane.f32.xlu0 %v1997
    %v1999 = vpop.xlane.xlu0 %1998
    %v2000 = vsel %vm834, %v1841, -inf
    %2001 = vmax.xlane.f32.xlu0 %v2000
    %v2002 = vpop.xlane.xlu0 %2001
    %v2003 = vsel %vm834, %v1889, -inf
    %2004 = vmax.xlane.f32.xlu0 %v2003
    %v2005 = vpop.xlane.xlu0 %2004
    %v2006 = vsel %vm834, %v1892, -inf
    %2007 = vmax.xlane.f32.xlu0 %v2006
    %v2008 = vpop.xlane.xlu0 %2007
    %v2009 = vsel %vm834, %v1940, -inf
    %2010 = vmax.xlane.f32.xlu0 %v2009
    %v2011 = vpop.xlane.xlu0 %2010
    %v2012 = vsel %vm834, %v1943, -inf
    %2013 = vmax.xlane.f32.xlu0 %v2012
    %v2014 = vpop.xlane.xlu0 %2013
    %v2015 = vsel %vm834, %v1991, -inf
    %2016 = vmax.xlane.f32.xlu0 %v2015
    %v2017 = vpop.xlane.xlu0 %2016
    %v2018 = vsel %vm834, %v1994, -inf
    %2019 = vmax.xlane.f32.xlu0 %v2018
    %v2020 = vpop.xlane.xlu0 %2019
    %v2021 = vsub.f32 %v1838, %v1999
    %v2022 = vsub.f32 %v1841, %v2002
    %v2023 = vsub.f32 %v1889, %v2005
    %v2024 = vsub.f32 %v1892, %v2008
    %v2025 = vsub.f32 %v1940, %v2011
    %v2026 = vsub.f32 %v1943, %v2014
    %v2027 = vsub.f32 %v1991, %v2017
    %v2028 = vsub.f32 %v1994, %v2020
    %v2029 = vmul.f32 %v2021, 1.442695
    %v2030 = vpow.pop %v2029
    %v2031 = vmul.f32 %v2022, 1.442695
    %v2032 = vpow.pop %v2031
    %v2033 = vmul.f32 %v2023, 1.442695
    %v2034 = vpow.pop %v2033
    %v2035 = vmul.f32 %v2024, 1.442695
    %v2036 = vpow.pop %v2035
    %v2037 = vmul.f32 %v2025, 1.442695
    %v2038 = vpow.pop %v2037
    %v2039 = vmul.f32 %v2026, 1.442695
    %v2040 = vpow.pop %v2039
    %v2041 = vmul.f32 %v2027, 1.442695
    %v2042 = vpow.pop %v2041
    %v2043 = vmul.f32 %v2028, 1.442695
    %v2044 = vpow.pop %v2043
    %v2045 = vsel %vm834, %v2030, 0.0
    %2046 = vadd.xlane.f32.xlu0 %v2045
    %v2047 = vpop.xlane.xlu0 %2046
    %v2048 = vsel %vm834, %v2032, 0.0
    %2049 = vadd.xlane.f32.xlu0 %v2048
    %v2050 = vpop.xlane.xlu0 %2049
    %v2051 = vsel %vm834, %v2034, 0.0
    %2052 = vadd.xlane.f32.xlu0 %v2051
    %v2053 = vpop.xlane.xlu0 %2052
    %v2054 = vsel %vm834, %v2036, 0.0
    %2055 = vadd.xlane.f32.xlu0 %v2054
    %v2056 = vpop.xlane.xlu0 %2055
    %v2057 = vsel %vm834, %v2038, 0.0
    %2058 = vadd.xlane.f32.xlu0 %v2057
    %v2059 = vpop.xlane.xlu0 %2058
    %v2060 = vsel %vm834, %v2040, 0.0
    %2061 = vadd.xlane.f32.xlu0 %v2060
    %v2062 = vpop.xlane.xlu0 %2061
    %v2063 = vsel %vm834, %v2042, 0.0
    %2064 = vadd.xlane.f32.xlu0 %v2063
    %v2065 = vpop.xlane.xlu0 %2064
    %v2066 = vsel %vm834, %v2044, 0.0
    %2067 = vadd.xlane.f32.xlu0 %v2066
    %v2068 = vpop.xlane.xlu0 %2067
    %v2069 = vrcp.pop %v2047
    %v2070 = vrcp.pop %v2050
    %v2071 = vrcp.pop %v2053
    %v2072 = vrcp.pop %v2056
    %v2073 = vrcp.pop %v2059
    %v2074 = vrcp.pop %v2062
    %v2075 = vrcp.pop %v2065
    %v2076 = vrcp.pop %v2068
    %v2077 = vmul.f32 %v2030, %v2069
    %v2078 = vmul.f32 %v2032, %v2070
    %v2079 = vmul.f32 %v2034, %v2071
    %v2080 = vmul.f32 %v2036, %v2072
    %v2081 = vmul.f32 %v2038, %v2073
    %v2082 = vmul.f32 %v2040, %v2074
    %v2083 = vmul.f32 %v2042, %v2075
    %v2084 = vmul.f32 %v2044, %v2076
    %v2085 = vpack.c.bf16 %v2078, %v2077
    %v2086 = vpack.c.bf16 %v2080, %v2079
    %v2087 = vpack.c.bf16 %v2082, %v2081
    %v2088 = vpack.c.bf16 %v2084, %v2083
    %2089 = vrot.lane.b32.xlu0 %v640, 64
    %v2090 = vpop.permute.xlu0 %2089
    %v2093 = vsel %vm834, %v2085, 0
    %2095 = vmatprep.subr.bf16.mxu0 0
    %2096 = vmatpush1.bf16.msra.mxu0 %v2090
    %2097 = vmatprep.subr.bf16.mxu0 0
    %2098 = vmatpush1.bf16.msra.mxu0 0
    %2099 = vmatprep.subr.bf16.mxu0 0
    %2100 = vmatpush1.bf16.msra.mxu0 0
    %2101 = vmatprep.subr.bf16.mxu0 0
    %2102 = vmatpush1.bf16.msra.mxu0 0
    %2103 = vmatprep.subr.bf16.mxu0 0
    %2104 = vmatpush1.bf16.msra.mxu0 0
    %2105 = vmatprep.subr.bf16.mxu0 0
    %2106 = vmatpush1.bf16.msra.mxu0 0
    %2107 = vmatprep.subr.bf16.mxu0 0
    %2108 = vmatpush1.bf16.msra.mxu0 0
    %2109 = vmatprep.subr.bf16.mxu0 0
    %2110 = vmatpush1.bf16.msra.mxu0 0
    %2111 = vmatprep.subr.bf16.mxu0 0
    %2112 = vmatpush1.bf16.msra.mxu0 0
    %2113 = vmatprep.subr.bf16.mxu0 0
    %2114 = vmatpush1.bf16.msra.mxu0 0
    %2115 = vmatprep.subr.bf16.mxu0 0
    %2116 = vmatpush1.bf16.msra.mxu0 0
    %2117 = vmatprep.subr.bf16.mxu0 0
    %2118 = vmatpush1.bf16.msra.mxu0 0
    %2119 = vmatprep.subr.bf16.mxu0 0
    %2120 = vmatpush1.bf16.msra.mxu0 0
    %2121 = vmatprep.subr.bf16.mxu0 0
    %2122 = vmatpush1.bf16.msra.mxu0 0
    %2123 = vmatprep.subr.bf16.mxu0 0
    %2124 = vmatpush1.bf16.msra.mxu0 0
    %2125 = vmatprep.subr.bf16.mxu0 0
    %2126 = vmatpush1.bf16.msra.mxu0 0
    %2127 = vmatprep.mubr.bf16.mxu0 0
    %2128 = vmatmul.mubr.bf16.gmra.mrb[0].mxu0 %v2093
    %v2129 = vpop.f32.mrb[0].mxu0
    %v2130 = vadd.f32 0.0, %v2129
    %v2131 = vpop.f32.mrb[0].mxu0
    %v2132 = vpop.f32.mrb[0].mxu0
    %v2133 = vadd.f32 0.0, %v2132
    %v2134 = vpop.f32.mrb[0].mxu0
    %2135 = vdwg.mxu0
    %2136 = vrot.lane.b32.xlu0 %v641, 64
    %v2137 = vpop.permute.xlu0 %2136
    %v2140 = vsel %vm834, %v2086, 0
    %2142 = vmatprep.subr.bf16.mxu0 0
    %2143 = vmatpush1.bf16.msra.mxu0 %v2137
    %2144 = vmatprep.subr.bf16.mxu0 0
    %2145 = vmatpush1.bf16.msra.mxu0 0
    %2146 = vmatprep.subr.bf16.mxu0 0
    %2147 = vmatpush1.bf16.msra.mxu0 0
    %2148 = vmatprep.subr.bf16.mxu0 0
    %2149 = vmatpush1.bf16.msra.mxu0 0
    %2150 = vmatprep.subr.bf16.mxu0 0
    %2151 = vmatpush1.bf16.msra.mxu0 0
    %2152 = vmatprep.subr.bf16.mxu0 0
    %2153 = vmatpush1.bf16.msra.mxu0 0
    %2154 = vmatprep.subr.bf16.mxu0 0
    %2155 = vmatpush1.bf16.msra.mxu0 0
    %2156 = vmatprep.subr.bf16.mxu0 0
    %2157 = vmatpush1.bf16.msra.mxu0 0
    %2158 = vmatprep.subr.bf16.mxu0 0
    %2159 = vmatpush1.bf16.msra.mxu0 0
    %2160 = vmatprep.subr.bf16.mxu0 0
    %2161 = vmatpush1.bf16.msra.mxu0 0
    %2162 = vmatprep.subr.bf16.mxu0 0
    %2163 = vmatpush1.bf16.msra.mxu0 0
    %2164 = vmatprep.subr.bf16.mxu0 0
    %2165 = vmatpush1.bf16.msra.mxu0 0
    %2166 = vmatprep.subr.bf16.mxu0 0
    %2167 = vmatpush1.bf16.msra.mxu0 0
    %2168 = vmatprep.subr.bf16.mxu0 0
    %2169 = vmatpush1.bf16.msra.mxu0 0
    %2170 = vmatprep.subr.bf16.mxu0 0
    %2171 = vmatpush1.bf16.msra.mxu0 0
    %2172 = vmatprep.subr.bf16.mxu0 0
    %2173 = vmatpush1.bf16.msra.mxu0 0
    %2174 = vmatprep.mubr.bf16.mxu0 0
    %2175 = vmatmul.mubr.bf16.gmra.mrb[0].mxu0 %v2140
    %v2176 = vpop.f32.mrb[0].mxu0
    %v2177 = vadd.f32 0.0, %v2176
    %v2178 = vpop.f32.mrb[0].mxu0
    %v2179 = vpop.f32.mrb[0].mxu0
    %v2180 = vadd.f32 0.0, %v2179
    %v2181 = vpop.f32.mrb[0].mxu0
    %2182 = vdwg.mxu0
    %2183 = vrot.lane.b32.xlu0 %v642, 64
    %v2184 = vpop.permute.xlu0 %2183
    %v2187 = vsel %vm834, %v2087, 0
    %2189 = vmatprep.subr.bf16.mxu0 0
    %2190 = vmatpush1.bf16.msra.mxu0 %v2184
    %2191 = vmatprep.subr.bf16.mxu0 0
    %2192 = vmatpush1.bf16.msra.mxu0 0
    %2193 = vmatprep.subr.bf16.mxu0 0
    %2194 = vmatpush1.bf16.msra.mxu0 0
    %2195 = vmatprep.subr.bf16.mxu0 0
    %2196 = vmatpush1.bf16.msra.mxu0 0
    %2197 = vmatprep.subr.bf16.mxu0 0
    %2198 = vmatpush1.bf16.msra.mxu0 0
    %2199 = vmatprep.subr.bf16.mxu0 0
    %2200 = vmatpush1.bf16.msra.mxu0 0
    %2201 = vmatprep.subr.bf16.mxu0 0
    %2202 = vmatpush1.bf16.msra.mxu0 0
    %2203 = vmatprep.subr.bf16.mxu0 0
    %2204 = vmatpush1.bf16.msra.mxu0 0
    %2205 = vmatprep.subr.bf16.mxu0 0
    %2206 = vmatpush1.bf16.msra.mxu0 0
    %2207 = vmatprep.subr.bf16.mxu0 0
    %2208 = vmatpush1.bf16.msra.mxu0 0
    %2209 = vmatprep.subr.bf16.mxu0 0
    %2210 = vmatpush1.bf16.msra.mxu0 0
    %2211 = vmatprep.subr.bf16.mxu0 0
    %2212 = vmatpush1.bf16.msra.mxu0 0
    %2213 = vmatprep.subr.bf16.mxu0 0
    %2214 = vmatpush1.bf16.msra.mxu0 0
    %2215 = vmatprep.subr.bf16.mxu0 0
    %2216 = vmatpush1.bf16.msra.mxu0 0
    %2217 = vmatprep.subr.bf16.mxu0 0
    %2218 = vmatpush1.bf16.msra.mxu0 0
    %2219 = vmatprep.subr.bf16.mxu0 0
    %2220 = vmatpush1.bf16.msra.mxu0 0
    %2221 = vmatprep.mubr.bf16.mxu0 0
    %2222 = vmatmul.mubr.bf16.gmra.mrb[0].mxu0 %v2187
    %v2223 = vpop.f32.mrb[0].mxu0
    %v2224 = vadd.f32 0.0, %v2223
    %v2225 = vpop.f32.mrb[0].mxu0
    %v2226 = vpop.f32.mrb[0].mxu0
    %v2227 = vadd.f32 0.0, %v2226
    %v2228 = vpop.f32.mrb[0].mxu0
    %2229 = vdwg.mxu0
    %2230 = vrot.lane.b32.xlu0 %v643, 64
    %v2231 = vpop.permute.xlu0 %2230
    %v2234 = vsel %vm834, %v2088, 0
    %2236 = vmatprep.subr.bf16.mxu0 0
    %2237 = vmatpush1.bf16.msra.mxu0 %v2231
    %2238 = vmatprep.subr.bf16.mxu0 0
    %2239 = vmatpush1.bf16.msra.mxu0 0
    %2240 = vmatprep.subr.bf16.mxu0 0
    %2241 = vmatpush1.bf16.msra.mxu0 0
    %2242 = vmatprep.subr.bf16.mxu0 0
    %2243 = vmatpush1.bf16.msra.mxu0 0
    %2244 = vmatprep.subr.bf16.mxu0 0
    %2245 = vmatpush1.bf16.msra.mxu0 0
    %2246 = vmatprep.subr.bf16.mxu0 0
    %2247 = vmatpush1.bf16.msra.mxu0 0
    %2248 = vmatprep.subr.bf16.mxu0 0
    %2249 = vmatpush1.bf16.msra.mxu0 0
    %2250 = vmatprep.subr.bf16.mxu0 0
    %2251 = vmatpush1.bf16.msra.mxu0 0
    %2252 = vmatprep.subr.bf16.mxu0 0
    %2253 = vmatpush1.bf16.msra.mxu0 0
    %2254 = vmatprep.subr.bf16.mxu0 0
    %2255 = vmatpush1.bf16.msra.mxu0 0
    %2256 = vmatprep.subr.bf16.mxu0 0
    %2257 = vmatpush1.bf16.msra.mxu0 0
    %2258 = vmatprep.subr.bf16.mxu0 0
    %2259 = vmatpush1.bf16.msra.mxu0 0
    %2260 = vmatprep.subr.bf16.mxu0 0
    %2261 = vmatpush1.bf16.msra.mxu0 0
    %2262 = vmatprep.subr.bf16.mxu0 0
    %2263 = vmatpush1.bf16.msra.mxu0 0
    %2264 = vmatprep.subr.bf16.mxu0 0
    %2265 = vmatpush1.bf16.msra.mxu0 0
    %2266 = vmatprep.subr.bf16.mxu0 0
    %2267 = vmatpush1.bf16.msra.mxu0 0
    %2268 = vmatprep.mubr.bf16.mxu0 0
    %2269 = vmatmul.mubr.bf16.gmra.mrb[0].mxu0 %v2234
    %v2270 = vpop.f32.mrb[0].mxu0
    %v2271 = vadd.f32 0.0, %v2270
    %v2272 = vpop.f32.mrb[0].mxu0
    %v2273 = vpop.f32.mrb[0].mxu0
    %v2274 = vadd.f32 0.0, %v2273
    %v2275 = vpop.f32.mrb[0].mxu0
    %2276 = vdwg.mxu0
    %v2277 = vpack.c.bf16 %v2133, %v2130
    %v2278 = vpack.c.bf16 %v2180, %v2177
    %v2279 = vpack.c.bf16 %v2227, %v2224
    %v2280 = vpack.c.bf16 %v2274, %v2271
    %v2281 = vld [vmem:[%s7 + $0x20] sm:$0xf]
    %v2282 = vld [vmem:[%s7 + $0x24] sm:$0xf]
    %v2283 = vld [vmem:[%s7 + $0x28] sm:$0xf]
    %v2284 = vld [vmem:[%s7 + $0x2c] sm:$0xf]
    %v2289 = vunpack.c.l.b16 %v2281
    %v2290 = vunpack.c.l.b16 %v2282
    %v2291 = vunpack.c.l.b16 %v2283
    %v2292 = vunpack.c.l.b16 %v2284
    %v2293 = vpack.c.b16 %v2290, %v2289
    %v2294 = vpack.c.b16 %v2292, %v2291
    %v2298 = vsel %vm645, %v2277, 0
    %v2301 = vsel %vm645, %v2278, 0
    %v2304 = vsel %vm645, %v2279, 0
    %v2307 = vsel %vm645, %v2280, 0
    %2309 = vmatprep.subr.bf16.mxu0 0
    %2310 = vmatpush1.bf16.msra.mxu0 %v2293
    %2311 = vmatprep.subr.bf16.mxu0 0
    %2312 = vmatpush1.bf16.msra.mxu0 %v2294
    %2313 = vmatprep.subr.bf16.mxu0 0
    %2314 = vmatpush1.bf16.msra.mxu0 0
    %2315 = vmatprep.subr.bf16.mxu0 0
    %2316 = vmatpush1.bf16.msra.mxu0 0
    %2317 = vmatprep.subr.bf16.mxu0 0
    %2318 = vmatpush1.bf16.msra.mxu0 0
    %2319 = vmatprep.subr.bf16.mxu0 0
    %2320 = vmatpush1.bf16.msra.mxu0 0
    %2321 = vmatprep.subr.bf16.mxu0 0
    %2322 = vmatpush1.bf16.msra.mxu0 0
    %2323 = vmatprep.subr.bf16.mxu0 0
    %2324 = vmatpush1.bf16.msra.mxu0 0
    %2325 = vmatprep.subr.bf16.mxu0 0
    %2326 = vmatpush1.bf16.msra.mxu0 0
    %2327 = vmatprep.subr.bf16.mxu0 0
    %2328 = vmatpush1.bf16.msra.mxu0 0
    %2329 = vmatprep.subr.bf16.mxu0 0
    %2330 = vmatpush1.bf16.msra.mxu0 0
    %2331 = vmatprep.subr.bf16.mxu0 0
    %2332 = vmatpush1.bf16.msra.mxu0 0
    %2333 = vmatprep.subr.bf16.mxu0 0
    %2334 = vmatpush1.bf16.msra.mxu0 0
    %2335 = vmatprep.subr.bf16.mxu0 0
    %2336 = vmatpush1.bf16.msra.mxu0 0
    %2337 = vmatprep.subr.bf16.mxu0 0
    %2338 = vmatpush1.bf16.msra.mxu0 0
    %2339 = vmatprep.subr.bf16.mxu0 0
    %2340 = vmatpush1.bf16.msra.mxu0 0
    %2341 = vmatprep.mubr.bf16.mxu0 0
    %2342 = vmatmul.mubr.bf16.gmra.mrb[0].mxu0 %v2298
    %v2343 = vpop.f32.mrb[0].mxu0
    %v2344 = vadd.f32 0.0, %v2343
    %v2345 = vpop.f32.mrb[0].mxu0
    %v2346 = vpop.f32.mrb[0].mxu0
    %v2347 = vadd.f32 0.0, %v2346
    %v2348 = vpop.f32.mrb[0].mxu0
    %2349 = vmatprep.mubr.bf16.mxu0 0
    %2350 = vmatmul.mubr.bf16.gmra.mrb[0].mxu0 %v2301
    %v2351 = vpop.f32.mrb[0].mxu0
    %v2352 = vadd.f32 0.0, %v2351
    %v2353 = vpop.f32.mrb[0].mxu0
    %v2354 = vpop.f32.mrb[0].mxu0
    %v2355 = vadd.f32 0.0, %v2354
    %v2356 = vpop.f32.mrb[0].mxu0
    %2357 = vmatprep.mubr.bf16.mxu0 0
    %2358 = vmatmul.mubr.bf16.gmra.mrb[0].mxu0 %v2304
    %v2359 = vpop.f32.mrb[0].mxu0
    %v2360 = vadd.f32 0.0, %v2359
    %v2361 = vpop.f32.mrb[0].mxu0
    %v2362 = vpop.f32.mrb[0].mxu0
    %v2363 = vadd.f32 0.0, %v2362
    %v2364 = vpop.f32.mrb[0].mxu0
    %2365 = vmatprep.mubr.bf16.mxu0 0
    %2366 = vmatmul.mubr.bf16.gmra.mrb[0].mxu0 %v2307
    %v2367 = vpop.f32.mrb[0].mxu0
    %v2368 = vadd.f32 0.0, %v2367
    %v2369 = vpop.f32.mrb[0].mxu0
    %v2370 = vpop.f32.mrb[0].mxu0
    %v2371 = vadd.f32 0.0, %v2370
    %v2372 = vpop.f32.mrb[0].mxu0
    %2373 = vdwg.mxu0
    %v2374 = vadd.f32 %v1763, %v2344
    %v2375 = vadd.f32 %v1766, %v2347
    %v2376 = vadd.f32 %v1771, %v2352
    %v2377 = vadd.f32 %v1774, %v2355
    %v2378 = vadd.f32 %v1779, %v2360
    %v2379 = vadd.f32 %v1782, %v2363
    %v2380 = vadd.f32 %v1787, %v2368
    %v2381 = vadd.f32 %v1790, %v2371
    %2382 = vrot.lane.b32.xlu0 %v632, 32
    %v2383 = vpop.permute.xlu0 %2382
    %2384 = vrot.lane.b32.xlu0 %v633, 32
    %v2385 = vpop.permute.xlu0 %2384
    %v2387 = vsel %vm645, %v2383, 0
    %v2390 = vsel %vm645, %v2385, 0
    %2392 = vmatprep.subr.bf16.mxu0 0
    %2393 = vmatpush1.bf16.xpose.msra.mxu0 %v2390
    %2394 = vmatprep.subr.bf16.mxu0 0
    %2395 = vmatpush1.bf16.xpose.msra.mxu0 0
    %2396 = vmatprep.subr.bf16.mxu0 0
    %2397 = vmatpush1.bf16.xpose.msra.mxu0 0
    %2398 = vmatprep.subr.bf16.mxu0 0
    %2399 = vmatpush1.bf16.xpose.msra.mxu0 0
    %2400 = vmatprep.subr.bf16.mxu0 0
    %2401 = vmatpush1.bf16.xpose.msra.mxu0 0
    %2402 = vmatprep.subr.bf16.mxu0 0
    %2403 = vmatpush1.bf16.xpose.msra.mxu0 0
    %2404 = vmatprep.subr.bf16.mxu0 0
    %2405 = vmatpush1.bf16.xpose.msra.mxu0 0
    %2406 = vmatprep.subr.bf16.mxu0 0
    %2407 = vmatpush1.bf16.xpose.msra.mxu0 0
    %2408 = vmatprep.subr.bf16.mxu0 0
    %2409 = vmatpush1.bf16.xpose.msra.mxu0 0
    %2410 = vmatprep.subr.bf16.mxu0 0
    %2411 = vmatpush1.bf16.xpose.msra.mxu0 0
    %2412 = vmatprep.subr.bf16.mxu0 0
    %2413 = vmatpush1.bf16.xpose.msra.mxu0 0
    %2414 = vmatprep.subr.bf16.mxu0 0
    %2415 = vmatpush1.bf16.xpose.msra.mxu0 0
    %2416 = vmatprep.subr.bf16.mxu0 0
    %2417 = vmatpush1.bf16.xpose.msra.mxu0 0
    %2418 = vmatprep.subr.bf16.mxu0 0
    %2419 = vmatpush1.bf16.xpose.msra.mxu0 0
    %2420 = vmatprep.subr.bf16.mxu0 0
    %2421 = vmatpush1.bf16.xpose.msra.mxu0 0
    %2422 = vmatprep.subr.bf16.mxu0 0
    %2423 = vmatpush1.bf16.xpose.msra.mxu0 0
    %2424 = vmatprep.mubr.bf16.mxu0 0
    %2425 = vmatmul.mubr.bf16.gmra.mrb[0].mxu0 %v2387
    %v2426 = vpop.f32.mrb[0].mxu0
    %v2427 = vadd.f32 0.0, %v2426
    %v2428 = vpop.f32.mrb[0].mxu0
    %v2429 = vpop.f32.mrb[0].mxu0
    %v2430 = vadd.f32 0.0, %v2429
    %v2431 = vpop.f32.mrb[0].mxu0
    %2432 = vdwg.mxu0
    %2433 = vrot.lane.b32.xlu0 %v634, 32
    %v2434 = vpop.permute.xlu0 %2433
    %2435 = vrot.lane.b32.xlu0 %v635, 32
    %v2436 = vpop.permute.xlu0 %2435
    %v2438 = vsel %vm645, %v2434, 0
    %v2441 = vsel %vm645, %v2436, 0
    %2443 = vmatprep.subr.bf16.mxu0 0
    %2444 = vmatpush1.bf16.xpose.msra.mxu0 %v2441
    %2445 = vmatprep.subr.bf16.mxu0 0
    %2446 = vmatpush1.bf16.xpose.msra.mxu0 0
    %2447 = vmatprep.subr.bf16.mxu0 0
    %2448 = vmatpush1.bf16.xpose.msra.mxu0 0
    %2449 = vmatprep.subr.bf16.mxu0 0
    %2450 = vmatpush1.bf16.xpose.msra.mxu0 0
    %2451 = vmatprep.subr.bf16.mxu0 0
    %2452 = vmatpush1.bf16.xpose.msra.mxu0 0
    %2453 = vmatprep.subr.bf16.mxu0 0
    %2454 = vmatpush1.bf16.xpose.msra.mxu0 0
    %2455 = vmatprep.subr.bf16.mxu0 0
    %2456 = vmatpush1.bf16.xpose.msra.mxu0 0
    %2457 = vmatprep.subr.bf16.mxu0 0
    %2458 = vmatpush1.bf16.xpose.msra.mxu0 0
    %2459 = vmatprep.subr.bf16.mxu0 0
    %2460 = vmatpush1.bf16.xpose.msra.mxu0 0
    %2461 = vmatprep.subr.bf16.mxu0 0
    %2462 = vmatpush1.bf16.xpose.msra.mxu0 0
    %2463 = vmatprep.subr.bf16.mxu0 0
    %2464 = vmatpush1.bf16.xpose.msra.mxu0 0
    %2465 = vmatprep.subr.bf16.mxu0 0
    %2466 = vmatpush1.bf16.xpose.msra.mxu0 0
    %2467 = vmatprep.subr.bf16.mxu0 0
    %2468 = vmatpush1.bf16.xpose.msra.mxu0 0
    %2469 = vmatprep.subr.bf16.mxu0 0
    %2470 = vmatpush1.bf16.xpose.msra.mxu0 0
    %2471 = vmatprep.subr.bf16.mxu0 0
    %2472 = vmatpush1.bf16.xpose.msra.mxu0 0
    %2473 = vmatprep.subr.bf16.mxu0 0
    %2474 = vmatpush1.bf16.xpose.msra.mxu0 0
    %2475 = vmatprep.mubr.bf16.mxu0 0
    %2476 = vmatmul.mubr.bf16.gmra.mrb[0].mxu0 %v2438
    %v2477 = vpop.f32.mrb[0].mxu0
    %v2478 = vadd.f32 0.0, %v2477
    %v2479 = vpop.f32.mrb[0].mxu0
    %v2480 = vpop.f32.mrb[0].mxu0
    %v2481 = vadd.f32 0.0, %v2480
    %v2482 = vpop.f32.mrb[0].mxu0
    %2483 = vdwg.mxu0
    %2484 = vrot.lane.b32.xlu0 %v636, 32
    %v2485 = vpop.permute.xlu0 %2484
    %2486 = vrot.lane.b32.xlu0 %v637, 32
    %v2487 = vpop.permute.xlu0 %2486
    %v2489 = vsel %vm645, %v2485, 0
    %v2492 = vsel %vm645, %v2487, 0
    %2494 = vmatprep.subr.bf16.mxu0 0
    %2495 = vmatpush1.bf16.xpose.msra.mxu0 %v2492
    %2496 = vmatprep.subr.bf16.mxu0 0
    %2497 = vmatpush1.bf16.xpose.msra.mxu0 0
    %2498 = vmatprep.subr.bf16.mxu0 0
    %2499 = vmatpush1.bf16.xpose.msra.mxu0 0
    %2500 = vmatprep.subr.bf16.mxu0 0
    %2501 = vmatpush1.bf16.xpose.msra.mxu0 0
    %2502 = vmatprep.subr.bf16.mxu0 0
    %2503 = vmatpush1.bf16.xpose.msra.mxu0 0
    %2504 = vmatprep.subr.bf16.mxu0 0
    %2505 = vmatpush1.bf16.xpose.msra.mxu0 0
    %2506 = vmatprep.subr.bf16.mxu0 0
    %2507 = vmatpush1.bf16.xpose.msra.mxu0 0
    %2508 = vmatprep.subr.bf16.mxu0 0
    %2509 = vmatpush1.bf16.xpose.msra.mxu0 0
    %2510 = vmatprep.subr.bf16.mxu0 0
    %2511 = vmatpush1.bf16.xpose.msra.mxu0 0
    %2512 = vmatprep.subr.bf16.mxu0 0
    %2513 = vmatpush1.bf16.xpose.msra.mxu0 0
    %2514 = vmatprep.subr.bf16.mxu0 0
    %2515 = vmatpush1.bf16.xpose.msra.mxu0 0
    %2516 = vmatprep.subr.bf16.mxu0 0
    %2517 = vmatpush1.bf16.xpose.msra.mxu0 0
    %2518 = vmatprep.subr.bf16.mxu0 0
    %2519 = vmatpush1.bf16.xpose.msra.mxu0 0
    %2520 = vmatprep.subr.bf16.mxu0 0
    %2521 = vmatpush1.bf16.xpose.msra.mxu0 0
    %2522 = vmatprep.subr.bf16.mxu0 0
    %2523 = vmatpush1.bf16.xpose.msra.mxu0 0
    %2524 = vmatprep.subr.bf16.mxu0 0
    %2525 = vmatpush1.bf16.xpose.msra.mxu0 0
    %2526 = vmatprep.mubr.bf16.mxu0 0
    %2527 = vmatmul.mubr.bf16.gmra.mrb[0].mxu0 %v2489
    %v2528 = vpop.f32.mrb[0].mxu0
    %v2529 = vadd.f32 0.0, %v2528
    %v2530 = vpop.f32.mrb[0].mxu0
    %v2531 = vpop.f32.mrb[0].mxu0
    %v2532 = vadd.f32 0.0, %v2531
    %v2533 = vpop.f32.mrb[0].mxu0
    %2534 = vdwg.mxu0
    %2535 = vrot.lane.b32.xlu0 %v638, 32
    %v2536 = vpop.permute.xlu0 %2535
    %2537 = vrot.lane.b32.xlu0 %v639, 32
    %v2538 = vpop.permute.xlu0 %2537
    %v2540 = vsel %vm645, %v2536, 0
    %v2543 = vsel %vm645, %v2538, 0
    %2545 = vmatprep.subr.bf16.mxu0 0
    %2546 = vmatpush1.bf16.xpose.msra.mxu0 %v2543
    %2547 = vmatprep.subr.bf16.mxu0 0
    %2548 = vmatpush1.bf16.xpose.msra.mxu0 0
    %2549 = vmatprep.subr.bf16.mxu0 0
    %2550 = vmatpush1.bf16.xpose.msra.mxu0 0
    %2551 = vmatprep.subr.bf16.mxu0 0
    %2552 = vmatpush1.bf16.xpose.msra.mxu0 0
    %2553 = vmatprep.subr.bf16.mxu0 0
    %2554 = vmatpush1.bf16.xpose.msra.mxu0 0
    %2555 = vmatprep.subr.bf16.mxu0 0
    %2556 = vmatpush1.bf16.xpose.msra.mxu0 0
    %2557 = vmatprep.subr.bf16.mxu0 0
    %2558 = vmatpush1.bf16.xpose.msra.mxu0 0
    %2559 = vmatprep.subr.bf16.mxu0 0
    %2560 = vmatpush1.bf16.xpose.msra.mxu0 0
    %2561 = vmatprep.subr.bf16.mxu0 0
    %2562 = vmatpush1.bf16.xpose.msra.mxu0 0
    %2563 = vmatprep.subr.bf16.mxu0 0
    %2564 = vmatpush1.bf16.xpose.msra.mxu0 0
    %2565 = vmatprep.subr.bf16.mxu0 0
    %2566 = vmatpush1.bf16.xpose.msra.mxu0 0
    %2567 = vmatprep.subr.bf16.mxu0 0
    %2568 = vmatpush1.bf16.xpose.msra.mxu0 0
    %2569 = vmatprep.subr.bf16.mxu0 0
    %2570 = vmatpush1.bf16.xpose.msra.mxu0 0
    %2571 = vmatprep.subr.bf16.mxu0 0
    %2572 = vmatpush1.bf16.xpose.msra.mxu0 0
    %2573 = vmatprep.subr.bf16.mxu0 0
    %2574 = vmatpush1.bf16.xpose.msra.mxu0 0
    %2575 = vmatprep.subr.bf16.mxu0 0
    %2576 = vmatpush1.bf16.xpose.msra.mxu0 0
    %2577 = vmatprep.mubr.bf16.mxu0 0
    %2578 = vmatmul.mubr.bf16.gmra.mrb[0].mxu0 %v2540
    %v2579 = vpop.f32.mrb[0].mxu0
    %v2580 = vadd.f32 0.0, %v2579
    %v2581 = vpop.f32.mrb[0].mxu0
    %v2582 = vpop.f32.mrb[0].mxu0
    %v2583 = vadd.f32 0.0, %v2582
    %v2584 = vpop.f32.mrb[0].mxu0
    %2585 = vdwg.mxu0
    %v2586 = vsel %vm834, %v2427, -inf
    %2587 = vmax.xlane.f32.xlu0 %v2586
    %v2588 = vpop.xlane.xlu0 %2587
    %v2589 = vsel %vm834, %v2430, -inf
    %2590 = vmax.xlane.f32.xlu0 %v2589
    %v2591 = vpop.xlane.xlu0 %2590
    %v2592 = vsel %vm834, %v2478, -inf
    %2593 = vmax.xlane.f32.xlu0 %v2592
    %v2594 = vpop.xlane.xlu0 %2593
    %v2595 = vsel %vm834, %v2481, -inf
    %2596 = vmax.xlane.f32.xlu0 %v2595
    %v2597 = vpop.xlane.xlu0 %2596
    %v2598 = vsel %vm834, %v2529, -inf
    %2599 = vmax.xlane.f32.xlu0 %v2598
    %v2600 = vpop.xlane.xlu0 %2599
    %v2601 = vsel %vm834, %v2532, -inf
    %2602 = vmax.xlane.f32.xlu0 %v2601
    %v2603 = vpop.xlane.xlu0 %2602
    %v2604 = vsel %vm834, %v2580, -inf
    %2605 = vmax.xlane.f32.xlu0 %v2604
    %v2606 = vpop.xlane.xlu0 %2605
    %v2607 = vsel %vm834, %v2583, -inf
    %2608 = vmax.xlane.f32.xlu0 %v2607
    %v2609 = vpop.xlane.xlu0 %2608
    %v2610 = vsub.f32 %v2427, %v2588
    %v2611 = vsub.f32 %v2430, %v2591
    %v2612 = vsub.f32 %v2478, %v2594
    %v2613 = vsub.f32 %v2481, %v2597
    %v2614 = vsub.f32 %v2529, %v2600
    %v2615 = vsub.f32 %v2532, %v2603
    %v2616 = vsub.f32 %v2580, %v2606
    %v2617 = vsub.f32 %v2583, %v2609
    %v2618 = vmul.f32 %v2610, 1.442695
    %v2619 = vpow.pop %v2618
    %v2620 = vmul.f32 %v2611, 1.442695
    %v2621 = vpow.pop %v2620
    %v2622 = vmul.f32 %v2612, 1.442695
    %v2623 = vpow.pop %v2622
    %v2624 = vmul.f32 %v2613, 1.442695
    %v2625 = vpow.pop %v2624
    %v2626 = vmul.f32 %v2614, 1.442695
    %v2627 = vpow.pop %v2626
    %v2628 = vmul.f32 %v2615, 1.442695
    %v2629 = vpow.pop %v2628
    %v2630 = vmul.f32 %v2616, 1.442695
    %v2631 = vpow.pop %v2630
    %v2632 = vmul.f32 %v2617, 1.442695
    %v2633 = vpow.pop %v2632
    %v2634 = vsel %vm834, %v2619, 0.0
    %2635 = vadd.xlane.f32.xlu0 %v2634
    %v2636 = vpop.xlane.xlu0 %2635
    %v2637 = vsel %vm834, %v2621, 0.0
    %2638 = vadd.xlane.f32.xlu0 %v2637
    %v2639 = vpop.xlane.xlu0 %2638
    %v2640 = vsel %vm834, %v2623, 0.0
    %2641 = vadd.xlane.f32.xlu0 %v2640
    %v2642 = vpop.xlane.xlu0 %2641
    %v2643 = vsel %vm834, %v2625, 0.0
    %2644 = vadd.xlane.f32.xlu0 %v2643
    %v2645 = vpop.xlane.xlu0 %2644
    %v2646 = vsel %vm834, %v2627, 0.0
    %2647 = vadd.xlane.f32.xlu0 %v2646
    %v2648 = vpop.xlane.xlu0 %2647
    %v2649 = vsel %vm834, %v2629, 0.0
    %2650 = vadd.xlane.f32.xlu0 %v2649
    %v2651 = vpop.xlane.xlu0 %2650
    %v2652 = vsel %vm834, %v2631, 0.0
    %2653 = vadd.xlane.f32.xlu0 %v2652
    %v2654 = vpop.xlane.xlu0 %2653
    %v2655 = vsel %vm834, %v2633, 0.0
    %2656 = vadd.xlane.f32.xlu0 %v2655
    %v2657 = vpop.xlane.xlu0 %2656
    %v2658 = vrcp.pop %v2636
    %v2659 = vrcp.pop %v2639
    %v2660 = vrcp.pop %v2642
    %v2661 = vrcp.pop %v2645
    %v2662 = vrcp.pop %v2648
    %v2663 = vrcp.pop %v2651
    %v2664 = vrcp.pop %v2654
    %v2665 = vrcp.pop %v2657
    %v2666 = vmul.f32 %v2619, %v2658
    %v2667 = vmul.f32 %v2621, %v2659
    %v2668 = vmul.f32 %v2623, %v2660
    %v2669 = vmul.f32 %v2625, %v2661
    %v2670 = vmul.f32 %v2627, %v2662
    %v2671 = vmul.f32 %v2629, %v2663
    %v2672 = vmul.f32 %v2631, %v2664
    %v2673 = vmul.f32 %v2633, %v2665
    %v2674 = vpack.c.bf16 %v2667, %v2666
    %v2675 = vpack.c.bf16 %v2669, %v2668
    %v2676 = vpack.c.bf16 %v2671, %v2670
    %v2677 = vpack.c.bf16 %v2673, %v2672
    %2678 = vrot.lane.b32.xlu0 %v640, 32
    %v2679 = vpop.permute.xlu0 %2678
    %v2682 = vsel %vm834, %v2674, 0
    %2684 = vmatprep.subr.bf16.mxu0 0
    %2685 = vmatpush1.bf16.msra.mxu0 %v2679
    %2686 = vmatprep.subr.bf16.mxu0 0
    %2687 = vmatpush1.bf16.msra.mxu0 0
    %2688 = vmatprep.subr.bf16.mxu0 0
    %2689 = vmatpush1.bf16.msra.mxu0 0
    %2690 = vmatprep.subr.bf16.mxu0 0
    %2691 = vmatpush1.bf16.msra.mxu0 0
    %2692 = vmatprep.subr.bf16.mxu0 0
    %2693 = vmatpush1.bf16.msra.mxu0 0
    %2694 = vmatprep.subr.bf16.mxu0 0
    %2695 = vmatpush1.bf16.msra.mxu0 0
    %2696 = vmatprep.subr.bf16.mxu0 0
    %2697 = vmatpush1.bf16.msra.mxu0 0
    %2698 = vmatprep.subr.bf16.mxu0 0
    %2699 = vmatpush1.bf16.msra.mxu0 0
    %2700 = vmatprep.subr.bf16.mxu0 0
    %2701 = vmatpush1.bf16.msra.mxu0 0
    %2702 = vmatprep.subr.bf16.mxu0 0
    %2703 = vmatpush1.bf16.msra.mxu0 0
    %2704 = vmatprep.subr.bf16.mxu0 0
    %2705 = vmatpush1.bf16.msra.mxu0 0
    %2706 = vmatprep.subr.bf16.mxu0 0
    %2707 = vmatpush1.bf16.msra.mxu0 0
    %2708 = vmatprep.subr.bf16.mxu0 0
    %2709 = vmatpush1.bf16.msra.mxu0 0
    %2710 = vmatprep.subr.bf16.mxu0 0
    %2711 = vmatpush1.bf16.msra.mxu0 0
    %2712 = vmatprep.subr.bf16.mxu0 0
    %2713 = vmatpush1.bf16.msra.mxu0 0
    %2714 = vmatprep.subr.bf16.mxu0 0
    %2715 = vmatpush1.bf16.msra.mxu0 0
    %2716 = vmatprep.mubr.bf16.mxu0 0
    %2717 = vmatmul.mubr.bf16.gmra.mrb[0].mxu0 %v2682
    %v2718 = vpop.f32.mrb[0].mxu0
    %v2719 = vadd.f32 0.0, %v2718
    %v2720 = vpop.f32.mrb[0].mxu0
    %v2721 = vpop.f32.mrb[0].mxu0
    %v2722 = vadd.f32 0.0, %v2721
    %v2723 = vpop.f32.mrb[0].mxu0
    %2724 = vdwg.mxu0
    %2725 = vrot.lane.b32.xlu0 %v641, 32
    %v2726 = vpop.permute.xlu0 %2725
    %v2729 = vsel %vm834, %v2675, 0
    %2731 = vmatprep.subr.bf16.mxu0 0
    %2732 = vmatpush1.bf16.msra.mxu0 %v2726
    %2733 = vmatprep.subr.bf16.mxu0 0
    %2734 = vmatpush1.bf16.msra.mxu0 0
    %2735 = vmatprep.subr.bf16.mxu0 0
    %2736 = vmatpush1.bf16.msra.mxu0 0
    %2737 = vmatprep.subr.bf16.mxu0 0
    %2738 = vmatpush1.bf16.msra.mxu0 0
    %2739 = vmatprep.subr.bf16.mxu0 0
    %2740 = vmatpush1.bf16.msra.mxu0 0
    %2741 = vmatprep.subr.bf16.mxu0 0
    %2742 = vmatpush1.bf16.msra.mxu0 0
    %2743 = vmatprep.subr.bf16.mxu0 0
    %2744 = vmatpush1.bf16.msra.mxu0 0
    %2745 = vmatprep.subr.bf16.mxu0 0
    %2746 = vmatpush1.bf16.msra.mxu0 0
    %2747 = vmatprep.subr.bf16.mxu0 0
    %2748 = vmatpush1.bf16.msra.mxu0 0
    %2749 = vmatprep.subr.bf16.mxu0 0
    %2750 = vmatpush1.bf16.msra.mxu0 0
    %2751 = vmatprep.subr.bf16.mxu0 0
    %2752 = vmatpush1.bf16.msra.mxu0 0
    %2753 = vmatprep.subr.bf16.mxu0 0
    %2754 = vmatpush1.bf16.msra.mxu0 0
    %2755 = vmatprep.subr.bf16.mxu0 0
    %2756 = vmatpush1.bf16.msra.mxu0 0
    %2757 = vmatprep.subr.bf16.mxu0 0
    %2758 = vmatpush1.bf16.msra.mxu0 0
    %2759 = vmatprep.subr.bf16.mxu0 0
    %2760 = vmatpush1.bf16.msra.mxu0 0
    %2761 = vmatprep.subr.bf16.mxu0 0
    %2762 = vmatpush1.bf16.msra.mxu0 0
    %2763 = vmatprep.mubr.bf16.mxu0 0
    %2764 = vmatmul.mubr.bf16.gmra.mrb[0].mxu0 %v2729
    %v2765 = vpop.f32.mrb[0].mxu0
    %v2766 = vadd.f32 0.0, %v2765
    %v2767 = vpop.f32.mrb[0].mxu0
    %v2768 = vpop.f32.mrb[0].mxu0
    %v2769 = vadd.f32 0.0, %v2768
    %v2770 = vpop.f32.mrb[0].mxu0
    %2771 = vdwg.mxu0
    %2772 = vrot.lane.b32.xlu0 %v642, 32
    %v2773 = vpop.permute.xlu0 %2772
    %v2776 = vsel %vm834, %v2676, 0
    %2778 = vmatprep.subr.bf16.mxu0 0
    %2779 = vmatpush1.bf16.msra.mxu0 %v2773
    %2780 = vmatprep.subr.bf16.mxu0 0
    %2781 = vmatpush1.bf16.msra.mxu0 0
    %2782 = vmatprep.subr.bf16.mxu0 0
    %2783 = vmatpush1.bf16.msra.mxu0 0
    %2784 = vmatprep.subr.bf16.mxu0 0
    %2785 = vmatpush1.bf16.msra.mxu0 0
    %2786 = vmatprep.subr.bf16.mxu0 0
    %2787 = vmatpush1.bf16.msra.mxu0 0
    %2788 = vmatprep.subr.bf16.mxu0 0
    %2789 = vmatpush1.bf16.msra.mxu0 0
    %2790 = vmatprep.subr.bf16.mxu0 0
    %2791 = vmatpush1.bf16.msra.mxu0 0
    %2792 = vmatprep.subr.bf16.mxu0 0
    %2793 = vmatpush1.bf16.msra.mxu0 0
    %2794 = vmatprep.subr.bf16.mxu0 0
    %2795 = vmatpush1.bf16.msra.mxu0 0
    %2796 = vmatprep.subr.bf16.mxu0 0
    %2797 = vmatpush1.bf16.msra.mxu0 0
    %2798 = vmatprep.subr.bf16.mxu0 0
    %2799 = vmatpush1.bf16.msra.mxu0 0
    %2800 = vmatprep.subr.bf16.mxu0 0
    %2801 = vmatpush1.bf16.msra.mxu0 0
    %2802 = vmatprep.subr.bf16.mxu0 0
    %2803 = vmatpush1.bf16.msra.mxu0 0
    %2804 = vmatprep.subr.bf16.mxu0 0
    %2805 = vmatpush1.bf16.msra.mxu0 0
    %2806 = vmatprep.subr.bf16.mxu0 0
    %2807 = vmatpush1.bf16.msra.mxu0 0
    %2808 = vmatprep.subr.bf16.mxu0 0
    %2809 = vmatpush1.bf16.msra.mxu0 0
    %2810 = vmatprep.mubr.bf16.mxu0 0
    %2811 = vmatmul.mubr.bf16.gmra.mrb[0].mxu0 %v2776
    %v2812 = vpop.f32.mrb[0].mxu0
    %v2813 = vadd.f32 0.0, %v2812
    %v2814 = vpop.f32.mrb[0].mxu0
    %v2815 = vpop.f32.mrb[0].mxu0
    %v2816 = vadd.f32 0.0, %v2815
    %v2817 = vpop.f32.mrb[0].mxu0
    %2818 = vdwg.mxu0
    %2819 = vrot.lane.b32.xlu0 %v643, 32
    %v2820 = vpop.permute.xlu0 %2819
    %v2823 = vsel %vm834, %v2677, 0
    %2825 = vmatprep.subr.bf16.mxu0 0
    %2826 = vmatpush1.bf16.msra.mxu0 %v2820
    %2827 = vmatprep.subr.bf16.mxu0 0
    %2828 = vmatpush1.bf16.msra.mxu0 0
    %2829 = vmatprep.subr.bf16.mxu0 0
    %2830 = vmatpush1.bf16.msra.mxu0 0
    %2831 = vmatprep.subr.bf16.mxu0 0
    %2832 = vmatpush1.bf16.msra.mxu0 0
    %2833 = vmatprep.subr.bf16.mxu0 0
    %2834 = vmatpush1.bf16.msra.mxu0 0
    %2835 = vmatprep.subr.bf16.mxu0 0
    %2836 = vmatpush1.bf16.msra.mxu0 0
    %2837 = vmatprep.subr.bf16.mxu0 0
    %2838 = vmatpush1.bf16.msra.mxu0 0
    %2839 = vmatprep.subr.bf16.mxu0 0
    %2840 = vmatpush1.bf16.msra.mxu0 0
    %2841 = vmatprep.subr.bf16.mxu0 0
    %2842 = vmatpush1.bf16.msra.mxu0 0
    %2843 = vmatprep.subr.bf16.mxu0 0
    %2844 = vmatpush1.bf16.msra.mxu0 0
    %2845 = vmatprep.subr.bf16.mxu0 0
    %2846 = vmatpush1.bf16.msra.mxu0 0
    %2847 = vmatprep.subr.bf16.mxu0 0
    %2848 = vmatpush1.bf16.msra.mxu0 0
    %2849 = vmatprep.subr.bf16.mxu0 0
    %2850 = vmatpush1.bf16.msra.mxu0 0
    %2851 = vmatprep.subr.bf16.mxu0 0
    %2852 = vmatpush1.bf16.msra.mxu0 0
    %2853 = vmatprep.subr.bf16.mxu0 0
    %2854 = vmatpush1.bf16.msra.mxu0 0
    %2855 = vmatprep.subr.bf16.mxu0 0
    %2856 = vmatpush1.bf16.msra.mxu0 0
    %2857 = vmatprep.mubr.bf16.mxu0 0
    %2858 = vmatmul.mubr.bf16.gmra.mrb[0].mxu0 %v2823
    %v2859 = vpop.f32.mrb[0].mxu0
    %v2860 = vadd.f32 0.0, %v2859
    %v2861 = vpop.f32.mrb[0].mxu0
    %v2862 = vpop.f32.mrb[0].mxu0
    %v2863 = vadd.f32 0.0, %v2862
    %v2864 = vpop.f32.mrb[0].mxu0
    %2865 = vdwg.mxu0
    %v2866 = vpack.c.bf16 %v2722, %v2719
    %v2867 = vpack.c.bf16 %v2769, %v2766
    %v2868 = vpack.c.bf16 %v2816, %v2813
    %v2869 = vpack.c.bf16 %v2863, %v2860
    %v2870 = vld [vmem:[%s7 + $0x30] sm:$0xf]
    %v2871 = vld [vmem:[%s7 + $0x34] sm:$0xf]
    %v2872 = vld [vmem:[%s7 + $0x38] sm:$0xf]
    %v2873 = vld [vmem:[%s7 + $0x3c] sm:$0xf]
    %v2878 = vunpack.c.l.b16 %v2870
    %v2879 = vunpack.c.l.b16 %v2871
    %v2880 = vunpack.c.l.b16 %v2872
    %v2881 = vunpack.c.l.b16 %v2873
    %v2882 = vpack.c.b16 %v2879, %v2878
    %v2883 = vpack.c.b16 %v2881, %v2880
    %v2887 = vsel %vm645, %v2866, 0
    %v2890 = vsel %vm645, %v2867, 0
    %v2893 = vsel %vm645, %v2868, 0
    %v2896 = vsel %vm645, %v2869, 0
    %2898 = vmatprep.subr.bf16.mxu0 0
    %2899 = vmatpush1.bf16.msra.mxu0 %v2882
    %2900 = vmatprep.subr.bf16.mxu0 0
    %2901 = vmatpush1.bf16.msra.mxu0 %v2883
    %2902 = vmatprep.subr.bf16.mxu0 0
    %2903 = vmatpush1.bf16.msra.mxu0 0
    %2904 = vmatprep.subr.bf16.mxu0 0
    %2905 = vmatpush1.bf16.msra.mxu0 0
    %2906 = vmatprep.subr.bf16.mxu0 0
    %2907 = vmatpush1.bf16.msra.mxu0 0
    %2908 = vmatprep.subr.bf16.mxu0 0
    %2909 = vmatpush1.bf16.msra.mxu0 0
    %2910 = vmatprep.subr.bf16.mxu0 0
    %2911 = vmatpush1.bf16.msra.mxu0 0
    %2912 = vmatprep.subr.bf16.mxu0 0
    %2913 = vmatpush1.bf16.msra.mxu0 0
    %2914 = vmatprep.subr.bf16.mxu0 0
    %2915 = vmatpush1.bf16.msra.mxu0 0
    %2916 = vmatprep.subr.bf16.mxu0 0
    %2917 = vmatpush1.bf16.msra.mxu0 0
    %2918 = vmatprep.subr.bf16.mxu0 0
    %2919 = vmatpush1.bf16.msra.mxu0 0
    %2920 = vmatprep.subr.bf16.mxu0 0
    %2921 = vmatpush1.bf16.msra.mxu0 0
    %2922 = vmatprep.subr.bf16.mxu0 0
    %2923 = vmatpush1.bf16.msra.mxu0 0
    %2924 = vmatprep.subr.bf16.mxu0 0
    %2925 = vmatpush1.bf16.msra.mxu0 0
    %2926 = vmatprep.subr.bf16.mxu0 0
    %2927 = vmatpush1.bf16.msra.mxu0 0
    %2928 = vmatprep.subr.bf16.mxu0 0
    %2929 = vmatpush1.bf16.msra.mxu0 0
    %2930 = vmatprep.mubr.bf16.mxu0 0
    %2931 = vmatmul.mubr.bf16.gmra.mrb[0].mxu0 %v2887
    %v2932 = vpop.f32.mrb[0].mxu0
    %v2933 = vadd.f32 0.0, %v2932
    %v2934 = vpop.f32.mrb[0].mxu0
    %v2935 = vpop.f32.mrb[0].mxu0
    %v2936 = vadd.f32 0.0, %v2935
    %v2937 = vpop.f32.mrb[0].mxu0
    %2938 = vmatprep.mubr.bf16.mxu0 0
    %2939 = vmatmul.mubr.bf16.gmra.mrb[0].mxu0 %v2890
    %v2940 = vpop.f32.mrb[0].mxu0
    %v2941 = vadd.f32 0.0, %v2940
    %v2942 = vpop.f32.mrb[0].mxu0
    %v2943 = vpop.f32.mrb[0].mxu0
    %v2944 = vadd.f32 0.0, %v2943
    %v2945 = vpop.f32.mrb[0].mxu0
    %2946 = vmatprep.mubr.bf16.mxu0 0
    %2947 = vmatmul.mubr.bf16.gmra.mrb[0].mxu0 %v2893
    %v2948 = vpop.f32.mrb[0].mxu0
    %v2949 = vadd.f32 0.0, %v2948
    %v2950 = vpop.f32.mrb[0].mxu0
    %v2951 = vpop.f32.mrb[0].mxu0
    %v2952 = vadd.f32 0.0, %v2951
    %v2953 = vpop.f32.mrb[0].mxu0
    %2954 = vmatprep.mubr.bf16.mxu0 0
    %2955 = vmatmul.mubr.bf16.gmra.mrb[0].mxu0 %v2896
    %v2956 = vpop.f32.mrb[0].mxu0
    %v2957 = vadd.f32 0.0, %v2956
    %v2958 = vpop.f32.mrb[0].mxu0
    %v2959 = vpop.f32.mrb[0].mxu0
    %v2960 = vadd.f32 0.0, %v2959
    %v2961 = vpop.f32.mrb[0].mxu0
    %2962 = vdwg.mxu0
    %v2963 = vadd.f32 %v2374, %v2933
    %v2964 = vadd.f32 %v2375, %v2936
    %v2965 = vadd.f32 %v2376, %v2941
    %v2966 = vadd.f32 %v2377, %v2944
    %v2967 = vadd.f32 %v2378, %v2949
    %v2968 = vadd.f32 %v2379, %v2952
    %v2969 = vadd.f32 %v2380, %v2957
    %v2970 = vadd.f32 %v2381, %v2960
    %v2972 = vlaneseq
    %v2973 = vshrl.u32 %v2972, 7
    %v2974 = vsub.s32 0, %v2973
    %v2975 = vrot.slane %v644, %v2974
    %v2977 = vadd.f32 %v2963, %v2975
    %v2978 = vadd.f32 %v2964, %v2975
    %v2979 = vadd.f32 %v2965, %v2975
    %v2980 = vadd.f32 %v2966, %v2975
    %v2981 = vadd.f32 %v2967, %v2975
    %v2982 = vadd.f32 %v2968, %v2975
    %v2983 = vadd.f32 %v2969, %v2975
    %v2984 = vadd.f32 %v2970, %v2975
    %v2985 = vunpack.c.l.bf16 %v195
    %v2986 = vunpack.c.l.bf16 %v196
    %v2987 = vunpack.c.l.bf16 %v197
    %v2988 = vunpack.c.l.bf16 %v198
    %v2989 = vunpack.c.l.bf16 %v199
    %v2990 = vunpack.c.l.bf16 %v200
    %v2991 = vunpack.c.l.bf16 %v201
    %v2992 = vunpack.c.l.bf16 %v202
    %v2993 = vld [vmem:[#allocation10] sm:$0x1]
    %v2994 = vld [vmem:[#allocation12] sm:$0x1]
    %v2995 = vadd.f32 %v2985, %v2977
    %v2996 = vadd.f32 %v2986, %v2978
    %v2997 = vadd.f32 %v2987, %v2979
    %v2998 = vadd.f32 %v2988, %v2980
    %v2999 = vadd.f32 %v2989, %v2981
    %v3000 = vadd.f32 %v2990, %v2982
    %v3001 = vadd.f32 %v2991, %v2983
    %v3002 = vadd.f32 %v2992, %v2984
    %3003 = vadd.xlane.f32.xlu0 %v2995
    %v3004 = vpop.xlane.xlu0 %3003
    %3005 = vadd.xlane.f32.xlu0 %v2996
    %v3006 = vpop.xlane.xlu0 %3005
    %3007 = vadd.xlane.f32.xlu0 %v2997
    %v3008 = vpop.xlane.xlu0 %3007
    %3009 = vadd.xlane.f32.xlu0 %v2998
    %v3010 = vpop.xlane.xlu0 %3009
    %3011 = vadd.xlane.f32.xlu0 %v2999
    %v3012 = vpop.xlane.xlu0 %3011
    %3013 = vadd.xlane.f32.xlu0 %v3000
    %v3014 = vpop.xlane.xlu0 %3013
    %3015 = vadd.xlane.f32.xlu0 %v3001
    %v3016 = vpop.xlane.xlu0 %3015
    %3017 = vadd.xlane.f32.xlu0 %v3002
    %v3018 = vpop.xlane.xlu0 %3017
    %v3019 = vrcp.pop 128.0
    %v3020 = vmul.f32 %v3004, %v3019
    %v3021 = vmul.f32 %v3006, %v3019
    %v3022 = vmul.f32 %v3008, %v3019
    %v3023 = vmul.f32 %v3010, %v3019
    %v3024 = vmul.f32 %v3012, %v3019
    %v3025 = vmul.f32 %v3014, %v3019
    %v3026 = vmul.f32 %v3016, %v3019
    %v3027 = vmul.f32 %v3018, %v3019
    %v3028 = vsub.f32 %v2995, %v3020
    %v3029 = vsub.f32 %v2996, %v3021
    %v3030 = vsub.f32 %v2997, %v3022
    %v3031 = vsub.f32 %v2998, %v3023
    %v3032 = vsub.f32 %v2999, %v3024
    %v3033 = vsub.f32 %v3000, %v3025
    %v3034 = vsub.f32 %v3001, %v3026
    %v3035 = vsub.f32 %v3002, %v3027
    %v3036 = vmul.f32 %v3028, %v3028
    %v3037 = vmul.f32 %v3029, %v3029
    %v3038 = vmul.f32 %v3030, %v3030
    %v3039 = vmul.f32 %v3031, %v3031
    %v3040 = vmul.f32 %v3032, %v3032
    %v3041 = vmul.f32 %v3033, %v3033
    %v3042 = vmul.f32 %v3034, %v3034
    %v3043 = vmul.f32 %v3035, %v3035
    %3044 = vadd.xlane.f32.xlu0 %v3036
    %v3045 = vpop.xlane.xlu0 %3044
    %3046 = vadd.xlane.f32.xlu0 %v3037
    %v3047 = vpop.xlane.xlu0 %3046
    %3048 = vadd.xlane.f32.xlu0 %v3038
    %v3049 = vpop.xlane.xlu0 %3048
    %3050 = vadd.xlane.f32.xlu0 %v3039
    %v3051 = vpop.xlane.xlu0 %3050
    %3052 = vadd.xlane.f32.xlu0 %v3040
    %v3053 = vpop.xlane.xlu0 %3052
    %3054 = vadd.xlane.f32.xlu0 %v3041
    %v3055 = vpop.xlane.xlu0 %3054
    %3056 = vadd.xlane.f32.xlu0 %v3042
    %v3057 = vpop.xlane.xlu0 %3056
    %3058 = vadd.xlane.f32.xlu0 %v3043
    %v3059 = vpop.xlane.xlu0 %3058
    %v3060 = vmul.f32 %v3045, %v3019
    %v3061 = vmul.f32 %v3047, %v3019
    %v3062 = vmul.f32 %v3049, %v3019
    %v3063 = vmul.f32 %v3051, %v3019
    %v3064 = vmul.f32 %v3053, %v3019
    %v3065 = vmul.f32 %v3055, %v3019
    %v3066 = vmul.f32 %v3057, %v3019
    %v3067 = vmul.f32 %v3059, %v3019
    %v3068 = vadd.f32 %v3060, 1e-05
    %v3069 = vadd.f32 %v3061, 1e-05
    %v3070 = vadd.f32 %v3062, 1e-05
    %v3071 = vadd.f32 %v3063, 1e-05
    %v3072 = vadd.f32 %v3064, 1e-05
    %v3073 = vadd.f32 %v3065, 1e-05
    %v3074 = vadd.f32 %v3066, 1e-05
    %v3075 = vadd.f32 %v3067, 1e-05
    %v3076 = vrsqrt.pop %v3068
    %v3077 = vrsqrt.pop %v3069
    %v3078 = vrsqrt.pop %v3070
    %v3079 = vrsqrt.pop %v3071
    %v3080 = vrsqrt.pop %v3072
    %v3081 = vrsqrt.pop %v3073
    %v3082 = vrsqrt.pop %v3074
    %v3083 = vrsqrt.pop %v3075
    %v3084 = vmul.f32 %v3028, %v3076
    %v3085 = vmul.f32 %v3029, %v3077
    %v3086 = vmul.f32 %v3030, %v3078
    %v3087 = vmul.f32 %v3031, %v3079
    %v3088 = vmul.f32 %v3032, %v3080
    %v3089 = vmul.f32 %v3033, %v3081
    %v3090 = vmul.f32 %v3034, %v3082
    %v3091 = vmul.f32 %v3035, %v3083
    %v3093 = vlaneseq
    %v3094 = vshrl.u32 %v3093, 7
    %v3095 = vsub.s32 0, %v3094
    %v3096 = vrot.slane %v2993, %v3095
    %v3098 = vmul.f32 %v3084, %v3096
    %v3099 = vmul.f32 %v3085, %v3096
    %v3100 = vmul.f32 %v3086, %v3096
    %v3101 = vmul.f32 %v3087, %v3096
    %v3102 = vmul.f32 %v3088, %v3096
    %v3103 = vmul.f32 %v3089, %v3096
    %v3104 = vmul.f32 %v3090, %v3096
    %v3105 = vmul.f32 %v3091, %v3096
    %v3107 = vlaneseq
    %v3108 = vshrl.u32 %v3107, 7
    %v3109 = vsub.s32 0, %v3108
    %v3110 = vrot.slane %v2994, %v3109
    %v3112 = vadd.f32 %v3098, %v3110
    %v3113 = vadd.f32 %v3099, %v3110
    %v3114 = vadd.f32 %v3100, %v3110
    %v3115 = vadd.f32 %v3101, %v3110
    %v3116 = vadd.f32 %v3102, %v3110
    %v3117 = vadd.f32 %v3103, %v3110
    %v3118 = vadd.f32 %v3104, %v3110
    %v3119 = vadd.f32 %v3105, %v3110
    %v3120 = vpack.c.bf16 %v3113, %v3112
    %v3121 = vpack.c.bf16 %v3115, %v3114
    %v3122 = vpack.c.bf16 %v3117, %v3116
    %v3123 = vpack.c.bf16 %v3119, %v3118
    %v3132 = vunpack.c.l.b16 %v203
    %v3133 = vunpack.c.l.b16 %v204
    %v3134 = vunpack.c.l.b16 %v205
    %v3135 = vunpack.c.l.b16 %v206
    %v3136 = vunpack.c.l.b16 %v207
    %v3137 = vunpack.c.l.b16 %v208
    %v3138 = vunpack.c.l.b16 %v209
    %v3139 = vunpack.c.l.b16 %v210
    %v3140 = vpack.c.b16 %v3133, %v3132
    %v3141 = vpack.c.b16 %v3135, %v3134
    %v3142 = vpack.c.b16 %v3137, %v3136
    %v3143 = vpack.c.b16 %v3139, %v3138
    %v3148 = vadd.bf16 %v3120, %v3140
    %v3149 = vadd.bf16 %v3121, %v3141
    %v3150 = vadd.bf16 %v3122, %v3142
    %v3151 = vadd.bf16 %v3123, %v3143
    %v3152 = vld [vmem:[%s9] sm:$0xf]
    %v3153 = vld [vmem:[%s9 + $0xc] sm:$0xf]
    %v3154 = vld [vmem:[%s9 + $0x18] sm:$0xf]
    %v3155 = vld [vmem:[%s9 + $0x24] sm:$0xf]
    %v3156 = vld [vmem:[%s9 + $0x30] sm:$0xf]
    %v3157 = vld [vmem:[%s9 + $0x3c] sm:$0xf]
    %v3158 = vld [vmem:[%s9 + $0x48] sm:$0xf]
    %v3159 = vld [vmem:[%s9 + $0x54] sm:$0xf]
    %v3160 = vld [vmem:[%s9 + $0x60] sm:$0xf]
    %v3161 = vld [vmem:[%s9 + $0x6c] sm:$0xf]
    %v3162 = vld [vmem:[%s9 + $0x78] sm:$0xf]
    %v3163 = vld [vmem:[%s9 + $0x84] sm:$0xf]
    %v3164 = vld [vmem:[%s9 + $0x90] sm:$0xf]
    %v3165 = vld [vmem:[%s9 + $0x9c] sm:$0xf]
    %v3166 = vld [vmem:[%s9 + $0xa8] sm:$0xf]
    %v3167 = vld [vmem:[%s9 + $0xb4] sm:$0xf]
    %v3168 = vld [vmem:[%s10] sm:$0x1]
    %v3170 = vlaneseq
    %v3171 = vshrl.u32 %v3170, 7
    %v3172 = vsub.s32 0, %v3171
    %v3173 = vrot.slane %v3168, %v3172
    %v3191 = vunpack.c.l.b16 %v3152
    %v3192 = vunpack.c.l.b16 %v3153
    %v3193 = vunpack.c.l.b16 %v3154
    %v3194 = vunpack.c.l.b16 %v3155
    %v3195 = vunpack.c.l.b16 %v3156
    %v3196 = vunpack.c.l.b16 %v3157
    %v3197 = vunpack.c.l.b16 %v3158
    %v3198 = vunpack.c.l.b16 %v3159
    %v3199 = vunpack.c.l.b16 %v3160
    %v3200 = vunpack.c.l.b16 %v3161
    %v3201 = vunpack.c.l.b16 %v3162
    %v3202 = vunpack.c.l.b16 %v3163
    %v3203 = vunpack.c.l.b16 %v3164
    %v3204 = vunpack.c.l.b16 %v3165
    %v3205 = vunpack.c.l.b16 %v3166
    %v3206 = vunpack.c.l.b16 %v3167
    %v3207 = vpack.c.b16 %v3192, %v3191
    %v3208 = vpack.c.b16 %v3194, %v3193
    %v3209 = vpack.c.b16 %v3196, %v3195
    %v3210 = vpack.c.b16 %v3198, %v3197
    %v3211 = vpack.c.b16 %v3200, %v3199
    %v3212 = vpack.c.b16 %v3202, %v3201
    %v3213 = vpack.c.b16 %v3204, %v3203
    %v3214 = vpack.c.b16 %v3206, %v3205
    %3223 = vmatprep.subr.bf16.mxu0 0
    %3224 = vmatpush1.bf16.msra.mxu0 %v3207
    %3225 = vmatprep.subr.bf16.mxu0 0
    %3226 = vmatpush1.bf16.msra.mxu0 %v3208
    %3227 = vmatprep.subr.bf16.mxu0 0
    %3228 = vmatpush1.bf16.msra.mxu0 %v3209
    %3229 = vmatprep.subr.bf16.mxu0 0
    %3230 = vmatpush1.bf16.msra.mxu0 %v3210
    %3231 = vmatprep.subr.bf16.mxu0 0
    %3232 = vmatpush1.bf16.msra.mxu0 %v3211
    %3233 = vmatprep.subr.bf16.mxu0 0
    %3234 = vmatpush1.bf16.msra.mxu0 %v3212
    %3235 = vmatprep.subr.bf16.mxu0 0
    %3236 = vmatpush1.bf16.msra.mxu0 %v3213
    %3237 = vmatprep.subr.bf16.mxu0 0
    %3238 = vmatpush1.bf16.msra.mxu0 %v3214
    %3239 = vmatprep.subr.bf16.mxu0 0
    %3240 = vmatpush1.bf16.msra.mxu0 0
    %3241 = vmatprep.subr.bf16.mxu0 0
    %3242 = vmatpush1.bf16.msra.mxu0 0
    %3243 = vmatprep.subr.bf16.mxu0 0
    %3244 = vmatpush1.bf16.msra.mxu0 0
    %3245 = vmatprep.subr.bf16.mxu0 0
    %3246 = vmatpush1.bf16.msra.mxu0 0
    %3247 = vmatprep.subr.bf16.mxu0 0
    %3248 = vmatpush1.bf16.msra.mxu0 0
    %3249 = vmatprep.subr.bf16.mxu0 0
    %3250 = vmatpush1.bf16.msra.mxu0 0
    %3251 = vmatprep.subr.bf16.mxu0 0
    %3252 = vmatpush1.bf16.msra.mxu0 0
    %3253 = vmatprep.subr.bf16.mxu0 0
    %3254 = vmatpush1.bf16.msra.mxu0 0
    %3255 = vmatprep.mubr.bf16.mxu0 0
    %3256 = vmatmul.mubr.bf16.gmra.mrb[0].mxu0 %v3148
    %v3257 = vpop.f32.mrb[0].mxu0
    %v3258 = vadd.f32 %v3173, %v3257
    %v3259 = vpop.f32.mrb[0].mxu0
    %v3260 = vpop.f32.mrb[0].mxu0
    %v3261 = vadd.f32 %v3173, %v3260
    %v3262 = vpop.f32.mrb[0].mxu0
    %3263 = vmatprep.mubr.bf16.mxu0 0
    %3264 = vmatmul.mubr.bf16.gmra.mrb[0].mxu0 %v3149
    %v3265 = vpop.f32.mrb[0].mxu0
    %v3266 = vadd.f32 %v3173, %v3265
    %v3267 = vpop.f32.mrb[0].mxu0
    %v3268 = vpop.f32.mrb[0].mxu0
    %v3269 = vadd.f32 %v3173, %v3268
    %v3270 = vpop.f32.mrb[0].mxu0
    %3271 = vmatprep.mubr.bf16.mxu0 0
    %3272 = vmatmul.mubr.bf16.gmra.mrb[0].mxu0 %v3150
    %v3273 = vpop.f32.mrb[0].mxu0
    %v3274 = vadd.f32 %v3173, %v3273
    %v3275 = vpop.f32.mrb[0].mxu0
    %v3276 = vpop.f32.mrb[0].mxu0
    %v3277 = vadd.f32 %v3173, %v3276
    %v3278 = vpop.f32.mrb[0].mxu0
    %3279 = vmatprep.mubr.bf16.mxu0 0
    %3280 = vmatmul.mubr.bf16.gmra.mrb[0].mxu0 %v3151
    %v3281 = vpop.f32.mrb[0].mxu0
    %v3282 = vadd.f32 %v3173, %v3281
    %v3283 = vpop.f32.mrb[0].mxu0
    %v3284 = vpop.f32.mrb[0].mxu0
    %v3285 = vadd.f32 %v3173, %v3284
    %v3286 = vpop.f32.mrb[0].mxu0
    %3287 = vdwg.mxu0
    %v3288 = vadd.bf16 %v211, %v227
    %v3289 = vadd.bf16 %v212, %v228
    %v3290 = vadd.bf16 %v213, %v229
    %v3291 = vadd.bf16 %v214, %v230
    %v3292 = vadd.bf16 %v215, %v231
    %v3293 = vadd.bf16 %v216, %v232
    %v3294 = vadd.bf16 %v217, %v233
    %v3295 = vadd.bf16 %v218, %v234
    %v3296 = vadd.bf16 %v219, %v235
    %v3297 = vadd.bf16 %v220, %v236
    %v3298 = vadd.bf16 %v221, %v237
    %v3299 = vadd.bf16 %v222, %v238
    %v3300 = vadd.bf16 %v223, %v239
    %v3301 = vadd.bf16 %v224, %v240
    %v3302 = vadd.bf16 %v225, %v241
    %v3303 = vadd.bf16 %v226, %v242
    %v3304 = vld [vmem:[%s9 + $0x4] sm:$0xf]
    %v3305 = vld [vmem:[%s9 + $0x10] sm:$0xf]
    %v3306 = vld [vmem:[%s9 + $0x1c] sm:$0xf]
    %v3307 = vld [vmem:[%s9 + $0x28] sm:$0xf]
    %v3308 = vld [vmem:[%s9 + $0x34] sm:$0xf]
    %v3309 = vld [vmem:[%s9 + $0x40] sm:$0xf]
    %v3310 = vld [vmem:[%s9 + $0x4c] sm:$0xf]
    %v3311 = vld [vmem:[%s9 + $0x58] sm:$0xf]
    %v3312 = vld [vmem:[%s9 + $0x64] sm:$0xf]
    %v3313 = vld [vmem:[%s9 + $0x70] sm:$0xf]
    %v3314 = vld [vmem:[%s9 + $0x7c] sm:$0xf]
    %v3315 = vld [vmem:[%s9 + $0x88] sm:$0xf]
    %v3316 = vld [vmem:[%s9 + $0x94] sm:$0xf]
    %v3317 = vld [vmem:[%s9 + $0xa0] sm:$0xf]
    %v3318 = vld [vmem:[%s9 + $0xac] sm:$0xf]
    %v3319 = vld [vmem:[%s9 + $0xb8] sm:$0xf]
    %v3320 = vld [vmem:[%s10 + $0x1] sm:$0x1]
    %v3322 = vlaneseq
    %v3323 = vshrl.u32 %v3322, 7
    %v3324 = vsub.s32 0, %v3323
    %v3325 = vrot.slane %v3320, %v3324
    %v3343 = vunpack.c.l.b16 %v3288
    %v3344 = vunpack.c.l.b16 %v3289
    %v3345 = vunpack.c.l.b16 %v3290
    %v3346 = vunpack.c.l.b16 %v3291
    %v3347 = vunpack.c.l.b16 %v3292
    %v3348 = vunpack.c.l.b16 %v3293
    %v3349 = vunpack.c.l.b16 %v3294
    %v3350 = vunpack.c.l.b16 %v3295
    %v3351 = vunpack.c.l.b16 %v3296
    %v3352 = vunpack.c.l.b16 %v3297
    %v3353 = vunpack.c.l.b16 %v3298
    %v3354 = vunpack.c.l.b16 %v3299
    %v3355 = vunpack.c.l.b16 %v3300
    %v3356 = vunpack.c.l.b16 %v3301
    %v3357 = vunpack.c.l.b16 %v3302
    %v3358 = vunpack.c.l.b16 %v3303
    %v3359 = vpack.c.b16 %v3344, %v3343
    %v3360 = vpack.c.b16 %v3346, %v3345
    %v3361 = vpack.c.b16 %v3348, %v3347
    %v3362 = vpack.c.b16 %v3350, %v3349
    %v3363 = vpack.c.b16 %v3352, %v3351
    %v3364 = vpack.c.b16 %v3354, %v3353
    %v3365 = vpack.c.b16 %v3356, %v3355
    %v3366 = vpack.c.b16 %v3358, %v3357
    %v3391 = vunpack.c.l.b16 %v3304
    %v3392 = vunpack.c.l.b16 %v3305
    %v3393 = vunpack.c.l.b16 %v3306
    %v3394 = vunpack.c.l.b16 %v3307
    %v3395 = vunpack.c.l.b16 %v3308
    %v3396 = vunpack.c.l.b16 %v3309
    %v3397 = vunpack.c.l.b16 %v3310
    %v3398 = vunpack.c.l.b16 %v3311
    %v3399 = vunpack.c.l.b16 %v3312
    %v3400 = vunpack.c.l.b16 %v3313
    %v3401 = vunpack.c.l.b16 %v3314
    %v3402 = vunpack.c.l.b16 %v3315
    %v3403 = vunpack.c.l.b16 %v3316
    %v3404 = vunpack.c.l.b16 %v3317
    %v3405 = vunpack.c.l.b16 %v3318
    %v3406 = vunpack.c.l.b16 %v3319
    %v3407 = vpack.c.b16 %v3392, %v3391
    %v3408 = vpack.c.b16 %v3394, %v3393
    %v3409 = vpack.c.b16 %v3396, %v3395
    %v3410 = vpack.c.b16 %v3398, %v3397
    %v3411 = vpack.c.b16 %v3400, %v3399
    %v3412 = vpack.c.b16 %v3402, %v3401
    %v3413 = vpack.c.b16 %v3404, %v3403
    %v3414 = vpack.c.b16 %v3406, %v3405
    %3423 = vmatprep.subr.bf16.mxu0 0
    %3424 = vmatpush1.bf16.msra.mxu0 %v3407
    %3425 = vmatprep.subr.bf16.mxu0 0
    %3426 = vmatpush1.bf16.msra.mxu0 %v3408
    %3427 = vmatprep.subr.bf16.mxu0 0
    %3428 = vmatpush1.bf16.msra.mxu0 %v3409
    %3429 = vmatprep.subr.bf16.mxu0 0
    %3430 = vmatpush1.bf16.msra.mxu0 %v3410
    %3431 = vmatprep.subr.bf16.mxu0 0
    %3432 = vmatpush1.bf16.msra.mxu0 %v3411
    %3433 = vmatprep.subr.bf16.mxu0 0
    %3434 = vmatpush1.bf16.msra.mxu0 %v3412
    %3435 = vmatprep.subr.bf16.mxu0 0
    %3436 = vmatpush1.bf16.msra.mxu0 %v3413
    %3437 = vmatprep.subr.bf16.mxu0 0
    %3438 = vmatpush1.bf16.msra.mxu0 %v3414
    %3439 = vmatprep.subr.bf16.mxu0 0
    %3440 = vmatpush1.bf16.msra.mxu0 0
    %3441 = vmatprep.subr.bf16.mxu0 0
    %3442 = vmatpush1.bf16.msra.mxu0 0
    %3443 = vmatprep.subr.bf16.mxu0 0
    %3444 = vmatpush1.bf16.msra.mxu0 0
    %3445 = vmatprep.subr.bf16.mxu0 0
    %3446 = vmatpush1.bf16.msra.mxu0 0
    %3447 = vmatprep.subr.bf16.mxu0 0
    %3448 = vmatpush1.bf16.msra.mxu0 0
    %3449 = vmatprep.subr.bf16.mxu0 0
    %3450 = vmatpush1.bf16.msra.mxu0 0
    %3451 = vmatprep.subr.bf16.mxu0 0
    %3452 = vmatpush1.bf16.msra.mxu0 0
    %3453 = vmatprep.subr.bf16.mxu0 0
    %3454 = vmatpush1.bf16.msra.mxu0 0
    %3455 = vmatprep.mubr.bf16.mxu0 0
    %3456 = vmatmul.mubr.bf16.gmra.mrb[0].mxu0 %v3359
    %v3457 = vpop.f32.mrb[0].mxu0
    %v3458 = vadd.f32 %v3325, %v3457
    %v3459 = vpop.f32.mrb[0].mxu0
    %v3460 = vpop.f32.mrb[0].mxu0
    %v3461 = vadd.f32 %v3325, %v3460
    %v3462 = vpop.f32.mrb[0].mxu0
    %3463 = vmatprep.mubr.bf16.mxu0 0
    %3464 = vmatmul.mubr.bf16.gmra.mrb[0].mxu0 %v3360
    %v3465 = vpop.f32.mrb[0].mxu0
    %v3466 = vadd.f32 %v3325, %v3465
    %v3467 = vpop.f32.mrb[0].mxu0
    %v3468 = vpop.f32.mrb[0].mxu0
    %v3469 = vadd.f32 %v3325, %v3468
    %v3470 = vpop.f32.mrb[0].mxu0
    %3471 = vmatprep.mubr.bf16.mxu0 0
    %3472 = vmatmul.mubr.bf16.gmra.mrb[0].mxu0 %v3361
    %v3473 = vpop.f32.mrb[0].mxu0
    %v3474 = vadd.f32 %v3325, %v3473
    %v3475 = vpop.f32.mrb[0].mxu0
    %v3476 = vpop.f32.mrb[0].mxu0
    %v3477 = vadd.f32 %v3325, %v3476
    %v3478 = vpop.f32.mrb[0].mxu0
    %3479 = vmatprep.mubr.bf16.mxu0 0
    %3480 = vmatmul.mubr.bf16.gmra.mrb[0].mxu0 %v3362
    %v3481 = vpop.f32.mrb[0].mxu0
    %v3482 = vadd.f32 %v3325, %v3481
    %v3483 = vpop.f32.mrb[0].mxu0
    %v3484 = vpop.f32.mrb[0].mxu0
    %v3485 = vadd.f32 %v3325, %v3484
    %v3486 = vpop.f32.mrb[0].mxu0
    %3487 = vmatprep.mubr.bf16.mxu0 0
    %3488 = vmatmul.mubr.bf16.gmra.mrb[0].mxu0 %v3363
    %v3489 = vpop.f32.mrb[0].mxu0
    %v3490 = vadd.f32 %v3325, %v3489
    %v3491 = vpop.f32.mrb[0].mxu0
    %v3492 = vpop.f32.mrb[0].mxu0
    %v3493 = vadd.f32 %v3325, %v3492
    %v3494 = vpop.f32.mrb[0].mxu0
    %3495 = vmatprep.mubr.bf16.mxu0 0
    %3496 = vmatmul.mubr.bf16.gmra.mrb[0].mxu0 %v3364
    %v3497 = vpop.f32.mrb[0].mxu0
    %v3498 = vadd.f32 %v3325, %v3497
    %v3499 = vpop.f32.mrb[0].mxu0
    %v3500 = vpop.f32.mrb[0].mxu0
    %v3501 = vadd.f32 %v3325, %v3500
    %v3502 = vpop.f32.mrb[0].mxu0
    %3503 = vmatprep.mubr.bf16.mxu0 0
    %3504 = vmatmul.mubr.bf16.gmra.mrb[0].mxu0 %v3365
    %v3505 = vpop.f32.mrb[0].mxu0
    %v3506 = vadd.f32 %v3325, %v3505
    %v3507 = vpop.f32.mrb[0].mxu0
    %v3508 = vpop.f32.mrb[0].mxu0
    %v3509 = vadd.f32 %v3325, %v3508
    %v3510 = vpop.f32.mrb[0].mxu0
    %3511 = vmatprep.mubr.bf16.mxu0 0
    %3512 = vmatmul.mubr.bf16.gmra.mrb[0].mxu0 %v3366
    %v3513 = vpop.f32.mrb[0].mxu0
    %v3514 = vadd.f32 %v3325, %v3513
    %v3515 = vpop.f32.mrb[0].mxu0
    %v3516 = vpop.f32.mrb[0].mxu0
    %v3517 = vadd.f32 %v3325, %v3516
    %v3518 = vpop.f32.mrb[0].mxu0
    %3519 = vdwg.mxu0
    %v3520 = vld [vmem:[%s9 + $0x8] sm:$0xf]
    %v3521 = vld [vmem:[%s9 + $0x14] sm:$0xf]
    %v3522 = vld [vmem:[%s9 + $0x20] sm:$0xf]
    %v3523 = vld [vmem:[%s9 + $0x2c] sm:$0xf]
    %v3524 = vld [vmem:[%s9 + $0x38] sm:$0xf]
    %v3525 = vld [vmem:[%s9 + $0x44] sm:$0xf]
    %v3526 = vld [vmem:[%s9 + $0x50] sm:$0xf]
    %v3527 = vld [vmem:[%s9 + $0x5c] sm:$0xf]
    %v3528 = vld [vmem:[%s9 + $0x68] sm:$0xf]
    %v3529 = vld [vmem:[%s9 + $0x74] sm:$0xf]
    %v3530 = vld [vmem:[%s9 + $0x80] sm:$0xf]
    %v3531 = vld [vmem:[%s9 + $0x8c] sm:$0xf]
    %v3532 = vld [vmem:[%s9 + $0x98] sm:$0xf]
    %v3533 = vld [vmem:[%s9 + $0xa4] sm:$0xf]
    %v3534 = vld [vmem:[%s9 + $0xb0] sm:$0xf]
    %v3535 = vld [vmem:[%s9 + $0xbc] sm:$0xf]
    %v3536 = vld [vmem:[%s10 + $0x2] sm:$0x1]
    %v3538 = vlaneseq
    %v3539 = vshrl.u32 %v3538, 7
    %v3540 = vsub.s32 0, %v3539
    %v3541 = vrot.slane %v3536, %v3540
    %v3559 = vunpack.c.l.b16 %v243
    %v3560 = vunpack.c.l.b16 %v244
    %v3561 = vunpack.c.l.b16 %v245
    %v3562 = vunpack.c.l.b16 %v246
    %v3563 = vunpack.c.l.b16 %v247
    %v3564 = vunpack.c.l.b16 %v248
    %v3565 = vunpack.c.l.b16 %v249
    %v3566 = vunpack.c.l.b16 %v250
    %v3567 = vunpack.c.l.b16 %v251
    %v3568 = vunpack.c.l.b16 %v252
    %v3569 = vunpack.c.l.b16 %v253
    %v3570 = vunpack.c.l.b16 %v254
    %v3571 = vunpack.c.l.b16 %v255
    %v3572 = vunpack.c.l.b16 %v256
    %v3573 = vunpack.c.l.b16 %v257
    %v3574 = vunpack.c.l.b16 %v258
    %v3575 = vpack.c.b16 %v3560, %v3559
    %v3576 = vpack.c.b16 %v3562, %v3561
    %v3577 = vpack.c.b16 %v3564, %v3563
    %v3578 = vpack.c.b16 %v3566, %v3565
    %v3579 = vpack.c.b16 %v3568, %v3567
    %v3580 = vpack.c.b16 %v3570, %v3569
    %v3581 = vpack.c.b16 %v3572, %v3571
    %v3582 = vpack.c.b16 %v3574, %v3573
    %v3607 = vunpack.c.l.b16 %v3520
    %v3608 = vunpack.c.l.b16 %v3521
    %v3609 = vunpack.c.l.b16 %v3522
    %v3610 = vunpack.c.l.b16 %v3523
    %v3611 = vunpack.c.l.b16 %v3524
    %v3612 = vunpack.c.l.b16 %v3525
    %v3613 = vunpack.c.l.b16 %v3526
    %v3614 = vunpack.c.l.b16 %v3527
    %v3615 = vunpack.c.l.b16 %v3528
    %v3616 = vunpack.c.l.b16 %v3529
    %v3617 = vunpack.c.l.b16 %v3530
    %v3618 = vunpack.c.l.b16 %v3531
    %v3619 = vunpack.c.l.b16 %v3532
    %v3620 = vunpack.c.l.b16 %v3533
    %v3621 = vunpack.c.l.b16 %v3534
    %v3622 = vunpack.c.l.b16 %v3535
    %v3623 = vpack.c.b16 %v3608, %v3607
    %v3624 = vpack.c.b16 %v3610, %v3609
    %v3625 = vpack.c.b16 %v3612, %v3611
    %v3626 = vpack.c.b16 %v3614, %v3613
    %v3627 = vpack.c.b16 %v3616, %v3615
    %v3628 = vpack.c.b16 %v3618, %v3617
    %v3629 = vpack.c.b16 %v3620, %v3619
    %v3630 = vpack.c.b16 %v3622, %v3621
    %3639 = vmatprep.subr.bf16.mxu0 0
    %3640 = vmatpush1.bf16.msra.mxu0 %v3623
    %3641 = vmatprep.subr.bf16.mxu0 0
    %3642 = vmatpush1.bf16.msra.mxu0 %v3624
    %3643 = vmatprep.subr.bf16.mxu0 0
    %3644 = vmatpush1.bf16.msra.mxu0 %v3625
    %3645 = vmatprep.subr.bf16.mxu0 0
    %3646 = vmatpush1.bf16.msra.mxu0 %v3626
    %3647 = vmatprep.subr.bf16.mxu0 0
    %3648 = vmatpush1.bf16.msra.mxu0 %v3627
    %3649 = vmatprep.subr.bf16.mxu0 0
    %3650 = vmatpush1.bf16.msra.mxu0 %v3628
    %3651 = vmatprep.subr.bf16.mxu0 0
    %3652 = vmatpush1.bf16.msra.mxu0 %v3629
    %3653 = vmatprep.subr.bf16.mxu0 0
    %3654 = vmatpush1.bf16.msra.mxu0 %v3630
    %3655 = vmatprep.subr.bf16.mxu0 0
    %3656 = vmatpush1.bf16.msra.mxu0 0
    %3657 = vmatprep.subr.bf16.mxu0 0
    %3658 = vmatpush1.bf16.msra.mxu0 0
    %3659 = vmatprep.subr.bf16.mxu0 0
    %3660 = vmatpush1.bf16.msra.mxu0 0
    %3661 = vmatprep.subr.bf16.mxu0 0
    %3662 = vmatpush1.bf16.msra.mxu0 0
    %3663 = vmatprep.subr.bf16.mxu0 0
    %3664 = vmatpush1.bf16.msra.mxu0 0
    %3665 = vmatprep.subr.bf16.mxu0 0
    %3666 = vmatpush1.bf16.msra.mxu0 0
    %3667 = vmatprep.subr.bf16.mxu0 0
    %3668 = vmatpush1.bf16.msra.mxu0 0
    %3669 = vmatprep.subr.bf16.mxu0 0
    %3670 = vmatpush1.bf16.msra.mxu0 0
    %3671 = vmatprep.mubr.bf16.mxu0 0
    %3672 = vmatmul.mubr.bf16.gmra.mrb[0].mxu0 %v3575
    %v3673 = vpop.f32.mrb[0].mxu0
    %v3674 = vadd.f32 %v3541, %v3673
    %v3675 = vpop.f32.mrb[0].mxu0
    %v3676 = vpop.f32.mrb[0].mxu0
    %v3677 = vadd.f32 %v3541, %v3676
    %v3678 = vpop.f32.mrb[0].mxu0
    %3679 = vmatprep.mubr.bf16.mxu0 0
    %3680 = vmatmul.mubr.bf16.gmra.mrb[0].mxu0 %v3576
    %v3681 = vpop.f32.mrb[0].mxu0
    %v3682 = vadd.f32 %v3541, %v3681
    %v3683 = vpop.f32.mrb[0].mxu0
    %v3684 = vpop.f32.mrb[0].mxu0
    %v3685 = vadd.f32 %v3541, %v3684
    %v3686 = vpop.f32.mrb[0].mxu0
    %3687 = vmatprep.mubr.bf16.mxu0 0
    %3688 = vmatmul.mubr.bf16.gmra.mrb[0].mxu0 %v3577
    %v3689 = vpop.f32.mrb[0].mxu0
    %v3690 = vadd.f32 %v3541, %v3689
    %v3691 = vpop.f32.mrb[0].mxu0
    %v3692 = vpop.f32.mrb[0].mxu0
    %v3693 = vadd.f32 %v3541, %v3692
    %v3694 = vpop.f32.mrb[0].mxu0
    %3695 = vmatprep.mubr.bf16.mxu0 0
    %3696 = vmatmul.mubr.bf16.gmra.mrb[0].mxu0 %v3578
    %v3697 = vpop.f32.mrb[0].mxu0
    %v3698 = vadd.f32 %v3541, %v3697
    %v3699 = vpop.f32.mrb[0].mxu0
    %v3700 = vpop.f32.mrb[0].mxu0
    %v3701 = vadd.f32 %v3541, %v3700
    %v3702 = vpop.f32.mrb[0].mxu0
    %3703 = vmatprep.mubr.bf16.mxu0 0
    %3704 = vmatmul.mubr.bf16.gmra.mrb[0].mxu0 %v3579
    %v3705 = vpop.f32.mrb[0].mxu0
    %v3706 = vadd.f32 %v3541, %v3705
    %v3707 = vpop.f32.mrb[0].mxu0
    %v3708 = vpop.f32.mrb[0].mxu0
    %v3709 = vadd.f32 %v3541, %v3708
    %v3710 = vpop.f32.mrb[0].mxu0
    %3711 = vmatprep.mubr.bf16.mxu0 0
    %3712 = vmatmul.mubr.bf16.gmra.mrb[0].mxu0 %v3580
    %v3713 = vpop.f32.mrb[0].mxu0
    %v3714 = vadd.f32 %v3541, %v3713
    %v3715 = vpop.f32.mrb[0].mxu0
    %v3716 = vpop.f32.mrb[0].mxu0
    %v3717 = vadd.f32 %v3541, %v3716
    %v3718 = vpop.f32.mrb[0].mxu0
    %3719 = vmatprep.mubr.bf16.mxu0 0
    %3720 = vmatmul.mubr.bf16.gmra.mrb[0].mxu0 %v3581
    %v3721 = vpop.f32.mrb[0].mxu0
    %v3722 = vadd.f32 %v3541, %v3721
    %v3723 = vpop.f32.mrb[0].mxu0
    %v3724 = vpop.f32.mrb[0].mxu0
    %v3725 = vadd.f32 %v3541, %v3724
    %v3726 = vpop.f32.mrb[0].mxu0
    %3727 = vmatprep.mubr.bf16.mxu0 0
    %3728 = vmatmul.mubr.bf16.gmra.mrb[0].mxu0 %v3582
    %v3729 = vpop.f32.mrb[0].mxu0
    %v3730 = vadd.f32 %v3541, %v3729
    %v3731 = vpop.f32.mrb[0].mxu0
    %v3732 = vpop.f32.mrb[0].mxu0
    %v3733 = vadd.f32 %v3541, %v3732
    %v3734 = vpop.f32.mrb[0].mxu0
    %3735 = vdwg.mxu0
    %v3736 = vpack.c.bf16 %v3261, %v3258
    %v3737 = vpack.c.bf16 %v3269, %v3266
    %v3738 = vpack.c.bf16 %v3277, %v3274
    %v3739 = vpack.c.bf16 %v3285, %v3282
    %v3740 = vpack.c.bf16 %v3461, %v3458
    %v3741 = vpack.c.bf16 %v3469, %v3466
    %v3742 = vpack.c.bf16 %v3477, %v3474
    %v3743 = vpack.c.bf16 %v3485, %v3482
    %v3744 = vpack.c.bf16 %v3493, %v3490
    %v3745 = vpack.c.bf16 %v3501, %v3498
    %v3746 = vpack.c.bf16 %v3509, %v3506
    %v3747 = vpack.c.bf16 %v3517, %v3514
    %v3748 = vpack.c.bf16 %v3677, %v3674
    %v3749 = vpack.c.bf16 %v3685, %v3682
    %v3750 = vpack.c.bf16 %v3693, %v3690
    %v3751 = vpack.c.bf16 %v3701, %v3698
    %v3752 = vpack.c.bf16 %v3709, %v3706
    %v3753 = vpack.c.bf16 %v3717, %v3714
    %v3754 = vpack.c.bf16 %v3725, %v3722
    %v3755 = vpack.c.bf16 %v3733, %v3730
    %v3756 = vld [vmem:[#allocation4] sm:$0x1]
    %v3758 = vsel %vm645, %v3736, 0
    %v3761 = vsel %vm645, %v3740, 0
    %v3764 = vsel %vm645, %v3741, 0
    %3766 = vmatprep.subr.bf16.mxu0 0
    %3767 = vmatpush1.bf16.xpose.msra.mxu0 %v3761
    %3768 = vmatprep.subr.bf16.mxu0 0
    %3769 = vmatpush1.bf16.xpose.msra.mxu0 %v3764
    %3770 = vmatprep.subr.bf16.mxu0 0
    %3771 = vmatpush1.bf16.xpose.msra.mxu0 0
    %3772 = vmatprep.subr.bf16.mxu0 0
    %3773 = vmatpush1.bf16.xpose.msra.mxu0 0
    %3774 = vmatprep.subr.bf16.mxu0 0
    %3775 = vmatpush1.bf16.xpose.msra.mxu0 0
    %3776 = vmatprep.subr.bf16.mxu0 0
    %3777 = vmatpush1.bf16.xpose.msra.mxu0 0
    %3778 = vmatprep.subr.bf16.mxu0 0
    %3779 = vmatpush1.bf16.xpose.msra.mxu0 0
    %3780 = vmatprep.subr.bf16.mxu0 0
    %3781 = vmatpush1.bf16.xpose.msra.mxu0 0
    %3782 = vmatprep.subr.bf16.mxu0 0
    %3783 = vmatpush1.bf16.xpose.msra.mxu0 0
    %3784 = vmatprep.subr.bf16.mxu0 0
    %3785 = vmatpush1.bf16.xpose.msra.mxu0 0
    %3786 = vmatprep.subr.bf16.mxu0 0
    %3787 = vmatpush1.bf16.xpose.msra.mxu0 0
    %3788 = vmatprep.subr.bf16.mxu0 0
    %3789 = vmatpush1.bf16.xpose.msra.mxu0 0
    %3790 = vmatprep.subr.bf16.mxu0 0
    %3791 = vmatpush1.bf16.xpose.msra.mxu0 0
    %3792 = vmatprep.subr.bf16.mxu0 0
    %3793 = vmatpush1.bf16.xpose.msra.mxu0 0
    %3794 = vmatprep.subr.bf16.mxu0 0
    %3795 = vmatpush1.bf16.xpose.msra.mxu0 0
    %3796 = vmatprep.subr.bf16.mxu0 0
    %3797 = vmatpush1.bf16.xpose.msra.mxu0 0
    %3798 = vmatprep.mubr.bf16.mxu0 0
    %3799 = vmatmul.mubr.bf16.gmra.mrb[0].mxu0 %v3758
    %v3800 = vpop.f32.mrb[0].mxu0
    %v3801 = vadd.f32 0.0, %v3800
    %v3802 = vpop.f32.mrb[0].mxu0
    %v3803 = vpop.f32.mrb[0].mxu0
    %v3804 = vadd.f32 0.0, %v3803
    %v3805 = vpop.f32.mrb[0].mxu0
    %3806 = vdwg.mxu0
    %v3808 = vsel %vm645, %v3737, 0
    %v3811 = vsel %vm645, %v3742, 0
    %v3814 = vsel %vm645, %v3743, 0
    %3816 = vmatprep.subr.bf16.mxu0 0
    %3817 = vmatpush1.bf16.xpose.msra.mxu0 %v3811
    %3818 = vmatprep.subr.bf16.mxu0 0
    %3819 = vmatpush1.bf16.xpose.msra.mxu0 %v3814
    %3820 = vmatprep.subr.bf16.mxu0 0
    %3821 = vmatpush1.bf16.xpose.msra.mxu0 0
    %3822 = vmatprep.subr.bf16.mxu0 0
    %3823 = vmatpush1.bf16.xpose.msra.mxu0 0
    %3824 = vmatprep.subr.bf16.mxu0 0
    %3825 = vmatpush1.bf16.xpose.msra.mxu0 0
    %3826 = vmatprep.subr.bf16.mxu0 0
    %3827 = vmatpush1.bf16.xpose.msra.mxu0 0
    %3828 = vmatprep.subr.bf16.mxu0 0
    %3829 = vmatpush1.bf16.xpose.msra.mxu0 0
    %3830 = vmatprep.subr.bf16.mxu0 0
    %3831 = vmatpush1.bf16.xpose.msra.mxu0 0
    %3832 = vmatprep.subr.bf16.mxu0 0
    %3833 = vmatpush1.bf16.xpose.msra.mxu0 0
    %3834 = vmatprep.subr.bf16.mxu0 0
    %3835 = vmatpush1.bf16.xpose.msra.mxu0 0
    %3836 = vmatprep.subr.bf16.mxu0 0
    %3837 = vmatpush1.bf16.xpose.msra.mxu0 0
    %3838 = vmatprep.subr.bf16.mxu0 0
    %3839 = vmatpush1.bf16.xpose.msra.mxu0 0
    %3840 = vmatprep.subr.bf16.mxu0 0
    %3841 = vmatpush1.bf16.xpose.msra.mxu0 0
    %3842 = vmatprep.subr.bf16.mxu0 0
    %3843 = vmatpush1.bf16.xpose.msra.mxu0 0
    %3844 = vmatprep.subr.bf16.mxu0 0
    %3845 = vmatpush1.bf16.xpose.msra.mxu0 0
    %3846 = vmatprep.subr.bf16.mxu0 0
    %3847 = vmatpush1.bf16.xpose.msra.mxu0 0
    %3848 = vmatprep.mubr.bf16.mxu0 0
    %3849 = vmatmul.mubr.bf16.gmra.mrb[0].mxu0 %v3808
    %v3850 = vpop.f32.mrb[0].mxu0
    %v3851 = vadd.f32 0.0, %v3850
    %v3852 = vpop.f32.mrb[0].mxu0
    %v3853 = vpop.f32.mrb[0].mxu0
    %v3854 = vadd.f32 0.0, %v3853
    %v3855 = vpop.f32.mrb[0].mxu0
    %3856 = vdwg.mxu0
    %v3858 = vsel %vm645, %v3738, 0
    %v3861 = vsel %vm645, %v3744, 0
    %v3864 = vsel %vm645, %v3745, 0
    %3866 = vmatprep.subr.bf16.mxu0 0
    %3867 = vmatpush1.bf16.xpose.msra.mxu0 %v3861
    %3868 = vmatprep.subr.bf16.mxu0 0
    %3869 = vmatpush1.bf16.xpose.msra.mxu0 %v3864
    %3870 = vmatprep.subr.bf16.mxu0 0
    %3871 = vmatpush1.bf16.xpose.msra.mxu0 0
    %3872 = vmatprep.subr.bf16.mxu0 0
    %3873 = vmatpush1.bf16.xpose.msra.mxu0 0
    %3874 = vmatprep.subr.bf16.mxu0 0
    %3875 = vmatpush1.bf16.xpose.msra.mxu0 0
    %3876 = vmatprep.subr.bf16.mxu0 0
    %3877 = vmatpush1.bf16.xpose.msra.mxu0 0
    %3878 = vmatprep.subr.bf16.mxu0 0
    %3879 = vmatpush1.bf16.xpose.msra.mxu0 0
    %3880 = vmatprep.subr.bf16.mxu0 0
    %3881 = vmatpush1.bf16.xpose.msra.mxu0 0
    %3882 = vmatprep.subr.bf16.mxu0 0
    %3883 = vmatpush1.bf16.xpose.msra.mxu0 0
    %3884 = vmatprep.subr.bf16.mxu0 0
    %3885 = vmatpush1.bf16.xpose.msra.mxu0 0
    %3886 = vmatprep.subr.bf16.mxu0 0
    %3887 = vmatpush1.bf16.xpose.msra.mxu0 0
    %3888 = vmatprep.subr.bf16.mxu0 0
    %3889 = vmatpush1.bf16.xpose.msra.mxu0 0
    %3890 = vmatprep.subr.bf16.mxu0 0
    %3891 = vmatpush1.bf16.xpose.msra.mxu0 0
    %3892 = vmatprep.subr.bf16.mxu0 0
    %3893 = vmatpush1.bf16.xpose.msra.mxu0 0
    %3894 = vmatprep.subr.bf16.mxu0 0
    %3895 = vmatpush1.bf16.xpose.msra.mxu0 0
    %3896 = vmatprep.subr.bf16.mxu0 0
    %3897 = vmatpush1.bf16.xpose.msra.mxu0 0
    %3898 = vmatprep.mubr.bf16.mxu0 0
    %3899 = vmatmul.mubr.bf16.gmra.mrb[0].mxu0 %v3858
    %v3900 = vpop.f32.mrb[0].mxu0
    %v3901 = vadd.f32 0.0, %v3900
    %v3902 = vpop.f32.mrb[0].mxu0
    %v3903 = vpop.f32.mrb[0].mxu0
    %v3904 = vadd.f32 0.0, %v3903
    %v3905 = vpop.f32.mrb[0].mxu0
    %3906 = vdwg.mxu0
    %v3908 = vsel %vm645, %v3739, 0
    %v3911 = vsel %vm645, %v3746, 0
    %v3914 = vsel %vm645, %v3747, 0
    %3916 = vmatprep.subr.bf16.mxu0 0
    %3917 = vmatpush1.bf16.xpose.msra.mxu0 %v3911
    %3918 = vmatprep.subr.bf16.mxu0 0
    %3919 = vmatpush1.bf16.xpose.msra.mxu0 %v3914
    %3920 = vmatprep.subr.bf16.mxu0 0
    %3921 = vmatpush1.bf16.xpose.msra.mxu0 0
    %3922 = vmatprep.subr.bf16.mxu0 0
    %3923 = vmatpush1.bf16.xpose.msra.mxu0 0
    %3924 = vmatprep.subr.bf16.mxu0 0
    %3925 = vmatpush1.bf16.xpose.msra.mxu0 0
    %3926 = vmatprep.subr.bf16.mxu0 0
    %3927 = vmatpush1.bf16.xpose.msra.mxu0 0
    %3928 = vmatprep.subr.bf16.mxu0 0
    %3929 = vmatpush1.bf16.xpose.msra.mxu0 0
    %3930 = vmatprep.subr.bf16.mxu0 0
    %3931 = vmatpush1.bf16.xpose.msra.mxu0 0
    %3932 = vmatprep.subr.bf16.mxu0 0
    %3933 = vmatpush1.bf16.xpose.msra.mxu0 0
    %3934 = vmatprep.subr.bf16.mxu0 0
    %3935 = vmatpush1.bf16.xpose.msra.mxu0 0
    %3936 = vmatprep.subr.bf16.mxu0 0
    %3937 = vmatpush1.bf16.xpose.msra.mxu0 0
    %3938 = vmatprep.subr.bf16.mxu0 0
    %3939 = vmatpush1.bf16.xpose.msra.mxu0 0
    %3940 = vmatprep.subr.bf16.mxu0 0
    %3941 = vmatpush1.bf16.xpose.msra.mxu0 0
    %3942 = vmatprep.subr.bf16.mxu0 0
    %3943 = vmatpush1.bf16.xpose.msra.mxu0 0
    %3944 = vmatprep.subr.bf16.mxu0 0
    %3945 = vmatpush1.bf16.xpose.msra.mxu0 0
    %3946 = vmatprep.subr.bf16.mxu0 0
    %3947 = vmatpush1.bf16.xpose.msra.mxu0 0
    %3948 = vmatprep.mubr.bf16.mxu0 0
    %3949 = vmatmul.mubr.bf16.gmra.mrb[0].mxu0 %v3908
    %v3950 = vpop.f32.mrb[0].mxu0
    %v3951 = vadd.f32 0.0, %v3950
    %v3952 = vpop.f32.mrb[0].mxu0
    %v3953 = vpop.f32.mrb[0].mxu0
    %v3954 = vadd.f32 0.0, %v3953
    %v3955 = vpop.f32.mrb[0].mxu0
    %3956 = vdwg.mxu0
    %v3957 = vsel %vm645, %v3801, -inf
    %3958 = vmax.xlane.f32.xlu0 %v3957
    %v3959 = vpop.xlane.xlu0 %3958
    %v3960 = vsel %vm645, %v3804, -inf
    %3961 = vmax.xlane.f32.xlu0 %v3960
    %v3962 = vpop.xlane.xlu0 %3961
    %v3963 = vsel %vm645, %v3851, -inf
    %3964 = vmax.xlane.f32.xlu0 %v3963
    %v3965 = vpop.xlane.xlu0 %3964
    %v3966 = vsel %vm645, %v3854, -inf
    %3967 = vmax.xlane.f32.xlu0 %v3966
    %v3968 = vpop.xlane.xlu0 %3967
    %v3969 = vsel %vm645, %v3901, -inf
    %3970 = vmax.xlane.f32.xlu0 %v3969
    %v3971 = vpop.xlane.xlu0 %3970
    %v3972 = vsel %vm645, %v3904, -inf
    %3973 = vmax.xlane.f32.xlu0 %v3972
    %v3974 = vpop.xlane.xlu0 %3973
    %v3975 = vsel %vm645, %v3951, -inf
    %3976 = vmax.xlane.f32.xlu0 %v3975
    %v3977 = vpop.xlane.xlu0 %3976
    %v3978 = vsel %vm645, %v3954, -inf
    %3979 = vmax.xlane.f32.xlu0 %v3978
    %v3980 = vpop.xlane.xlu0 %3979
    %v3981 = vsub.f32 %v3801, %v3959
    %v3982 = vsub.f32 %v3804, %v3962
    %v3983 = vsub.f32 %v3851, %v3965
    %v3984 = vsub.f32 %v3854, %v3968
    %v3985 = vsub.f32 %v3901, %v3971
    %v3986 = vsub.f32 %v3904, %v3974
    %v3987 = vsub.f32 %v3951, %v3977
    %v3988 = vsub.f32 %v3954, %v3980
    %v3989 = vmul.f32 %v3981, 1.442695
    %v3990 = vpow.pop %v3989
    %v3991 = vmul.f32 %v3982, 1.442695
    %v3992 = vpow.pop %v3991
    %v3993 = vmul.f32 %v3983, 1.442695
    %v3994 = vpow.pop %v3993
    %v3995 = vmul.f32 %v3984, 1.442695
    %v3996 = vpow.pop %v3995
    %v3997 = vmul.f32 %v3985, 1.442695
    %v3998 = vpow.pop %v3997
    %v3999 = vmul.f32 %v3986, 1.442695
    %v4000 = vpow.pop %v3999
    %v4001 = vmul.f32 %v3987, 1.442695
    %v4002 = vpow.pop %v4001
    %v4003 = vmul.f32 %v3988, 1.442695
    %v4004 = vpow.pop %v4003
    %v4005 = vsel %vm645, %v3990, 0.0
    %4006 = vadd.xlane.f32.xlu0 %v4005
    %v4007 = vpop.xlane.xlu0 %4006
    %v4008 = vsel %vm645, %v3992, 0.0
    %4009 = vadd.xlane.f32.xlu0 %v4008
    %v4010 = vpop.xlane.xlu0 %4009
    %v4011 = vsel %vm645, %v3994, 0.0
    %4012 = vadd.xlane.f32.xlu0 %v4011
    %v4013 = vpop.xlane.xlu0 %4012
    %v4014 = vsel %vm645, %v3996, 0.0
    %4015 = vadd.xlane.f32.xlu0 %v4014
    %v4016 = vpop.xlane.xlu0 %4015
    %v4017 = vsel %vm645, %v3998, 0.0
    %4018 = vadd.xlane.f32.xlu0 %v4017
    %v4019 = vpop.xlane.xlu0 %4018
    %v4020 = vsel %vm645, %v4000, 0.0
    %4021 = vadd.xlane.f32.xlu0 %v4020
    %v4022 = vpop.xlane.xlu0 %4021
    %v4023 = vsel %vm645, %v4002, 0.0
    %4024 = vadd.xlane.f32.xlu0 %v4023
    %v4025 = vpop.xlane.xlu0 %4024
    %v4026 = vsel %vm645, %v4004, 0.0
    %4027 = vadd.xlane.f32.xlu0 %v4026
    %v4028 = vpop.xlane.xlu0 %4027
    %v4029 = vrcp.pop %v4007
    %v4030 = vrcp.pop %v4010
    %v4031 = vrcp.pop %v4013
    %v4032 = vrcp.pop %v4016
    %v4033 = vrcp.pop %v4019
    %v4034 = vrcp.pop %v4022
    %v4035 = vrcp.pop %v4025
    %v4036 = vrcp.pop %v4028
    %v4037 = vmul.f32 %v3990, %v4029
    %v4038 = vmul.f32 %v3992, %v4030
    %v4039 = vmul.f32 %v3994, %v4031
    %v4040 = vmul.f32 %v3996, %v4032
    %v4041 = vmul.f32 %v3998, %v4033
    %v4042 = vmul.f32 %v4000, %v4034
    %v4043 = vmul.f32 %v4002, %v4035
    %v4044 = vmul.f32 %v4004, %v4036
    %v4045 = vpack.c.bf16 %v4038, %v4037
    %v4046 = vpack.c.bf16 %v4040, %v4039
    %v4047 = vpack.c.bf16 %v4042, %v4041
    %v4048 = vpack.c.bf16 %v4044, %v4043
    %v4050 = vsel %vm645, %v4045, 0
    %4052 = vmatprep.subr.bf16.mxu0 0
    %4053 = vmatpush1.bf16.msra.mxu0 %v3748
    %4054 = vmatprep.subr.bf16.mxu0 0
    %4055 = vmatpush1.bf16.msra.mxu0 %v3749
    %4056 = vmatprep.subr.bf16.mxu0 0
    %4057 = vmatpush1.bf16.msra.mxu0 0
    %4058 = vmatprep.subr.bf16.mxu0 0
    %4059 = vmatpush1.bf16.msra.mxu0 0
    %4060 = vmatprep.subr.bf16.mxu0 0
    %4061 = vmatpush1.bf16.msra.mxu0 0
    %4062 = vmatprep.subr.bf16.mxu0 0
    %4063 = vmatpush1.bf16.msra.mxu0 0
    %4064 = vmatprep.subr.bf16.mxu0 0
    %4065 = vmatpush1.bf16.msra.mxu0 0
    %4066 = vmatprep.subr.bf16.mxu0 0
    %4067 = vmatpush1.bf16.msra.mxu0 0
    %4068 = vmatprep.subr.bf16.mxu0 0
    %4069 = vmatpush1.bf16.msra.mxu0 0
    %4070 = vmatprep.subr.bf16.mxu0 0
    %4071 = vmatpush1.bf16.msra.mxu0 0
    %4072 = vmatprep.subr.bf16.mxu0 0
    %4073 = vmatpush1.bf16.msra.mxu0 0
    %4074 = vmatprep.subr.bf16.mxu0 0
    %4075 = vmatpush1.bf16.msra.mxu0 0
    %4076 = vmatprep.subr.bf16.mxu0 0
    %4077 = vmatpush1.bf16.msra.mxu0 0
    %4078 = vmatprep.subr.bf16.mxu0 0
    %4079 = vmatpush1.bf16.msra.mxu0 0
    %4080 = vmatprep.subr.bf16.mxu0 0
    %4081 = vmatpush1.bf16.msra.mxu0 0
    %4082 = vmatprep.subr.bf16.mxu0 0
    %4083 = vmatpush1.bf16.msra.mxu0 0
    %4084 = vmatprep.mubr.bf16.mxu0 0
    %4085 = vmatmul.mubr.bf16.gmra.mrb[0].mxu0 %v4050
    %v4086 = vpop.f32.mrb[0].mxu0
    %v4087 = vadd.f32 0.0, %v4086
    %v4088 = vpop.f32.mrb[0].mxu0
    %v4089 = vpop.f32.mrb[0].mxu0
    %v4090 = vadd.f32 0.0, %v4089
    %v4091 = vpop.f32.mrb[0].mxu0
    %4092 = vdwg.mxu0
    %v4094 = vsel %vm645, %v4046, 0
    %4096 = vmatprep.subr.bf16.mxu0 0
    %4097 = vmatpush1.bf16.msra.mxu0 %v3750
    %4098 = vmatprep.subr.bf16.mxu0 0
    %4099 = vmatpush1.bf16.msra.mxu0 %v3751
    %4100 = vmatprep.subr.bf16.mxu0 0
    %4101 = vmatpush1.bf16.msra.mxu0 0
    %4102 = vmatprep.subr.bf16.mxu0 0
    %4103 = vmatpush1.bf16.msra.mxu0 0
    %4104 = vmatprep.subr.bf16.mxu0 0
    %4105 = vmatpush1.bf16.msra.mxu0 0
    %4106 = vmatprep.subr.bf16.mxu0 0
    %4107 = vmatpush1.bf16.msra.mxu0 0
    %4108 = vmatprep.subr.bf16.mxu0 0
    %4109 = vmatpush1.bf16.msra.mxu0 0
    %4110 = vmatprep.subr.bf16.mxu0 0
    %4111 = vmatpush1.bf16.msra.mxu0 0
    %4112 = vmatprep.subr.bf16.mxu0 0
    %4113 = vmatpush1.bf16.msra.mxu0 0
    %4114 = vmatprep.subr.bf16.mxu0 0
    %4115 = vmatpush1.bf16.msra.mxu0 0
    %4116 = vmatprep.subr.bf16.mxu0 0
    %4117 = vmatpush1.bf16.msra.mxu0 0
    %4118 = vmatprep.subr.bf16.mxu0 0
    %4119 = vmatpush1.bf16.msra.mxu0 0
    %4120 = vmatprep.subr.bf16.mxu0 0
    %4121 = vmatpush1.bf16.msra.mxu0 0
    %4122 = vmatprep.subr.bf16.mxu0 0
    %4123 = vmatpush1.bf16.msra.mxu0 0
    %4124 = vmatprep.subr.bf16.mxu0 0
    %4125 = vmatpush1.bf16.msra.mxu0 0
    %4126 = vmatprep.subr.bf16.mxu0 0
    %4127 = vmatpush1.bf16.msra.mxu0 0
    %4128 = vmatprep.mubr.bf16.mxu0 0
    %4129 = vmatmul.mubr.bf16.gmra.mrb[0].mxu0 %v4094
    %v4130 = vpop.f32.mrb[0].mxu0
    %v4131 = vadd.f32 0.0, %v4130
    %v4132 = vpop.f32.mrb[0].mxu0
    %v4133 = vpop.f32.mrb[0].mxu0
    %v4134 = vadd.f32 0.0, %v4133
    %v4135 = vpop.f32.mrb[0].mxu0
    %4136 = vdwg.mxu0
    %v4138 = vsel %vm645, %v4047, 0
    %4140 = vmatprep.subr.bf16.mxu0 0
    %4141 = vmatpush1.bf16.msra.mxu0 %v3752
    %4142 = vmatprep.subr.bf16.mxu0 0
    %4143 = vmatpush1.bf16.msra.mxu0 %v3753
    %4144 = vmatprep.subr.bf16.mxu0 0
    %4145 = vmatpush1.bf16.msra.mxu0 0
    %4146 = vmatprep.subr.bf16.mxu0 0
    %4147 = vmatpush1.bf16.msra.mxu0 0
    %4148 = vmatprep.subr.bf16.mxu0 0
    %4149 = vmatpush1.bf16.msra.mxu0 0
    %4150 = vmatprep.subr.bf16.mxu0 0
    %4151 = vmatpush1.bf16.msra.mxu0 0
    %4152 = vmatprep.subr.bf16.mxu0 0
    %4153 = vmatpush1.bf16.msra.mxu0 0
    %4154 = vmatprep.subr.bf16.mxu0 0
    %4155 = vmatpush1.bf16.msra.mxu0 0
    %4156 = vmatprep.subr.bf16.mxu0 0
    %4157 = vmatpush1.bf16.msra.mxu0 0
    %4158 = vmatprep.subr.bf16.mxu0 0
    %4159 = vmatpush1.bf16.msra.mxu0 0
    %4160 = vmatprep.subr.bf16.mxu0 0
    %4161 = vmatpush1.bf16.msra.mxu0 0
    %4162 = vmatprep.subr.bf16.mxu0 0
    %4163 = vmatpush1.bf16.msra.mxu0 0
    %4164 = vmatprep.subr.bf16.mxu0 0
    %4165 = vmatpush1.bf16.msra.mxu0 0
    %4166 = vmatprep.subr.bf16.mxu0 0
    %4167 = vmatpush1.bf16.msra.mxu0 0
    %4168 = vmatprep.subr.bf16.mxu0 0
    %4169 = vmatpush1.bf16.msra.mxu0 0
    %4170 = vmatprep.subr.bf16.mxu0 0
    %4171 = vmatpush1.bf16.msra.mxu0 0
    %4172 = vmatprep.mubr.bf16.mxu0 0
    %4173 = vmatmul.mubr.bf16.gmra.mrb[0].mxu0 %v4138
    %v4174 = vpop.f32.mrb[0].mxu0
    %v4175 = vadd.f32 0.0, %v4174
    %v4176 = vpop.f32.mrb[0].mxu0
    %v4177 = vpop.f32.mrb[0].mxu0
    %v4178 = vadd.f32 0.0, %v4177
    %v4179 = vpop.f32.mrb[0].mxu0
    %4180 = vdwg.mxu0
    %v4182 = vsel %vm645, %v4048, 0
    %4184 = vmatprep.subr.bf16.mxu0 0
    %4185 = vmatpush1.bf16.msra.mxu0 %v3754
    %4186 = vmatprep.subr.bf16.mxu0 0
    %4187 = vmatpush1.bf16.msra.mxu0 %v3755
    %4188 = vmatprep.subr.bf16.mxu0 0
    %4189 = vmatpush1.bf16.msra.mxu0 0
    %4190 = vmatprep.subr.bf16.mxu0 0
    %4191 = vmatpush1.bf16.msra.mxu0 0
    %4192 = vmatprep.subr.bf16.mxu0 0
    %4193 = vmatpush1.bf16.msra.mxu0 0
    %4194 = vmatprep.subr.bf16.mxu0 0
    %4195 = vmatpush1.bf16.msra.mxu0 0
    %4196 = vmatprep.subr.bf16.mxu0 0
    %4197 = vmatpush1.bf16.msra.mxu0 0
    %4198 = vmatprep.subr.bf16.mxu0 0
    %4199 = vmatpush1.bf16.msra.mxu0 0
    %4200 = vmatprep.subr.bf16.mxu0 0
    %4201 = vmatpush1.bf16.msra.mxu0 0
    %4202 = vmatprep.subr.bf16.mxu0 0
    %4203 = vmatpush1.bf16.msra.mxu0 0
    %4204 = vmatprep.subr.bf16.mxu0 0
    %4205 = vmatpush1.bf16.msra.mxu0 0
    %4206 = vmatprep.subr.bf16.mxu0 0
    %4207 = vmatpush1.bf16.msra.mxu0 0
    %4208 = vmatprep.subr.bf16.mxu0 0
    %4209 = vmatpush1.bf16.msra.mxu0 0
    %4210 = vmatprep.subr.bf16.mxu0 0
    %4211 = vmatpush1.bf16.msra.mxu0 0
    %4212 = vmatprep.subr.bf16.mxu0 0
    %4213 = vmatpush1.bf16.msra.mxu0 0
    %4214 = vmatprep.subr.bf16.mxu0 0
    %4215 = vmatpush1.bf16.msra.mxu0 0
    %4216 = vmatprep.mubr.bf16.mxu0 0
    %4217 = vmatmul.mubr.bf16.gmra.mrb[0].mxu0 %v4182
    %v4218 = vpop.f32.mrb[0].mxu0
    %v4219 = vadd.f32 0.0, %v4218
    %v4220 = vpop.f32.mrb[0].mxu0
    %v4221 = vpop.f32.mrb[0].mxu0
    %v4222 = vadd.f32 0.0, %v4221
    %v4223 = vpop.f32.mrb[0].mxu0
    %4224 = vdwg.mxu0
    %v4225 = vpack.c.bf16 %v4090, %v4087
    %v4226 = vpack.c.bf16 %v4134, %v4131
    %v4227 = vpack.c.bf16 %v4178, %v4175
    %v4228 = vpack.c.bf16 %v4222, %v4219
    %v4229 = vld [vmem:[#allocation2] sm:$0xf]
    %v4230 = vld [vmem:[#allocation2 + $0x4] sm:$0xf]
    %v4231 = vld [vmem:[#allocation2 + $0x8] sm:$0xf]
    %v4232 = vld [vmem:[#allocation2 + $0xc] sm:$0xf]
    %4234 = vrot.lane.b32.xlu0 %v3736, 96
    %v4235 = vpop.permute.xlu0 %4234
    %4238 = vrot.lane.b32.xlu0 %v3740, 96
    %v4239 = vpop.permute.xlu0 %4238
    %4240 = vrot.lane.b32.xlu0 %v3741, 96
    %v4241 = vpop.permute.xlu0 %4240
    %v4243 = vsel %vm645, %v4235, 0
    %v4246 = vsel %vm645, %v4239, 0
    %v4249 = vsel %vm645, %v4241, 0
    %4251 = vmatprep.subr.bf16.mxu0 0
    %4252 = vmatpush1.bf16.xpose.msra.mxu0 %v4246
    %4253 = vmatprep.subr.bf16.mxu0 0
    %4254 = vmatpush1.bf16.xpose.msra.mxu0 %v4249
    %4255 = vmatprep.subr.bf16.mxu0 0
    %4256 = vmatpush1.bf16.xpose.msra.mxu0 0
    %4257 = vmatprep.subr.bf16.mxu0 0
    %4258 = vmatpush1.bf16.xpose.msra.mxu0 0
    %4259 = vmatprep.subr.bf16.mxu0 0
    %4260 = vmatpush1.bf16.xpose.msra.mxu0 0
    %4261 = vmatprep.subr.bf16.mxu0 0
    %4262 = vmatpush1.bf16.xpose.msra.mxu0 0
    %4263 = vmatprep.subr.bf16.mxu0 0
    %4264 = vmatpush1.bf16.xpose.msra.mxu0 0
    %4265 = vmatprep.subr.bf16.mxu0 0
    %4266 = vmatpush1.bf16.xpose.msra.mxu0 0
    %4267 = vmatprep.subr.bf16.mxu0 0
    %4268 = vmatpush1.bf16.xpose.msra.mxu0 0
    %4269 = vmatprep.subr.bf16.mxu0 0
    %4270 = vmatpush1.bf16.xpose.msra.mxu0 0
    %4271 = vmatprep.subr.bf16.mxu0 0
    %4272 = vmatpush1.bf16.xpose.msra.mxu0 0
    %4273 = vmatprep.subr.bf16.mxu0 0
    %4274 = vmatpush1.bf16.xpose.msra.mxu0 0
    %4275 = vmatprep.subr.bf16.mxu0 0
    %4276 = vmatpush1.bf16.xpose.msra.mxu0 0
    %4277 = vmatprep.subr.bf16.mxu0 0
    %4278 = vmatpush1.bf16.xpose.msra.mxu0 0
    %4279 = vmatprep.subr.bf16.mxu0 0
    %4280 = vmatpush1.bf16.xpose.msra.mxu0 0
    %4281 = vmatprep.subr.bf16.mxu0 0
    %4282 = vmatpush1.bf16.xpose.msra.mxu0 0
    %4283 = vmatprep.mubr.bf16.mxu0 0
    %4284 = vmatmul.mubr.bf16.gmra.mrb[0].mxu0 %v4243
    %v4285 = vpop.f32.mrb[0].mxu0
    %v4286 = vadd.f32 0.0, %v4285
    %v4287 = vpop.f32.mrb[0].mxu0
    %v4288 = vpop.f32.mrb[0].mxu0
    %v4289 = vadd.f32 0.0, %v4288
    %v4290 = vpop.f32.mrb[0].mxu0
    %4291 = vdwg.mxu0
    %4293 = vrot.lane.b32.xlu0 %v3737, 96
    %v4294 = vpop.permute.xlu0 %4293
    %4297 = vrot.lane.b32.xlu0 %v3742, 96
    %v4298 = vpop.permute.xlu0 %4297
    %4299 = vrot.lane.b32.xlu0 %v3743, 96
    %v4300 = vpop.permute.xlu0 %4299
    %v4302 = vsel %vm645, %v4294, 0
    %v4305 = vsel %vm645, %v4298, 0
    %v4308 = vsel %vm645, %v4300, 0
    %4310 = vmatprep.subr.bf16.mxu0 0
    %4311 = vmatpush1.bf16.xpose.msra.mxu0 %v4305
    %4312 = vmatprep.subr.bf16.mxu0 0
    %4313 = vmatpush1.bf16.xpose.msra.mxu0 %v4308
    %4314 = vmatprep.subr.bf16.mxu0 0
    %4315 = vmatpush1.bf16.xpose.msra.mxu0 0
    %4316 = vmatprep.subr.bf16.mxu0 0
    %4317 = vmatpush1.bf16.xpose.msra.mxu0 0
    %4318 = vmatprep.subr.bf16.mxu0 0
    %4319 = vmatpush1.bf16.xpose.msra.mxu0 0
    %4320 = vmatprep.subr.bf16.mxu0 0
    %4321 = vmatpush1.bf16.xpose.msra.mxu0 0
    %4322 = vmatprep.subr.bf16.mxu0 0
    %4323 = vmatpush1.bf16.xpose.msra.mxu0 0
    %4324 = vmatprep.subr.bf16.mxu0 0
    %4325 = vmatpush1.bf16.xpose.msra.mxu0 0
    %4326 = vmatprep.subr.bf16.mxu0 0
    %4327 = vmatpush1.bf16.xpose.msra.mxu0 0
    %4328 = vmatprep.subr.bf16.mxu0 0
    %4329 = vmatpush1.bf16.xpose.msra.mxu0 0
    %4330 = vmatprep.subr.bf16.mxu0 0
    %4331 = vmatpush1.bf16.xpose.msra.mxu0 0
    %4332 = vmatprep.subr.bf16.mxu0 0
    %4333 = vmatpush1.bf16.xpose.msra.mxu0 0
    %4334 = vmatprep.subr.bf16.mxu0 0
    %4335 = vmatpush1.bf16.xpose.msra.mxu0 0
    %4336 = vmatprep.subr.bf16.mxu0 0
    %4337 = vmatpush1.bf16.xpose.msra.mxu0 0
    %4338 = vmatprep.subr.bf16.mxu0 0
    %4339 = vmatpush1.bf16.xpose.msra.mxu0 0
    %4340 = vmatprep.subr.bf16.mxu0 0
    %4341 = vmatpush1.bf16.xpose.msra.mxu0 0
    %4342 = vmatprep.mubr.bf16.mxu0 0
    %4343 = vmatmul.mubr.bf16.gmra.mrb[0].mxu0 %v4302
    %v4344 = vpop.f32.mrb[0].mxu0
    %v4345 = vadd.f32 0.0, %v4344
    %v4346 = vpop.f32.mrb[0].mxu0
    %v4347 = vpop.f32.mrb[0].mxu0
    %v4348 = vadd.f32 0.0, %v4347
    %v4349 = vpop.f32.mrb[0].mxu0
    %4350 = vdwg.mxu0
    %4352 = vrot.lane.b32.xlu0 %v3738, 96
    %v4353 = vpop.permute.xlu0 %4352
    %4356 = vrot.lane.b32.xlu0 %v3744, 96
    %v4357 = vpop.permute.xlu0 %4356
    %4358 = vrot.lane.b32.xlu0 %v3745, 96
    %v4359 = vpop.permute.xlu0 %4358
    %v4361 = vsel %vm645, %v4353, 0
    %v4364 = vsel %vm645, %v4357, 0
    %v4367 = vsel %vm645, %v4359, 0
    %4369 = vmatprep.subr.bf16.mxu0 0
    %4370 = vmatpush1.bf16.xpose.msra.mxu0 %v4364
    %4371 = vmatprep.subr.bf16.mxu0 0
    %4372 = vmatpush1.bf16.xpose.msra.mxu0 %v4367
    %4373 = vmatprep.subr.bf16.mxu0 0
    %4374 = vmatpush1.bf16.xpose.msra.mxu0 0
    %4375 = vmatprep.subr.bf16.mxu0 0
    %4376 = vmatpush1.bf16.xpose.msra.mxu0 0
    %4377 = vmatprep.subr.bf16.mxu0 0
    %4378 = vmatpush1.bf16.xpose.msra.mxu0 0
    %4379 = vmatprep.subr.bf16.mxu0 0
    %4380 = vmatpush1.bf16.xpose.msra.mxu0 0
    %4381 = vmatprep.subr.bf16.mxu0 0
    %4382 = vmatpush1.bf16.xpose.msra.mxu0 0
    %4383 = vmatprep.subr.bf16.mxu0 0
    %4384 = vmatpush1.bf16.xpose.msra.mxu0 0
    %4385 = vmatprep.subr.bf16.mxu0 0
    %4386 = vmatpush1.bf16.xpose.msra.mxu0 0
    %4387 = vmatprep.subr.bf16.mxu0 0
    %4388 = vmatpush1.bf16.xpose.msra.mxu0 0
    %4389 = vmatprep.subr.bf16.mxu0 0
    %4390 = vmatpush1.bf16.xpose.msra.mxu0 0
    %4391 = vmatprep.subr.bf16.mxu0 0
    %4392 = vmatpush1.bf16.xpose.msra.mxu0 0
    %4393 = vmatprep.subr.bf16.mxu0 0
    %4394 = vmatpush1.bf16.xpose.msra.mxu0 0
    %4395 = vmatprep.subr.bf16.mxu0 0
    %4396 = vmatpush1.bf16.xpose.msra.mxu0 0
    %4397 = vmatprep.subr.bf16.mxu0 0
    %4398 = vmatpush1.bf16.xpose.msra.mxu0 0
    %4399 = vmatprep.subr.bf16.mxu0 0
    %4400 = vmatpush1.bf16.xpose.msra.mxu0 0
    %4401 = vmatprep.mubr.bf16.mxu0 0
    %4402 = vmatmul.mubr.bf16.gmra.mrb[0].mxu0 %v4361
    %v4403 = vpop.f32.mrb[0].mxu0
    %v4404 = vadd.f32 0.0, %v4403
    %v4405 = vpop.f32.mrb[0].mxu0
    %v4406 = vpop.f32.mrb[0].mxu0
    %v4407 = vadd.f32 0.0, %v4406
    %v4408 = vpop.f32.mrb[0].mxu0
    %4409 = vdwg.mxu0
    %4411 = vrot.lane.b32.xlu0 %v3739, 96
    %v4412 = vpop.permute.xlu0 %4411
    %4415 = vrot.lane.b32.xlu0 %v3746, 96
    %v4416 = vpop.permute.xlu0 %4415
    %4417 = vrot.lane.b32.xlu0 %v3747, 96
    %v4418 = vpop.permute.xlu0 %4417
    %v4420 = vsel %vm645, %v4412, 0
    %v4423 = vsel %vm645, %v4416, 0
    %v4426 = vsel %vm645, %v4418, 0
    %4428 = vmatprep.subr.bf16.mxu0 0
    %4429 = vmatpush1.bf16.xpose.msra.mxu0 %v4423
    %4430 = vmatprep.subr.bf16.mxu0 0
    %4431 = vmatpush1.bf16.xpose.msra.mxu0 %v4426
    %4432 = vmatprep.subr.bf16.mxu0 0
    %4433 = vmatpush1.bf16.xpose.msra.mxu0 0
    %4434 = vmatprep.subr.bf16.mxu0 0
    %4435 = vmatpush1.bf16.xpose.msra.mxu0 0
    %4436 = vmatprep.subr.bf16.mxu0 0
    %4437 = vmatpush1.bf16.xpose.msra.mxu0 0
    %4438 = vmatprep.subr.bf16.mxu0 0
    %4439 = vmatpush1.bf16.xpose.msra.mxu0 0
    %4440 = vmatprep.subr.bf16.mxu0 0
    %4441 = vmatpush1.bf16.xpose.msra.mxu0 0
    %4442 = vmatprep.subr.bf16.mxu0 0
    %4443 = vmatpush1.bf16.xpose.msra.mxu0 0
    %4444 = vmatprep.subr.bf16.mxu0 0
    %4445 = vmatpush1.bf16.xpose.msra.mxu0 0
    %4446 = vmatprep.subr.bf16.mxu0 0
    %4447 = vmatpush1.bf16.xpose.msra.mxu0 0
    %4448 = vmatprep.subr.bf16.mxu0 0
    %4449 = vmatpush1.bf16.xpose.msra.mxu0 0
    %4450 = vmatprep.subr.bf16.mxu0 0
    %4451 = vmatpush1.bf16.xpose.msra.mxu0 0
    %4452 = vmatprep.subr.bf16.mxu0 0
    %4453 = vmatpush1.bf16.xpose.msra.mxu0 0
    %4454 = vmatprep.subr.bf16.mxu0 0
    %4455 = vmatpush1.bf16.xpose.msra.mxu0 0
    %4456 = vmatprep.subr.bf16.mxu0 0
    %4457 = vmatpush1.bf16.xpose.msra.mxu0 0
    %4458 = vmatprep.subr.bf16.mxu0 0
    %4459 = vmatpush1.bf16.xpose.msra.mxu0 0
    %4460 = vmatprep.mubr.bf16.mxu0 0
    %4461 = vmatmul.mubr.bf16.gmra.mrb[0].mxu0 %v4420
    %v4462 = vpop.f32.mrb[0].mxu0
    %v4463 = vadd.f32 0.0, %v4462
    %v4464 = vpop.f32.mrb[0].mxu0
    %v4465 = vpop.f32.mrb[0].mxu0
    %v4466 = vadd.f32 0.0, %v4465
    %v4467 = vpop.f32.mrb[0].mxu0
    %4468 = vdwg.mxu0
    %v4469 = vsel %vm645, %v4286, -inf
    %4470 = vmax.xlane.f32.xlu0 %v4469
    %v4471 = vpop.xlane.xlu0 %4470
    %v4472 = vsel %vm645, %v4289, -inf
    %4473 = vmax.xlane.f32.xlu0 %v4472
    %v4474 = vpop.xlane.xlu0 %4473
    %v4475 = vsel %vm645, %v4345, -inf
    %4476 = vmax.xlane.f32.xlu0 %v4475
    %v4477 = vpop.xlane.xlu0 %4476
    %v4478 = vsel %vm645, %v4348, -inf
    %4479 = vmax.xlane.f32.xlu0 %v4478
    %v4480 = vpop.xlane.xlu0 %4479
    %v4481 = vsel %vm645, %v4404, -inf
    %4482 = vmax.xlane.f32.xlu0 %v4481
    %v4483 = vpop.xlane.xlu0 %4482
    %v4484 = vsel %vm645, %v4407, -inf
    %4485 = vmax.xlane.f32.xlu0 %v4484
    %v4486 = vpop.xlane.xlu0 %4485
    %v4487 = vsel %vm645, %v4463, -inf
    %4488 = vmax.xlane.f32.xlu0 %v4487
    %v4489 = vpop.xlane.xlu0 %4488
    %v4490 = vsel %vm645, %v4466, -inf
    %4491 = vmax.xlane.f32.xlu0 %v4490
    %v4492 = vpop.xlane.xlu0 %4491
    %v4493 = vsub.f32 %v4286, %v4471
    %v4494 = vsub.f32 %v4289, %v4474
    %v4495 = vsub.f32 %v4345, %v4477
    %v4496 = vsub.f32 %v4348, %v4480
    %v4497 = vsub.f32 %v4404, %v4483
    %v4498 = vsub.f32 %v4407, %v4486
    %v4499 = vsub.f32 %v4463, %v4489
    %v4500 = vsub.f32 %v4466, %v4492
    %v4501 = vmul.f32 %v4493, 1.442695
    %v4502 = vpow.pop %v4501
    %v4503 = vmul.f32 %v4494, 1.442695
    %v4504 = vpow.pop %v4503
    %v4505 = vmul.f32 %v4495, 1.442695
    %v4506 = vpow.pop %v4505
    %v4507 = vmul.f32 %v4496, 1.442695
    %v4508 = vpow.pop %v4507
    %v4509 = vmul.f32 %v4497, 1.442695
    %v4510 = vpow.pop %v4509
    %v4511 = vmul.f32 %v4498, 1.442695
    %v4512 = vpow.pop %v4511
    %v4513 = vmul.f32 %v4499, 1.442695
    %v4514 = vpow.pop %v4513
    %v4515 = vmul.f32 %v4500, 1.442695
    %v4516 = vpow.pop %v4515
    %v4517 = vsel %vm645, %v4502, 0.0
    %4518 = vadd.xlane.f32.xlu0 %v4517
    %v4519 = vpop.xlane.xlu0 %4518
    %v4520 = vsel %vm645, %v4504, 0.0
    %4521 = vadd.xlane.f32.xlu0 %v4520
    %v4522 = vpop.xlane.xlu0 %4521
    %v4523 = vsel %vm645, %v4506, 0.0
    %4524 = vadd.xlane.f32.xlu0 %v4523
    %v4525 = vpop.xlane.xlu0 %4524
    %v4526 = vsel %vm645, %v4508, 0.0
    %4527 = vadd.xlane.f32.xlu0 %v4526
    %v4528 = vpop.xlane.xlu0 %4527
    %v4529 = vsel %vm645, %v4510, 0.0
    %4530 = vadd.xlane.f32.xlu0 %v4529
    %v4531 = vpop.xlane.xlu0 %4530
    %v4532 = vsel %vm645, %v4512, 0.0
    %4533 = vadd.xlane.f32.xlu0 %v4532
    %v4534 = vpop.xlane.xlu0 %4533
    %v4535 = vsel %vm645, %v4514, 0.0
    %4536 = vadd.xlane.f32.xlu0 %v4535
    %v4537 = vpop.xlane.xlu0 %4536
    %v4538 = vsel %vm645, %v4516, 0.0
    %4539 = vadd.xlane.f32.xlu0 %v4538
    %v4540 = vpop.xlane.xlu0 %4539
    %v4541 = vrcp.pop %v4519
    %v4542 = vrcp.pop %v4522
    %v4543 = vrcp.pop %v4525
    %v4544 = vrcp.pop %v4528
    %v4545 = vrcp.pop %v4531
    %v4546 = vrcp.pop %v4534
    %v4547 = vrcp.pop %v4537
    %v4548 = vrcp.pop %v4540
    %v4549 = vmul.f32 %v4502, %v4541
    %v4550 = vmul.f32 %v4504, %v4542
    %v4551 = vmul.f32 %v4506, %v4543
    %v4552 = vmul.f32 %v4508, %v4544
    %v4553 = vmul.f32 %v4510, %v4545
    %v4554 = vmul.f32 %v4512, %v4546
    %v4555 = vmul.f32 %v4514, %v4547
    %v4556 = vmul.f32 %v4516, %v4548
    %v4557 = vpack.c.bf16 %v4550, %v4549
    %v4558 = vpack.c.bf16 %v4552, %v4551
    %v4559 = vpack.c.bf16 %v4554, %v4553
    %v4560 = vpack.c.bf16 %v4556, %v4555
    %4563 = vrot.lane.b32.xlu0 %v3748, 96
    %v4564 = vpop.permute.xlu0 %4563
    %4565 = vrot.lane.b32.xlu0 %v3749, 96
    %v4566 = vpop.permute.xlu0 %4565
    %v4570 = vsel %vm645, %v4557, 0
    %4572 = vmatprep.subr.bf16.mxu0 0
    %4573 = vmatpush1.bf16.msra.mxu0 %v4564
    %4574 = vmatprep.subr.bf16.mxu0 0
    %4575 = vmatpush1.bf16.msra.mxu0 %v4566
    %4576 = vmatprep.subr.bf16.mxu0 0
    %4577 = vmatpush1.bf16.msra.mxu0 0
    %4578 = vmatprep.subr.bf16.mxu0 0
    %4579 = vmatpush1.bf16.msra.mxu0 0
    %4580 = vmatprep.subr.bf16.mxu0 0
    %4581 = vmatpush1.bf16.msra.mxu0 0
    %4582 = vmatprep.subr.bf16.mxu0 0
    %4583 = vmatpush1.bf16.msra.mxu0 0
    %4584 = vmatprep.subr.bf16.mxu0 0
    %4585 = vmatpush1.bf16.msra.mxu0 0
    %4586 = vmatprep.subr.bf16.mxu0 0
    %4587 = vmatpush1.bf16.msra.mxu0 0
    %4588 = vmatprep.subr.bf16.mxu0 0
    %4589 = vmatpush1.bf16.msra.mxu0 0
    %4590 = vmatprep.subr.bf16.mxu0 0
    %4591 = vmatpush1.bf16.msra.mxu0 0
    %4592 = vmatprep.subr.bf16.mxu0 0
    %4593 = vmatpush1.bf16.msra.mxu0 0
    %4594 = vmatprep.subr.bf16.mxu0 0
    %4595 = vmatpush1.bf16.msra.mxu0 0
    %4596 = vmatprep.subr.bf16.mxu0 0
    %4597 = vmatpush1.bf16.msra.mxu0 0
    %4598 = vmatprep.subr.bf16.mxu0 0
    %4599 = vmatpush1.bf16.msra.mxu0 0
    %4600 = vmatprep.subr.bf16.mxu0 0
    %4601 = vmatpush1.bf16.msra.mxu0 0
    %4602 = vmatprep.subr.bf16.mxu0 0
    %4603 = vmatpush1.bf16.msra.mxu0 0
    %4604 = vmatprep.mubr.bf16.mxu0 0
    %4605 = vmatmul.mubr.bf16.gmra.mrb[0].mxu0 %v4570
    %v4606 = vpop.f32.mrb[0].mxu0
    %v4607 = vadd.f32 0.0, %v4606
    %v4608 = vpop.f32.mrb[0].mxu0
    %v4609 = vpop.f32.mrb[0].mxu0
    %v4610 = vadd.f32 0.0, %v4609
    %v4611 = vpop.f32.mrb[0].mxu0
    %4612 = vdwg.mxu0
    %4615 = vrot.lane.b32.xlu0 %v3750, 96
    %v4616 = vpop.permute.xlu0 %4615
    %4617 = vrot.lane.b32.xlu0 %v3751, 96
    %v4618 = vpop.permute.xlu0 %4617
    %v4622 = vsel %vm645, %v4558, 0
    %4624 = vmatprep.subr.bf16.mxu0 0
    %4625 = vmatpush1.bf16.msra.mxu0 %v4616
    %4626 = vmatprep.subr.bf16.mxu0 0
    %4627 = vmatpush1.bf16.msra.mxu0 %v4618
    %4628 = vmatprep.subr.bf16.mxu0 0
    %4629 = vmatpush1.bf16.msra.mxu0 0
    %4630 = vmatprep.subr.bf16.mxu0 0
    %4631 = vmatpush1.bf16.msra.mxu0 0
    %4632 = vmatprep.subr.bf16.mxu0 0
    %4633 = vmatpush1.bf16.msra.mxu0 0
    %4634 = vmatprep.subr.bf16.mxu0 0
    %4635 = vmatpush1.bf16.msra.mxu0 0
    %4636 = vmatprep.subr.bf16.mxu0 0
    %4637 = vmatpush1.bf16.msra.mxu0 0
    %4638 = vmatprep.subr.bf16.mxu0 0
    %4639 = vmatpush1.bf16.msra.mxu0 0
    %4640 = vmatprep.subr.bf16.mxu0 0
    %4641 = vmatpush1.bf16.msra.mxu0 0
    %4642 = vmatprep.subr.bf16.mxu0 0
    %4643 = vmatpush1.bf16.msra.mxu0 0
    %4644 = vmatprep.subr.bf16.mxu0 0
    %4645 = vmatpush1.bf16.msra.mxu0 0
    %4646 = vmatprep.subr.bf16.mxu0 0
    %4647 = vmatpush1.bf16.msra.mxu0 0
    %4648 = vmatprep.subr.bf16.mxu0 0
    %4649 = vmatpush1.bf16.msra.mxu0 0
    %4650 = vmatprep.subr.bf16.mxu0 0
    %4651 = vmatpush1.bf16.msra.mxu0 0
    %4652 = vmatprep.subr.bf16.mxu0 0
    %4653 = vmatpush1.bf16.msra.mxu0 0
    %4654 = vmatprep.subr.bf16.mxu0 0
    %4655 = vmatpush1.bf16.msra.mxu0 0
    %4656 = vmatprep.mubr.bf16.mxu0 0
    %4657 = vmatmul.mubr.bf16.gmra.mrb[0].mxu0 %v4622
    %v4658 = vpop.f32.mrb[0].mxu0
    %v4659 = vadd.f32 0.0, %v4658
    %v4660 = vpop.f32.mrb[0].mxu0
    %v4661 = vpop.f32.mrb[0].mxu0
    %v4662 = vadd.f32 0.0, %v4661
    %v4663 = vpop.f32.mrb[0].mxu0
    %4664 = vdwg.mxu0
    %4667 = vrot.lane.b32.xlu0 %v3752, 96
    %v4668 = vpop.permute.xlu0 %4667
    %4669 = vrot.lane.b32.xlu0 %v3753, 96
    %v4670 = vpop.permute.xlu0 %4669
    %v4674 = vsel %vm645, %v4559, 0
    %4676 = vmatprep.subr.bf16.mxu0 0
    %4677 = vmatpush1.bf16.msra.mxu0 %v4668
    %4678 = vmatprep.subr.bf16.mxu0 0
    %4679 = vmatpush1.bf16.msra.mxu0 %v4670
    %4680 = vmatprep.subr.bf16.mxu0 0
    %4681 = vmatpush1.bf16.msra.mxu0 0
    %4682 = vmatprep.subr.bf16.mxu0 0
    %4683 = vmatpush1.bf16.msra.mxu0 0
    %4684 = vmatprep.subr.bf16.mxu0 0
    %4685 = vmatpush1.bf16.msra.mxu0 0
    %4686 = vmatprep.subr.bf16.mxu0 0
    %4687 = vmatpush1.bf16.msra.mxu0 0
    %4688 = vmatprep.subr.bf16.mxu0 0
    %4689 = vmatpush1.bf16.msra.mxu0 0
    %4690 = vmatprep.subr.bf16.mxu0 0
    %4691 = vmatpush1.bf16.msra.mxu0 0
    %4692 = vmatprep.subr.bf16.mxu0 0
    %4693 = vmatpush1.bf16.msra.mxu0 0
    %4694 = vmatprep.subr.bf16.mxu0 0
    %4695 = vmatpush1.bf16.msra.mxu0 0
    %4696 = vmatprep.subr.bf16.mxu0 0
    %4697 = vmatpush1.bf16.msra.mxu0 0
    %4698 = vmatprep.subr.bf16.mxu0 0
    %4699 = vmatpush1.bf16.msra.mxu0 0
    %4700 = vmatprep.subr.bf16.mxu0 0
    %4701 = vmatpush1.bf16.msra.mxu0 0
    %4702 = vmatprep.subr.bf16.mxu0 0
    %4703 = vmatpush1.bf16.msra.mxu0 0
    %4704 = vmatprep.subr.bf16.mxu0 0
    %4705 = vmatpush1.bf16.msra.mxu0 0
    %4706 = vmatprep.subr.bf16.mxu0 0
    %4707 = vmatpush1.bf16.msra.mxu0 0
    %4708 = vmatprep.mubr.bf16.mxu0 0
    %4709 = vmatmul.mubr.bf16.gmra.mrb[0].mxu0 %v4674
    %v4710 = vpop.f32.mrb[0].mxu0
    %v4711 = vadd.f32 0.0, %v4710
    %v4712 = vpop.f32.mrb[0].mxu0
    %v4713 = vpop.f32.mrb[0].mxu0
    %v4714 = vadd.f32 0.0, %v4713
    %v4715 = vpop.f32.mrb[0].mxu0
    %4716 = vdwg.mxu0
    %4719 = vrot.lane.b32.xlu0 %v3754, 96
    %v4720 = vpop.permute.xlu0 %4719
    %4721 = vrot.lane.b32.xlu0 %v3755, 96
    %v4722 = vpop.permute.xlu0 %4721
    %v4726 = vsel %vm645, %v4560, 0
    %4728 = vmatprep.subr.bf16.mxu0 0
    %4729 = vmatpush1.bf16.msra.mxu0 %v4720
    %4730 = vmatprep.subr.bf16.mxu0 0
    %4731 = vmatpush1.bf16.msra.mxu0 %v4722
    %4732 = vmatprep.subr.bf16.mxu0 0
    %4733 = vmatpush1.bf16.msra.mxu0 0
    %4734 = vmatprep.subr.bf16.mxu0 0
    %4735 = vmatpush1.bf16.msra.mxu0 0
    %4736 = vmatprep.subr.bf16.mxu0 0
    %4737 = vmatpush1.bf16.msra.mxu0 0
    %4738 = vmatprep.subr.bf16.mxu0 0
    %4739 = vmatpush1.bf16.msra.mxu0 0
    %4740 = vmatprep.subr.bf16.mxu0 0
    %4741 = vmatpush1.bf16.msra.mxu0 0
    %4742 = vmatprep.subr.bf16.mxu0 0
    %4743 = vmatpush1.bf16.msra.mxu0 0
    %4744 = vmatprep.subr.bf16.mxu0 0
    %4745 = vmatpush1.bf16.msra.mxu0 0
    %4746 = vmatprep.subr.bf16.mxu0 0
    %4747 = vmatpush1.bf16.msra.mxu0 0
    %4748 = vmatprep.subr.bf16.mxu0 0
    %4749 = vmatpush1.bf16.msra.mxu0 0
    %4750 = vmatprep.subr.bf16.mxu0 0
    %4751 = vmatpush1.bf16.msra.mxu0 0
    %4752 = vmatprep.subr.bf16.mxu0 0
    %4753 = vmatpush1.bf16.msra.mxu0 0
    %4754 = vmatprep.subr.bf16.mxu0 0
    %4755 = vmatpush1.bf16.msra.mxu0 0
    %4756 = vmatprep.subr.bf16.mxu0 0
    %4757 = vmatpush1.bf16.msra.mxu0 0
    %4758 = vmatprep.subr.bf16.mxu0 0
    %4759 = vmatpush1.bf16.msra.mxu0 0
    %4760 = vmatprep.mubr.bf16.mxu0 0
    %4761 = vmatmul.mubr.bf16.gmra.mrb[0].mxu0 %v4726
    %v4762 = vpop.f32.mrb[0].mxu0
    %v4763 = vadd.f32 0.0, %v4762
    %v4764 = vpop.f32.mrb[0].mxu0
    %v4765 = vpop.f32.mrb[0].mxu0
    %v4766 = vadd.f32 0.0, %v4765
    %v4767 = vpop.f32.mrb[0].mxu0
    %4768 = vdwg.mxu0
    %v4769 = vpack.c.bf16 %v4610, %v4607
    %v4770 = vpack.c.bf16 %v4662, %v4659
    %v4771 = vpack.c.bf16 %v4714, %v4711
    %v4772 = vpack.c.bf16 %v4766, %v4763
    %v4773 = vld [vmem:[#allocation2 + $0x10] sm:$0xf]
    %v4774 = vld [vmem:[#allocation2 + $0x14] sm:$0xf]
    %v4775 = vld [vmem:[#allocation2 + $0x18] sm:$0xf]
    %v4776 = vld [vmem:[#allocation2 + $0x1c] sm:$0xf]
    %v4781 = vunpack.c.l.b16 %v4773
    %v4782 = vunpack.c.l.b16 %v4774
    %v4783 = vunpack.c.l.b16 %v4775
    %v4784 = vunpack.c.l.b16 %v4776
    %v4785 = vpack.c.b16 %v4782, %v4781
    %v4786 = vpack.c.b16 %v4784, %v4783
    %v4790 = vsel %vm645, %v4769, 0
    %v4793 = vsel %vm645, %v4770, 0
    %v4796 = vsel %vm645, %v4771, 0
    %v4799 = vsel %vm645, %v4772, 0
    %4801 = vmatprep.subr.bf16.mxu0 0
    %4802 = vmatpush1.bf16.msra.mxu0 %v4785
    %4803 = vmatprep.subr.bf16.mxu0 0
    %4804 = vmatpush1.bf16.msra.mxu0 %v4786
    %4805 = vmatprep.subr.bf16.mxu0 0
    %4806 = vmatpush1.bf16.msra.mxu0 0
    %4807 = vmatprep.subr.bf16.mxu0 0
    %4808 = vmatpush1.bf16.msra.mxu0 0
    %4809 = vmatprep.subr.bf16.mxu0 0
    %4810 = vmatpush1.bf16.msra.mxu0 0
    %4811 = vmatprep.subr.bf16.mxu0 0
    %4812 = vmatpush1.bf16.msra.mxu0 0
    %4813 = vmatprep.subr.bf16.mxu0 0
    %4814 = vmatpush1.bf16.msra.mxu0 0
    %4815 = vmatprep.subr.bf16.mxu0 0
    %4816 = vmatpush1.bf16.msra.mxu0 0
    %4817 = vmatprep.subr.bf16.mxu0 0
    %4818 = vmatpush1.bf16.msra.mxu0 0
    %4819 = vmatprep.subr.bf16.mxu0 0
    %4820 = vmatpush1.bf16.msra.mxu0 0
    %4821 = vmatprep.subr.bf16.mxu0 0
    %4822 = vmatpush1.bf16.msra.mxu0 0
    %4823 = vmatprep.subr.bf16.mxu0 0
    %4824 = vmatpush1.bf16.msra.mxu0 0
    %4825 = vmatprep.subr.bf16.mxu0 0
    %4826 = vmatpush1.bf16.msra.mxu0 0
    %4827 = vmatprep.subr.bf16.mxu0 0
    %4828 = vmatpush1.bf16.msra.mxu0 0
    %4829 = vmatprep.subr.bf16.mxu0 0
    %4830 = vmatpush1.bf16.msra.mxu0 0
    %4831 = vmatprep.subr.bf16.mxu0 0
    %4832 = vmatpush1.bf16.msra.mxu0 0
    %4833 = vmatprep.mubr.bf16.mxu0 0
    %4834 = vmatmul.mubr.bf16.gmra.mrb[0].mxu0 %v4790
    %v4835 = vpop.f32.mrb[0].mxu0
    %v4836 = vadd.f32 0.0, %v4835
    %v4837 = vpop.f32.mrb[0].mxu0
    %v4838 = vpop.f32.mrb[0].mxu0
    %v4839 = vadd.f32 0.0, %v4838
    %v4840 = vpop.f32.mrb[0].mxu0
    %4841 = vmatprep.mubr.bf16.mxu0 0
    %4842 = vmatmul.mubr.bf16.gmra.mrb[0].mxu0 %v4793
    %v4843 = vpop.f32.mrb[0].mxu0
    %v4844 = vadd.f32 0.0, %v4843
    %v4845 = vpop.f32.mrb[0].mxu0
    %v4846 = vpop.f32.mrb[0].mxu0
    %v4847 = vadd.f32 0.0, %v4846
    %v4848 = vpop.f32.mrb[0].mxu0
    %4849 = vmatprep.mubr.bf16.mxu0 0
    %4850 = vmatmul.mubr.bf16.gmra.mrb[0].mxu0 %v4796
    %v4851 = vpop.f32.mrb[0].mxu0
    %v4852 = vadd.f32 0.0, %v4851
    %v4853 = vpop.f32.mrb[0].mxu0
    %v4854 = vpop.f32.mrb[0].mxu0
    %v4855 = vadd.f32 0.0, %v4854
    %v4856 = vpop.f32.mrb[0].mxu0
    %4857 = vmatprep.mubr.bf16.mxu0 0
    %4858 = vmatmul.mubr.bf16.gmra.mrb[0].mxu0 %v4799
    %v4859 = vpop.f32.mrb[0].mxu0
    %v4860 = vadd.f32 0.0, %v4859
    %v4861 = vpop.f32.mrb[0].mxu0
    %v4862 = vpop.f32.mrb[0].mxu0
    %v4863 = vadd.f32 0.0, %v4862
    %v4864 = vpop.f32.mrb[0].mxu0
    %4865 = vdwg.mxu0
    %v4870 = vunpack.c.l.b16 %v4229
    %v4871 = vunpack.c.l.b16 %v4230
    %v4872 = vunpack.c.l.b16 %v4231
    %v4873 = vunpack.c.l.b16 %v4232
    %v4874 = vpack.c.b16 %v4871, %v4870
    %v4875 = vpack.c.b16 %v4873, %v4872
    %v4879 = vsel %vm645, %v4225, 0
    %v4882 = vsel %vm645, %v4226, 0
    %v4885 = vsel %vm645, %v4227, 0
    %v4888 = vsel %vm645, %v4228, 0
    %4890 = vmatprep.subr.bf16.mxu0 0
    %4891 = vmatpush1.bf16.msra.mxu0 %v4874
    %4892 = vmatprep.subr.bf16.mxu0 0
    %4893 = vmatpush1.bf16.msra.mxu0 %v4875
    %4894 = vmatprep.subr.bf16.mxu0 0
    %4895 = vmatpush1.bf16.msra.mxu0 0
    %4896 = vmatprep.subr.bf16.mxu0 0
    %4897 = vmatpush1.bf16.msra.mxu0 0
    %4898 = vmatprep.subr.bf16.mxu0 0
    %4899 = vmatpush1.bf16.msra.mxu0 0
    %4900 = vmatprep.subr.bf16.mxu0 0
    %4901 = vmatpush1.bf16.msra.mxu0 0
    %4902 = vmatprep.subr.bf16.mxu0 0
    %4903 = vmatpush1.bf16.msra.mxu0 0
    %4904 = vmatprep.subr.bf16.mxu0 0
    %4905 = vmatpush1.bf16.msra.mxu0 0
    %4906 = vmatprep.subr.bf16.mxu0 0
    %4907 = vmatpush1.bf16.msra.mxu0 0
    %4908 = vmatprep.subr.bf16.mxu0 0
    %4909 = vmatpush1.bf16.msra.mxu0 0
    %4910 = vmatprep.subr.bf16.mxu0 0
    %4911 = vmatpush1.bf16.msra.mxu0 0
    %4912 = vmatprep.subr.bf16.mxu0 0
    %4913 = vmatpush1.bf16.msra.mxu0 0
    %4914 = vmatprep.subr.bf16.mxu0 0
    %4915 = vmatpush1.bf16.msra.mxu0 0
    %4916 = vmatprep.subr.bf16.mxu0 0
    %4917 = vmatpush1.bf16.msra.mxu0 0
    %4918 = vmatprep.subr.bf16.mxu0 0
    %4919 = vmatpush1.bf16.msra.mxu0 0
    %4920 = vmatprep.subr.bf16.mxu0 0
    %4921 = vmatpush1.bf16.msra.mxu0 0
    %4922 = vmatprep.mubr.bf16.mxu0 0
    %4923 = vmatmul.mubr.bf16.gmra.mrb[0].mxu0 %v4879
    %v4924 = vpop.f32.mrb[0].mxu0
    %v4925 = vadd.f32 %v4836, %v4924
    %v4926 = vpop.f32.mrb[0].mxu0
    %v4927 = vpop.f32.mrb[0].mxu0
    %v4928 = vadd.f32 %v4839, %v4927
    %v4929 = vpop.f32.mrb[0].mxu0
    %4930 = vmatprep.mubr.bf16.mxu0 0
    %4931 = vmatmul.mubr.bf16.gmra.mrb[0].mxu0 %v4882
    %v4932 = vpop.f32.mrb[0].mxu0
    %v4933 = vadd.f32 %v4844, %v4932
    %v4934 = vpop.f32.mrb[0].mxu0
    %v4935 = vpop.f32.mrb[0].mxu0
    %v4936 = vadd.f32 %v4847, %v4935
    %v4937 = vpop.f32.mrb[0].mxu0
    %4938 = vmatprep.mubr.bf16.mxu0 0
    %4939 = vmatmul.mubr.bf16.gmra.mrb[0].mxu0 %v4885
    %v4940 = vpop.f32.mrb[0].mxu0
    %v4941 = vadd.f32 %v4852, %v4940
    %v4942 = vpop.f32.mrb[0].mxu0
    %v4943 = vpop.f32.mrb[0].mxu0
    %v4944 = vadd.f32 %v4855, %v4943
    %v4945 = vpop.f32.mrb[0].mxu0
    %4946 = vmatprep.mubr.bf16.mxu0 0
    %4947 = vmatmul.mubr.bf16.gmra.mrb[0].mxu0 %v4888
    %v4948 = vpop.f32.mrb[0].mxu0
    %v4949 = vadd.f32 %v4860, %v4948
    %v4950 = vpop.f32.mrb[0].mxu0
    %v4951 = vpop.f32.mrb[0].mxu0
    %v4952 = vadd.f32 %v4863, %v4951
    %v4953 = vpop.f32.mrb[0].mxu0
    %4954 = vdwg.mxu0
    %4955 = vrot.lane.b32.xlu0 %v3736, 64
    %v4956 = vpop.permute.xlu0 %4955
    %4957 = vrot.lane.b32.xlu0 %v3740, 64
    %v4958 = vpop.permute.xlu0 %4957
    %4959 = vrot.lane.b32.xlu0 %v3741, 64
    %v4960 = vpop.permute.xlu0 %4959
    %v4962 = vsel %vm645, %v4956, 0
    %v4965 = vsel %vm645, %v4958, 0
    %v4968 = vsel %vm645, %v4960, 0
    %4970 = vmatprep.subr.bf16.mxu0 0
    %4971 = vmatpush1.bf16.xpose.msra.mxu0 %v4965
    %4972 = vmatprep.subr.bf16.mxu0 0
    %4973 = vmatpush1.bf16.xpose.msra.mxu0 %v4968
    %4974 = vmatprep.subr.bf16.mxu0 0
    %4975 = vmatpush1.bf16.xpose.msra.mxu0 0
    %4976 = vmatprep.subr.bf16.mxu0 0
    %4977 = vmatpush1.bf16.xpose.msra.mxu0 0
    %4978 = vmatprep.subr.bf16.mxu0 0
    %4979 = vmatpush1.bf16.xpose.msra.mxu0 0
    %4980 = vmatprep.subr.bf16.mxu0 0
    %4981 = vmatpush1.bf16.xpose.msra.mxu0 0
    %4982 = vmatprep.subr.bf16.mxu0 0
    %4983 = vmatpush1.bf16.xpose.msra.mxu0 0
    %4984 = vmatprep.subr.bf16.mxu0 0
    %4985 = vmatpush1.bf16.xpose.msra.mxu0 0
    %4986 = vmatprep.subr.bf16.mxu0 0
    %4987 = vmatpush1.bf16.xpose.msra.mxu0 0
    %4988 = vmatprep.subr.bf16.mxu0 0
    %4989 = vmatpush1.bf16.xpose.msra.mxu0 0
    %4990 = vmatprep.subr.bf16.mxu0 0
    %4991 = vmatpush1.bf16.xpose.msra.mxu0 0
    %4992 = vmatprep.subr.bf16.mxu0 0
    %4993 = vmatpush1.bf16.xpose.msra.mxu0 0
    %4994 = vmatprep.subr.bf16.mxu0 0
    %4995 = vmatpush1.bf16.xpose.msra.mxu0 0
    %4996 = vmatprep.subr.bf16.mxu0 0
    %4997 = vmatpush1.bf16.xpose.msra.mxu0 0
    %4998 = vmatprep.subr.bf16.mxu0 0
    %4999 = vmatpush1.bf16.xpose.msra.mxu0 0
    %5000 = vmatprep.subr.bf16.mxu0 0
    %5001 = vmatpush1.bf16.xpose.msra.mxu0 0
    %5002 = vmatprep.mubr.bf16.mxu0 0
    %5003 = vmatmul.mubr.bf16.gmra.mrb[0].mxu0 %v4962
    %v5004 = vpop.f32.mrb[0].mxu0
    %v5005 = vadd.f32 0.0, %v5004
    %v5006 = vpop.f32.mrb[0].mxu0
    %v5007 = vpop.f32.mrb[0].mxu0
    %v5008 = vadd.f32 0.0, %v5007
    %v5009 = vpop.f32.mrb[0].mxu0
    %5010 = vdwg.mxu0
    %5011 = vrot.lane.b32.xlu0 %v3737, 64
    %v5012 = vpop.permute.xlu0 %5011
    %5013 = vrot.lane.b32.xlu0 %v3742, 64
    %v5014 = vpop.permute.xlu0 %5013
    %5015 = vrot.lane.b32.xlu0 %v3743, 64
    %v5016 = vpop.permute.xlu0 %5015
    %v5018 = vsel %vm645, %v5012, 0
    %v5021 = vsel %vm645, %v5014, 0
    %v5024 = vsel %vm645, %v5016, 0
    %5026 = vmatprep.subr.bf16.mxu0 0
    %5027 = vmatpush1.bf16.xpose.msra.mxu0 %v5021
    %5028 = vmatprep.subr.bf16.mxu0 0
    %5029 = vmatpush1.bf16.xpose.msra.mxu0 %v5024
    %5030 = vmatprep.subr.bf16.mxu0 0
    %5031 = vmatpush1.bf16.xpose.msra.mxu0 0
    %5032 = vmatprep.subr.bf16.mxu0 0
    %5033 = vmatpush1.bf16.xpose.msra.mxu0 0
    %5034 = vmatprep.subr.bf16.mxu0 0
    %5035 = vmatpush1.bf16.xpose.msra.mxu0 0
    %5036 = vmatprep.subr.bf16.mxu0 0
    %5037 = vmatpush1.bf16.xpose.msra.mxu0 0
    %5038 = vmatprep.subr.bf16.mxu0 0
    %5039 = vmatpush1.bf16.xpose.msra.mxu0 0
    %5040 = vmatprep.subr.bf16.mxu0 0
    %5041 = vmatpush1.bf16.xpose.msra.mxu0 0
    %5042 = vmatprep.subr.bf16.mxu0 0
    %5043 = vmatpush1.bf16.xpose.msra.mxu0 0
    %5044 = vmatprep.subr.bf16.mxu0 0
    %5045 = vmatpush1.bf16.xpose.msra.mxu0 0
    %5046 = vmatprep.subr.bf16.mxu0 0
    %5047 = vmatpush1.bf16.xpose.msra.mxu0 0
    %5048 = vmatprep.subr.bf16.mxu0 0
    %5049 = vmatpush1.bf16.xpose.msra.mxu0 0
    %5050 = vmatprep.subr.bf16.mxu0 0
    %5051 = vmatpush1.bf16.xpose.msra.mxu0 0
    %5052 = vmatprep.subr.bf16.mxu0 0
    %5053 = vmatpush1.bf16.xpose.msra.mxu0 0
    %5054 = vmatprep.subr.bf16.mxu0 0
    %5055 = vmatpush1.bf16.xpose.msra.mxu0 0
    %5056 = vmatprep.subr.bf16.mxu0 0
    %5057 = vmatpush1.bf16.xpose.msra.mxu0 0
    %5058 = vmatprep.mubr.bf16.mxu0 0
    %5059 = vmatmul.mubr.bf16.gmra.mrb[0].mxu0 %v5018
    %v5060 = vpop.f32.mrb[0].mxu0
    %v5061 = vadd.f32 0.0, %v5060
    %v5062 = vpop.f32.mrb[0].mxu0
    %v5063 = vpop.f32.mrb[0].mxu0
    %v5064 = vadd.f32 0.0, %v5063
    %v5065 = vpop.f32.mrb[0].mxu0
    %5066 = vdwg.mxu0
    %5067 = vrot.lane.b32.xlu0 %v3738, 64
    %v5068 = vpop.permute.xlu0 %5067
    %5069 = vrot.lane.b32.xlu0 %v3744, 64
    %v5070 = vpop.permute.xlu0 %5069
    %5071 = vrot.lane.b32.xlu0 %v3745, 64
    %v5072 = vpop.permute.xlu0 %5071
    %v5074 = vsel %vm645, %v5068, 0
    %v5077 = vsel %vm645, %v5070, 0
    %v5080 = vsel %vm645, %v5072, 0
    %5082 = vmatprep.subr.bf16.mxu0 0
    %5083 = vmatpush1.bf16.xpose.msra.mxu0 %v5077
    %5084 = vmatprep.subr.bf16.mxu0 0
    %5085 = vmatpush1.bf16.xpose.msra.mxu0 %v5080
    %5086 = vmatprep.subr.bf16.mxu0 0
    %5087 = vmatpush1.bf16.xpose.msra.mxu0 0
    %5088 = vmatprep.subr.bf16.mxu0 0
    %5089 = vmatpush1.bf16.xpose.msra.mxu0 0
    %5090 = vmatprep.subr.bf16.mxu0 0
    %5091 = vmatpush1.bf16.xpose.msra.mxu0 0
    %5092 = vmatprep.subr.bf16.mxu0 0
    %5093 = vmatpush1.bf16.xpose.msra.mxu0 0
    %5094 = vmatprep.subr.bf16.mxu0 0
    %5095 = vmatpush1.bf16.xpose.msra.mxu0 0
    %5096 = vmatprep.subr.bf16.mxu0 0
    %5097 = vmatpush1.bf16.xpose.msra.mxu0 0
    %5098 = vmatprep.subr.bf16.mxu0 0
    %5099 = vmatpush1.bf16.xpose.msra.mxu0 0
    %5100 = vmatprep.subr.bf16.mxu0 0
    %5101 = vmatpush1.bf16.xpose.msra.mxu0 0
    %5102 = vmatprep.subr.bf16.mxu0 0
    %5103 = vmatpush1.bf16.xpose.msra.mxu0 0
    %5104 = vmatprep.subr.bf16.mxu0 0
    %5105 = vmatpush1.bf16.xpose.msra.mxu0 0
    %5106 = vmatprep.subr.bf16.mxu0 0
    %5107 = vmatpush1.bf16.xpose.msra.mxu0 0
    %5108 = vmatprep.subr.bf16.mxu0 0
    %5109 = vmatpush1.bf16.xpose.msra.mxu0 0
    %5110 = vmatprep.subr.bf16.mxu0 0
    %5111 = vmatpush1.bf16.xpose.msra.mxu0 0
    %5112 = vmatprep.subr.bf16.mxu0 0
    %5113 = vmatpush1.bf16.xpose.msra.mxu0 0
    %5114 = vmatprep.mubr.bf16.mxu0 0
    %5115 = vmatmul.mubr.bf16.gmra.mrb[0].mxu0 %v5074
    %v5116 = vpop.f32.mrb[0].mxu0
    %v5117 = vadd.f32 0.0, %v5116
    %v5118 = vpop.f32.mrb[0].mxu0
    %v5119 = vpop.f32.mrb[0].mxu0
    %v5120 = vadd.f32 0.0, %v5119
    %v5121 = vpop.f32.mrb[0].mxu0
    %5122 = vdwg.mxu0
    %5123 = vrot.lane.b32.xlu0 %v3739, 64
    %v5124 = vpop.permute.xlu0 %5123
    %5125 = vrot.lane.b32.xlu0 %v3746, 64
    %v5126 = vpop.permute.xlu0 %5125
    %5127 = vrot.lane.b32.xlu0 %v3747, 64
    %v5128 = vpop.permute.xlu0 %5127
    %v5130 = vsel %vm645, %v5124, 0
    %v5133 = vsel %vm645, %v5126, 0
    %v5136 = vsel %vm645, %v5128, 0
    %5138 = vmatprep.subr.bf16.mxu0 0
    %5139 = vmatpush1.bf16.xpose.msra.mxu0 %v5133
    %5140 = vmatprep.subr.bf16.mxu0 0
    %5141 = vmatpush1.bf16.xpose.msra.mxu0 %v5136
    %5142 = vmatprep.subr.bf16.mxu0 0
    %5143 = vmatpush1.bf16.xpose.msra.mxu0 0
    %5144 = vmatprep.subr.bf16.mxu0 0
    %5145 = vmatpush1.bf16.xpose.msra.mxu0 0
    %5146 = vmatprep.subr.bf16.mxu0 0
    %5147 = vmatpush1.bf16.xpose.msra.mxu0 0
    %5148 = vmatprep.subr.bf16.mxu0 0
    %5149 = vmatpush1.bf16.xpose.msra.mxu0 0
    %5150 = vmatprep.subr.bf16.mxu0 0
    %5151 = vmatpush1.bf16.xpose.msra.mxu0 0
    %5152 = vmatprep.subr.bf16.mxu0 0
    %5153 = vmatpush1.bf16.xpose.msra.mxu0 0
    %5154 = vmatprep.subr.bf16.mxu0 0
    %5155 = vmatpush1.bf16.xpose.msra.mxu0 0
    %5156 = vmatprep.subr.bf16.mxu0 0
    %5157 = vmatpush1.bf16.xpose.msra.mxu0 0
    %5158 = vmatprep.subr.bf16.mxu0 0
    %5159 = vmatpush1.bf16.xpose.msra.mxu0 0
    %5160 = vmatprep.subr.bf16.mxu0 0
    %5161 = vmatpush1.bf16.xpose.msra.mxu0 0
    %5162 = vmatprep.subr.bf16.mxu0 0
    %5163 = vmatpush1.bf16.xpose.msra.mxu0 0
    %5164 = vmatprep.subr.bf16.mxu0 0
    %5165 = vmatpush1.bf16.xpose.msra.mxu0 0
    %5166 = vmatprep.subr.bf16.mxu0 0
    %5167 = vmatpush1.bf16.xpose.msra.mxu0 0
    %5168 = vmatprep.subr.bf16.mxu0 0
    %5169 = vmatpush1.bf16.xpose.msra.mxu0 0
    %5170 = vmatprep.mubr.bf16.mxu0 0
    %5171 = vmatmul.mubr.bf16.gmra.mrb[0].mxu0 %v5130
    %v5172 = vpop.f32.mrb[0].mxu0
    %v5173 = vadd.f32 0.0, %v5172
    %v5174 = vpop.f32.mrb[0].mxu0
    %v5175 = vpop.f32.mrb[0].mxu0
    %v5176 = vadd.f32 0.0, %v5175
    %v5177 = vpop.f32.mrb[0].mxu0
    %5178 = vdwg.mxu0
    %v5179 = vsel %vm645, %v5005, -inf
    %5180 = vmax.xlane.f32.xlu0 %v5179
    %v5181 = vpop.xlane.xlu0 %5180
    %v5182 = vsel %vm645, %v5008, -inf
    %5183 = vmax.xlane.f32.xlu0 %v5182
    %v5184 = vpop.xlane.xlu0 %5183
    %v5185 = vsel %vm645, %v5061, -inf
    %5186 = vmax.xlane.f32.xlu0 %v5185
    %v5187 = vpop.xlane.xlu0 %5186
    %v5188 = vsel %vm645, %v5064, -inf
    %5189 = vmax.xlane.f32.xlu0 %v5188
    %v5190 = vpop.xlane.xlu0 %5189
    %v5191 = vsel %vm645, %v5117, -inf
    %5192 = vmax.xlane.f32.xlu0 %v5191
    %v5193 = vpop.xlane.xlu0 %5192
    %v5194 = vsel %vm645, %v5120, -inf
    %5195 = vmax.xlane.f32.xlu0 %v5194
    %v5196 = vpop.xlane.xlu0 %5195
    %v5197 = vsel %vm645, %v5173, -inf
    %5198 = vmax.xlane.f32.xlu0 %v5197
    %v5199 = vpop.xlane.xlu0 %5198
    %v5200 = vsel %vm645, %v5176, -inf
    %5201 = vmax.xlane.f32.xlu0 %v5200
    %v5202 = vpop.xlane.xlu0 %5201
    %v5203 = vsub.f32 %v5005, %v5181
    %v5204 = vsub.f32 %v5008, %v5184
    %v5205 = vsub.f32 %v5061, %v5187
    %v5206 = vsub.f32 %v5064, %v5190
    %v5207 = vsub.f32 %v5117, %v5193
    %v5208 = vsub.f32 %v5120, %v5196
    %v5209 = vsub.f32 %v5173, %v5199
    %v5210 = vsub.f32 %v5176, %v5202
    %v5211 = vmul.f32 %v5203, 1.442695
    %v5212 = vpow.pop %v5211
    %v5213 = vmul.f32 %v5204, 1.442695
    %v5214 = vpow.pop %v5213
    %v5215 = vmul.f32 %v5205, 1.442695
    %v5216 = vpow.pop %v5215
    %v5217 = vmul.f32 %v5206, 1.442695
    %v5218 = vpow.pop %v5217
    %v5219 = vmul.f32 %v5207, 1.442695
    %v5220 = vpow.pop %v5219
    %v5221 = vmul.f32 %v5208, 1.442695
    %v5222 = vpow.pop %v5221
    %v5223 = vmul.f32 %v5209, 1.442695
    %v5224 = vpow.pop %v5223
    %v5225 = vmul.f32 %v5210, 1.442695
    %v5226 = vpow.pop %v5225
    %v5227 = vsel %vm645, %v5212, 0.0
    %5228 = vadd.xlane.f32.xlu0 %v5227
    %v5229 = vpop.xlane.xlu0 %5228
    %v5230 = vsel %vm645, %v5214, 0.0
    %5231 = vadd.xlane.f32.xlu0 %v5230
    %v5232 = vpop.xlane.xlu0 %5231
    %v5233 = vsel %vm645, %v5216, 0.0
    %5234 = vadd.xlane.f32.xlu0 %v5233
    %v5235 = vpop.xlane.xlu0 %5234
    %v5236 = vsel %vm645, %v5218, 0.0
    %5237 = vadd.xlane.f32.xlu0 %v5236
    %v5238 = vpop.xlane.xlu0 %5237
    %v5239 = vsel %vm645, %v5220, 0.0
    %5240 = vadd.xlane.f32.xlu0 %v5239
    %v5241 = vpop.xlane.xlu0 %5240
    %v5242 = vsel %vm645, %v5222, 0.0
    %5243 = vadd.xlane.f32.xlu0 %v5242
    %v5244 = vpop.xlane.xlu0 %5243
    %v5245 = vsel %vm645, %v5224, 0.0
    %5246 = vadd.xlane.f32.xlu0 %v5245
    %v5247 = vpop.xlane.xlu0 %5246
    %v5248 = vsel %vm645, %v5226, 0.0
    %5249 = vadd.xlane.f32.xlu0 %v5248
    %v5250 = vpop.xlane.xlu0 %5249
    %v5251 = vrcp.pop %v5229
    %v5252 = vrcp.pop %v5232
    %v5253 = vrcp.pop %v5235
    %v5254 = vrcp.pop %v5238
    %v5255 = vrcp.pop %v5241
    %v5256 = vrcp.pop %v5244
    %v5257 = vrcp.pop %v5247
    %v5258 = vrcp.pop %v5250
    %v5259 = vmul.f32 %v5212, %v5251
    %v5260 = vmul.f32 %v5214, %v5252
    %v5261 = vmul.f32 %v5216, %v5253
    %v5262 = vmul.f32 %v5218, %v5254
    %v5263 = vmul.f32 %v5220, %v5255
    %v5264 = vmul.f32 %v5222, %v5256
    %v5265 = vmul.f32 %v5224, %v5257
    %v5266 = vmul.f32 %v5226, %v5258
    %v5267 = vpack.c.bf16 %v5260, %v5259
    %v5268 = vpack.c.bf16 %v5262, %v5261
    %v5269 = vpack.c.bf16 %v5264, %v5263
    %v5270 = vpack.c.bf16 %v5266, %v5265
    %5271 = vrot.lane.b32.xlu0 %v3748, 64
    %v5272 = vpop.permute.xlu0 %5271
    %5273 = vrot.lane.b32.xlu0 %v3749, 64
    %v5274 = vpop.permute.xlu0 %5273
    %v5278 = vsel %vm645, %v5267, 0
    %5280 = vmatprep.subr.bf16.mxu0 0
    %5281 = vmatpush1.bf16.msra.mxu0 %v5272
    %5282 = vmatprep.subr.bf16.mxu0 0
    %5283 = vmatpush1.bf16.msra.mxu0 %v5274
    %5284 = vmatprep.subr.bf16.mxu0 0
    %5285 = vmatpush1.bf16.msra.mxu0 0
    %5286 = vmatprep.subr.bf16.mxu0 0
    %5287 = vmatpush1.bf16.msra.mxu0 0
    %5288 = vmatprep.subr.bf16.mxu0 0
    %5289 = vmatpush1.bf16.msra.mxu0 0
    %5290 = vmatprep.subr.bf16.mxu0 0
    %5291 = vmatpush1.bf16.msra.mxu0 0
    %5292 = vmatprep.subr.bf16.mxu0 0
    %5293 = vmatpush1.bf16.msra.mxu0 0
    %5294 = vmatprep.subr.bf16.mxu0 0
    %5295 = vmatpush1.bf16.msra.mxu0 0
    %5296 = vmatprep.subr.bf16.mxu0 0
    %5297 = vmatpush1.bf16.msra.mxu0 0
    %5298 = vmatprep.subr.bf16.mxu0 0
    %5299 = vmatpush1.bf16.msra.mxu0 0
    %5300 = vmatprep.subr.bf16.mxu0 0
    %5301 = vmatpush1.bf16.msra.mxu0 0
    %5302 = vmatprep.subr.bf16.mxu0 0
    %5303 = vmatpush1.bf16.msra.mxu0 0
    %5304 = vmatprep.subr.bf16.mxu0 0
    %5305 = vmatpush1.bf16.msra.mxu0 0
    %5306 = vmatprep.subr.bf16.mxu0 0
    %5307 = vmatpush1.bf16.msra.mxu0 0
    %5308 = vmatprep.subr.bf16.mxu0 0
    %5309 = vmatpush1.bf16.msra.mxu0 0
    %5310 = vmatprep.subr.bf16.mxu0 0
    %5311 = vmatpush1.bf16.msra.mxu0 0
    %5312 = vmatprep.mubr.bf16.mxu0 0
    %5313 = vmatmul.mubr.bf16.gmra.mrb[0].mxu0 %v5278
    %v5314 = vpop.f32.mrb[0].mxu0
    %v5315 = vadd.f32 0.0, %v5314
    %v5316 = vpop.f32.mrb[0].mxu0
    %v5317 = vpop.f32.mrb[0].mxu0
    %v5318 = vadd.f32 0.0, %v5317
    %v5319 = vpop.f32.mrb[0].mxu0
    %5320 = vdwg.mxu0
    %5321 = vrot.lane.b32.xlu0 %v3750, 64
    %v5322 = vpop.permute.xlu0 %5321
    %5323 = vrot.lane.b32.xlu0 %v3751, 64
    %v5324 = vpop.permute.xlu0 %5323
    %v5328 = vsel %vm645, %v5268, 0
    %5330 = vmatprep.subr.bf16.mxu0 0
    %5331 = vmatpush1.bf16.msra.mxu0 %v5322
    %5332 = vmatprep.subr.bf16.mxu0 0
    %5333 = vmatpush1.bf16.msra.mxu0 %v5324
    %5334 = vmatprep.subr.bf16.mxu0 0
    %5335 = vmatpush1.bf16.msra.mxu0 0
    %5336 = vmatprep.subr.bf16.mxu0 0
    %5337 = vmatpush1.bf16.msra.mxu0 0
    %5338 = vmatprep.subr.bf16.mxu0 0
    %5339 = vmatpush1.bf16.msra.mxu0 0
    %5340 = vmatprep.subr.bf16.mxu0 0
    %5341 = vmatpush1.bf16.msra.mxu0 0
    %5342 = vmatprep.subr.bf16.mxu0 0
    %5343 = vmatpush1.bf16.msra.mxu0 0
    %5344 = vmatprep.subr.bf16.mxu0 0
    %5345 = vmatpush1.bf16.msra.mxu0 0
    %5346 = vmatprep.subr.bf16.mxu0 0
    %5347 = vmatpush1.bf16.msra.mxu0 0
    %5348 = vmatprep.subr.bf16.mxu0 0
    %5349 = vmatpush1.bf16.msra.mxu0 0
    %5350 = vmatprep.subr.bf16.mxu0 0
    %5351 = vmatpush1.bf16.msra.mxu0 0
    %5352 = vmatprep.subr.bf16.mxu0 0
    %5353 = vmatpush1.bf16.msra.mxu0 0
    %5354 = vmatprep.subr.bf16.mxu0 0
    %5355 = vmatpush1.bf16.msra.mxu0 0
    %5356 = vmatprep.subr.bf16.mxu0 0
    %5357 = vmatpush1.bf16.msra.mxu0 0
    %5358 = vmatprep.subr.bf16.mxu0 0
    %5359 = vmatpush1.bf16.msra.mxu0 0
    %5360 = vmatprep.subr.bf16.mxu0 0
    %5361 = vmatpush1.bf16.msra.mxu0 0
    %5362 = vmatprep.mubr.bf16.mxu0 0
    %5363 = vmatmul.mubr.bf16.gmra.mrb[0].mxu0 %v5328
    %v5364 = vpop.f32.mrb[0].mxu0
    %v5365 = vadd.f32 0.0, %v5364
    %v5366 = vpop.f32.mrb[0].mxu0
    %v5367 = vpop.f32.mrb[0].mxu0
    %v5368 = vadd.f32 0.0, %v5367
    %v5369 = vpop.f32.mrb[0].mxu0
    %5370 = vdwg.mxu0
    %5371 = vrot.lane.b32.xlu0 %v3752, 64
    %v5372 = vpop.permute.xlu0 %5371
    %5373 = vrot.lane.b32.xlu0 %v3753, 64
    %v5374 = vpop.permute.xlu0 %5373
    %v5378 = vsel %vm645, %v5269, 0
    %5380 = vmatprep.subr.bf16.mxu0 0
    %5381 = vmatpush1.bf16.msra.mxu0 %v5372
    %5382 = vmatprep.subr.bf16.mxu0 0
    %5383 = vmatpush1.bf16.msra.mxu0 %v5374
    %5384 = vmatprep.subr.bf16.mxu0 0
    %5385 = vmatpush1.bf16.msra.mxu0 0
    %5386 = vmatprep.subr.bf16.mxu0 0
    %5387 = vmatpush1.bf16.msra.mxu0 0
    %5388 = vmatprep.subr.bf16.mxu0 0
    %5389 = vmatpush1.bf16.msra.mxu0 0
    %5390 = vmatprep.subr.bf16.mxu0 0
    %5391 = vmatpush1.bf16.msra.mxu0 0
    %5392 = vmatprep.subr.bf16.mxu0 0
    %5393 = vmatpush1.bf16.msra.mxu0 0
    %5394 = vmatprep.subr.bf16.mxu0 0
    %5395 = vmatpush1.bf16.msra.mxu0 0
    %5396 = vmatprep.subr.bf16.mxu0 0
    %5397 = vmatpush1.bf16.msra.mxu0 0
    %5398 = vmatprep.subr.bf16.mxu0 0
    %5399 = vmatpush1.bf16.msra.mxu0 0
    %5400 = vmatprep.subr.bf16.mxu0 0
    %5401 = vmatpush1.bf16.msra.mxu0 0
    %5402 = vmatprep.subr.bf16.mxu0 0
    %5403 = vmatpush1.bf16.msra.mxu0 0
    %5404 = vmatprep.subr.bf16.mxu0 0
    %5405 = vmatpush1.bf16.msra.mxu0 0
    %5406 = vmatprep.subr.bf16.mxu0 0
    %5407 = vmatpush1.bf16.msra.mxu0 0
    %5408 = vmatprep.subr.bf16.mxu0 0
    %5409 = vmatpush1.bf16.msra.mxu0 0
    %5410 = vmatprep.subr.bf16.mxu0 0
    %5411 = vmatpush1.bf16.msra.mxu0 0
    %5412 = vmatprep.mubr.bf16.mxu0 0
    %5413 = vmatmul.mubr.bf16.gmra.mrb[0].mxu0 %v5378
    %v5414 = vpop.f32.mrb[0].mxu0
    %v5415 = vadd.f32 0.0, %v5414
    %v5416 = vpop.f32.mrb[0].mxu0
    %v5417 = vpop.f32.mrb[0].mxu0
    %v5418 = vadd.f32 0.0, %v5417
    %v5419 = vpop.f32.mrb[0].mxu0
    %5420 = vdwg.mxu0
    %5421 = vrot.lane.b32.xlu0 %v3754, 64
    %v5422 = vpop.permute.xlu0 %5421
    %5423 = vrot.lane.b32.xlu0 %v3755, 64
    %v5424 = vpop.permute.xlu0 %5423
    %v5428 = vsel %vm645, %v5270, 0
    %5430 = vmatprep.subr.bf16.mxu0 0
    %5431 = vmatpush1.bf16.msra.mxu0 %v5422
    %5432 = vmatprep.subr.bf16.mxu0 0
    %5433 = vmatpush1.bf16.msra.mxu0 %v5424
    %5434 = vmatprep.subr.bf16.mxu0 0
    %5435 = vmatpush1.bf16.msra.mxu0 0
    %5436 = vmatprep.subr.bf16.mxu0 0
    %5437 = vmatpush1.bf16.msra.mxu0 0
    %5438 = vmatprep.subr.bf16.mxu0 0
    %5439 = vmatpush1.bf16.msra.mxu0 0
    %5440 = vmatprep.subr.bf16.mxu0 0
    %5441 = vmatpush1.bf16.msra.mxu0 0
    %5442 = vmatprep.subr.bf16.mxu0 0
    %5443 = vmatpush1.bf16.msra.mxu0 0
    %5444 = vmatprep.subr.bf16.mxu0 0
    %5445 = vmatpush1.bf16.msra.mxu0 0
    %5446 = vmatprep.subr.bf16.mxu0 0
    %5447 = vmatpush1.bf16.msra.mxu0 0
    %5448 = vmatprep.subr.bf16.mxu0 0
    %5449 = vmatpush1.bf16.msra.mxu0 0
    %5450 = vmatprep.subr.bf16.mxu0 0
    %5451 = vmatpush1.bf16.msra.mxu0 0
    %5452 = vmatprep.subr.bf16.mxu0 0
    %5453 = vmatpush1.bf16.msra.mxu0 0
    %5454 = vmatprep.subr.bf16.mxu0 0
    %5455 = vmatpush1.bf16.msra.mxu0 0
    %5456 = vmatprep.subr.bf16.mxu0 0
    %5457 = vmatpush1.bf16.msra.mxu0 0
    %5458 = vmatprep.subr.bf16.mxu0 0
    %5459 = vmatpush1.bf16.msra.mxu0 0
    %5460 = vmatprep.subr.bf16.mxu0 0
    %5461 = vmatpush1.bf16.msra.mxu0 0
    %5462 = vmatprep.mubr.bf16.mxu0 0
    %5463 = vmatmul.mubr.bf16.gmra.mrb[0].mxu0 %v5428
    %v5464 = vpop.f32.mrb[0].mxu0
    %v5465 = vadd.f32 0.0, %v5464
    %v5466 = vpop.f32.mrb[0].mxu0
    %v5467 = vpop.f32.mrb[0].mxu0
    %v5468 = vadd.f32 0.0, %v5467
    %v5469 = vpop.f32.mrb[0].mxu0
    %5470 = vdwg.mxu0
    %v5471 = vpack.c.bf16 %v5318, %v5315
    %v5472 = vpack.c.bf16 %v5368, %v5365
    %v5473 = vpack.c.bf16 %v5418, %v5415
    %v5474 = vpack.c.bf16 %v5468, %v5465
    %v5475 = vld [vmem:[#allocation2 + $0x20] sm:$0xf]
    %v5476 = vld [vmem:[#allocation2 + $0x24] sm:$0xf]
    %v5477 = vld [vmem:[#allocation2 + $0x28] sm:$0xf]
    %v5478 = vld [vmem:[#allocation2 + $0x2c] sm:$0xf]
    %v5483 = vunpack.c.l.b16 %v5475
    %v5484 = vunpack.c.l.b16 %v5476
    %v5485 = vunpack.c.l.b16 %v5477
    %v5486 = vunpack.c.l.b16 %v5478
    %v5487 = vpack.c.b16 %v5484, %v5483
    %v5488 = vpack.c.b16 %v5486, %v5485
    %v5492 = vsel %vm645, %v5471, 0
    %v5495 = vsel %vm645, %v5472, 0
    %v5498 = vsel %vm645, %v5473, 0
    %v5501 = vsel %vm645, %v5474, 0
    %5503 = vmatprep.subr.bf16.mxu0 0
    %5504 = vmatpush1.bf16.msra.mxu0 %v5487
    %5505 = vmatprep.subr.bf16.mxu0 0
    %5506 = vmatpush1.bf16.msra.mxu0 %v5488
    %5507 = vmatprep.subr.bf16.mxu0 0
    %5508 = vmatpush1.bf16.msra.mxu0 0
    %5509 = vmatprep.subr.bf16.mxu0 0
    %5510 = vmatpush1.bf16.msra.mxu0 0
    %5511 = vmatprep.subr.bf16.mxu0 0
    %5512 = vmatpush1.bf16.msra.mxu0 0
    %5513 = vmatprep.subr.bf16.mxu0 0
    %5514 = vmatpush1.bf16.msra.mxu0 0
    %5515 = vmatprep.subr.bf16.mxu0 0
    %5516 = vmatpush1.bf16.msra.mxu0 0
    %5517 = vmatprep.subr.bf16.mxu0 0
    %5518 = vmatpush1.bf16.msra.mxu0 0
    %5519 = vmatprep.subr.bf16.mxu0 0
    %5520 = vmatpush1.bf16.msra.mxu0 0
    %5521 = vmatprep.subr.bf16.mxu0 0
    %5522 = vmatpush1.bf16.msra.mxu0 0
    %5523 = vmatprep.subr.bf16.mxu0 0
    %5524 = vmatpush1.bf16.msra.mxu0 0
    %5525 = vmatprep.subr.bf16.mxu0 0
    %5526 = vmatpush1.bf16.msra.mxu0 0
    %5527 = vmatprep.subr.bf16.mxu0 0
    %5528 = vmatpush1.bf16.msra.mxu0 0
    %5529 = vmatprep.subr.bf16.mxu0 0
    %5530 = vmatpush1.bf16.msra.mxu0 0
    %5531 = vmatprep.subr.bf16.mxu0 0
    %5532 = vmatpush1.bf16.msra.mxu0 0
    %5533 = vmatprep.subr.bf16.mxu0 0
    %5534 = vmatpush1.bf16.msra.mxu0 0
    %5535 = vmatprep.mubr.bf16.mxu0 0
    %5536 = vmatmul.mubr.bf16.gmra.mrb[0].mxu0 %v5492
    %v5537 = vpop.f32.mrb[0].mxu0
    %v5538 = vadd.f32 0.0, %v5537
    %v5539 = vpop.f32.mrb[0].mxu0
    %v5540 = vpop.f32.mrb[0].mxu0
    %v5541 = vadd.f32 0.0, %v5540
    %v5542 = vpop.f32.mrb[0].mxu0
    %5543 = vmatprep.mubr.bf16.mxu0 0
    %5544 = vmatmul.mubr.bf16.gmra.mrb[0].mxu0 %v5495
    %v5545 = vpop.f32.mrb[0].mxu0
    %v5546 = vadd.f32 0.0, %v5545
    %v5547 = vpop.f32.mrb[0].mxu0
    %v5548 = vpop.f32.mrb[0].mxu0
    %v5549 = vadd.f32 0.0, %v5548
    %v5550 = vpop.f32.mrb[0].mxu0
    %5551 = vmatprep.mubr.bf16.mxu0 0
    %5552 = vmatmul.mubr.bf16.gmra.mrb[0].mxu0 %v5498
    %v5553 = vpop.f32.mrb[0].mxu0
    %v5554 = vadd.f32 0.0, %v5553
    %v5555 = vpop.f32.mrb[0].mxu0
    %v5556 = vpop.f32.mrb[0].mxu0
    %v5557 = vadd.f32 0.0, %v5556
    %v5558 = vpop.f32.mrb[0].mxu0
    %5559 = vmatprep.mubr.bf16.mxu0 0
    %5560 = vmatmul.mubr.bf16.gmra.mrb[0].mxu0 %v5501
    %v5561 = vpop.f32.mrb[0].mxu0
    %v5562 = vadd.f32 0.0, %v5561
    %v5563 = vpop.f32.mrb[0].mxu0
    %v5564 = vpop.f32.mrb[0].mxu0
    %v5565 = vadd.f32 0.0, %v5564
    %v5566 = vpop.f32.mrb[0].mxu0
    %5567 = vdwg.mxu0
    %v5568 = vadd.f32 %v4925, %v5538
    %v5569 = vadd.f32 %v4928, %v5541
    %v5570 = vadd.f32 %v4933, %v5546
    %v5571 = vadd.f32 %v4936, %v5549
    %v5572 = vadd.f32 %v4941, %v5554
    %v5573 = vadd.f32 %v4944, %v5557
    %v5574 = vadd.f32 %v4949, %v5562
    %v5575 = vadd.f32 %v4952, %v5565
    %5576 = vrot.lane.b32.xlu0 %v3736, 32
    %v5577 = vpop.permute.xlu0 %5576
    %5578 = vrot.lane.b32.xlu0 %v3740, 32
    %v5579 = vpop.permute.xlu0 %5578
    %5580 = vrot.lane.b32.xlu0 %v3741, 32
    %v5581 = vpop.permute.xlu0 %5580
    %v5583 = vsel %vm645, %v5577, 0
    %v5586 = vsel %vm645, %v5579, 0
    %v5589 = vsel %vm645, %v5581, 0
    %5591 = vmatprep.subr.bf16.mxu0 0
    %5592 = vmatpush1.bf16.xpose.msra.mxu0 %v5586
    %5593 = vmatprep.subr.bf16.mxu0 0
    %5594 = vmatpush1.bf16.xpose.msra.mxu0 %v5589
    %5595 = vmatprep.subr.bf16.mxu0 0
    %5596 = vmatpush1.bf16.xpose.msra.mxu0 0
    %5597 = vmatprep.subr.bf16.mxu0 0
    %5598 = vmatpush1.bf16.xpose.msra.mxu0 0
    %5599 = vmatprep.subr.bf16.mxu0 0
    %5600 = vmatpush1.bf16.xpose.msra.mxu0 0
    %5601 = vmatprep.subr.bf16.mxu0 0
    %5602 = vmatpush1.bf16.xpose.msra.mxu0 0
    %5603 = vmatprep.subr.bf16.mxu0 0
    %5604 = vmatpush1.bf16.xpose.msra.mxu0 0
    %5605 = vmatprep.subr.bf16.mxu0 0
    %5606 = vmatpush1.bf16.xpose.msra.mxu0 0
    %5607 = vmatprep.subr.bf16.mxu0 0
    %5608 = vmatpush1.bf16.xpose.msra.mxu0 0
    %5609 = vmatprep.subr.bf16.mxu0 0
    %5610 = vmatpush1.bf16.xpose.msra.mxu0 0
    %5611 = vmatprep.subr.bf16.mxu0 0
    %5612 = vmatpush1.bf16.xpose.msra.mxu0 0
    %5613 = vmatprep.subr.bf16.mxu0 0
    %5614 = vmatpush1.bf16.xpose.msra.mxu0 0
    %5615 = vmatprep.subr.bf16.mxu0 0
    %5616 = vmatpush1.bf16.xpose.msra.mxu0 0
    %5617 = vmatprep.subr.bf16.mxu0 0
    %5618 = vmatpush1.bf16.xpose.msra.mxu0 0
    %5619 = vmatprep.subr.bf16.mxu0 0
    %5620 = vmatpush1.bf16.xpose.msra.mxu0 0
    %5621 = vmatprep.subr.bf16.mxu0 0
    %5622 = vmatpush1.bf16.xpose.msra.mxu0 0
    %5623 = vmatprep.mubr.bf16.mxu0 0
    %5624 = vmatmul.mubr.bf16.gmra.mrb[0].mxu0 %v5583
    %v5625 = vpop.f32.mrb[0].mxu0
    %v5626 = vadd.f32 0.0, %v5625
    %v5627 = vpop.f32.mrb[0].mxu0
    %v5628 = vpop.f32.mrb[0].mxu0
    %v5629 = vadd.f32 0.0, %v5628
    %v5630 = vpop.f32.mrb[0].mxu0
    %5631 = vdwg.mxu0
    %5632 = vrot.lane.b32.xlu0 %v3737, 32
    %v5633 = vpop.permute.xlu0 %5632
    %5634 = vrot.lane.b32.xlu0 %v3742, 32
    %v5635 = vpop.permute.xlu0 %5634
    %5636 = vrot.lane.b32.xlu0 %v3743, 32
    %v5637 = vpop.permute.xlu0 %5636
    %v5639 = vsel %vm645, %v5633, 0
    %v5642 = vsel %vm645, %v5635, 0
    %v5645 = vsel %vm645, %v5637, 0
    %5647 = vmatprep.subr.bf16.mxu0 0
    %5648 = vmatpush1.bf16.xpose.msra.mxu0 %v5642
    %5649 = vmatprep.subr.bf16.mxu0 0
    %5650 = vmatpush1.bf16.xpose.msra.mxu0 %v5645
    %5651 = vmatprep.subr.bf16.mxu0 0
    %5652 = vmatpush1.bf16.xpose.msra.mxu0 0
    %5653 = vmatprep.subr.bf16.mxu0 0
    %5654 = vmatpush1.bf16.xpose.msra.mxu0 0
    %5655 = vmatprep.subr.bf16.mxu0 0
    %5656 = vmatpush1.bf16.xpose.msra.mxu0 0
    %5657 = vmatprep.subr.bf16.mxu0 0
    %5658 = vmatpush1.bf16.xpose.msra.mxu0 0
    %5659 = vmatprep.subr.bf16.mxu0 0
    %5660 = vmatpush1.bf16.xpose.msra.mxu0 0
    %5661 = vmatprep.subr.bf16.mxu0 0
    %5662 = vmatpush1.bf16.xpose.msra.mxu0 0
    %5663 = vmatprep.subr.bf16.mxu0 0
    %5664 = vmatpush1.bf16.xpose.msra.mxu0 0
    %5665 = vmatprep.subr.bf16.mxu0 0
    %5666 = vmatpush1.bf16.xpose.msra.mxu0 0
    %5667 = vmatprep.subr.bf16.mxu0 0
    %5668 = vmatpush1.bf16.xpose.msra.mxu0 0
    %5669 = vmatprep.subr.bf16.mxu0 0
    %5670 = vmatpush1.bf16.xpose.msra.mxu0 0
    %5671 = vmatprep.subr.bf16.mxu0 0
    %5672 = vmatpush1.bf16.xpose.msra.mxu0 0
    %5673 = vmatprep.subr.bf16.mxu0 0
    %5674 = vmatpush1.bf16.xpose.msra.mxu0 0
    %5675 = vmatprep.subr.bf16.mxu0 0
    %5676 = vmatpush1.bf16.xpose.msra.mxu0 0
    %5677 = vmatprep.subr.bf16.mxu0 0
    %5678 = vmatpush1.bf16.xpose.msra.mxu0 0
    %5679 = vmatprep.mubr.bf16.mxu0 0
    %5680 = vmatmul.mubr.bf16.gmra.mrb[0].mxu0 %v5639
    %v5681 = vpop.f32.mrb[0].mxu0
    %v5682 = vadd.f32 0.0, %v5681
    %v5683 = vpop.f32.mrb[0].mxu0
    %v5684 = vpop.f32.mrb[0].mxu0
    %v5685 = vadd.f32 0.0, %v5684
    %v5686 = vpop.f32.mrb[0].mxu0
    %5687 = vdwg.mxu0
    %5688 = vrot.lane.b32.xlu0 %v3738, 32
    %v5689 = vpop.permute.xlu0 %5688
    %5690 = vrot.lane.b32.xlu0 %v3744, 32
    %v5691 = vpop.permute.xlu0 %5690
    %5692 = vrot.lane.b32.xlu0 %v3745, 32
    %v5693 = vpop.permute.xlu0 %5692
    %v5695 = vsel %vm645, %v5689, 0
    %v5698 = vsel %vm645, %v5691, 0
    %v5701 = vsel %vm645, %v5693, 0
    %5703 = vmatprep.subr.bf16.mxu0 0
    %5704 = vmatpush1.bf16.xpose.msra.mxu0 %v5698
    %5705 = vmatprep.subr.bf16.mxu0 0
    %5706 = vmatpush1.bf16.xpose.msra.mxu0 %v5701
    %5707 = vmatprep.subr.bf16.mxu0 0
    %5708 = vmatpush1.bf16.xpose.msra.mxu0 0
    %5709 = vmatprep.subr.bf16.mxu0 0
    %5710 = vmatpush1.bf16.xpose.msra.mxu0 0
    %5711 = vmatprep.subr.bf16.mxu0 0
    %5712 = vmatpush1.bf16.xpose.msra.mxu0 0
    %5713 = vmatprep.subr.bf16.mxu0 0
    %5714 = vmatpush1.bf16.xpose.msra.mxu0 0
    %5715 = vmatprep.subr.bf16.mxu0 0
    %5716 = vmatpush1.bf16.xpose.msra.mxu0 0
    %5717 = vmatprep.subr.bf16.mxu0 0
    %5718 = vmatpush1.bf16.xpose.msra.mxu0 0
    %5719 = vmatprep.subr.bf16.mxu0 0
    %5720 = vmatpush1.bf16.xpose.msra.mxu0 0
    %5721 = vmatprep.subr.bf16.mxu0 0
    %5722 = vmatpush1.bf16.xpose.msra.mxu0 0
    %5723 = vmatprep.subr.bf16.mxu0 0
    %5724 = vmatpush1.bf16.xpose.msra.mxu0 0
    %5725 = vmatprep.subr.bf16.mxu0 0
    %5726 = vmatpush1.bf16.xpose.msra.mxu0 0
    %5727 = vmatprep.subr.bf16.mxu0 0
    %5728 = vmatpush1.bf16.xpose.msra.mxu0 0
    %5729 = vmatprep.subr.bf16.mxu0 0
    %5730 = vmatpush1.bf16.xpose.msra.mxu0 0
    %5731 = vmatprep.subr.bf16.mxu0 0
    %5732 = vmatpush1.bf16.xpose.msra.mxu0 0
    %5733 = vmatprep.subr.bf16.mxu0 0
    %5734 = vmatpush1.bf16.xpose.msra.mxu0 0
    %5735 = vmatprep.mubr.bf16.mxu0 0
    %5736 = vmatmul.mubr.bf16.gmra.mrb[0].mxu0 %v5695
    %v5737 = vpop.f32.mrb[0].mxu0
    %v5738 = vadd.f32 0.0, %v5737
    %v5739 = vpop.f32.mrb[0].mxu0
    %v5740 = vpop.f32.mrb[0].mxu0
    %v5741 = vadd.f32 0.0, %v5740
    %v5742 = vpop.f32.mrb[0].mxu0
    %5743 = vdwg.mxu0
    %5744 = vrot.lane.b32.xlu0 %v3739, 32
    %v5745 = vpop.permute.xlu0 %5744
    %5746 = vrot.lane.b32.xlu0 %v3746, 32
    %v5747 = vpop.permute.xlu0 %5746
    %5748 = vrot.lane.b32.xlu0 %v3747, 32
    %v5749 = vpop.permute.xlu0 %5748
    %v5751 = vsel %vm645, %v5745, 0
    %v5754 = vsel %vm645, %v5747, 0
    %v5757 = vsel %vm645, %v5749, 0
    %5759 = vmatprep.subr.bf16.mxu0 0
    %5760 = vmatpush1.bf16.xpose.msra.mxu0 %v5754
    %5761 = vmatprep.subr.bf16.mxu0 0
    %5762 = vmatpush1.bf16.xpose.msra.mxu0 %v5757
    %5763 = vmatprep.subr.bf16.mxu0 0
    %5764 = vmatpush1.bf16.xpose.msra.mxu0 0
    %5765 = vmatprep.subr.bf16.mxu0 0
    %5766 = vmatpush1.bf16.xpose.msra.mxu0 0
    %5767 = vmatprep.subr.bf16.mxu0 0
    %5768 = vmatpush1.bf16.xpose.msra.mxu0 0
    %5769 = vmatprep.subr.bf16.mxu0 0
    %5770 = vmatpush1.bf16.xpose.msra.mxu0 0
    %5771 = vmatprep.subr.bf16.mxu0 0
    %5772 = vmatpush1.bf16.xpose.msra.mxu0 0
    %5773 = vmatprep.subr.bf16.mxu0 0
    %5774 = vmatpush1.bf16.xpose.msra.mxu0 0
    %5775 = vmatprep.subr.bf16.mxu0 0
    %5776 = vmatpush1.bf16.xpose.msra.mxu0 0
    %5777 = vmatprep.subr.bf16.mxu0 0
    %5778 = vmatpush1.bf16.xpose.msra.mxu0 0
    %5779 = vmatprep.subr.bf16.mxu0 0
    %5780 = vmatpush1.bf16.xpose.msra.mxu0 0
    %5781 = vmatprep.subr.bf16.mxu0 0
    %5782 = vmatpush1.bf16.xpose.msra.mxu0 0
    %5783 = vmatprep.subr.bf16.mxu0 0
    %5784 = vmatpush1.bf16.xpose.msra.mxu0 0
    %5785 = vmatprep.subr.bf16.mxu0 0
    %5786 = vmatpush1.bf16.xpose.msra.mxu0 0
    %5787 = vmatprep.subr.bf16.mxu0 0
    %5788 = vmatpush1.bf16.xpose.msra.mxu0 0
    %5789 = vmatprep.subr.bf16.mxu0 0
    %5790 = vmatpush1.bf16.xpose.msra.mxu0 0
    %5791 = vmatprep.mubr.bf16.mxu0 0
    %5792 = vmatmul.mubr.bf16.gmra.mrb[0].mxu0 %v5751
    %v5793 = vpop.f32.mrb[0].mxu0
    %v5794 = vadd.f32 0.0, %v5793
    %v5795 = vpop.f32.mrb[0].mxu0
    %v5796 = vpop.f32.mrb[0].mxu0
    %v5797 = vadd.f32 0.0, %v5796
    %v5798 = vpop.f32.mrb[0].mxu0
    %5799 = vdwg.mxu0
    %v5800 = vsel %vm645, %v5626, -inf
    %5801 = vmax.xlane.f32.xlu0 %v5800
    %v5802 = vpop.xlane.xlu0 %5801
    %v5803 = vsel %vm645, %v5629, -inf
    %5804 = vmax.xlane.f32.xlu0 %v5803
    %v5805 = vpop.xlane.xlu0 %5804
    %v5806 = vsel %vm645, %v5682, -inf
    %5807 = vmax.xlane.f32.xlu0 %v5806
    %v5808 = vpop.xlane.xlu0 %5807
    %v5809 = vsel %vm645, %v5685, -inf
    %5810 = vmax.xlane.f32.xlu0 %v5809
    %v5811 = vpop.xlane.xlu0 %5810
    %v5812 = vsel %vm645, %v5738, -inf
    %5813 = vmax.xlane.f32.xlu0 %v5812
    %v5814 = vpop.xlane.xlu0 %5813
    %v5815 = vsel %vm645, %v5741, -inf
    %5816 = vmax.xlane.f32.xlu0 %v5815
    %v5817 = vpop.xlane.xlu0 %5816
    %v5818 = vsel %vm645, %v5794, -inf
    %5819 = vmax.xlane.f32.xlu0 %v5818
    %v5820 = vpop.xlane.xlu0 %5819
    %v5821 = vsel %vm645, %v5797, -inf
    %5822 = vmax.xlane.f32.xlu0 %v5821
    %v5823 = vpop.xlane.xlu0 %5822
    %v5824 = vsub.f32 %v5626, %v5802
    %v5825 = vsub.f32 %v5629, %v5805
    %v5826 = vsub.f32 %v5682, %v5808
    %v5827 = vsub.f32 %v5685, %v5811
    %v5828 = vsub.f32 %v5738, %v5814
    %v5829 = vsub.f32 %v5741, %v5817
    %v5830 = vsub.f32 %v5794, %v5820
    %v5831 = vsub.f32 %v5797, %v5823
    %v5832 = vmul.f32 %v5824, 1.442695
    %v5833 = vpow.pop %v5832
    %v5834 = vmul.f32 %v5825, 1.442695
    %v5835 = vpow.pop %v5834
    %v5836 = vmul.f32 %v5826, 1.442695
    %v5837 = vpow.pop %v5836
    %v5838 = vmul.f32 %v5827, 1.442695
    %v5839 = vpow.pop %v5838
    %v5840 = vmul.f32 %v5828, 1.442695
    %v5841 = vpow.pop %v5840
    %v5842 = vmul.f32 %v5829, 1.442695
    %v5843 = vpow.pop %v5842
    %v5844 = vmul.f32 %v5830, 1.442695
    %v5845 = vpow.pop %v5844
    %v5846 = vmul.f32 %v5831, 1.442695
    %v5847 = vpow.pop %v5846
    %v5848 = vsel %vm645, %v5833, 0.0
    %5849 = vadd.xlane.f32.xlu0 %v5848
    %v5850 = vpop.xlane.xlu0 %5849
    %v5851 = vsel %vm645, %v5835, 0.0
    %5852 = vadd.xlane.f32.xlu0 %v5851
    %v5853 = vpop.xlane.xlu0 %5852
    %v5854 = vsel %vm645, %v5837, 0.0
    %5855 = vadd.xlane.f32.xlu0 %v5854
    %v5856 = vpop.xlane.xlu0 %5855
    %v5857 = vsel %vm645, %v5839, 0.0
    %5858 = vadd.xlane.f32.xlu0 %v5857
    %v5859 = vpop.xlane.xlu0 %5858
    %v5860 = vsel %vm645, %v5841, 0.0
    %5861 = vadd.xlane.f32.xlu0 %v5860
    %v5862 = vpop.xlane.xlu0 %5861
    %v5863 = vsel %vm645, %v5843, 0.0
    %5864 = vadd.xlane.f32.xlu0 %v5863
    %v5865 = vpop.xlane.xlu0 %5864
    %v5866 = vsel %vm645, %v5845, 0.0
    %5867 = vadd.xlane.f32.xlu0 %v5866
    %v5868 = vpop.xlane.xlu0 %5867
    %v5869 = vsel %vm645, %v5847, 0.0
    %5870 = vadd.xlane.f32.xlu0 %v5869
    %v5871 = vpop.xlane.xlu0 %5870
    %v5872 = vrcp.pop %v5850
    %v5873 = vrcp.pop %v5853
    %v5874 = vrcp.pop %v5856
    %v5875 = vrcp.pop %v5859
    %v5876 = vrcp.pop %v5862
    %v5877 = vrcp.pop %v5865
    %v5878 = vrcp.pop %v5868
    %v5879 = vrcp.pop %v5871
    %v5880 = vmul.f32 %v5833, %v5872
    %v5881 = vmul.f32 %v5835, %v5873
    %v5882 = vmul.f32 %v5837, %v5874
    %v5883 = vmul.f32 %v5839, %v5875
    %v5884 = vmul.f32 %v5841, %v5876
    %v5885 = vmul.f32 %v5843, %v5877
    %v5886 = vmul.f32 %v5845, %v5878
    %v5887 = vmul.f32 %v5847, %v5879
    %v5888 = vpack.c.bf16 %v5881, %v5880
    %v5889 = vpack.c.bf16 %v5883, %v5882
    %v5890 = vpack.c.bf16 %v5885, %v5884
    %v5891 = vpack.c.bf16 %v5887, %v5886
    %5892 = vrot.lane.b32.xlu0 %v3748, 32
    %v5893 = vpop.permute.xlu0 %5892
    %5894 = vrot.lane.b32.xlu0 %v3749, 32
    %v5895 = vpop.permute.xlu0 %5894
    %v5899 = vsel %vm645, %v5888, 0
    %5901 = vmatprep.subr.bf16.mxu0 0
    %5902 = vmatpush1.bf16.msra.mxu0 %v5893
    %5903 = vmatprep.subr.bf16.mxu0 0
    %5904 = vmatpush1.bf16.msra.mxu0 %v5895
    %5905 = vmatprep.subr.bf16.mxu0 0
    %5906 = vmatpush1.bf16.msra.mxu0 0
    %5907 = vmatprep.subr.bf16.mxu0 0
    %5908 = vmatpush1.bf16.msra.mxu0 0
    %5909 = vmatprep.subr.bf16.mxu0 0
    %5910 = vmatpush1.bf16.msra.mxu0 0
    %5911 = vmatprep.subr.bf16.mxu0 0
    %5912 = vmatpush1.bf16.msra.mxu0 0
    %5913 = vmatprep.subr.bf16.mxu0 0
    %5914 = vmatpush1.bf16.msra.mxu0 0
    %5915 = vmatprep.subr.bf16.mxu0 0
    %5916 = vmatpush1.bf16.msra.mxu0 0
    %5917 = vmatprep.subr.bf16.mxu0 0
    %5918 = vmatpush1.bf16.msra.mxu0 0
    %5919 = vmatprep.subr.bf16.mxu0 0
    %5920 = vmatpush1.bf16.msra.mxu0 0
    %5921 = vmatprep.subr.bf16.mxu0 0
    %5922 = vmatpush1.bf16.msra.mxu0 0
    %5923 = vmatprep.subr.bf16.mxu0 0
    %5924 = vmatpush1.bf16.msra.mxu0 0
    %5925 = vmatprep.subr.bf16.mxu0 0
    %5926 = vmatpush1.bf16.msra.mxu0 0
    %5927 = vmatprep.subr.bf16.mxu0 0
    %5928 = vmatpush1.bf16.msra.mxu0 0
    %5929 = vmatprep.subr.bf16.mxu0 0
    %5930 = vmatpush1.bf16.msra.mxu0 0
    %5931 = vmatprep.subr.bf16.mxu0 0
    %5932 = vmatpush1.bf16.msra.mxu0 0
    %5933 = vmatprep.mubr.bf16.mxu0 0
    %5934 = vmatmul.mubr.bf16.gmra.mrb[0].mxu0 %v5899
    %v5935 = vpop.f32.mrb[0].mxu0
    %v5936 = vadd.f32 0.0, %v5935
    %v5937 = vpop.f32.mrb[0].mxu0
    %v5938 = vpop.f32.mrb[0].mxu0
    %v5939 = vadd.f32 0.0, %v5938
    %v5940 = vpop.f32.mrb[0].mxu0
    %5941 = vdwg.mxu0
    %5942 = vrot.lane.b32.xlu0 %v3750, 32
    %v5943 = vpop.permute.xlu0 %5942
    %5944 = vrot.lane.b32.xlu0 %v3751, 32
    %v5945 = vpop.permute.xlu0 %5944
    %v5949 = vsel %vm645, %v5889, 0
    %5951 = vmatprep.subr.bf16.mxu0 0
    %5952 = vmatpush1.bf16.msra.mxu0 %v5943
    %5953 = vmatprep.subr.bf16.mxu0 0
    %5954 = vmatpush1.bf16.msra.mxu0 %v5945
    %5955 = vmatprep.subr.bf16.mxu0 0
    %5956 = vmatpush1.bf16.msra.mxu0 0
    %5957 = vmatprep.subr.bf16.mxu0 0
    %5958 = vmatpush1.bf16.msra.mxu0 0
    %5959 = vmatprep.subr.bf16.mxu0 0
    %5960 = vmatpush1.bf16.msra.mxu0 0
    %5961 = vmatprep.subr.bf16.mxu0 0
    %5962 = vmatpush1.bf16.msra.mxu0 0
    %5963 = vmatprep.subr.bf16.mxu0 0
    %5964 = vmatpush1.bf16.msra.mxu0 0
    %5965 = vmatprep.subr.bf16.mxu0 0
    %5966 = vmatpush1.bf16.msra.mxu0 0
    %5967 = vmatprep.subr.bf16.mxu0 0
    %5968 = vmatpush1.bf16.msra.mxu0 0
    %5969 = vmatprep.subr.bf16.mxu0 0
    %5970 = vmatpush1.bf16.msra.mxu0 0
    %5971 = vmatprep.subr.bf16.mxu0 0
    %5972 = vmatpush1.bf16.msra.mxu0 0
    %5973 = vmatprep.subr.bf16.mxu0 0
    %5974 = vmatpush1.bf16.msra.mxu0 0
    %5975 = vmatprep.subr.bf16.mxu0 0
    %5976 = vmatpush1.bf16.msra.mxu0 0
    %5977 = vmatprep.subr.bf16.mxu0 0
    %5978 = vmatpush1.bf16.msra.mxu0 0
    %5979 = vmatprep.subr.bf16.mxu0 0
    %5980 = vmatpush1.bf16.msra.mxu0 0
    %5981 = vmatprep.subr.bf16.mxu0 0
    %5982 = vmatpush1.bf16.msra.mxu0 0
    %5983 = vmatprep.mubr.bf16.mxu0 0
    %5984 = vmatmul.mubr.bf16.gmra.mrb[0].mxu0 %v5949
    %v5985 = vpop.f32.mrb[0].mxu0
    %v5986 = vadd.f32 0.0, %v5985
    %v5987 = vpop.f32.mrb[0].mxu0
    %v5988 = vpop.f32.mrb[0].mxu0
    %v5989 = vadd.f32 0.0, %v5988
    %v5990 = vpop.f32.mrb[0].mxu0
    %5991 = vdwg.mxu0
    %5992 = vrot.lane.b32.xlu0 %v3752, 32
    %v5993 = vpop.permute.xlu0 %5992
    %5994 = vrot.lane.b32.xlu0 %v3753, 32
    %v5995 = vpop.permute.xlu0 %5994
    %v5999 = vsel %vm645, %v5890, 0
    %6001 = vmatprep.subr.bf16.mxu0 0
    %6002 = vmatpush1.bf16.msra.mxu0 %v5993
    %6003 = vmatprep.subr.bf16.mxu0 0
    %6004 = vmatpush1.bf16.msra.mxu0 %v5995
    %6005 = vmatprep.subr.bf16.mxu0 0
    %6006 = vmatpush1.bf16.msra.mxu0 0
    %6007 = vmatprep.subr.bf16.mxu0 0
    %6008 = vmatpush1.bf16.msra.mxu0 0
    %6009 = vmatprep.subr.bf16.mxu0 0
    %6010 = vmatpush1.bf16.msra.mxu0 0
    %6011 = vmatprep.subr.bf16.mxu0 0
    %6012 = vmatpush1.bf16.msra.mxu0 0
    %6013 = vmatprep.subr.bf16.mxu0 0
    %6014 = vmatpush1.bf16.msra.mxu0 0
    %6015 = vmatprep.subr.bf16.mxu0 0
    %6016 = vmatpush1.bf16.msra.mxu0 0
    %6017 = vmatprep.subr.bf16.mxu0 0
    %6018 = vmatpush1.bf16.msra.mxu0 0
    %6019 = vmatprep.subr.bf16.mxu0 0
    %6020 = vmatpush1.bf16.msra.mxu0 0
    %6021 = vmatprep.subr.bf16.mxu0 0
    %6022 = vmatpush1.bf16.msra.mxu0 0
    %6023 = vmatprep.subr.bf16.mxu0 0
    %6024 = vmatpush1.bf16.msra.mxu0 0
    %6025 = vmatprep.subr.bf16.mxu0 0
    %6026 = vmatpush1.bf16.msra.mxu0 0
    %6027 = vmatprep.subr.bf16.mxu0 0
    %6028 = vmatpush1.bf16.msra.mxu0 0
    %6029 = vmatprep.subr.bf16.mxu0 0
    %6030 = vmatpush1.bf16.msra.mxu0 0
    %6031 = vmatprep.subr.bf16.mxu0 0
    %6032 = vmatpush1.bf16.msra.mxu0 0
    %6033 = vmatprep.mubr.bf16.mxu0 0
    %6034 = vmatmul.mubr.bf16.gmra.mrb[0].mxu0 %v5999
    %v6035 = vpop.f32.mrb[0].mxu0
    %v6036 = vadd.f32 0.0, %v6035
    %v6037 = vpop.f32.mrb[0].mxu0
    %v6038 = vpop.f32.mrb[0].mxu0
    %v6039 = vadd.f32 0.0, %v6038
    %v6040 = vpop.f32.mrb[0].mxu0
    %6041 = vdwg.mxu0
    %6042 = vrot.lane.b32.xlu0 %v3754, 32
    %v6043 = vpop.permute.xlu0 %6042
    %6044 = vrot.lane.b32.xlu0 %v3755, 32
    %v6045 = vpop.permute.xlu0 %6044
    %v6049 = vsel %vm645, %v5891, 0
    %6051 = vmatprep.subr.bf16.mxu0 0
    %6052 = vmatpush1.bf16.msra.mxu0 %v6043
    %6053 = vmatprep.subr.bf16.mxu0 0
    %6054 = vmatpush1.bf16.msra.mxu0 %v6045
    %6055 = vmatprep.subr.bf16.mxu0 0
    %6056 = vmatpush1.bf16.msra.mxu0 0
    %6057 = vmatprep.subr.bf16.mxu0 0
    %6058 = vmatpush1.bf16.msra.mxu0 0
    %6059 = vmatprep.subr.bf16.mxu0 0
    %6060 = vmatpush1.bf16.msra.mxu0 0
    %6061 = vmatprep.subr.bf16.mxu0 0
    %6062 = vmatpush1.bf16.msra.mxu0 0
    %6063 = vmatprep.subr.bf16.mxu0 0
    %6064 = vmatpush1.bf16.msra.mxu0 0
    %6065 = vmatprep.subr.bf16.mxu0 0
    %6066 = vmatpush1.bf16.msra.mxu0 0
    %6067 = vmatprep.subr.bf16.mxu0 0
    %6068 = vmatpush1.bf16.msra.mxu0 0
    %6069 = vmatprep.subr.bf16.mxu0 0
    %6070 = vmatpush1.bf16.msra.mxu0 0
    %6071 = vmatprep.subr.bf16.mxu0 0
    %6072 = vmatpush1.bf16.msra.mxu0 0
    %6073 = vmatprep.subr.bf16.mxu0 0
    %6074 = vmatpush1.bf16.msra.mxu0 0
    %6075 = vmatprep.subr.bf16.mxu0 0
    %6076 = vmatpush1.bf16.msra.mxu0 0
    %6077 = vmatprep.subr.bf16.mxu0 0
    %6078 = vmatpush1.bf16.msra.mxu0 0
    %6079 = vmatprep.subr.bf16.mxu0 0
    %6080 = vmatpush1.bf16.msra.mxu0 0
    %6081 = vmatprep.subr.bf16.mxu0 0
    %6082 = vmatpush1.bf16.msra.mxu0 0
    %6083 = vmatprep.mubr.bf16.mxu0 0
    %6084 = vmatmul.mubr.bf16.gmra.mrb[0].mxu0 %v6049
    %v6085 = vpop.f32.mrb[0].mxu0
    %v6086 = vadd.f32 0.0, %v6085
    %v6087 = vpop.f32.mrb[0].mxu0
    %v6088 = vpop.f32.mrb[0].mxu0
    %v6089 = vadd.f32 0.0, %v6088
    %v6090 = vpop.f32.mrb[0].mxu0
    %6091 = vdwg.mxu0
    %v6092 = vpack.c.bf16 %v5939, %v5936
    %v6093 = vpack.c.bf16 %v5989, %v5986
    %v6094 = vpack.c.bf16 %v6039, %v6036
    %v6095 = vpack.c.bf16 %v6089, %v6086
    %v6096 = vld [vmem:[#allocation2 + $0x30] sm:$0xf]
    %v6097 = vld [vmem:[#allocation2 + $0x34] sm:$0xf]
    %v6098 = vld [vmem:[#allocation2 + $0x38] sm:$0xf]
    %v6099 = vld [vmem:[#allocation2 + $0x3c] sm:$0xf]
    %v6104 = vunpack.c.l.b16 %v6096
    %v6105 = vunpack.c.l.b16 %v6097
    %v6106 = vunpack.c.l.b16 %v6098
    %v6107 = vunpack.c.l.b16 %v6099
    %v6108 = vpack.c.b16 %v6105, %v6104
    %v6109 = vpack.c.b16 %v6107, %v6106
    %v6113 = vsel %vm645, %v6092, 0
    %v6116 = vsel %vm645, %v6093, 0
    %v6119 = vsel %vm645, %v6094, 0
    %v6122 = vsel %vm645, %v6095, 0
    %6124 = vmatprep.subr.bf16.mxu0 0
    %6125 = vmatpush1.bf16.msra.mxu0 %v6108
    %6126 = vmatprep.subr.bf16.mxu0 0
    %6127 = vmatpush1.bf16.msra.mxu0 %v6109
    %6128 = vmatprep.subr.bf16.mxu0 0
    %6129 = vmatpush1.bf16.msra.mxu0 0
    %6130 = vmatprep.subr.bf16.mxu0 0
    %6131 = vmatpush1.bf16.msra.mxu0 0
    %6132 = vmatprep.subr.bf16.mxu0 0
    %6133 = vmatpush1.bf16.msra.mxu0 0
    %6134 = vmatprep.subr.bf16.mxu0 0
    %6135 = vmatpush1.bf16.msra.mxu0 0
    %6136 = vmatprep.subr.bf16.mxu0 0
    %6137 = vmatpush1.bf16.msra.mxu0 0
    %6138 = vmatprep.subr.bf16.mxu0 0
    %6139 = vmatpush1.bf16.msra.mxu0 0
    %6140 = vmatprep.subr.bf16.mxu0 0
    %6141 = vmatpush1.bf16.msra.mxu0 0
    %6142 = vmatprep.subr.bf16.mxu0 0
    %6143 = vmatpush1.bf16.msra.mxu0 0
    %6144 = vmatprep.subr.bf16.mxu0 0
    %6145 = vmatpush1.bf16.msra.mxu0 0
    %6146 = vmatprep.subr.bf16.mxu0 0
    %6147 = vmatpush1.bf16.msra.mxu0 0
    %6148 = vmatprep.subr.bf16.mxu0 0
    %6149 = vmatpush1.bf16.msra.mxu0 0
    %6150 = vmatprep.subr.bf16.mxu0 0
    %6151 = vmatpush1.bf16.msra.mxu0 0
    %6152 = vmatprep.subr.bf16.mxu0 0
    %6153 = vmatpush1.bf16.msra.mxu0 0
    %6154 = vmatprep.subr.bf16.mxu0 0
    %6155 = vmatpush1.bf16.msra.mxu0 0
    %6156 = vmatprep.mubr.bf16.mxu0 0
    %6157 = vmatmul.mubr.bf16.gmra.mrb[0].mxu0 %v6113
    %v6158 = vpop.f32.mrb[0].mxu0
    %v6159 = vadd.f32 0.0, %v6158
    %v6160 = vpop.f32.mrb[0].mxu0
    %v6161 = vpop.f32.mrb[0].mxu0
    %v6162 = vadd.f32 0.0, %v6161
    %v6163 = vpop.f32.mrb[0].mxu0
    %6164 = vmatprep.mubr.bf16.mxu0 0
    %6165 = vmatmul.mubr.bf16.gmra.mrb[0].mxu0 %v6116
    %v6166 = vpop.f32.mrb[0].mxu0
    %v6167 = vadd.f32 0.0, %v6166
    %v6168 = vpop.f32.mrb[0].mxu0
    %v6169 = vpop.f32.mrb[0].mxu0
    %v6170 = vadd.f32 0.0, %v6169
    %v6171 = vpop.f32.mrb[0].mxu0
    %6172 = vmatprep.mubr.bf16.mxu0 0
    %6173 = vmatmul.mubr.bf16.gmra.mrb[0].mxu0 %v6119
    %v6174 = vpop.f32.mrb[0].mxu0
    %v6175 = vadd.f32 0.0, %v6174
    %v6176 = vpop.f32.mrb[0].mxu0
    %v6177 = vpop.f32.mrb[0].mxu0
    %v6178 = vadd.f32 0.0, %v6177
    %v6179 = vpop.f32.mrb[0].mxu0
    %6180 = vmatprep.mubr.bf16.mxu0 0
    %6181 = vmatmul.mubr.bf16.gmra.mrb[0].mxu0 %v6122
    %v6182 = vpop.f32.mrb[0].mxu0
    %v6183 = vadd.f32 0.0, %v6182
    %v6184 = vpop.f32.mrb[0].mxu0
    %v6185 = vpop.f32.mrb[0].mxu0
    %v6186 = vadd.f32 0.0, %v6185
    %v6187 = vpop.f32.mrb[0].mxu0
    %6188 = vdwg.mxu0
    %v6189 = vadd.f32 %v5568, %v6159
    %v6190 = vadd.f32 %v5569, %v6162
    %v6191 = vadd.f32 %v5570, %v6167
    %v6192 = vadd.f32 %v5571, %v6170
    %v6193 = vadd.f32 %v5572, %v6175
    %v6194 = vadd.f32 %v5573, %v6178
    %v6195 = vadd.f32 %v5574, %v6183
    %v6196 = vadd.f32 %v5575, %v6186
    %v6198 = vlaneseq
    %v6199 = vshrl.u32 %v6198, 7
    %v6200 = vsub.s32 0, %v6199
    %v6201 = vrot.slane %v3756, %v6200
    %v6203 = vadd.f32 %v6189, %v6201
    %v6204 = vadd.f32 %v6190, %v6201
    %v6205 = vadd.f32 %v6191, %v6201
    %v6206 = vadd.f32 %v6192, %v6201
    %v6207 = vadd.f32 %v6193, %v6201
    %v6208 = vadd.f32 %v6194, %v6201
    %v6209 = vadd.f32 %v6195, %v6201
    %v6210 = vadd.f32 %v6196, %v6201
    %v6211 = vld [vmem:[#allocation13] sm:$0x1]
    %v6212 = vld [vmem:[#allocation15] sm:$0x1]
    %v6213 = vadd.f32 %v3112, %v6203
    %v6214 = vadd.f32 %v3113, %v6204
    %v6215 = vadd.f32 %v3114, %v6205
    %v6216 = vadd.f32 %v3115, %v6206
    %v6217 = vadd.f32 %v3116, %v6207
    %v6218 = vadd.f32 %v3117, %v6208
    %v6219 = vadd.f32 %v3118, %v6209
    %v6220 = vadd.f32 %v3119, %v6210
    %6221 = vadd.xlane.f32.xlu0 %v6213
    %v6222 = vpop.xlane.xlu0 %6221
    %6223 = vadd.xlane.f32.xlu0 %v6214
    %v6224 = vpop.xlane.xlu0 %6223
    %6225 = vadd.xlane.f32.xlu0 %v6215
    %v6226 = vpop.xlane.xlu0 %6225
    %6227 = vadd.xlane.f32.xlu0 %v6216
    %v6228 = vpop.xlane.xlu0 %6227
    %6229 = vadd.xlane.f32.xlu0 %v6217
    %v6230 = vpop.xlane.xlu0 %6229
    %6231 = vadd.xlane.f32.xlu0 %v6218
    %v6232 = vpop.xlane.xlu0 %6231
    %6233 = vadd.xlane.f32.xlu0 %v6219
    %v6234 = vpop.xlane.xlu0 %6233
    %6235 = vadd.xlane.f32.xlu0 %v6220
    %v6236 = vpop.xlane.xlu0 %6235
    %v6237 = vmul.f32 %v6222, %v3019
    %v6238 = vmul.f32 %v6224, %v3019
    %v6239 = vmul.f32 %v6226, %v3019
    %v6240 = vmul.f32 %v6228, %v3019
    %v6241 = vmul.f32 %v6230, %v3019
    %v6242 = vmul.f32 %v6232, %v3019
    %v6243 = vmul.f32 %v6234, %v3019
    %v6244 = vmul.f32 %v6236, %v3019
    %v6245 = vsub.f32 %v6213, %v6237
    %v6246 = vsub.f32 %v6214, %v6238
    %v6247 = vsub.f32 %v6215, %v6239
    %v6248 = vsub.f32 %v6216, %v6240
    %v6249 = vsub.f32 %v6217, %v6241
    %v6250 = vsub.f32 %v6218, %v6242
    %v6251 = vsub.f32 %v6219, %v6243
    %v6252 = vsub.f32 %v6220, %v6244
    %v6253 = vmul.f32 %v6245, %v6245
    %v6254 = vmul.f32 %v6246, %v6246
    %v6255 = vmul.f32 %v6247, %v6247
    %v6256 = vmul.f32 %v6248, %v6248
    %v6257 = vmul.f32 %v6249, %v6249
    %v6258 = vmul.f32 %v6250, %v6250
    %v6259 = vmul.f32 %v6251, %v6251
    %v6260 = vmul.f32 %v6252, %v6252
    %6261 = vadd.xlane.f32.xlu0 %v6253
    %v6262 = vpop.xlane.xlu0 %6261
    %6263 = vadd.xlane.f32.xlu0 %v6254
    %v6264 = vpop.xlane.xlu0 %6263
    %6265 = vadd.xlane.f32.xlu0 %v6255
    %v6266 = vpop.xlane.xlu0 %6265
    %6267 = vadd.xlane.f32.xlu0 %v6256
    %v6268 = vpop.xlane.xlu0 %6267
    %6269 = vadd.xlane.f32.xlu0 %v6257
    %v6270 = vpop.xlane.xlu0 %6269
    %6271 = vadd.xlane.f32.xlu0 %v6258
    %v6272 = vpop.xlane.xlu0 %6271
    %6273 = vadd.xlane.f32.xlu0 %v6259
    %v6274 = vpop.xlane.xlu0 %6273
    %6275 = vadd.xlane.f32.xlu0 %v6260
    %v6276 = vpop.xlane.xlu0 %6275
    %v6277 = vmul.f32 %v6262, %v3019
    %v6278 = vmul.f32 %v6264, %v3019
    %v6279 = vmul.f32 %v6266, %v3019
    %v6280 = vmul.f32 %v6268, %v3019
    %v6281 = vmul.f32 %v6270, %v3019
    %v6282 = vmul.f32 %v6272, %v3019
    %v6283 = vmul.f32 %v6274, %v3019
    %v6284 = vmul.f32 %v6276, %v3019
    %v6285 = vadd.f32 %v6277, 1e-05
    %v6286 = vadd.f32 %v6278, 1e-05
    %v6287 = vadd.f32 %v6279, 1e-05
    %v6288 = vadd.f32 %v6280, 1e-05
    %v6289 = vadd.f32 %v6281, 1e-05
    %v6290 = vadd.f32 %v6282, 1e-05
    %v6291 = vadd.f32 %v6283, 1e-05
    %v6292 = vadd.f32 %v6284, 1e-05
    %v6293 = vrsqrt.pop %v6285
    %v6294 = vrsqrt.pop %v6286
    %v6295 = vrsqrt.pop %v6287
    %v6296 = vrsqrt.pop %v6288
    %v6297 = vrsqrt.pop %v6289
    %v6298 = vrsqrt.pop %v6290
    %v6299 = vrsqrt.pop %v6291
    %v6300 = vrsqrt.pop %v6292
    %v6301 = vmul.f32 %v6245, %v6293
    %v6302 = vmul.f32 %v6246, %v6294
    %v6303 = vmul.f32 %v6247, %v6295
    %v6304 = vmul.f32 %v6248, %v6296
    %v6305 = vmul.f32 %v6249, %v6297
    %v6306 = vmul.f32 %v6250, %v6298
    %v6307 = vmul.f32 %v6251, %v6299
    %v6308 = vmul.f32 %v6252, %v6300
    %v6310 = vlaneseq
    %v6311 = vshrl.u32 %v6310, 7
    %v6312 = vsub.s32 0, %v6311
    %v6313 = vrot.slane %v6211, %v6312
    %v6315 = vmul.f32 %v6301, %v6313
    %v6316 = vmul.f32 %v6302, %v6313
    %v6317 = vmul.f32 %v6303, %v6313
    %v6318 = vmul.f32 %v6304, %v6313
    %v6319 = vmul.f32 %v6305, %v6313
    %v6320 = vmul.f32 %v6306, %v6313
    %v6321 = vmul.f32 %v6307, %v6313
    %v6322 = vmul.f32 %v6308, %v6313
    %v6324 = vlaneseq
    %v6325 = vshrl.u32 %v6324, 7
    %v6326 = vsub.s32 0, %v6325
    %v6327 = vrot.slane %v6212, %v6326
    %v6329 = vadd.f32 %v6315, %v6327
    %v6330 = vadd.f32 %v6316, %v6327
    %v6331 = vadd.f32 %v6317, %v6327
    %v6332 = vadd.f32 %v6318, %v6327
    %v6333 = vadd.f32 %v6319, %v6327
    %v6334 = vadd.f32 %v6320, %v6327
    %v6335 = vadd.f32 %v6321, %v6327
    %v6336 = vadd.f32 %v6322, %v6327
    %v6337 = vpack.c.bf16 %v6330, %v6329
    %v6338 = vpack.c.bf16 %v6332, %v6331
    %v6339 = vpack.c.bf16 %v6334, %v6333
    %v6340 = vpack.c.bf16 %v6336, %v6335
    %v6341 = vld [vmem:[%s13] sm:$0xff]
    %v6342 = vld [vmem:[%s13 + $0x8] sm:$0xff]
    %v6343 = vld [vmem:[%s13 + $0x10] sm:$0xff]
    %v6344 = vld [vmem:[%s13 + $0x18] sm:$0xff]
    %v6345 = vld [vmem:[%s13 + $0x20] sm:$0xff]
    %v6346 = vld [vmem:[%s13 + $0x28] sm:$0xff]
    %v6347 = vld [vmem:[%s13 + $0x30] sm:$0xff]
    %v6348 = vld [vmem:[%s13 + $0x38] sm:$0xff]
    %v6349 = vld [vmem:[%s13 + $0x40] sm:$0xff]
    %v6350 = vld [vmem:[%s13 + $0x48] sm:$0xff]
    %v6351 = vld [vmem:[%s13 + $0x50] sm:$0xff]
    %v6352 = vld [vmem:[%s13 + $0x58] sm:$0xff]
    %v6353 = vld [vmem:[%s13 + $0x60] sm:$0xff]
    %v6354 = vld [vmem:[%s13 + $0x68] sm:$0xff]
    %v6355 = vld [vmem:[%s13 + $0x70] sm:$0xff]
    %v6356 = vld [vmem:[%s13 + $0x78] sm:$0xff]
    %v6357 = vld [vmem:[#allocation6] sm:$0x3]
    %v6359 = vlaneseq
    %v6360 = vshrl.u32 %v6359, 7
    %v6361 = vsub.s32 0, %v6360
    %v6362 = vrot.slane %v6357, %v6361
    %v6363 = vlaneseq
    %v6364 = vshrl.u32 %v6363, 7
    %v6365 = vsub.s32 1, %v6364
    %v6366 = vrot.slane %v6357, %v6365
    %v6385 = vunpack.c.l.b16 %v6341
    %v6386 = vunpack.c.h.b16 %v6341
    %v6387 = vunpack.c.l.b16 %v6342
    %v6388 = vunpack.c.h.b16 %v6342
    %v6389 = vunpack.c.l.b16 %v6343
    %v6390 = vunpack.c.h.b16 %v6343
    %v6391 = vunpack.c.l.b16 %v6344
    %v6392 = vunpack.c.h.b16 %v6344
    %v6393 = vunpack.c.l.b16 %v6345
    %v6394 = vunpack.c.h.b16 %v6345
    %v6395 = vunpack.c.l.b16 %v6346
    %v6396 = vunpack.c.h.b16 %v6346
    %v6397 = vunpack.c.l.b16 %v6347
    %v6398 = vunpack.c.h.b16 %v6347
    %v6399 = vunpack.c.l.b16 %v6348
    %v6400 = vunpack.c.h.b16 %v6348
    %v6401 = vunpack.c.l.b16 %v6349
    %v6402 = vunpack.c.h.b16 %v6349
    %v6403 = vunpack.c.l.b16 %v6350
    %v6404 = vunpack.c.h.b16 %v6350
    %v6405 = vunpack.c.l.b16 %v6351
    %v6406 = vunpack.c.h.b16 %v6351
    %v6407 = vunpack.c.l.b16 %v6352
    %v6408 = vunpack.c.h.b16 %v6352
    %v6409 = vunpack.c.l.b16 %v6353
    %v6410 = vunpack.c.h.b16 %v6353
    %v6411 = vunpack.c.l.b16 %v6354
    %v6412 = vunpack.c.h.b16 %v6354
    %v6413 = vunpack.c.l.b16 %v6355
    %v6414 = vunpack.c.h.b16 %v6355
    %v6415 = vunpack.c.l.b16 %v6356
    %v6416 = vunpack.c.h.b16 %v6356
    %v6417 = vpack.c.b16 %v6387, %v6385
    %v6418 = vpack.c.b16 %v6388, %v6386
    %v6419 = vpack.c.b16 %v6391, %v6389
    %v6420 = vpack.c.b16 %v6392, %v6390
    %v6421 = vpack.c.b16 %v6395, %v6393
    %v6422 = vpack.c.b16 %v6396, %v6394
    %v6423 = vpack.c.b16 %v6399, %v6397
    %v6424 = vpack.c.b16 %v6400, %v6398
    %v6425 = vpack.c.b16 %v6403, %v6401
    %v6426 = vpack.c.b16 %v6404, %v6402
    %v6427 = vpack.c.b16 %v6407, %v6405
    %v6428 = vpack.c.b16 %v6408, %v6406
    %v6429 = vpack.c.b16 %v6411, %v6409
    %v6430 = vpack.c.b16 %v6412, %v6410
    %v6431 = vpack.c.b16 %v6415, %v6413
    %v6432 = vpack.c.b16 %v6416, %v6414
    %6449 = vmatprep.subr.bf16.mxu0 %v6418
    %6450 = vmatpush1.bf16.msra.mxu0 %v6417
    %6451 = vmatprep.subr.bf16.mxu0 %v6420
    %6452 = vmatpush1.bf16.msra.mxu0 %v6419
    %6453 = vmatprep.subr.bf16.mxu0 %v6422
    %6454 = vmatpush1.bf16.msra.mxu0 %v6421
    %6455 = vmatprep.subr.bf16.mxu0 %v6424
    %6456 = vmatpush1.bf16.msra.mxu0 %v6423
    %6457 = vmatprep.subr.bf16.mxu0 %v6426
    %6458 = vmatpush1.bf16.msra.mxu0 %v6425
    %6459 = vmatprep.subr.bf16.mxu0 %v6428
    %6460 = vmatpush1.bf16.msra.mxu0 %v6427
    %6461 = vmatprep.subr.bf16.mxu0 %v6430
    %6462 = vmatpush1.bf16.msra.mxu0 %v6429
    %6463 = vmatprep.subr.bf16.mxu0 %v6432
    %6464 = vmatpush1.bf16.msra.mxu0 %v6431
    %6465 = vmatprep.subr.bf16.mxu0 0
    %6466 = vmatpush1.bf16.msra.mxu0 0
    %6467 = vmatprep.subr.bf16.mxu0 0
    %6468 = vmatpush1.bf16.msra.mxu0 0
    %6469 = vmatprep.subr.bf16.mxu0 0
    %6470 = vmatpush1.bf16.msra.mxu0 0
    %6471 = vmatprep.subr.bf16.mxu0 0
    %6472 = vmatpush1.bf16.msra.mxu0 0
    %6473 = vmatprep.subr.bf16.mxu0 0
    %6474 = vmatpush1.bf16.msra.mxu0 0
    %6475 = vmatprep.subr.bf16.mxu0 0
    %6476 = vmatpush1.bf16.msra.mxu0 0
    %6477 = vmatprep.subr.bf16.mxu0 0
    %6478 = vmatpush1.bf16.msra.mxu0 0
    %6479 = vmatprep.subr.bf16.mxu0 0
    %6480 = vmatpush1.bf16.msra.mxu0 0
    %6481 = vmatprep.mubr.bf16.mxu0 0
    %6482 = vmatmul.mubr.bf16.gmra.mrb[0].mxu0 %v6337
    %v6483 = vpop.f32.mrb[0].mxu0
    %v6484 = vadd.f32 %v6362, %v6483
    %v6485 = vpop.f32.mrb[0].mxu0
    %v6486 = vadd.f32 %v6366, %v6485
    %v6487 = vpop.f32.mrb[0].mxu0
    %v6488 = vadd.f32 %v6362, %v6487
    %v6489 = vpop.f32.mrb[0].mxu0
    %v6490 = vadd.f32 %v6366, %v6489
    %6491 = vmatprep.mubr.bf16.mxu0 0
    %6492 = vmatmul.mubr.bf16.gmra.mrb[0].mxu0 %v6338
    %v6493 = vpop.f32.mrb[0].mxu0
    %v6494 = vadd.f32 %v6362, %v6493
    %v6495 = vpop.f32.mrb[0].mxu0
    %v6496 = vadd.f32 %v6366, %v6495
    %v6497 = vpop.f32.mrb[0].mxu0
    %v6498 = vadd.f32 %v6362, %v6497
    %v6499 = vpop.f32.mrb[0].mxu0
    %v6500 = vadd.f32 %v6366, %v6499
    %6501 = vmatprep.mubr.bf16.mxu0 0
    %6502 = vmatmul.mubr.bf16.gmra.mrb[0].mxu0 %v6339
    %v6503 = vpop.f32.mrb[0].mxu0
    %v6504 = vadd.f32 %v6362, %v6503
    %v6505 = vpop.f32.mrb[0].mxu0
    %v6506 = vadd.f32 %v6366, %v6505
    %v6507 = vpop.f32.mrb[0].mxu0
    %v6508 = vadd.f32 %v6362, %v6507
    %v6509 = vpop.f32.mrb[0].mxu0
    %v6510 = vadd.f32 %v6366, %v6509
    %6511 = vmatprep.mubr.bf16.mxu0 0
    %6512 = vmatmul.mubr.bf16.gmra.mrb[0].mxu0 %v6340
    %v6513 = vpop.f32.mrb[0].mxu0
    %v6514 = vadd.f32 %v6362, %v6513
    %v6515 = vpop.f32.mrb[0].mxu0
    %v6516 = vadd.f32 %v6366, %v6515
    %v6517 = vpop.f32.mrb[0].mxu0
    %v6518 = vadd.f32 %v6362, %v6517
    %v6519 = vpop.f32.mrb[0].mxu0
    %v6520 = vadd.f32 %v6366, %v6519
    %6521 = vdwg.mxu0
    %v6522 = vmax.f32 %v6484, 0.0
    %v6523 = vmax.f32 %v6486, 0.0
    %v6524 = vmax.f32 %v6488, 0.0
    %v6525 = vmax.f32 %v6490, 0.0
    %v6526 = vmax.f32 %v6494, 0.0
    %v6527 = vmax.f32 %v6496, 0.0
    %v6528 = vmax.f32 %v6498, 0.0
    %v6529 = vmax.f32 %v6500, 0.0
    %v6530 = vmax.f32 %v6504, 0.0
    %v6531 = vmax.f32 %v6506, 0.0
    %v6532 = vmax.f32 %v6508, 0.0
    %v6533 = vmax.f32 %v6510, 0.0
    %v6534 = vmax.f32 %v6514, 0.0
    %v6535 = vmax.f32 %v6516, 0.0
    %v6536 = vmax.f32 %v6518, 0.0
    %v6537 = vmax.f32 %v6520, 0.0
    %v6538 = vpack.c.bf16 %v6524, %v6522
    %v6539 = vpack.c.bf16 %v6525, %v6523
    %v6540 = vpack.c.bf16 %v6528, %v6526
    %v6541 = vpack.c.bf16 %v6529, %v6527
    %v6542 = vpack.c.bf16 %v6532, %v6530
    %v6543 = vpack.c.bf16 %v6533, %v6531
    %v6544 = vpack.c.bf16 %v6536, %v6534
    %v6545 = vpack.c.bf16 %v6537, %v6535
    %v6546 = vld [vmem:[#allocation7] sm:$0xf]
    %v6547 = vld [vmem:[#allocation7 + $0x4] sm:$0xf]
    %v6548 = vld [vmem:[#allocation7 + $0x8] sm:$0xf]
    %v6549 = vld [vmem:[#allocation7 + $0xc] sm:$0xf]
    %v6550 = vld [vmem:[#allocation7 + $0x10] sm:$0xf]
    %v6551 = vld [vmem:[#allocation7 + $0x14] sm:$0xf]
    %v6552 = vld [vmem:[#allocation7 + $0x18] sm:$0xf]
    %v6553 = vld [vmem:[#allocation7 + $0x1c] sm:$0xf]
    %v6554 = vld [vmem:[#allocation7 + $0x20] sm:$0xf]
    %v6555 = vld [vmem:[#allocation7 + $0x24] sm:$0xf]
    %v6556 = vld [vmem:[#allocation7 + $0x28] sm:$0xf]
    %v6557 = vld [vmem:[#allocation7 + $0x2c] sm:$0xf]
    %v6558 = vld [vmem:[#allocation7 + $0x30] sm:$0xf]
    %v6559 = vld [vmem:[#allocation7 + $0x34] sm:$0xf]
    %v6560 = vld [vmem:[#allocation7 + $0x38] sm:$0xf]
    %v6561 = vld [vmem:[#allocation7 + $0x3c] sm:$0xf]
    %v6562 = vld [vmem:[#allocation7 + $0x40] sm:$0xf]
    %v6563 = vld [vmem:[#allocation7 + $0x44] sm:$0xf]
    %v6564 = vld [vmem:[#allocation7 + $0x48] sm:$0xf]
    %v6565 = vld [vmem:[#allocation7 + $0x4c] sm:$0xf]
    %v6566 = vld [vmem:[#allocation7 + $0x50] sm:$0xf]
    %v6567 = vld [vmem:[#allocation7 + $0x54] sm:$0xf]
    %v6568 = vld [vmem:[#allocation7 + $0x58] sm:$0xf]
    %v6569 = vld [vmem:[#allocation7 + $0x5c] sm:$0xf]
    %v6570 = vld [vmem:[#allocation7 + $0x60] sm:$0xf]
    %v6571 = vld [vmem:[#allocation7 + $0x64] sm:$0xf]
    %v6572 = vld [vmem:[#allocation7 + $0x68] sm:$0xf]
    %v6573 = vld [vmem:[#allocation7 + $0x6c] sm:$0xf]
    %v6574 = vld [vmem:[#allocation7 + $0x70] sm:$0xf]
    %v6575 = vld [vmem:[#allocation7 + $0x74] sm:$0xf]
    %v6576 = vld [vmem:[#allocation7 + $0x78] sm:$0xf]
    %v6577 = vld [vmem:[#allocation7 + $0x7c] sm:$0xf]
    %v6578 = vld [vmem:[#allocation9] sm:$0x1]
    %v6580 = vlaneseq
    %v6581 = vshrl.u32 %v6580, 7
    %v6582 = vsub.s32 0, %v6581
    %v6583 = vrot.slane %v6578, %v6582
    %v6617 = vunpack.c.l.b16 %v6546
    %v6618 = vunpack.c.l.b16 %v6547
    %v6619 = vunpack.c.l.b16 %v6548
    %v6620 = vunpack.c.l.b16 %v6549
    %v6621 = vunpack.c.l.b16 %v6550
    %v6622 = vunpack.c.l.b16 %v6551
    %v6623 = vunpack.c.l.b16 %v6552
    %v6624 = vunpack.c.l.b16 %v6553
    %v6625 = vunpack.c.l.b16 %v6554
    %v6626 = vunpack.c.l.b16 %v6555
    %v6627 = vunpack.c.l.b16 %v6556
    %v6628 = vunpack.c.l.b16 %v6557
    %v6629 = vunpack.c.l.b16 %v6558
    %v6630 = vunpack.c.l.b16 %v6559
    %v6631 = vunpack.c.l.b16 %v6560
    %v6632 = vunpack.c.l.b16 %v6561
    %v6633 = vunpack.c.l.b16 %v6562
    %v6634 = vunpack.c.l.b16 %v6563
    %v6635 = vunpack.c.l.b16 %v6564
    %v6636 = vunpack.c.l.b16 %v6565
    %v6637 = vunpack.c.l.b16 %v6566
    %v6638 = vunpack.c.l.b16 %v6567
    %v6639 = vunpack.c.l.b16 %v6568
    %v6640 = vunpack.c.l.b16 %v6569
    %v6641 = vunpack.c.l.b16 %v6570
    %v6642 = vunpack.c.l.b16 %v6571
    %v6643 = vunpack.c.l.b16 %v6572
    %v6644 = vunpack.c.l.b16 %v6573
    %v6645 = vunpack.c.l.b16 %v6574
    %v6646 = vunpack.c.l.b16 %v6575
    %v6647 = vunpack.c.l.b16 %v6576
    %v6648 = vunpack.c.l.b16 %v6577
    %v6649 = vpack.c.b16 %v6618, %v6617
    %v6650 = vpack.c.b16 %v6620, %v6619
    %v6651 = vpack.c.b16 %v6622, %v6621
    %v6652 = vpack.c.b16 %v6624, %v6623
    %v6653 = vpack.c.b16 %v6626, %v6625
    %v6654 = vpack.c.b16 %v6628, %v6627
    %v6655 = vpack.c.b16 %v6630, %v6629
    %v6656 = vpack.c.b16 %v6632, %v6631
    %v6657 = vpack.c.b16 %v6634, %v6633
    %v6658 = vpack.c.b16 %v6636, %v6635
    %v6659 = vpack.c.b16 %v6638, %v6637
    %v6660 = vpack.c.b16 %v6640, %v6639
    %v6661 = vpack.c.b16 %v6642, %v6641
    %v6662 = vpack.c.b16 %v6644, %v6643
    %v6663 = vpack.c.b16 %v6646, %v6645
    %v6664 = vpack.c.b16 %v6648, %v6647
    %6681 = vmatprep.subr.bf16.mxu0 0
    %6682 = vmatpush1.bf16.msra.mxu0 %v6649
    %6683 = vmatprep.subr.bf16.mxu0 0
    %6684 = vmatpush1.bf16.msra.mxu0 %v6650
    %6685 = vmatprep.subr.bf16.mxu0 0
    %6686 = vmatpush1.bf16.msra.mxu0 %v6651
    %6687 = vmatprep.subr.bf16.mxu0 0
    %6688 = vmatpush1.bf16.msra.mxu0 %v6652
    %6689 = vmatprep.subr.bf16.mxu0 0
    %6690 = vmatpush1.bf16.msra.mxu0 %v6653
    %6691 = vmatprep.subr.bf16.mxu0 0
    %6692 = vmatpush1.bf16.msra.mxu0 %v6654
    %6693 = vmatprep.subr.bf16.mxu0 0
    %6694 = vmatpush1.bf16.msra.mxu0 %v6655
    %6695 = vmatprep.subr.bf16.mxu0 0
    %6696 = vmatpush1.bf16.msra.mxu0 %v6656
    %6697 = vmatprep.subr.bf16.mxu0 0
    %6698 = vmatpush1.bf16.msra.mxu0 %v6657
    %6699 = vmatprep.subr.bf16.mxu0 0
    %6700 = vmatpush1.bf16.msra.mxu0 %v6658
    %6701 = vmatprep.subr.bf16.mxu0 0
    %6702 = vmatpush1.bf16.msra.mxu0 %v6659
    %6703 = vmatprep.subr.bf16.mxu0 0
    %6704 = vmatpush1.bf16.msra.mxu0 %v6660
    %6705 = vmatprep.subr.bf16.mxu0 0
    %6706 = vmatpush1.bf16.msra.mxu0 %v6661
    %6707 = vmatprep.subr.bf16.mxu0 0
    %6708 = vmatpush1.bf16.msra.mxu0 %v6662
    %6709 = vmatprep.subr.bf16.mxu0 0
    %6710 = vmatpush1.bf16.msra.mxu0 %v6663
    %6711 = vmatprep.subr.bf16.mxu0 0
    %6712 = vmatpush1.bf16.msra.mxu0 %v6664
    %6713 = vmatprep.mubr.bf16.mxu0 %v6539
    %6714 = vmatmul.mubr.bf16.gmra.mrb[0].mxu0 %v6538
    %v6715 = vpop.f32.mrb[0].mxu0
    %v6716 = vadd.f32 %v6583, %v6715
    %v6717 = vpop.f32.mrb[0].mxu0
    %v6718 = vpop.f32.mrb[0].mxu0
    %v6719 = vadd.f32 %v6583, %v6718
    %v6720 = vpop.f32.mrb[0].mxu0
    %6721 = vmatprep.mubr.bf16.mxu0 %v6541
    %6722 = vmatmul.mubr.bf16.gmra.mrb[0].mxu0 %v6540
    %v6723 = vpop.f32.mrb[0].mxu0
    %v6724 = vadd.f32 %v6583, %v6723
    %v6725 = vpop.f32.mrb[0].mxu0
    %v6726 = vpop.f32.mrb[0].mxu0
    %v6727 = vadd.f32 %v6583, %v6726
    %v6728 = vpop.f32.mrb[0].mxu0
    %6729 = vmatprep.mubr.bf16.mxu0 %v6543
    %6730 = vmatmul.mubr.bf16.gmra.mrb[0].mxu0 %v6542
    %v6731 = vpop.f32.mrb[0].mxu0
    %v6732 = vadd.f32 %v6583, %v6731
    %v6733 = vpop.f32.mrb[0].mxu0
    %v6734 = vpop.f32.mrb[0].mxu0
    %v6735 = vadd.f32 %v6583, %v6734
    %v6736 = vpop.f32.mrb[0].mxu0
    %6737 = vmatprep.mubr.bf16.mxu0 %v6545
    %6738 = vmatmul.mubr.bf16.gmra.mrb[0].mxu0 %v6544
    %v6739 = vpop.f32.mrb[0].mxu0
    %v6740 = vadd.f32 %v6583, %v6739
    %v6741 = vpop.f32.mrb[0].mxu0
    %v6742 = vpop.f32.mrb[0].mxu0
    %v6743 = vadd.f32 %v6583, %v6742
    %v6744 = vpop.f32.mrb[0].mxu0
    %6745 = vdwg.mxu0
    %v6746 = vld [vmem:[%s21] sm:$0x1]
    %v6747 = vld [vmem:[#allocation16] sm:$0x1]
    %v6748 = vadd.f32 %v6329, %v6716
    %v6749 = vadd.f32 %v6330, %v6719
    %v6750 = vadd.f32 %v6331, %v6724
    %v6751 = vadd.f32 %v6332, %v6727
    %v6752 = vadd.f32 %v6333, %v6732
    %v6753 = vadd.f32 %v6334, %v6735
    %v6754 = vadd.f32 %v6335, %v6740
    %v6755 = vadd.f32 %v6336, %v6743
    %6756 = vadd.xlane.f32.xlu0 %v6748
    %v6757 = vpop.xlane.xlu0 %6756
    %6758 = vadd.xlane.f32.xlu0 %v6749
    %v6759 = vpop.xlane.xlu0 %6758
    %6760 = vadd.xlane.f32.xlu0 %v6750
    %v6761 = vpop.xlane.xlu0 %6760
    %6762 = vadd.xlane.f32.xlu0 %v6751
    %v6763 = vpop.xlane.xlu0 %6762
    %6764 = vadd.xlane.f32.xlu0 %v6752
    %v6765 = vpop.xlane.xlu0 %6764
    %6766 = vadd.xlane.f32.xlu0 %v6753
    %v6767 = vpop.xlane.xlu0 %6766
    %6768 = vadd.xlane.f32.xlu0 %v6754
    %v6769 = vpop.xlane.xlu0 %6768
    %6770 = vadd.xlane.f32.xlu0 %v6755
    %v6771 = vpop.xlane.xlu0 %6770
    %v6772 = vmul.f32 %v6757, %v3019
    %v6773 = vmul.f32 %v6759, %v3019
    %v6774 = vmul.f32 %v6761, %v3019
    %v6775 = vmul.f32 %v6763, %v3019
    %v6776 = vmul.f32 %v6765, %v3019
    %v6777 = vmul.f32 %v6767, %v3019
    %v6778 = vmul.f32 %v6769, %v3019
    %v6779 = vmul.f32 %v6771, %v3019
    %v6780 = vsub.f32 %v6748, %v6772
    %v6781 = vsub.f32 %v6749, %v6773
    %v6782 = vsub.f32 %v6750, %v6774
    %v6783 = vsub.f32 %v6751, %v6775
    %v6784 = vsub.f32 %v6752, %v6776
    %v6785 = vsub.f32 %v6753, %v6777
    %v6786 = vsub.f32 %v6754, %v6778
    %v6787 = vsub.f32 %v6755, %v6779
    %v6788 = vmul.f32 %v6780, %v6780
    %v6789 = vmul.f32 %v6781, %v6781
    %v6790 = vmul.f32 %v6782, %v6782
    %v6791 = vmul.f32 %v6783, %v6783
    %v6792 = vmul.f32 %v6784, %v6784
    %v6793 = vmul.f32 %v6785, %v6785
    %v6794 = vmul.f32 %v6786, %v6786
    %v6795 = vmul.f32 %v6787, %v6787
    %6796 = vadd.xlane.f32.xlu0 %v6788
    %v6797 = vpop.xlane.xlu0 %6796
    %6798 = vadd.xlane.f32.xlu0 %v6789
    %v6799 = vpop.xlane.xlu0 %6798
    %6800 = vadd.xlane.f32.xlu0 %v6790
    %v6801 = vpop.xlane.xlu0 %6800
    %6802 = vadd.xlane.f32.xlu0 %v6791
    %v6803 = vpop.xlane.xlu0 %6802
    %6804 = vadd.xlane.f32.xlu0 %v6792
    %v6805 = vpop.xlane.xlu0 %6804
    %6806 = vadd.xlane.f32.xlu0 %v6793
    %v6807 = vpop.xlane.xlu0 %6806
    %6808 = vadd.xlane.f32.xlu0 %v6794
    %v6809 = vpop.xlane.xlu0 %6808
    %6810 = vadd.xlane.f32.xlu0 %v6795
    %v6811 = vpop.xlane.xlu0 %6810
    %v6812 = vmul.f32 %v6797, %v3019
    %v6813 = vmul.f32 %v6799, %v3019
    %v6814 = vmul.f32 %v6801, %v3019
    %v6815 = vmul.f32 %v6803, %v3019
    %v6816 = vmul.f32 %v6805, %v3019
    %v6817 = vmul.f32 %v6807, %v3019
    %v6818 = vmul.f32 %v6809, %v3019
    %v6819 = vmul.f32 %v6811, %v3019
    %v6820 = vadd.f32 %v6812, 1e-05
    %v6821 = vadd.f32 %v6813, 1e-05
    %v6822 = vadd.f32 %v6814, 1e-05
    %v6823 = vadd.f32 %v6815, 1e-05
    %v6824 = vadd.f32 %v6816, 1e-05
    %v6825 = vadd.f32 %v6817, 1e-05
    %v6826 = vadd.f32 %v6818, 1e-05
    %v6827 = vadd.f32 %v6819, 1e-05
    %v6828 = vrsqrt.pop %v6820
    %v6829 = vrsqrt.pop %v6821
    %v6830 = vrsqrt.pop %v6822
    %v6831 = vrsqrt.pop %v6823
    %v6832 = vrsqrt.pop %v6824
    %v6833 = vrsqrt.pop %v6825
    %v6834 = vrsqrt.pop %v6826
    %v6835 = vrsqrt.pop %v6827
    %v6836 = vmul.f32 %v6780, %v6828
    %v6837 = vmul.f32 %v6781, %v6829
    %v6838 = vmul.f32 %v6782, %v6830
    %v6839 = vmul.f32 %v6783, %v6831
    %v6840 = vmul.f32 %v6784, %v6832
    %v6841 = vmul.f32 %v6785, %v6833
    %v6842 = vmul.f32 %v6786, %v6834
    %v6843 = vmul.f32 %v6787, %v6835
    %v6845 = vlaneseq
    %v6846 = vshrl.u32 %v6845, 7
    %v6847 = vsub.s32 0, %v6846
    %v6848 = vrot.slane %v6746, %v6847
    %v6850 = vmul.f32 %v6836, %v6848
    %v6851 = vmul.f32 %v6837, %v6848
    %v6852 = vmul.f32 %v6838, %v6848
    %v6853 = vmul.f32 %v6839, %v6848
    %v6854 = vmul.f32 %v6840, %v6848
    %v6855 = vmul.f32 %v6841, %v6848
    %v6856 = vmul.f32 %v6842, %v6848
    %v6857 = vmul.f32 %v6843, %v6848
    %v6859 = vlaneseq
    %v6860 = vshrl.u32 %v6859, 7
    %v6861 = vsub.s32 0, %v6860
    %v6862 = vrot.slane %v6747, %v6861
    %v6864 = vadd.f32 %v6850, %v6862
    %v6865 = vadd.f32 %v6851, %v6862
    %v6866 = vadd.f32 %v6852, %v6862
    %v6867 = vadd.f32 %v6853, %v6862
    %v6868 = vadd.f32 %v6854, %v6862
    %v6869 = vadd.f32 %v6855, %v6862
    %v6870 = vadd.f32 %v6856, %v6862
    %v6871 = vadd.f32 %v6857, %v6862
    %6872 = vst [vmem:[%s23] sm:$0xff] %v6864
    %6873 = vst [vmem:[%s23 + $0x8] sm:$0xff] %v6865
    %6874 = vst [vmem:[%s23 + $0x10] sm:$0xff] %v6866
    %6875 = vst [vmem:[%s23 + $0x18] sm:$0xff] %v6867
    %6876 = vst [vmem:[%s23 + $0x20] sm:$0xff] %v6868
    %6877 = vst [vmem:[%s23 + $0x28] sm:$0xff] %v6869
    %6878 = vst [vmem:[%s23 + $0x30] sm:$0xff] %v6870
    %6879 = vst [vmem:[%s23 + $0x38] sm:$0xff] %v6871
    // Predicated region
    $region134: #{transformer_decoder_layer.1} parent=1 // pred_check
      _
    $region135: #{transformer_decoder_layer.1} parent=1 // pred_check_branch
      %6881 = sbr.rel (0) target = $region137
    $region136: #{transformer_decoder_layer.1} parent=1 // pred_region
      _
    $region137: #{transformer_decoder_layer.1} parent=1 // pred_fallthru
      _
    // Predicated region
    $region138: #{transformer_decoder_layer.1} parent=1 // pred_check
      _
    $region139: #{transformer_decoder_layer.1} parent=1 // pred_check_branch
      %6883 = sbr.rel (0) target = $region141
    $region140: #{transformer_decoder_layer.1} parent=1 // pred_region
      _
    $region141: #{transformer_decoder_layer.1} parent=1 // pred_fallthru
      _
    %6884 = vsyncpa [#allocation3], 1
    %6885 = vsyncpa [#allocation5], 1
    %6886 = vsyncpa [#allocation8], 1
    %6887 = vsyncpa [#allocation11], 1
    %6888 = vsyncpa [#allocation14], 1
    %6889 = vsyncpa [#allocation17], 1

</llo_original>
